<compile_context>
chip_gen: v7x
topology: tpu7x:2x2x1
jax: 0.10.0
libtpu: 0.0.40
codegen_flags: <defaults>
</compile_context>

<pallas_src>
import functools

import numpy as np
import jax
import jax.numpy as jnp
from jax import lax
from jax.experimental import pallas as pl
from jax.experimental.pallas import tpu as pltpu

BN_EPS = 1e-5


# ----------------------------- Pallas kernels --------------------------------
def _conv3x3_flat(x_ref, w_ref, Wp, L):
    """3x3 / stride-1 / pad-1 conv of one zero-padded image, flat row layout.

    x_ref: (1, R, Cin) bf16 -- padded image flattened as r = i*Wp + j, with a
           zero tail (R = L + 2*Wp + 2) so every shifted tap slice stays in
           bounds.
    w_ref: (9, Cin, Cout) bf16, tap order (ky, kx).
    Returns (L, Cout) f32; row r = i*Wp + j is the conv output at (i, j)
    (only rows with i < H and j < W are meaningful).
    """
    xf = x_ref[0]                                   # (R, Cin)
    cout = w_ref.shape[-1]
    acc = jnp.zeros((L, cout), jnp.float32)
    for dy in range(3):
        for dx in range(3):
            off = dy * Wp + dx
            acc = acc + jnp.dot(xf[off:off + L, :], w_ref[3 * dy + dx],
                                preferred_element_type=jnp.float32)
    return acc


def _conv_stats_kernel(x_ref, w_ref, mask_ref, y_ref, stat_ref, *, H, W):
    """Pass 1: conv one image, store the f32 conv map, and accumulate
    per-channel sum / sum-of-squares over the whole batch."""
    Wp = W + 2
    L = (H + 2) * Wp
    y = _conv3x3_flat(x_ref, w_ref, Wp, L)          # (L, Cout) f32
    y_ref[0] = y
    # mask_ref is (1, L): 1.0 on valid rows (i < H and j < W), 0.0 on junk rows,
    # so the masked reductions are plain MXU matmuls (no reshapes / iota).
    s1 = jnp.dot(mask_ref[...], y, preferred_element_type=jnp.float32)
    s2 = jnp.dot(mask_ref[...], y * y, preferred_element_type=jnp.float32)

    @pl.when(pl.program_id(0) == 0)
    def _init():
        stat_ref[...] = jnp.zeros_like(stat_ref)

    stat_ref[...] += jnp.concatenate([s1, s2], axis=0)      # (2, Cout)


def _bn_pool_kernel(y_ref, scale_ref, shift_ref, p_ref, o_ref, *, H, W):
    """Pass 2 (conv-free): folded BatchNorm (y*scale + shift) + ReLU + 2x2/2
    max-pool, written directly in the next block's padded-flat layout."""
    Wp = W + 2
    L = (H + 2) * Wp
    y = y_ref[0] * scale_ref[...] + shift_ref[...]  # (L, Cout) BN folded
    y = jnp.maximum(y, 0.0)                         # ReLU
    # 2x2 / stride-2 max pool in the flat layout:
    #   m1[r] = max over the horizontal pair (r, r+1)
    #   m2[r] = max over the 2x2 window anchored at row r
    m1 = jnp.maximum(y[:L - 1, :], y[1:, :])
    m2 = jnp.maximum(m1[:L - 1 - Wp, :], m1[Wp:, :])
    # Constant 0/1 matrix p_ref picks the even-(i, j) anchors and scatters them
    # into the next block's zero-padded flat layout (borders + tail stay 0).
    o_ref[0] = jnp.dot(p_ref[...], m2,
                       preferred_element_type=jnp.float32).astype(o_ref.dtype)


# ----------------------------- host-side constants ---------------------------
def _flat_dims(H, W):
    Wp = W + 2
    L = (H + 2) * Wp
    R = L + 2 * Wp + 2
    return Wp, L, R


def _valid_mask(H, W):
    Wp, L, _ = _flat_dims(H, W)
    valid = (np.arange(H + 2)[:, None] < H) & (np.arange(Wp)[None, :] < W)
    return valid.reshape(1, L).astype(np.float32)


def _pool_scatter_matrix(H, W):
    """0/1 matrix mapping the 2x2-window max map m2 (length L-1-Wp) to the
    pooled image laid out in the NEXT block's padded-flat format (R2 rows)."""
    Wp, L, _ = _flat_dims(H, W)
    Ho, Wo = H // 2, W // 2
    Wp2, L2, R2 = _flat_dims(Ho, Wo)
    P = np.zeros((R2, L - 1 - Wp), np.float32)
    for oi in range(Ho):
        for oj in range(Wo):
            P[(oi + 1) * Wp2 + (oj + 1), 2 * oi * Wp + 2 * oj] = 1.0
    return P


# ------------------------------- wrappers -------------------------------------
def conv_block_apply(x_flat, w_hwio, gamma, beta, H, W, out_dtype=jnp.bfloat16):
    """One ConvBlock: Conv2d(3x3, s=1, p=1, bias=False) + BatchNorm2d (batch
    statistics, biased variance) + ReLU + MaxPool2d(2, 2).

    x_flat: (B, R, Cin) padded-flat bf16 image (row r = i*(W+2)+j, zero tail).
    Returns (B, R_out, Cout) in the same layout for the pooled (H//2, W//2)
    image, in `out_dtype`.
    """
    B, R, Cin = x_flat.shape
    Cout = w_hwio.shape[-1]
    assert H % 2 == 0 and W % 2 == 0
    Wp, L, R_chk = _flat_dims(H, W)
    assert R == R_chk, (R, R_chk)
    Ho, Wo = H // 2, W // 2
    _, _, R2 = _flat_dims(Ho, Wo)

    wf = w_hwio.reshape(9, Cin, Cout).astype(jnp.bfloat16)
    mask_t = jnp.asarray(_valid_mask(H, W))
    pmat = jnp.asarray(_pool_scatter_matrix(H, W))

    grid = (B,)                      # one image per grid step (pipelined DMA)
    x_spec = pl.BlockSpec((1, R, Cin), lambda b: (b, 0, 0))
    w_spec = pl.BlockSpec((9, Cin, Cout), lambda b: (0, 0, 0))
    y_spec = pl.BlockSpec((1, L, Cout), lambda b: (b, 0, 0))

    # Pass 1: conv once per image; f32 conv map + batch statistics.
    y, stats = pl.pallas_call(
        functools.partial(_conv_stats_kernel, H=H, W=W),
        out_shape=(jax.ShapeDtypeStruct((B, L, Cout), jnp.float32),
                   jax.ShapeDtypeStruct((2, Cout), jnp.float32)),
        grid=grid,
        in_specs=[x_spec, w_spec, pl.BlockSpec((1, L), lambda b: (0, 0))],
        out_specs=[y_spec, pl.BlockSpec((2, Cout), lambda b: (0, 0))],
        compiler_params=pltpu.CompilerParams(
            dimension_semantics=("arbitrary",)),
    )(x_flat, wf, mask_t)

    count = float(B * H * W)
    mean = stats[0] / count
    var = jnp.maximum(stats[1] / count - mean * mean, 0.0)  # biased batch var
    scale = gamma * lax.rsqrt(var + BN_EPS)                 # folded BN
    shift = beta - mean * scale

    # Pass 2: folded BN + ReLU + pool; batch axis "parallel" (megacore).
    out = pl.pallas_call(
        functools.partial(_bn_pool_kernel, H=H, W=W),
        out_shape=jax.ShapeDtypeStruct((B, R2, Cout), out_dtype),
        grid=grid,
        in_specs=[y_spec,
                  pl.BlockSpec((1, Cout), lambda b: (0, 0)),
                  pl.BlockSpec((1, Cout), lambda b: (0, 0)),
                  pl.BlockSpec(pmat.shape, lambda b: (0, 0))],
        out_specs=pl.BlockSpec((1, R2, Cout), lambda b: (b, 0, 0)),
        compiler_params=pltpu.CompilerParams(
            dimension_semantics=("parallel",)),
    )(y, scale.reshape(1, Cout), shift.reshape(1, Cout), pmat)
    return out


def init_params(key, x_dim, h_dim, z_dim):
    dims = [(x_dim, h_dim), (h_dim, h_dim), (h_dim, h_dim), (h_dim, z_dim)]
    params = []
    for cin, cout in dims:
        key, wk, gk, bk = jax.random.split(key, 4)
        w = jax.random.normal(wk, (3, 3, cin, cout), jnp.float32) / jnp.sqrt(9.0 * cin)
        # nn.BatchNorm2d default init is gamma=1, beta=0; perturb slightly so the
        # affine path is actually exercised by the test.
        gamma = 1.0 + 0.1 * jax.random.normal(gk, (cout,), jnp.float32)
        beta = 0.1 * jax.random.normal(bk, (cout,), jnp.float32)
        params.append((w, gamma, beta))
    return params


def autoprotonet_embedding(x_nchw, params):
    """AutoProtoNetEmbedding.forward: encoder (4 ConvBlocks) + flatten."""
    x = jnp.transpose(x_nchw, (0, 2, 3, 1))          # NCHW -> NHWC
    B, H, W, Cin = x.shape

    # One-time layout prep (~1x HBM traffic, NOT an im2col): zero-pad the
    # spatial borders, flatten (i, j) -> i*(W+2) + j, append the zero tail, bf16.
    _, L, R = _flat_dims(H, W)
    xp = jnp.pad(x.astype(jnp.bfloat16), ((0, 0), (1, 1), (1, 1), (0, 0)))
    xf = jnp.pad(xp.reshape(B, L, Cin), ((0, 0), (0, R - L), (0, 0)))

    h, w = H, W
    n = len(params)
    for i, (wgt, g, b) in enumerate(params):
        out_dtype = jnp.float32 if i == n - 1 else jnp.bfloat16
        xf = conv_block_apply(xf, wgt, g, b, h, w, out_dtype=out_dtype)
        h, w = h // 2, w // 2

    # Final block output is in the padded-flat layout of the (h, w) image.
    C = params[-1][0].shape[-1]
    Wp2, L2, _ = _flat_dims(h, w)
    img = xf[:, :L2, :].reshape(B, h + 2, Wp2, C)[:, 1:1 + h, 1:1 + w, :]
    # PyTorch flattens NCHW: (B, C*H*W) in (c, h, w) order.
    return jnp.transpose(img, (0, 3, 1, 2)).reshape(B, -1)


# --------------------------- pure-JAX references ------------------------------
def _ref_block(x, w, g, b, conv_dtype):
    y = lax.conv_general_dilated(x.astype(conv_dtype), w.astype(conv_dtype),
                                 (1, 1), 'SAME',
                                 dimension_numbers=('NHWC', 'HWIO', 'NHWC'),
                                 preferred_element_type=jnp.float32)
    mean = y.mean(axis=(0, 1, 2), keepdims=True)
    var = jnp.square(y - mean).mean(axis=(0, 1, 2), keepdims=True)
    y = (y - mean) * lax.rsqrt(var + BN_EPS)
    y = y * g.reshape(1, 1, 1, -1) + b.reshape(1, 1, 1, -1)
    y = jnp.maximum(y, 0.0)
    B, H, W, C = y.shape
    return y.reshape(B, H // 2, 2, W // 2, 2, C).max(axis=(2, 4))


def _ref_forward(x_nchw, params, conv_dtype=jnp.bfloat16):
    x = jnp.transpose(x_nchw, (0, 2, 3, 1))
    for (w, g, b) in params:
        x = _ref_block(x, w, g, b, conv_dtype)
    B = x.shape[0]
    return jnp.transpose(x, (0, 3, 1, 2)).reshape(B, -1)


# ---------------------------------- main --------------------------------------
if __name__ == "__main__":
    B, x_dim, h_dim, z_dim, H, W = 4, 3, 16, 16, 16, 16
    key = jax.random.PRNGKey(0)
    key, xk = jax.random.split(key)
    x = jax.random.normal(xk, (B, x_dim, H, W), jnp.float32)
    params = init_params(key, x_dim, h_dim, z_dim)

    fwd = jax.jit(autoprotonet_embedding)
    emb = jax.block_until_ready(fwd(x, params))

    # Reference matching the kernel's bf16 MXU inputs (f32 accumulation).
    ref = jax.block_until_ready(_ref_forward(x, params, jnp.bfloat16))
    # Full-f32 reference = exact PyTorch semantics.
    ref32 = jax.block_until_ready(_ref_forward(x, params, jnp.float32))

    assert emb.shape == (B, z_dim), emb.shape        # 16x16 -> 4 pools -> 1x1
    err = float(jnp.max(jnp.abs(emb - ref)))
    assert jnp.allclose(emb, ref, atol=1e-2, rtol=1e-2), err
    err32 = float(jnp.max(jnp.abs(emb - ref32)))
    assert err32 < 0.1, err32                        # bf16-conv vs f32 semantics
    print("KERNEL_OK")
</pallas_src>

<mosaic_0001>
module attributes {stable_mosaic.version = 11 : i64} {
  func.func @_conv_stats_kernel(%arg0: i32, %arg1: memref<1x362x3xbf16, #tpu.memory_space<vmem>>, %arg2: memref<9x3x16xbf16, #tpu.memory_space<vmem>>, %arg3: memref<1x324xf32, #tpu.memory_space<vmem>>, %arg4: memref<1x324x16xf32, #tpu.memory_space<vmem>>, %arg5: memref<2x16xf32, #tpu.memory_space<vmem>>) attributes {dimension_semantics = [#tpu.dimension_semantics<arbitrary>], iteration_bounds = array<i64: 4>, scalar_prefetch = 0 : i64, scratch_operands = 0 : i64, tpu.core_type = #tpu.core_type<tc>, window_params = [{transform_indices = @transform_0, window_bounds = array<i64: 1, 362, 3>}, {pipeline_mode = #tpu.pipeline_mode<synchronous>, transform_indices = @transform_1, window_bounds = array<i64: 9, 3, 16>}, {pipeline_mode = #tpu.pipeline_mode<synchronous>, transform_indices = @transform_2, window_bounds = array<i64: 1, 324>}, {transform_indices = @transform_3, window_bounds = array<i64: 1, 324, 16>}, {pipeline_mode = #tpu.pipeline_mode<synchronous>, transform_indices = @transform_4, window_bounds = array<i64: 2, 16>}]} {
    %c0 = arith.constant 0 : index
    %c0_0 = arith.constant 0 : index
    %c0_1 = arith.constant 0 : index
    %0 = vector.load %arg1[%c0, %c0_0, %c0_1] : memref<1x362x3xbf16, #tpu.memory_space<vmem>>, vector<1x362x3xbf16>
    %1 = vector.shape_cast %0 : vector<1x362x3xbf16> to vector<362x3xbf16>
    %cst = arith.constant 0.000000e+00 : f32
    %2 = vector.broadcast %cst : f32 to vector<324x16xf32>
    %3 = vector.extract_strided_slice %1 {offsets = [0, 0], sizes = [324, 3], strides = [1, 1]} : vector<362x3xbf16> to vector<324x3xbf16>
    %c0_2 = arith.constant 0 : index
    %c0_3 = arith.constant 0 : index
    %c0_4 = arith.constant 0 : index
    %4 = vector.load %arg2[%c0_2, %c0_3, %c0_4] : memref<9x3x16xbf16, #tpu.memory_space<vmem>>, vector<1x3x16xbf16>
    %5 = vector.shape_cast %4 : vector<1x3x16xbf16> to vector<3x16xbf16>
    %cst_5 = arith.constant dense<0.000000e+00> : vector<324x16xf32>
    %6 = tpu.matmul %3, %5, %cst_5 {dimension_numbers = #tpu.dot_dimension_numbers<[1], [0], [0], [1], [0, 0, 1, 1], [], []>} : vector<324x3xbf16>, vector<3x16xbf16>, vector<324x16xf32> -> vector<324x16xf32>
    %7 = arith.addf %2, %6 : vector<324x16xf32>
    %8 = vector.extract_strided_slice %1 {offsets = [1, 0], sizes = [324, 3], strides = [1, 1]} : vector<362x3xbf16> to vector<324x3xbf16>
    %c1 = arith.constant 1 : index
    %c0_6 = arith.constant 0 : index
    %c0_7 = arith.constant 0 : index
    %9 = vector.load %arg2[%c1, %c0_6, %c0_7] : memref<9x3x16xbf16, #tpu.memory_space<vmem>>, vector<1x3x16xbf16>
    %10 = vector.shape_cast %9 : vector<1x3x16xbf16> to vector<3x16xbf16>
    %cst_8 = arith.constant dense<0.000000e+00> : vector<324x16xf32>
    %11 = tpu.matmul %8, %10, %cst_8 {dimension_numbers = #tpu.dot_dimension_numbers<[1], [0], [0], [1], [0, 0, 1, 1], [], []>} : vector<324x3xbf16>, vector<3x16xbf16>, vector<324x16xf32> -> vector<324x16xf32>
    %12 = arith.addf %7, %11 : vector<324x16xf32>
    %13 = vector.extract_strided_slice %1 {offsets = [2, 0], sizes = [324, 3], strides = [1, 1]} : vector<362x3xbf16> to vector<324x3xbf16>
    %c2 = arith.constant 2 : index
    %c0_9 = arith.constant 0 : index
    %c0_10 = arith.constant 0 : index
    %14 = vector.load %arg2[%c2, %c0_9, %c0_10] : memref<9x3x16xbf16, #tpu.memory_space<vmem>>, vector<1x3x16xbf16>
    %15 = vector.shape_cast %14 : vector<1x3x16xbf16> to vector<3x16xbf16>
    %cst_11 = arith.constant dense<0.000000e+00> : vector<324x16xf32>
    %16 = tpu.matmul %13, %15, %cst_11 {dimension_numbers = #tpu.dot_dimension_numbers<[1], [0], [0], [1], [0, 0, 1, 1], [], []>} : vector<324x3xbf16>, vector<3x16xbf16>, vector<324x16xf32> -> vector<324x16xf32>
    %17 = arith.addf %12, %16 : vector<324x16xf32>
    %18 = vector.extract_strided_slice %1 {offsets = [18, 0], sizes = [324, 3], strides = [1, 1]} : vector<362x3xbf16> to vector<324x3xbf16>
    %c3 = arith.constant 3 : index
    %c0_12 = arith.constant 0 : index
    %c0_13 = arith.constant 0 : index
    %19 = vector.load %arg2[%c3, %c0_12, %c0_13] : memref<9x3x16xbf16, #tpu.memory_space<vmem>>, vector<1x3x16xbf16>
    %20 = vector.shape_cast %19 : vector<1x3x16xbf16> to vector<3x16xbf16>
    %cst_14 = arith.constant dense<0.000000e+00> : vector<324x16xf32>
    %21 = tpu.matmul %18, %20, %cst_14 {dimension_numbers = #tpu.dot_dimension_numbers<[1], [0], [0], [1], [0, 0, 1, 1], [], []>} : vector<324x3xbf16>, vector<3x16xbf16>, vector<324x16xf32> -> vector<324x16xf32>
    %22 = arith.addf %17, %21 : vector<324x16xf32>
    %23 = vector.extract_strided_slice %1 {offsets = [19, 0], sizes = [324, 3], strides = [1, 1]} : vector<362x3xbf16> to vector<324x3xbf16>
    %c4 = arith.constant 4 : index
    %c0_15 = arith.constant 0 : index
    %c0_16 = arith.constant 0 : index
    %24 = vector.load %arg2[%c4, %c0_15, %c0_16] : memref<9x3x16xbf16, #tpu.memory_space<vmem>>, vector<1x3x16xbf16>
    %25 = vector.shape_cast %24 : vector<1x3x16xbf16> to vector<3x16xbf16>
    %cst_17 = arith.constant dense<0.000000e+00> : vector<324x16xf32>
    %26 = tpu.matmul %23, %25, %cst_17 {dimension_numbers = #tpu.dot_dimension_numbers<[1], [0], [0], [1], [0, 0, 1, 1], [], []>} : vector<324x3xbf16>, vector<3x16xbf16>, vector<324x16xf32> -> vector<324x16xf32>
    %27 = arith.addf %22, %26 : vector<324x16xf32>
    %28 = vector.extract_strided_slice %1 {offsets = [20, 0], sizes = [324, 3], strides = [1, 1]} : vector<362x3xbf16> to vector<324x3xbf16>
    %c5 = arith.constant 5 : index
    %c0_18 = arith.constant 0 : index
    %c0_19 = arith.constant 0 : index
    %29 = vector.load %arg2[%c5, %c0_18, %c0_19] : memref<9x3x16xbf16, #tpu.memory_space<vmem>>, vector<1x3x16xbf16>
    %30 = vector.shape_cast %29 : vector<1x3x16xbf16> to vector<3x16xbf16>
    %cst_20 = arith.constant dense<0.000000e+00> : vector<324x16xf32>
    %31 = tpu.matmul %28, %30, %cst_20 {dimension_numbers = #tpu.dot_dimension_numbers<[1], [0], [0], [1], [0, 0, 1, 1], [], []>} : vector<324x3xbf16>, vector<3x16xbf16>, vector<324x16xf32> -> vector<324x16xf32>
    %32 = arith.addf %27, %31 : vector<324x16xf32>
    %33 = vector.extract_strided_slice %1 {offsets = [36, 0], sizes = [324, 3], strides = [1, 1]} : vector<362x3xbf16> to vector<324x3xbf16>
    %c6 = arith.constant 6 : index
    %c0_21 = arith.constant 0 : index
    %c0_22 = arith.constant 0 : index
    %34 = vector.load %arg2[%c6, %c0_21, %c0_22] : memref<9x3x16xbf16, #tpu.memory_space<vmem>>, vector<1x3x16xbf16>
    %35 = vector.shape_cast %34 : vector<1x3x16xbf16> to vector<3x16xbf16>
    %cst_23 = arith.constant dense<0.000000e+00> : vector<324x16xf32>
    %36 = tpu.matmul %33, %35, %cst_23 {dimension_numbers = #tpu.dot_dimension_numbers<[1], [0], [0], [1], [0, 0, 1, 1], [], []>} : vector<324x3xbf16>, vector<3x16xbf16>, vector<324x16xf32> -> vector<324x16xf32>
    %37 = arith.addf %32, %36 : vector<324x16xf32>
    %38 = vector.extract_strided_slice %1 {offsets = [37, 0], sizes = [324, 3], strides = [1, 1]} : vector<362x3xbf16> to vector<324x3xbf16>
    %c7 = arith.constant 7 : index
    %c0_24 = arith.constant 0 : index
    %c0_25 = arith.constant 0 : index
    %39 = vector.load %arg2[%c7, %c0_24, %c0_25] : memref<9x3x16xbf16, #tpu.memory_space<vmem>>, vector<1x3x16xbf16>
    %40 = vector.shape_cast %39 : vector<1x3x16xbf16> to vector<3x16xbf16>
    %cst_26 = arith.constant dense<0.000000e+00> : vector<324x16xf32>
    %41 = tpu.matmul %38, %40, %cst_26 {dimension_numbers = #tpu.dot_dimension_numbers<[1], [0], [0], [1], [0, 0, 1, 1], [], []>} : vector<324x3xbf16>, vector<3x16xbf16>, vector<324x16xf32> -> vector<324x16xf32>
    %42 = arith.addf %37, %41 : vector<324x16xf32>
    %43 = vector.extract_strided_slice %1 {offsets = [38, 0], sizes = [324, 3], strides = [1, 1]} : vector<362x3xbf16> to vector<324x3xbf16>
    %c8 = arith.constant 8 : index
    %c0_27 = arith.constant 0 : index
    %c0_28 = arith.constant 0 : index
    %44 = vector.load %arg2[%c8, %c0_27, %c0_28] : memref<9x3x16xbf16, #tpu.memory_space<vmem>>, vector<1x3x16xbf16>
    %45 = vector.shape_cast %44 : vector<1x3x16xbf16> to vector<3x16xbf16>
    %cst_29 = arith.constant dense<0.000000e+00> : vector<324x16xf32>
    %46 = tpu.matmul %43, %45, %cst_29 {dimension_numbers = #tpu.dot_dimension_numbers<[1], [0], [0], [1], [0, 0, 1, 1], [], []>} : vector<324x3xbf16>, vector<3x16xbf16>, vector<324x16xf32> -> vector<324x16xf32>
    %47 = arith.addf %42, %46 : vector<324x16xf32>
    %c0_30 = arith.constant 0 : index
    %c0_31 = arith.constant 0 : index
    %c0_32 = arith.constant 0 : index
    %48 = vector.load %arg4[%c0_30, %c0_31, %c0_32] : memref<1x324x16xf32, #tpu.memory_space<vmem>>, vector<1x324x16xf32>
    %49 = vector.shape_cast %48 : vector<1x324x16xf32> to vector<324x16xf32>
    %50 = vector.shape_cast %47 : vector<324x16xf32> to vector<1x324x16xf32>
    tpu.vector_store %arg4[%c0_30, %c0_31, %c0_32], %50 {strides = array<i32>} : memref<1x324x16xf32, #tpu.memory_space<vmem>>, vector<1x324x16xf32>,
    %c0_33 = arith.constant 0 : index
    %c0_34 = arith.constant 0 : index
    %51 = vector.load %arg3[%c0_33, %c0_34] : memref<1x324xf32, #tpu.memory_space<vmem>>, vector<1x324xf32>
    %cst_35 = arith.constant dense<0.000000e+00> : vector<1x16xf32>
    %52 = tpu.matmul %51, %47, %cst_35 {dimension_numbers = #tpu.dot_dimension_numbers<[1], [0], [0], [1], [0, 0, 1, 1], [], []>} : vector<1x324xf32>, vector<324x16xf32>, vector<1x16xf32> -> vector<1x16xf32>
    %c0_36 = arith.constant 0 : index
    %c0_37 = arith.constant 0 : index
    %53 = vector.load %arg3[%c0_36, %c0_37] : memref<1x324xf32, #tpu.memory_space<vmem>>, vector<1x324xf32>
    %54 = arith.mulf %47, %47 : vector<324x16xf32>
    %cst_38 = arith.constant dense<0.000000e+00> : vector<1x16xf32>
    %55 = tpu.matmul %53, %54, %cst_38 {dimension_numbers = #tpu.dot_dimension_numbers<[1], [0], [0], [1], [0, 0, 1, 1], [], []>} : vector<1x324xf32>, vector<324x16xf32>, vector<1x16xf32> -> vector<1x16xf32>
    %c0_i32 = arith.constant 0 : i32
    %56 = arith.cmpi eq, %arg0, %c0_i32 : i32
    %57 = arith.extui %56 : i1 to i32
    %c0_i32_39 = arith.constant 0 : i32
    %58 = arith.cmpi ne, %57, %c0_i32_39 : i32
    scf.if %58 {
      %cst_44 = arith.constant 0.000000e+00 : f32
      %63 = vector.broadcast %cst_44 : f32 to vector<2x16xf32>
      %c0_45 = arith.constant 0 : index
      %c0_46 = arith.constant 0 : index
      %64 = vector.load %arg5[%c0_45, %c0_46] : memref<2x16xf32, #tpu.memory_space<vmem>>, vector<2x16xf32>
      tpu.vector_store %arg5[%c0_45, %c0_46], %63 {strides = array<i32>} : memref<2x16xf32, #tpu.memory_space<vmem>>, vector<2x16xf32>,
    } else {
    }
    %c0_40 = arith.constant 0 : index
    %c0_41 = arith.constant 0 : index
    %59 = vector.load %arg5[%c0_40, %c0_41] : memref<2x16xf32, #tpu.memory_space<vmem>>, vector<2x16xf32>
    %60 = tpu.concatenate %52, %55 in 0 : vector<1x16xf32>, vector<1x16xf32> -> vector<2x16xf32>
    %61 = arith.addf %59, %60 : vector<2x16xf32>
    %c0_42 = arith.constant 0 : index
    %c0_43 = arith.constant 0 : index
    %62 = vector.load %arg5[%c0_42, %c0_43] : memref<2x16xf32, #tpu.memory_space<vmem>>, vector<2x16xf32>
    tpu.vector_store %arg5[%c0_42, %c0_43], %61 {strides = array<i32>} : memref<2x16xf32, #tpu.memory_space<vmem>>, vector<2x16xf32>,
    return
  }
  func.func @transform_0(%arg0: i32) -> (i32, i32, i32) {
    %c0_i32 = arith.constant 0 : i32
    %c0_i32_0 = arith.constant 0 : i32
    %c0_i32_1 = arith.constant 0 : i32
    return %arg0, %c0_i32, %c0_i32_0 : i32, i32, i32
  }
  func.func @transform_1(%arg0: i32) -> (i32, i32, i32) {
    %c0_i32 = arith.constant 0 : i32
    %c0_i32_0 = arith.constant 0 : i32
    %c0_i32_1 = arith.constant 0 : i32
    %c0_i32_2 = arith.constant 0 : i32
    return %c0_i32, %c0_i32_0, %c0_i32_1 : i32, i32, i32
  }
  func.func @transform_2(%arg0: i32) -> (i32, i32) {
    %c0_i32 = arith.constant 0 : i32
    %c0_i32_0 = arith.constant 0 : i32
    %c0_i32_1 = arith.constant 0 : i32
    return %c0_i32, %c0_i32_0 : i32, i32
  }
  func.func @transform_3(%arg0: i32) -> (i32, i32, i32) {
    %c0_i32 = arith.constant 0 : i32
    %c0_i32_0 = arith.constant 0 : i32
    %c0_i32_1 = arith.constant 0 : i32
    return %arg0, %c0_i32, %c0_i32_0 : i32, i32, i32
  }
  func.func @transform_4(%arg0: i32) -> (i32, i32) {
    %c0_i32 = arith.constant 0 : i32
    %c0_i32_0 = arith.constant 0 : i32
    %c0_i32_1 = arith.constant 0 : i32
    return %c0_i32, %c0_i32_0 : i32, i32
  }
}

module attributes {stable_mosaic.version = 11 : i64} {
  func.func @_bn_pool_kernel(%arg0: i32, %arg1: memref<1x324x16xf32, #tpu.memory_space<vmem>>, %arg2: memref<1x16xf32, #tpu.memory_space<vmem>>, %arg3: memref<1x16xf32, #tpu.memory_space<vmem>>, %arg4: memref<122x305xf32, #tpu.memory_space<vmem>>, %arg5: memref<1x122x16xbf16, #tpu.memory_space<vmem>>) attributes {dimension_semantics = [#tpu.dimension_semantics<parallel>], iteration_bounds = array<i64: 4>, scalar_prefetch = 0 : i64, scratch_operands = 0 : i64, tpu.core_type = #tpu.core_type<tc>, window_params = [{transform_indices = @transform_0, window_bounds = array<i64: 1, 324, 16>}, {pipeline_mode = #tpu.pipeline_mode<synchronous>, transform_indices = @transform_1, window_bounds = array<i64: 1, 16>}, {pipeline_mode = #tpu.pipeline_mode<synchronous>, transform_indices = @transform_2, window_bounds = array<i64: 1, 16>}, {pipeline_mode = #tpu.pipeline_mode<synchronous>, transform_indices = @transform_3, window_bounds = array<i64: 122, 305>}, {transform_indices = @transform_4, window_bounds = array<i64: 1, 122, 16>}]} {
    %c0 = arith.constant 0 : index
    %c0_0 = arith.constant 0 : index
    %c0_1 = arith.constant 0 : index
    %0 = vector.load %arg1[%c0, %c0_0, %c0_1] : memref<1x324x16xf32, #tpu.memory_space<vmem>>, vector<1x324x16xf32>
    %1 = vector.shape_cast %0 : vector<1x324x16xf32> to vector<324x16xf32>
    %c0_2 = arith.constant 0 : index
    %c0_3 = arith.constant 0 : index
    %2 = vector.load %arg2[%c0_2, %c0_3] : memref<1x16xf32, #tpu.memory_space<vmem>>, vector<1x16xf32>
    %3 = vector.broadcast %2 : vector<1x16xf32> to vector<324x16xf32>
    %4 = arith.mulf %1, %3 : vector<324x16xf32>
    %c0_4 = arith.constant 0 : index
    %c0_5 = arith.constant 0 : index
    %5 = vector.load %arg3[%c0_4, %c0_5] : memref<1x16xf32, #tpu.memory_space<vmem>>, vector<1x16xf32>
    %6 = vector.broadcast %5 : vector<1x16xf32> to vector<324x16xf32>
    %7 = arith.addf %4, %6 : vector<324x16xf32>
    %cst = arith.constant 0.000000e+00 : f32
    %8 = vector.broadcast %cst : f32 to vector<324x16xf32>
    %9 = arith.maximumf %7, %8 : vector<324x16xf32>
    %10 = vector.extract_strided_slice %9 {offsets = [0, 0], sizes = [323, 16], strides = [1, 1]} : vector<324x16xf32> to vector<323x16xf32>
    %11 = vector.extract_strided_slice %9 {offsets = [1, 0], sizes = [323, 16], strides = [1, 1]} : vector<324x16xf32> to vector<323x16xf32>
    %12 = arith.maximumf %10, %11 : vector<323x16xf32>
    %13 = vector.extract_strided_slice %12 {offsets = [0, 0], sizes = [305, 16], strides = [1, 1]} : vector<323x16xf32> to vector<305x16xf32>
    %14 = vector.extract_strided_slice %12 {offsets = [18, 0], sizes = [305, 16], strides = [1, 1]} : vector<323x16xf32> to vector<305x16xf32>
    %15 = arith.maximumf %13, %14 : vector<305x16xf32>
    %c0_6 = arith.constant 0 : index
    %c0_7 = arith.constant 0 : index
    %16 = vector.load %arg4[%c0_6, %c0_7] : memref<122x305xf32, #tpu.memory_space<vmem>>, vector<122x305xf32>
    %cst_8 = arith.constant dense<0.000000e+00> : vector<122x16xf32>
    %17 = tpu.matmul %16, %15, %cst_8 {dimension_numbers = #tpu.dot_dimension_numbers<[1], [0], [0], [1], [0, 0, 1, 1], [], []>} : vector<122x305xf32>, vector<305x16xf32>, vector<122x16xf32> -> vector<122x16xf32>
    %18 = arith.truncf %17 : vector<122x16xf32> to vector<122x16xbf16>
    %c0_9 = arith.constant 0 : index
    %c0_10 = arith.constant 0 : index
    %c0_11 = arith.constant 0 : index
    %19 = vector.load %arg5[%c0_9, %c0_10, %c0_11] : memref<1x122x16xbf16, #tpu.memory_space<vmem>>, vector<1x122x16xbf16>
    %20 = vector.shape_cast %19 : vector<1x122x16xbf16> to vector<122x16xbf16>
    %21 = vector.shape_cast %18 : vector<122x16xbf16> to vector<1x122x16xbf16>
    tpu.vector_store %arg5[%c0_9, %c0_10, %c0_11], %21 {strides = array<i32>} : memref<1x122x16xbf16, #tpu.memory_space<vmem>>, vector<1x122x16xbf16>,
    return
  }
  func.func @transform_0(%arg0: i32) -> (i32, i32, i32) {
    %c0_i32 = arith.constant 0 : i32
    %c0_i32_0 = arith.constant 0 : i32
    %c0_i32_1 = arith.constant 0 : i32
    return %arg0, %c0_i32, %c0_i32_0 : i32, i32, i32
  }
  func.func @transform_1(%arg0: i32) -> (i32, i32) {
    %c0_i32 = arith.constant 0 : i32
    %c0_i32_0 = arith.constant 0 : i32
    %c0_i32_1 = arith.constant 0 : i32
    return %c0_i32, %c0_i32_0 : i32, i32
  }
  func.func @transform_2(%arg0: i32) -> (i32, i32) {
    %c0_i32 = arith.constant 0 : i32
    %c0_i32_0 = arith.constant 0 : i32
    %c0_i32_1 = arith.constant 0 : i32
    return %c0_i32, %c0_i32_0 : i32, i32
  }
  func.func @transform_3(%arg0: i32) -> (i32, i32) {
    %c0_i32 = arith.constant 0 : i32
    %c0_i32_0 = arith.constant 0 : i32
    %c0_i32_1 = arith.constant 0 : i32
    return %c0_i32, %c0_i32_0 : i32, i32
  }
  func.func @transform_4(%arg0: i32) -> (i32, i32, i32) {
    %c0_i32 = arith.constant 0 : i32
    %c0_i32_0 = arith.constant 0 : i32
    %c0_i32_1 = arith.constant 0 : i32
    return %arg0, %c0_i32, %c0_i32_0 : i32, i32, i32
  }
}

module attributes {stable_mosaic.version = 11 : i64} {
  func.func @_conv_stats_kernel(%arg0: i32, %arg1: memref<1x122x16xbf16, #tpu.memory_space<vmem>>, %arg2: memref<9x16x16xbf16, #tpu.memory_space<vmem>>, %arg3: memref<1x100xf32, #tpu.memory_space<vmem>>, %arg4: memref<1x100x16xf32, #tpu.memory_space<vmem>>, %arg5: memref<2x16xf32, #tpu.memory_space<vmem>>) attributes {dimension_semantics = [#tpu.dimension_semantics<arbitrary>], iteration_bounds = array<i64: 4>, scalar_prefetch = 0 : i64, scratch_operands = 0 : i64, tpu.core_type = #tpu.core_type<tc>, window_params = [{transform_indices = @transform_0, window_bounds = array<i64: 1, 122, 16>}, {pipeline_mode = #tpu.pipeline_mode<synchronous>, transform_indices = @transform_1, window_bounds = array<i64: 9, 16, 16>}, {pipeline_mode = #tpu.pipeline_mode<synchronous>, transform_indices = @transform_2, window_bounds = array<i64: 1, 100>}, {transform_indices = @transform_3, window_bounds = array<i64: 1, 100, 16>}, {pipeline_mode = #tpu.pipeline_mode<synchronous>, transform_indices = @transform_4, window_bounds = array<i64: 2, 16>}]} {
    %c0 = arith.constant 0 : index
    %c0_0 = arith.constant 0 : index
    %c0_1 = arith.constant 0 : index
    %0 = vector.load %arg1[%c0, %c0_0, %c0_1] : memref<1x122x16xbf16, #tpu.memory_space<vmem>>, vector<1x122x16xbf16>
    %1 = vector.shape_cast %0 : vector<1x122x16xbf16> to vector<122x16xbf16>
    %cst = arith.constant 0.000000e+00 : f32
    %2 = vector.broadcast %cst : f32 to vector<100x16xf32>
    %3 = vector.extract_strided_slice %1 {offsets = [0, 0], sizes = [100, 16], strides = [1, 1]} : vector<122x16xbf16> to vector<100x16xbf16>
    %c0_2 = arith.constant 0 : index
    %c0_3 = arith.constant 0 : index
    %c0_4 = arith.constant 0 : index
    %4 = vector.load %arg2[%c0_2, %c0_3, %c0_4] : memref<9x16x16xbf16, #tpu.memory_space<vmem>>, vector<1x16x16xbf16>
    %5 = vector.shape_cast %4 : vector<1x16x16xbf16> to vector<16x16xbf16>
    %cst_5 = arith.constant dense<0.000000e+00> : vector<100x16xf32>
    %6 = tpu.matmul %3, %5, %cst_5 {dimension_numbers = #tpu.dot_dimension_numbers<[1], [0], [0], [1], [0, 0, 1, 1], [], []>} : vector<100x16xbf16>, vector<16x16xbf16>, vector<100x16xf32> -> vector<100x16xf32>
    %7 = arith.addf %2, %6 : vector<100x16xf32>
    %8 = vector.extract_strided_slice %1 {offsets = [1, 0], sizes = [100, 16], strides = [1, 1]} : vector<122x16xbf16> to vector<100x16xbf16>
    %c1 = arith.constant 1 : index
    %c0_6 = arith.constant 0 : index
    %c0_7 = arith.constant 0 : index
    %9 = vector.load %arg2[%c1, %c0_6, %c0_7] : memref<9x16x16xbf16, #tpu.memory_space<vmem>>, vector<1x16x16xbf16>
    %10 = vector.shape_cast %9 : vector<1x16x16xbf16> to vector<16x16xbf16>
    %cst_8 = arith.constant dense<0.000000e+00> : vector<100x16xf32>
    %11 = tpu.matmul %8, %10, %cst_8 {dimension_numbers = #tpu.dot_dimension_numbers<[1], [0], [0], [1], [0, 0, 1, 1], [], []>} : vector<100x16xbf16>, vector<16x16xbf16>, vector<100x16xf32> -> vector<100x16xf32>
    %12 = arith.addf %7, %11 : vector<100x16xf32>
    %13 = vector.extract_strided_slice %1 {offsets = [2, 0], sizes = [100, 16], strides = [1, 1]} : vector<122x16xbf16> to vector<100x16xbf16>
    %c2 = arith.constant 2 : index
    %c0_9 = arith.constant 0 : index
    %c0_10 = arith.constant 0 : index
    %14 = vector.load %arg2[%c2, %c0_9, %c0_10] : memref<9x16x16xbf16, #tpu.memory_space<vmem>>, vector<1x16x16xbf16>
    %15 = vector.shape_cast %14 : vector<1x16x16xbf16> to vector<16x16xbf16>
    %cst_11 = arith.constant dense<0.000000e+00> : vector<100x16xf32>
    %16 = tpu.matmul %13, %15, %cst_11 {dimension_numbers = #tpu.dot_dimension_numbers<[1], [0], [0], [1], [0, 0, 1, 1], [], []>} : vector<100x16xbf16>, vector<16x16xbf16>, vector<100x16xf32> -> vector<100x16xf32>
    %17 = arith.addf %12, %16 : vector<100x16xf32>
    %18 = vector.extract_strided_slice %1 {offsets = [10, 0], sizes = [100, 16], strides = [1, 1]} : vector<122x16xbf16> to vector<100x16xbf16>
    %c3 = arith.constant 3 : index
    %c0_12 = arith.constant 0 : index
    %c0_13 = arith.constant 0 : index
    %19 = vector.load %arg2[%c3, %c0_12, %c0_13] : memref<9x16x16xbf16, #tpu.memory_space<vmem>>, vector<1x16x16xbf16>
    %20 = vector.shape_cast %19 : vector<1x16x16xbf16> to vector<16x16xbf16>
    %cst_14 = arith.constant dense<0.000000e+00> : vector<100x16xf32>
    %21 = tpu.matmul %18, %20, %cst_14 {dimension_numbers = #tpu.dot_dimension_numbers<[1], [0], [0], [1], [0, 0, 1, 1], [], []>} : vector<100x16xbf16>, vector<16x16xbf16>, vector<100x16xf32> -> vector<100x16xf32>
    %22 = arith.addf %17, %21 : vector<100x16xf32>
    %23 = vector.extract_strided_slice %1 {offsets = [11, 0], sizes = [100, 16], strides = [1, 1]} : vector<122x16xbf16> to vector<100x16xbf16>
    %c4 = arith.constant 4 : index
    %c0_15 = arith.constant 0 : index
    %c0_16 = arith.constant 0 : index
    %24 = vector.load %arg2[%c4, %c0_15, %c0_16] : memref<9x16x16xbf16, #tpu.memory_space<vmem>>, vector<1x16x16xbf16>
    %25 = vector.shape_cast %24 : vector<1x16x16xbf16> to vector<16x16xbf16>
    %cst_17 = arith.constant dense<0.000000e+00> : vector<100x16xf32>
    %26 = tpu.matmul %23, %25, %cst_17 {dimension_numbers = #tpu.dot_dimension_numbers<[1], [0], [0], [1], [0, 0, 1, 1], [], []>} : vector<100x16xbf16>, vector<16x16xbf16>, vector<100x16xf32> -> vector<100x16xf32>
    %27 = arith.addf %22, %26 : vector<100x16xf32>
    %28 = vector.extract_strided_slice %1 {offsets = [12, 0], sizes = [100, 16], strides = [1, 1]} : vector<122x16xbf16> to vector<100x16xbf16>
    %c5 = arith.constant 5 : index
    %c0_18 = arith.constant 0 : index
    %c0_19 = arith.constant 0 : index
    %29 = vector.load %arg2[%c5, %c0_18, %c0_19] : memref<9x16x16xbf16, #tpu.memory_space<vmem>>, vector<1x16x16xbf16>
    %30 = vector.shape_cast %29 : vector<1x16x16xbf16> to vector<16x16xbf16>
    %cst_20 = arith.constant dense<0.000000e+00> : vector<100x16xf32>
    %31 = tpu.matmul %28, %30, %cst_20 {dimension_numbers = #tpu.dot_dimension_numbers<[1], [0], [0], [1], [0, 0, 1, 1], [], []>} : vector<100x16xbf16>, vector<16x16xbf16>, vector<100x16xf32> -> vector<100x16xf32>
    %32 = arith.addf %27, %31 : vector<100x16xf32>
    %33 = vector.extract_strided_slice %1 {offsets = [20, 0], sizes = [100, 16], strides = [1, 1]} : vector<122x16xbf16> to vector<100x16xbf16>
    %c6 = arith.constant 6 : index
    %c0_21 = arith.constant 0 : index
    %c0_22 = arith.constant 0 : index
    %34 = vector.load %arg2[%c6, %c0_21, %c0_22] : memref<9x16x16xbf16, #tpu.memory_space<vmem>>, vector<1x16x16xbf16>
    %35 = vector.shape_cast %34 : vector<1x16x16xbf16> to vector<16x16xbf16>
    %cst_23 = arith.constant dense<0.000000e+00> : vector<100x16xf32>
    %36 = tpu.matmul %33, %35, %cst_23 {dimension_numbers = #tpu.dot_dimension_numbers<[1], [0], [0], [1], [0, 0, 1, 1], [], []>} : vector<100x16xbf16>, vector<16x16xbf16>, vector<100x16xf32> -> vector<100x16xf32>
    %37 = arith.addf %32, %36 : vector<100x16xf32>
    %38 = vector.extract_strided_slice %1 {offsets = [21, 0], sizes = [100, 16], strides = [1, 1]} : vector<122x16xbf16> to vector<100x16xbf16>
    %c7 = arith.constant 7 : index
    %c0_24 = arith.constant 0 : index
    %c0_25 = arith.constant 0 : index
    %39 = vector.load %arg2[%c7, %c0_24, %c0_25] : memref<9x16x16xbf16, #tpu.memory_space<vmem>>, vector<1x16x16xbf16>
    %40 = vector.shape_cast %39 : vector<1x16x16xbf16> to vector<16x16xbf16>
    %cst_26 = arith.constant dense<0.000000e+00> : vector<100x16xf32>
    %41 = tpu.matmul %38, %40, %cst_26 {dimension_numbers = #tpu.dot_dimension_numbers<[1], [0], [0], [1], [0, 0, 1, 1], [], []>} : vector<100x16xbf16>, vector<16x16xbf16>, vector<100x16xf32> -> vector<100x16xf32>
    %42 = arith.addf %37, %41 : vector<100x16xf32>
    %43 = vector.extract_strided_slice %1 {offsets = [22, 0], sizes = [100, 16], strides = [1, 1]} : vector<122x16xbf16> to vector<100x16xbf16>
    %c8 = arith.constant 8 : index
    %c0_27 = arith.constant 0 : index
    %c0_28 = arith.constant 0 : index
    %44 = vector.load %arg2[%c8, %c0_27, %c0_28] : memref<9x16x16xbf16, #tpu.memory_space<vmem>>, vector<1x16x16xbf16>
    %45 = vector.shape_cast %44 : vector<1x16x16xbf16> to vector<16x16xbf16>
    %cst_29 = arith.constant dense<0.000000e+00> : vector<100x16xf32>
    %46 = tpu.matmul %43, %45, %cst_29 {dimension_numbers = #tpu.dot_dimension_numbers<[1], [0], [0], [1], [0, 0, 1, 1], [], []>} : vector<100x16xbf16>, vector<16x16xbf16>, vector<100x16xf32> -> vector<100x16xf32>
    %47 = arith.addf %42, %46 : vector<100x16xf32>
    %c0_30 = arith.constant 0 : index
    %c0_31 = arith.constant 0 : index
    %c0_32 = arith.constant 0 : index
    %48 = vector.load %arg4[%c0_30, %c0_31, %c0_32] : memref<1x100x16xf32, #tpu.memory_space<vmem>>, vector<1x100x16xf32>
    %49 = vector.shape_cast %48 : vector<1x100x16xf32> to vector<100x16xf32>
    %50 = vector.shape_cast %47 : vector<100x16xf32> to vector<1x100x16xf32>
    tpu.vector_store %arg4[%c0_30, %c0_31, %c0_32], %50 {strides = array<i32>} : memref<1x100x16xf32, #tpu.memory_space<vmem>>, vector<1x100x16xf32>,
    %c0_33 = arith.constant 0 : index
    %c0_34 = arith.constant 0 : index
    %51 = vector.load %arg3[%c0_33, %c0_34] : memref<1x100xf32, #tpu.memory_space<vmem>>, vector<1x100xf32>
    %cst_35 = arith.constant dense<0.000000e+00> : vector<1x16xf32>
    %52 = tpu.matmul %51, %47, %cst_35 {dimension_numbers = #tpu.dot_dimension_numbers<[1], [0], [0], [1], [0, 0, 1, 1], [], []>} : vector<1x100xf32>, vector<100x16xf32>, vector<1x16xf32> -> vector<1x16xf32>
    %c0_36 = arith.constant 0 : index
    %c0_37 = arith.constant 0 : index
    %53 = vector.load %arg3[%c0_36, %c0_37] : memref<1x100xf32, #tpu.memory_space<vmem>>, vector<1x100xf32>
    %54 = arith.mulf %47, %47 : vector<100x16xf32>
    %cst_38 = arith.constant dense<0.000000e+00> : vector<1x16xf32>
    %55 = tpu.matmul %53, %54, %cst_38 {dimension_numbers = #tpu.dot_dimension_numbers<[1], [0], [0], [1], [0, 0, 1, 1], [], []>} : vector<1x100xf32>, vector<100x16xf32>, vector<1x16xf32> -> vector<1x16xf32>
    %c0_i32 = arith.constant 0 : i32
    %56 = arith.cmpi eq, %arg0, %c0_i32 : i32
    %57 = arith.extui %56 : i1 to i32
    %c0_i32_39 = arith.constant 0 : i32
    %58 = arith.cmpi ne, %57, %c0_i32_39 : i32
    scf.if %58 {
      %cst_44 = arith.constant 0.000000e+00 : f32
      %63 = vector.broadcast %cst_44 : f32 to vector<2x16xf32>
      %c0_45 = arith.constant 0 : index
      %c0_46 = arith.constant 0 : index
      %64 = vector.load %arg5[%c0_45, %c0_46] : memref<2x16xf32, #tpu.memory_space<vmem>>, vector<2x16xf32>
      tpu.vector_store %arg5[%c0_45, %c0_46], %63 {strides = array<i32>} : memref<2x16xf32, #tpu.memory_space<vmem>>, vector<2x16xf32>,
    } else {
    }
    %c0_40 = arith.constant 0 : index
    %c0_41 = arith.constant 0 : index
    %59 = vector.load %arg5[%c0_40, %c0_41] : memref<2x16xf32, #tpu.memory_space<vmem>>, vector<2x16xf32>
    %60 = tpu.concatenate %52, %55 in 0 : vector<1x16xf32>, vector<1x16xf32> -> vector<2x16xf32>
    %61 = arith.addf %59, %60 : vector<2x16xf32>
    %c0_42 = arith.constant 0 : index
    %c0_43 = arith.constant 0 : index
    %62 = vector.load %arg5[%c0_42, %c0_43] : memref<2x16xf32, #tpu.memory_space<vmem>>, vector<2x16xf32>
    tpu.vector_store %arg5[%c0_42, %c0_43], %61 {strides = array<i32>} : memref<2x16xf32, #tpu.memory_space<vmem>>, vector<2x16xf32>,
    return
  }
  func.func @transform_0(%arg0: i32) -> (i32, i32, i32) {
    %c0_i32 = arith.constant 0 : i32
    %c0_i32_0 = arith.constant 0 : i32
    %c0_i32_1 = arith.constant 0 : i32
    return %arg0, %c0_i32, %c0_i32_0 : i32, i32, i32
  }
  func.func @transform_1(%arg0: i32) -> (i32, i32, i32) {
    %c0_i32 = arith.constant 0 : i32
    %c0_i32_0 = arith.constant 0 : i32
    %c0_i32_1 = arith.constant 0 : i32
    %c0_i32_2 = arith.constant 0 : i32
    return %c0_i32, %c0_i32_0, %c0_i32_1 : i32, i32, i32
  }
  func.func @transform_2(%arg0: i32) -> (i32, i32) {
    %c0_i32 = arith.constant 0 : i32
    %c0_i32_0 = arith.constant 0 : i32
    %c0_i32_1 = arith.constant 0 : i32
    return %c0_i32, %c0_i32_0 : i32, i32
  }
  func.func @transform_3(%arg0: i32) -> (i32, i32, i32) {
    %c0_i32 = arith.constant 0 : i32
    %c0_i32_0 = arith.constant 0 : i32
    %c0_i32_1 = arith.constant 0 : i32
    return %arg0, %c0_i32, %c0_i32_0 : i32, i32, i32
  }
  func.func @transform_4(%arg0: i32) -> (i32, i32) {
    %c0_i32 = arith.constant 0 : i32
    %c0_i32_0 = arith.constant 0 : i32
    %c0_i32_1 = arith.constant 0 : i32
    return %c0_i32, %c0_i32_0 : i32, i32
  }
}

module attributes {stable_mosaic.version = 11 : i64} {
  func.func @_bn_pool_kernel(%arg0: i32, %arg1: memref<1x100x16xf32, #tpu.memory_space<vmem>>, %arg2: memref<1x16xf32, #tpu.memory_space<vmem>>, %arg3: memref<1x16xf32, #tpu.memory_space<vmem>>, %arg4: memref<50x89xf32, #tpu.memory_space<vmem>>, %arg5: memref<1x50x16xbf16, #tpu.memory_space<vmem>>) attributes {dimension_semantics = [#tpu.dimension_semantics<parallel>], iteration_bounds = array<i64: 4>, scalar_prefetch = 0 : i64, scratch_operands = 0 : i64, tpu.core_type = #tpu.core_type<tc>, window_params = [{transform_indices = @transform_0, window_bounds = array<i64: 1, 100, 16>}, {pipeline_mode = #tpu.pipeline_mode<synchronous>, transform_indices = @transform_1, window_bounds = array<i64: 1, 16>}, {pipeline_mode = #tpu.pipeline_mode<synchronous>, transform_indices = @transform_2, window_bounds = array<i64: 1, 16>}, {pipeline_mode = #tpu.pipeline_mode<synchronous>, transform_indices = @transform_3, window_bounds = array<i64: 50, 89>}, {transform_indices = @transform_4, window_bounds = array<i64: 1, 50, 16>}]} {
    %c0 = arith.constant 0 : index
    %c0_0 = arith.constant 0 : index
    %c0_1 = arith.constant 0 : index
    %0 = vector.load %arg1[%c0, %c0_0, %c0_1] : memref<1x100x16xf32, #tpu.memory_space<vmem>>, vector<1x100x16xf32>
    %1 = vector.shape_cast %0 : vector<1x100x16xf32> to vector<100x16xf32>
    %c0_2 = arith.constant 0 : index
    %c0_3 = arith.constant 0 : index
    %2 = vector.load %arg2[%c0_2, %c0_3] : memref<1x16xf32, #tpu.memory_space<vmem>>, vector<1x16xf32>
    %3 = vector.broadcast %2 : vector<1x16xf32> to vector<100x16xf32>
    %4 = arith.mulf %1, %3 : vector<100x16xf32>
    %c0_4 = arith.constant 0 : index
    %c0_5 = arith.constant 0 : index
    %5 = vector.load %arg3[%c0_4, %c0_5] : memref<1x16xf32, #tpu.memory_space<vmem>>, vector<1x16xf32>
    %6 = vector.broadcast %5 : vector<1x16xf32> to vector<100x16xf32>
    %7 = arith.addf %4, %6 : vector<100x16xf32>
    %cst = arith.constant 0.000000e+00 : f32
    %8 = vector.broadcast %cst : f32 to vector<100x16xf32>
    %9 = arith.maximumf %7, %8 : vector<100x16xf32>
    %10 = vector.extract_strided_slice %9 {offsets = [0, 0], sizes = [99, 16], strides = [1, 1]} : vector<100x16xf32> to vector<99x16xf32>
    %11 = vector.extract_strided_slice %9 {offsets = [1, 0], sizes = [99, 16], strides = [1, 1]} : vector<100x16xf32> to vector<99x16xf32>
    %12 = arith.maximumf %10, %11 : vector<99x16xf32>
    %13 = vector.extract_strided_slice %12 {offsets = [0, 0], sizes = [89, 16], strides = [1, 1]} : vector<99x16xf32> to vector<89x16xf32>
    %14 = vector.extract_strided_slice %12 {offsets = [10, 0], sizes = [89, 16], strides = [1, 1]} : vector<99x16xf32> to vector<89x16xf32>
    %15 = arith.maximumf %13, %14 : vector<89x16xf32>
    %c0_6 = arith.constant 0 : index
    %c0_7 = arith.constant 0 : index
    %16 = vector.load %arg4[%c0_6, %c0_7] : memref<50x89xf32, #tpu.memory_space<vmem>>, vector<50x89xf32>
    %cst_8 = arith.constant dense<0.000000e+00> : vector<50x16xf32>
    %17 = tpu.matmul %16, %15, %cst_8 {dimension_numbers = #tpu.dot_dimension_numbers<[1], [0], [0], [1], [0, 0, 1, 1], [], []>} : vector<50x89xf32>, vector<89x16xf32>, vector<50x16xf32> -> vector<50x16xf32>
    %18 = arith.truncf %17 : vector<50x16xf32> to vector<50x16xbf16>
    %c0_9 = arith.constant 0 : index
    %c0_10 = arith.constant 0 : index
    %c0_11 = arith.constant 0 : index
    %19 = vector.load %arg5[%c0_9, %c0_10, %c0_11] : memref<1x50x16xbf16, #tpu.memory_space<vmem>>, vector<1x50x16xbf16>
    %20 = vector.shape_cast %19 : vector<1x50x16xbf16> to vector<50x16xbf16>
    %21 = vector.shape_cast %18 : vector<50x16xbf16> to vector<1x50x16xbf16>
    tpu.vector_store %arg5[%c0_9, %c0_10, %c0_11], %21 {strides = array<i32>} : memref<1x50x16xbf16, #tpu.memory_space<vmem>>, vector<1x50x16xbf16>,
    return
  }
  func.func @transform_0(%arg0: i32) -> (i32, i32, i32) {
    %c0_i32 = arith.constant 0 : i32
    %c0_i32_0 = arith.constant 0 : i32
    %c0_i32_1 = arith.constant 0 : i32
    return %arg0, %c0_i32, %c0_i32_0 : i32, i32, i32
  }
  func.func @transform_1(%arg0: i32) -> (i32, i32) {
    %c0_i32 = arith.constant 0 : i32
    %c0_i32_0 = arith.constant 0 : i32
    %c0_i32_1 = arith.constant 0 : i32
    return %c0_i32, %c0_i32_0 : i32, i32
  }
  func.func @transform_2(%arg0: i32) -> (i32, i32) {
    %c0_i32 = arith.constant 0 : i32
    %c0_i32_0 = arith.constant 0 : i32
    %c0_i32_1 = arith.constant 0 : i32
    return %c0_i32, %c0_i32_0 : i32, i32
  }
  func.func @transform_3(%arg0: i32) -> (i32, i32) {
    %c0_i32 = arith.constant 0 : i32
    %c0_i32_0 = arith.constant 0 : i32
    %c0_i32_1 = arith.constant 0 : i32
    return %c0_i32, %c0_i32_0 : i32, i32
  }
  func.func @transform_4(%arg0: i32) -> (i32, i32, i32) {
    %c0_i32 = arith.constant 0 : i32
    %c0_i32_0 = arith.constant 0 : i32
    %c0_i32_1 = arith.constant 0 : i32
    return %arg0, %c0_i32, %c0_i32_0 : i32, i32, i32
  }
}

module attributes {stable_mosaic.version = 11 : i64} {
  func.func @_conv_stats_kernel(%arg0: i32, %arg1: memref<1x50x16xbf16, #tpu.memory_space<vmem>>, %arg2: memref<9x16x16xbf16, #tpu.memory_space<vmem>>, %arg3: memref<1x36xf32, #tpu.memory_space<vmem>>, %arg4: memref<1x36x16xf32, #tpu.memory_space<vmem>>, %arg5: memref<2x16xf32, #tpu.memory_space<vmem>>) attributes {dimension_semantics = [#tpu.dimension_semantics<arbitrary>], iteration_bounds = array<i64: 4>, scalar_prefetch = 0 : i64, scratch_operands = 0 : i64, tpu.core_type = #tpu.core_type<tc>, window_params = [{transform_indices = @transform_0, window_bounds = array<i64: 1, 50, 16>}, {pipeline_mode = #tpu.pipeline_mode<synchronous>, transform_indices = @transform_1, window_bounds = array<i64: 9, 16, 16>}, {pipeline_mode = #tpu.pipeline_mode<synchronous>, transform_indices = @transform_2, window_bounds = array<i64: 1, 36>}, {transform_indices = @transform_3, window_bounds = array<i64: 1, 36, 16>}, {pipeline_mode = #tpu.pipeline_mode<synchronous>, transform_indices = @transform_4, window_bounds = array<i64: 2, 16>}]} {
    %c0 = arith.constant 0 : index
    %c0_0 = arith.constant 0 : index
    %c0_1 = arith.constant 0 : index
    %0 = vector.load %arg1[%c0, %c0_0, %c0_1] : memref<1x50x16xbf16, #tpu.memory_space<vmem>>, vector<1x50x16xbf16>
    %1 = vector.shape_cast %0 : vector<1x50x16xbf16> to vector<50x16xbf16>
    %cst = arith.constant 0.000000e+00 : f32
    %2 = vector.broadcast %cst : f32 to vector<36x16xf32>
    %3 = vector.extract_strided_slice %1 {offsets = [0, 0], sizes = [36, 16], strides = [1, 1]} : vector<50x16xbf16> to vector<36x16xbf16>
    %c0_2 = arith.constant 0 : index
    %c0_3 = arith.constant 0 : index
    %c0_4 = arith.constant 0 : index
    %4 = vector.load %arg2[%c0_2, %c0_3, %c0_4] : memref<9x16x16xbf16, #tpu.memory_space<vmem>>, vector<1x16x16xbf16>
    %5 = vector.shape_cast %4 : vector<1x16x16xbf16> to vector<16x16xbf16>
    %cst_5 = arith.constant dense<0.000000e+00> : vector<36x16xf32>
    %6 = tpu.matmul %3, %5, %cst_5 {dimension_numbers = #tpu.dot_dimension_numbers<[1], [0], [0], [1], [0, 0, 1, 1], [], []>} : vector<36x16xbf16>, vector<16x16xbf16>, vector<36x16xf32> -> vector<36x16xf32>
    %7 = arith.addf %2, %6 : vector<36x16xf32>
    %8 = vector.extract_strided_slice %1 {offsets = [1, 0], sizes = [36, 16], strides = [1, 1]} : vector<50x16xbf16> to vector<36x16xbf16>
    %c1 = arith.constant 1 : index
    %c0_6 = arith.constant 0 : index
    %c0_7 = arith.constant 0 : index
    %9 = vector.load %arg2[%c1, %c0_6, %c0_7] : memref<9x16x16xbf16, #tpu.memory_space<vmem>>, vector<1x16x16xbf16>
    %10 = vector.shape_cast %9 : vector<1x16x16xbf16> to vector<16x16xbf16>
    %cst_8 = arith.constant dense<0.000000e+00> : vector<36x16xf32>
    %11 = tpu.matmul %8, %10, %cst_8 {dimension_numbers = #tpu.dot_dimension_numbers<[1], [0], [0], [1], [0, 0, 1, 1], [], []>} : vector<36x16xbf16>, vector<16x16xbf16>, vector<36x16xf32> -> vector<36x16xf32>
    %12 = arith.addf %7, %11 : vector<36x16xf32>
    %13 = vector.extract_strided_slice %1 {offsets = [2, 0], sizes = [36, 16], strides = [1, 1]} : vector<50x16xbf16> to vector<36x16xbf16>
    %c2 = arith.constant 2 : index
    %c0_9 = arith.constant 0 : index
    %c0_10 = arith.constant 0 : index
    %14 = vector.load %arg2[%c2, %c0_9, %c0_10] : memref<9x16x16xbf16, #tpu.memory_space<vmem>>, vector<1x16x16xbf16>
    %15 = vector.shape_cast %14 : vector<1x16x16xbf16> to vector<16x16xbf16>
    %cst_11 = arith.constant dense<0.000000e+00> : vector<36x16xf32>
    %16 = tpu.matmul %13, %15, %cst_11 {dimension_numbers = #tpu.dot_dimension_numbers<[1], [0], [0], [1], [0, 0, 1, 1], [], []>} : vector<36x16xbf16>, vector<16x16xbf16>, vector<36x16xf32> -> vector<36x16xf32>
    %17 = arith.addf %12, %16 : vector<36x16xf32>
    %18 = vector.extract_strided_slice %1 {offsets = [6, 0], sizes = [36, 16], strides = [1, 1]} : vector<50x16xbf16> to vector<36x16xbf16>
    %c3 = arith.constant 3 : index
    %c0_12 = arith.constant 0 : index
    %c0_13 = arith.constant 0 : index
    %19 = vector.load %arg2[%c3, %c0_12, %c0_13] : memref<9x16x16xbf16, #tpu.memory_space<vmem>>, vector<1x16x16xbf16>
    %20 = vector.shape_cast %19 : vector<1x16x16xbf16> to vector<16x16xbf16>
    %cst_14 = arith.constant dense<0.000000e+00> : vector<36x16xf32>
    %21 = tpu.matmul %18, %20, %cst_14 {dimension_numbers = #tpu.dot_dimension_numbers<[1], [0], [0], [1], [0, 0, 1, 1], [], []>} : vector<36x16xbf16>, vector<16x16xbf16>, vector<36x16xf32> -> vector<36x16xf32>
    %22 = arith.addf %17, %21 : vector<36x16xf32>
    %23 = vector.extract_strided_slice %1 {offsets = [7, 0], sizes = [36, 16], strides = [1, 1]} : vector<50x16xbf16> to vector<36x16xbf16>
    %c4 = arith.constant 4 : index
    %c0_15 = arith.constant 0 : index
    %c0_16 = arith.constant 0 : index
    %24 = vector.load %arg2[%c4, %c0_15, %c0_16] : memref<9x16x16xbf16, #tpu.memory_space<vmem>>, vector<1x16x16xbf16>
    %25 = vector.shape_cast %24 : vector<1x16x16xbf16> to vector<16x16xbf16>
    %cst_17 = arith.constant dense<0.000000e+00> : vector<36x16xf32>
    %26 = tpu.matmul %23, %25, %cst_17 {dimension_numbers = #tpu.dot_dimension_numbers<[1], [0], [0], [1], [0, 0, 1, 1], [], []>} : vector<36x16xbf16>, vector<16x16xbf16>, vector<36x16xf32> -> vector<36x16xf32>
    %27 = arith.addf %22, %26 : vector<36x16xf32>
    %28 = vector.extract_strided_slice %1 {offsets = [8, 0], sizes = [36, 16], strides = [1, 1]} : vector<50x16xbf16> to vector<36x16xbf16>
    %c5 = arith.constant 5 : index
    %c0_18 = arith.constant 0 : index
    %c0_19 = arith.constant 0 : index
    %29 = vector.load %arg2[%c5, %c0_18, %c0_19] : memref<9x16x16xbf16, #tpu.memory_space<vmem>>, vector<1x16x16xbf16>
    %30 = vector.shape_cast %29 : vector<1x16x16xbf16> to vector<16x16xbf16>
    %cst_20 = arith.constant dense<0.000000e+00> : vector<36x16xf32>
    %31 = tpu.matmul %28, %30, %cst_20 {dimension_numbers = #tpu.dot_dimension_numbers<[1], [0], [0], [1], [0, 0, 1, 1], [], []>} : vector<36x16xbf16>, vector<16x16xbf16>, vector<36x16xf32> -> vector<36x16xf32>
    %32 = arith.addf %27, %31 : vector<36x16xf32>
    %33 = vector.extract_strided_slice %1 {offsets = [12, 0], sizes = [36, 16], strides = [1, 1]} : vector<50x16xbf16> to vector<36x16xbf16>
    %c6 = arith.constant 6 : index
    %c0_21 = arith.constant 0 : index
    %c0_22 = arith.constant 0 : index
    %34 = vector.load %arg2[%c6, %c0_21, %c0_22] : memref<9x16x16xbf16, #tpu.memory_space<vmem>>, vector<1x16x16xbf16>
    %35 = vector.shape_cast %34 : vector<1x16x16xbf16> to vector<16x16xbf16>
    %cst_23 = arith.constant dense<0.000000e+00> : vector<36x16xf32>
    %36 = tpu.matmul %33, %35, %cst_23 {dimension_numbers = #tpu.dot_dimension_numbers<[1], [0], [0], [1], [0, 0, 1, 1], [], []>} : vector<36x16xbf16>, vector<16x16xbf16>, vector<36x16xf32> -> vector<36x16xf32>
    %37 = arith.addf %32, %36 : vector<36x16xf32>
    %38 = vector.extract_strided_slice %1 {offsets = [13, 0], sizes = [36, 16], strides = [1, 1]} : vector<50x16xbf16> to vector<36x16xbf16>
    %c7 = arith.constant 7 : index
    %c0_24 = arith.constant 0 : index
    %c0_25 = arith.constant 0 : index
    %39 = vector.load %arg2[%c7, %c0_24, %c0_25] : memref<9x16x16xbf16, #tpu.memory_space<vmem>>, vector<1x16x16xbf16>
    %40 = vector.shape_cast %39 : vector<1x16x16xbf16> to vector<16x16xbf16>
    %cst_26 = arith.constant dense<0.000000e+00> : vector<36x16xf32>
    %41 = tpu.matmul %38, %40, %cst_26 {dimension_numbers = #tpu.dot_dimension_numbers<[1], [0], [0], [1], [0, 0, 1, 1], [], []>} : vector<36x16xbf16>, vector<16x16xbf16>, vector<36x16xf32> -> vector<36x16xf32>
    %42 = arith.addf %37, %41 : vector<36x16xf32>
    %43 = vector.extract_strided_slice %1 {offsets = [14, 0], sizes = [36, 16], strides = [1, 1]} : vector<50x16xbf16> to vector<36x16xbf16>
    %c8 = arith.constant 8 : index
    %c0_27 = arith.constant 0 : index
    %c0_28 = arith.constant 0 : index
    %44 = vector.load %arg2[%c8, %c0_27, %c0_28] : memref<9x16x16xbf16, #tpu.memory_space<vmem>>, vector<1x16x16xbf16>
    %45 = vector.shape_cast %44 : vector<1x16x16xbf16> to vector<16x16xbf16>
    %cst_29 = arith.constant dense<0.000000e+00> : vector<36x16xf32>
    %46 = tpu.matmul %43, %45, %cst_29 {dimension_numbers = #tpu.dot_dimension_numbers<[1], [0], [0], [1], [0, 0, 1, 1], [], []>} : vector<36x16xbf16>, vector<16x16xbf16>, vector<36x16xf32> -> vector<36x16xf32>
    %47 = arith.addf %42, %46 : vector<36x16xf32>
    %c0_30 = arith.constant 0 : index
    %c0_31 = arith.constant 0 : index
    %c0_32 = arith.constant 0 : index
    %48 = vector.load %arg4[%c0_30, %c0_31, %c0_32] : memref<1x36x16xf32, #tpu.memory_space<vmem>>, vector<1x36x16xf32>
    %49 = vector.shape_cast %48 : vector<1x36x16xf32> to vector<36x16xf32>
    %50 = vector.shape_cast %47 : vector<36x16xf32> to vector<1x36x16xf32>
    tpu.vector_store %arg4[%c0_30, %c0_31, %c0_32], %50 {strides = array<i32>} : memref<1x36x16xf32, #tpu.memory_space<vmem>>, vector<1x36x16xf32>,
    %c0_33 = arith.constant 0 : index
    %c0_34 = arith.constant 0 : index
    %51 = vector.load %arg3[%c0_33, %c0_34] : memref<1x36xf32, #tpu.memory_space<vmem>>, vector<1x36xf32>
    %cst_35 = arith.constant dense<0.000000e+00> : vector<1x16xf32>
    %52 = tpu.matmul %51, %47, %cst_35 {dimension_numbers = #tpu.dot_dimension_numbers<[1], [0], [0], [1], [0, 0, 1, 1], [], []>} : vector<1x36xf32>, vector<36x16xf32>, vector<1x16xf32> -> vector<1x16xf32>
    %c0_36 = arith.constant 0 : index
    %c0_37 = arith.constant 0 : index
    %53 = vector.load %arg3[%c0_36, %c0_37] : memref<1x36xf32, #tpu.memory_space<vmem>>, vector<1x36xf32>
    %54 = arith.mulf %47, %47 : vector<36x16xf32>
    %cst_38 = arith.constant dense<0.000000e+00> : vector<1x16xf32>
    %55 = tpu.matmul %53, %54, %cst_38 {dimension_numbers = #tpu.dot_dimension_numbers<[1], [0], [0], [1], [0, 0, 1, 1], [], []>} : vector<1x36xf32>, vector<36x16xf32>, vector<1x16xf32> -> vector<1x16xf32>
    %c0_i32 = arith.constant 0 : i32
    %56 = arith.cmpi eq, %arg0, %c0_i32 : i32
    %57 = arith.extui %56 : i1 to i32
    %c0_i32_39 = arith.constant 0 : i32
    %58 = arith.cmpi ne, %57, %c0_i32_39 : i32
    scf.if %58 {
      %cst_44 = arith.constant 0.000000e+00 : f32
      %63 = vector.broadcast %cst_44 : f32 to vector<2x16xf32>
      %c0_45 = arith.constant 0 : index
      %c0_46 = arith.constant 0 : index
      %64 = vector.load %arg5[%c0_45, %c0_46] : memref<2x16xf32, #tpu.memory_space<vmem>>, vector<2x16xf32>
      tpu.vector_store %arg5[%c0_45, %c0_46], %63 {strides = array<i32>} : memref<2x16xf32, #tpu.memory_space<vmem>>, vector<2x16xf32>,
    } else {
    }
    %c0_40 = arith.constant 0 : index
    %c0_41 = arith.constant 0 : index
    %59 = vector.load %arg5[%c0_40, %c0_41] : memref<2x16xf32, #tpu.memory_space<vmem>>, vector<2x16xf32>
    %60 = tpu.concatenate %52, %55 in 0 : vector<1x16xf32>, vector<1x16xf32> -> vector<2x16xf32>
    %61 = arith.addf %59, %60 : vector<2x16xf32>
    %c0_42 = arith.constant 0 : index
    %c0_43 = arith.constant 0 : index
    %62 = vector.load %arg5[%c0_42, %c0_43] : memref<2x16xf32, #tpu.memory_space<vmem>>, vector<2x16xf32>
    tpu.vector_store %arg5[%c0_42, %c0_43], %61 {strides = array<i32>} : memref<2x16xf32, #tpu.memory_space<vmem>>, vector<2x16xf32>,
    return
  }
  func.func @transform_0(%arg0: i32) -> (i32, i32, i32) {
    %c0_i32 = arith.constant 0 : i32
    %c0_i32_0 = arith.constant 0 : i32
    %c0_i32_1 = arith.constant 0 : i32
    return %arg0, %c0_i32, %c0_i32_0 : i32, i32, i32
  }
  func.func @transform_1(%arg0: i32) -> (i32, i32, i32) {
    %c0_i32 = arith.constant 0 : i32
    %c0_i32_0 = arith.constant 0 : i32
    %c0_i32_1 = arith.constant 0 : i32
    %c0_i32_2 = arith.constant 0 : i32
    return %c0_i32, %c0_i32_0, %c0_i32_1 : i32, i32, i32
  }
  func.func @transform_2(%arg0: i32) -> (i32, i32) {
    %c0_i32 = arith.constant 0 : i32
    %c0_i32_0 = arith.constant 0 : i32
    %c0_i32_1 = arith.constant 0 : i32
    return %c0_i32, %c0_i32_0 : i32, i32
  }
  func.func @transform_3(%arg0: i32) -> (i32, i32, i32) {
    %c0_i32 = arith.constant 0 : i32
    %c0_i32_0 = arith.constant 0 : i32
    %c0_i32_1 = arith.constant 0 : i32
    return %arg0, %c0_i32, %c0_i32_0 : i32, i32, i32
  }
  func.func @transform_4(%arg0: i32) -> (i32, i32) {
    %c0_i32 = arith.constant 0 : i32
    %c0_i32_0 = arith.constant 0 : i32
    %c0_i32_1 = arith.constant 0 : i32
    return %c0_i32, %c0_i32_0 : i32, i32
  }
}

module attributes {stable_mosaic.version = 11 : i64} {
  func.func @_conv_stats_kernel(%arg0: i32, %arg1: memref<1x26x16xbf16, #tpu.memory_space<vmem>>, %arg2: memref<9x16x16xbf16, #tpu.memory_space<vmem>>, %arg3: memref<1x16xf32, #tpu.memory_space<vmem>>, %arg4: memref<1x16x16xf32, #tpu.memory_space<vmem>>, %arg5: memref<2x16xf32, #tpu.memory_space<vmem>>) attributes {dimension_semantics = [#tpu.dimension_semantics<arbitrary>], iteration_bounds = array<i64: 4>, scalar_prefetch = 0 : i64, scratch_operands = 0 : i64, tpu.core_type = #tpu.core_type<tc>, window_params = [{transform_indices = @transform_0, window_bounds = array<i64: 1, 26, 16>}, {pipeline_mode = #tpu.pipeline_mode<synchronous>, transform_indices = @transform_1, window_bounds = array<i64: 9, 16, 16>}, {pipeline_mode = #tpu.pipeline_mode<synchronous>, transform_indices = @transform_2, window_bounds = array<i64: 1, 16>}, {transform_indices = @transform_3, window_bounds = array<i64: 1, 16, 16>}, {pipeline_mode = #tpu.pipeline_mode<synchronous>, transform_indices = @transform_4, window_bounds = array<i64: 2, 16>}]} {
    %c0 = arith.constant 0 : index
    %c0_0 = arith.constant 0 : index
    %c0_1 = arith.constant 0 : index
    %0 = vector.load %arg1[%c0, %c0_0, %c0_1] : memref<1x26x16xbf16, #tpu.memory_space<vmem>>, vector<1x26x16xbf16>
    %1 = vector.shape_cast %0 : vector<1x26x16xbf16> to vector<26x16xbf16>
    %cst = arith.constant 0.000000e+00 : f32
    %2 = vector.broadcast %cst : f32 to vector<16x16xf32>
    %3 = vector.extract_strided_slice %1 {offsets = [0, 0], sizes = [16, 16], strides = [1, 1]} : vector<26x16xbf16> to vector<16x16xbf16>
    %c0_2 = arith.constant 0 : index
    %c0_3 = arith.constant 0 : index
    %c0_4 = arith.constant 0 : index
    %4 = vector.load %arg2[%c0_2, %c0_3, %c0_4] : memref<9x16x16xbf16, #tpu.memory_space<vmem>>, vector<1x16x16xbf16>
    %5 = vector.shape_cast %4 : vector<1x16x16xbf16> to vector<16x16xbf16>
    %cst_5 = arith.constant dense<0.000000e+00> : vector<16x16xf32>
    %6 = tpu.matmul %3, %5, %cst_5 {dimension_numbers = #tpu.dot_dimension_numbers<[1], [0], [0], [1], [0, 0, 1, 1], [], []>} : vector<16x16xbf16>, vector<16x16xbf16>, vector<16x16xf32> -> vector<16x16xf32>
    %7 = arith.addf %2, %6 : vector<16x16xf32>
    %8 = vector.extract_strided_slice %1 {offsets = [1, 0], sizes = [16, 16], strides = [1, 1]} : vector<26x16xbf16> to vector<16x16xbf16>
    %c1 = arith.constant 1 : index
    %c0_6 = arith.constant 0 : index
    %c0_7 = arith.constant 0 : index
    %9 = vector.load %arg2[%c1, %c0_6, %c0_7] : memref<9x16x16xbf16, #tpu.memory_space<vmem>>, vector<1x16x16xbf16>
    %10 = vector.shape_cast %9 : vector<1x16x16xbf16> to vector<16x16xbf16>
    %cst_8 = arith.constant dense<0.000000e+00> : vector<16x16xf32>
    %11 = tpu.matmul %8, %10, %cst_8 {dimension_numbers = #tpu.dot_dimension_numbers<[1], [0], [0], [1], [0, 0, 1, 1], [], []>} : vector<16x16xbf16>, vector<16x16xbf16>, vector<16x16xf32> -> vector<16x16xf32>
    %12 = arith.addf %7, %11 : vector<16x16xf32>
    %13 = vector.extract_strided_slice %1 {offsets = [2, 0], sizes = [16, 16], strides = [1, 1]} : vector<26x16xbf16> to vector<16x16xbf16>
    %c2 = arith.constant 2 : index
    %c0_9 = arith.constant 0 : index
    %c0_10 = arith.constant 0 : index
    %14 = vector.load %arg2[%c2, %c0_9, %c0_10] : memref<9x16x16xbf16, #tpu.memory_space<vmem>>, vector<1x16x16xbf16>
    %15 = vector.shape_cast %14 : vector<1x16x16xbf16> to vector<16x16xbf16>
    %cst_11 = arith.constant dense<0.000000e+00> : vector<16x16xf32>
    %16 = tpu.matmul %13, %15, %cst_11 {dimension_numbers = #tpu.dot_dimension_numbers<[1], [0], [0], [1], [0, 0, 1, 1], [], []>} : vector<16x16xbf16>, vector<16x16xbf16>, vector<16x16xf32> -> vector<16x16xf32>
    %17 = arith.addf %12, %16 : vector<16x16xf32>
    %18 = vector.extract_strided_slice %1 {offsets = [4, 0], sizes = [16, 16], strides = [1, 1]} : vector<26x16xbf16> to vector<16x16xbf16>
    %c3 = arith.constant 3 : index
    %c0_12 = arith.constant 0 : index
    %c0_13 = arith.constant 0 : index
    %19 = vector.load %arg2[%c3, %c0_12, %c0_13] : memref<9x16x16xbf16, #tpu.memory_space<vmem>>, vector<1x16x16xbf16>
    %20 = vector.shape_cast %19 : vector<1x16x16xbf16> to vector<16x16xbf16>
    %cst_14 = arith.constant dense<0.000000e+00> : vector<16x16xf32>
    %21 = tpu.matmul %18, %20, %cst_14 {dimension_numbers = #tpu.dot_dimension_numbers<[1], [0], [0], [1], [0, 0, 1, 1], [], []>} : vector<16x16xbf16>, vector<16x16xbf16>, vector<16x16xf32> -> vector<16x16xf32>
    %22 = arith.addf %17, %21 : vector<16x16xf32>
    %23 = vector.extract_strided_slice %1 {offsets = [5, 0], sizes = [16, 16], strides = [1, 1]} : vector<26x16xbf16> to vector<16x16xbf16>
    %c4 = arith.constant 4 : index
    %c0_15 = arith.constant 0 : index
    %c0_16 = arith.constant 0 : index
    %24 = vector.load %arg2[%c4, %c0_15, %c0_16] : memref<9x16x16xbf16, #tpu.memory_space<vmem>>, vector<1x16x16xbf16>
    %25 = vector.shape_cast %24 : vector<1x16x16xbf16> to vector<16x16xbf16>
    %cst_17 = arith.constant dense<0.000000e+00> : vector<16x16xf32>
    %26 = tpu.matmul %23, %25, %cst_17 {dimension_numbers = #tpu.dot_dimension_numbers<[1], [0], [0], [1], [0, 0, 1, 1], [], []>} : vector<16x16xbf16>, vector<16x16xbf16>, vector<16x16xf32> -> vector<16x16xf32>
    %27 = arith.addf %22, %26 : vector<16x16xf32>
    %28 = vector.extract_strided_slice %1 {offsets = [6, 0], sizes = [16, 16], strides = [1, 1]} : vector<26x16xbf16> to vector<16x16xbf16>
    %c5 = arith.constant 5 : index
    %c0_18 = arith.constant 0 : index
    %c0_19 = arith.constant 0 : index
    %29 = vector.load %arg2[%c5, %c0_18, %c0_19] : memref<9x16x16xbf16, #tpu.memory_space<vmem>>, vector<1x16x16xbf16>
    %30 = vector.shape_cast %29 : vector<1x16x16xbf16> to vector<16x16xbf16>
    %cst_20 = arith.constant dense<0.000000e+00> : vector<16x16xf32>
    %31 = tpu.matmul %28, %30, %cst_20 {dimension_numbers = #tpu.dot_dimension_numbers<[1], [0], [0], [1], [0, 0, 1, 1], [], []>} : vector<16x16xbf16>, vector<16x16xbf16>, vector<16x16xf32> -> vector<16x16xf32>
    %32 = arith.addf %27, %31 : vector<16x16xf32>
    %33 = vector.extract_strided_slice %1 {offsets = [8, 0], sizes = [16, 16], strides = [1, 1]} : vector<26x16xbf16> to vector<16x16xbf16>
    %c6 = arith.constant 6 : index
    %c0_21 = arith.constant 0 : index
    %c0_22 = arith.constant 0 : index
    %34 = vector.load %arg2[%c6, %c0_21, %c0_22] : memref<9x16x16xbf16, #tpu.memory_space<vmem>>, vector<1x16x16xbf16>
    %35 = vector.shape_cast %34 : vector<1x16x16xbf16> to vector<16x16xbf16>
    %cst_23 = arith.constant dense<0.000000e+00> : vector<16x16xf32>
    %36 = tpu.matmul %33, %35, %cst_23 {dimension_numbers = #tpu.dot_dimension_numbers<[1], [0], [0], [1], [0, 0, 1, 1], [], []>} : vector<16x16xbf16>, vector<16x16xbf16>, vector<16x16xf32> -> vector<16x16xf32>
    %37 = arith.addf %32, %36 : vector<16x16xf32>
    %38 = vector.extract_strided_slice %1 {offsets = [9, 0], sizes = [16, 16], strides = [1, 1]} : vector<26x16xbf16> to vector<16x16xbf16>
    %c7 = arith.constant 7 : index
    %c0_24 = arith.constant 0 : index
    %c0_25 = arith.constant 0 : index
    %39 = vector.load %arg2[%c7, %c0_24, %c0_25] : memref<9x16x16xbf16, #tpu.memory_space<vmem>>, vector<1x16x16xbf16>
    %40 = vector.shape_cast %39 : vector<1x16x16xbf16> to vector<16x16xbf16>
    %cst_26 = arith.constant dense<0.000000e+00> : vector<16x16xf32>
    %41 = tpu.matmul %38, %40, %cst_26 {dimension_numbers = #tpu.dot_dimension_numbers<[1], [0], [0], [1], [0, 0, 1, 1], [], []>} : vector<16x16xbf16>, vector<16x16xbf16>, vector<16x16xf32> -> vector<16x16xf32>
    %42 = arith.addf %37, %41 : vector<16x16xf32>
    %43 = vector.extract_strided_slice %1 {offsets = [10, 0], sizes = [16, 16], strides = [1, 1]} : vector<26x16xbf16> to vector<16x16xbf16>
    %c8 = arith.constant 8 : index
    %c0_27 = arith.constant 0 : index
    %c0_28 = arith.constant 0 : index
    %44 = vector.load %arg2[%c8, %c0_27, %c0_28] : memref<9x16x16xbf16, #tpu.memory_space<vmem>>, vector<1x16x16xbf16>
    %45 = vector.shape_cast %44 : vector<1x16x16xbf16> to vector<16x16xbf16>
    %cst_29 = arith.constant dense<0.000000e+00> : vector<16x16xf32>
    %46 = tpu.matmul %43, %45, %cst_29 {dimension_numbers = #tpu.dot_dimension_numbers<[1], [0], [0], [1], [0, 0, 1, 1], [], []>} : vector<16x16xbf16>, vector<16x16xbf16>, vector<16x16xf32> -> vector<16x16xf32>
    %47 = arith.addf %42, %46 : vector<16x16xf32>
    %c0_30 = arith.constant 0 : index
    %c0_31 = arith.constant 0 : index
    %c0_32 = arith.constant 0 : index
    %48 = vector.load %arg4[%c0_30, %c0_31, %c0_32] : memref<1x16x16xf32, #tpu.memory_space<vmem>>, vector<1x16x16xf32>
    %49 = vector.shape_cast %48 : vector<1x16x16xf32> to vector<16x16xf32>
    %50 = vector.shape_cast %47 : vector<16x16xf32> to vector<1x16x16xf32>
    tpu.vector_store %arg4[%c0_30, %c0_31, %c0_32], %50 {strides = array<i32>} : memref<1x16x16xf32, #tpu.memory_space<vmem>>, vector<1x16x16xf32>,
    %c0_33 = arith.constant 0 : index
    %c0_34 = arith.constant 0 : index
    %51 = vector.load %arg3[%c0_33, %c0_34] : memref<1x16xf32, #tpu.memory_space<vmem>>, vector<1x16xf32>
    %cst_35 = arith.constant dense<0.000000e+00> : vector<1x16xf32>
    %52 = tpu.matmul %51, %47, %cst_35 {dimension_numbers = #tpu.dot_dimension_numbers<[1], [0], [0], [1], [0, 0, 1, 1], [], []>} : vector<1x16xf32>, vector<16x16xf32>, vector<1x16xf32> -> vector<1x16xf32>
    %c0_36 = arith.constant 0 : index
    %c0_37 = arith.constant 0 : index
    %53 = vector.load %arg3[%c0_36, %c0_37] : memref<1x16xf32, #tpu.memory_space<vmem>>, vector<1x16xf32>
    %54 = arith.mulf %47, %47 : vector<16x16xf32>
    %cst_38 = arith.constant dense<0.000000e+00> : vector<1x16xf32>
    %55 = tpu.matmul %53, %54, %cst_38 {dimension_numbers = #tpu.dot_dimension_numbers<[1], [0], [0], [1], [0, 0, 1, 1], [], []>} : vector<1x16xf32>, vector<16x16xf32>, vector<1x16xf32> -> vector<1x16xf32>
    %c0_i32 = arith.constant 0 : i32
    %56 = arith.cmpi eq, %arg0, %c0_i32 : i32
    %57 = arith.extui %56 : i1 to i32
    %c0_i32_39 = arith.constant 0 : i32
    %58 = arith.cmpi ne, %57, %c0_i32_39 : i32
    scf.if %58 {
      %cst_44 = arith.constant 0.000000e+00 : f32
      %63 = vector.broadcast %cst_44 : f32 to vector<2x16xf32>
      %c0_45 = arith.constant 0 : index
      %c0_46 = arith.constant 0 : index
      %64 = vector.load %arg5[%c0_45, %c0_46] : memref<2x16xf32, #tpu.memory_space<vmem>>, vector<2x16xf32>
      tpu.vector_store %arg5[%c0_45, %c0_46], %63 {strides = array<i32>} : memref<2x16xf32, #tpu.memory_space<vmem>>, vector<2x16xf32>,
    } else {
    }
    %c0_40 = arith.constant 0 : index
    %c0_41 = arith.constant 0 : index
    %59 = vector.load %arg5[%c0_40, %c0_41] : memref<2x16xf32, #tpu.memory_space<vmem>>, vector<2x16xf32>
    %60 = tpu.concatenate %52, %55 in 0 : vector<1x16xf32>, vector<1x16xf32> -> vector<2x16xf32>
    %61 = arith.addf %59, %60 : vector<2x16xf32>
    %c0_42 = arith.constant 0 : index
    %c0_43 = arith.constant 0 : index
    %62 = vector.load %arg5[%c0_42, %c0_43] : memref<2x16xf32, #tpu.memory_space<vmem>>, vector<2x16xf32>
    tpu.vector_store %arg5[%c0_42, %c0_43], %61 {strides = array<i32>} : memref<2x16xf32, #tpu.memory_space<vmem>>, vector<2x16xf32>,
    return
  }
  func.func @transform_0(%arg0: i32) -> (i32, i32, i32) {
    %c0_i32 = arith.constant 0 : i32
    %c0_i32_0 = arith.constant 0 : i32
    %c0_i32_1 = arith.constant 0 : i32
    return %arg0, %c0_i32, %c0_i32_0 : i32, i32, i32
  }
  func.func @transform_1(%arg0: i32) -> (i32, i32, i32) {
    %c0_i32 = arith.constant 0 : i32
    %c0_i32_0 = arith.constant 0 : i32
    %c0_i32_1 = arith.constant 0 : i32
    %c0_i32_2 = arith.constant 0 : i32
    return %c0_i32, %c0_i32_0, %c0_i32_1 : i32, i32, i32
  }
  func.func @transform_2(%arg0: i32) -> (i32, i32) {
    %c0_i32 = arith.constant 0 : i32
    %c0_i32_0 = arith.constant 0 : i32
    %c0_i32_1 = arith.constant 0 : i32
    return %c0_i32, %c0_i32_0 : i32, i32
  }
  func.func @transform_3(%arg0: i32) -> (i32, i32, i32) {
    %c0_i32 = arith.constant 0 : i32
    %c0_i32_0 = arith.constant 0 : i32
    %c0_i32_1 = arith.constant 0 : i32
    return %arg0, %c0_i32, %c0_i32_0 : i32, i32, i32
  }
  func.func @transform_4(%arg0: i32) -> (i32, i32) {
    %c0_i32 = arith.constant 0 : i32
    %c0_i32_0 = arith.constant 0 : i32
    %c0_i32_1 = arith.constant 0 : i32
    return %c0_i32, %c0_i32_0 : i32, i32
  }
}

module attributes {stable_mosaic.version = 11 : i64} {
  func.func @_bn_pool_kernel(%arg0: i32, %arg1: memref<1x36x16xf32, #tpu.memory_space<vmem>>, %arg2: memref<1x16xf32, #tpu.memory_space<vmem>>, %arg3: memref<1x16xf32, #tpu.memory_space<vmem>>, %arg4: memref<26x29xf32, #tpu.memory_space<vmem>>, %arg5: memref<1x26x16xbf16, #tpu.memory_space<vmem>>) attributes {dimension_semantics = [#tpu.dimension_semantics<parallel>], iteration_bounds = array<i64: 4>, scalar_prefetch = 0 : i64, scratch_operands = 0 : i64, tpu.core_type = #tpu.core_type<tc>, window_params = [{transform_indices = @transform_0, window_bounds = array<i64: 1, 36, 16>}, {pipeline_mode = #tpu.pipeline_mode<synchronous>, transform_indices = @transform_1, window_bounds = array<i64: 1, 16>}, {pipeline_mode = #tpu.pipeline_mode<synchronous>, transform_indices = @transform_2, window_bounds = array<i64: 1, 16>}, {pipeline_mode = #tpu.pipeline_mode<synchronous>, transform_indices = @transform_3, window_bounds = array<i64: 26, 29>}, {transform_indices = @transform_4, window_bounds = array<i64: 1, 26, 16>}]} {
    %c0 = arith.constant 0 : index
    %c0_0 = arith.constant 0 : index
    %c0_1 = arith.constant 0 : index
    %0 = vector.load %arg1[%c0, %c0_0, %c0_1] : memref<1x36x16xf32, #tpu.memory_space<vmem>>, vector<1x36x16xf32>
    %1 = vector.shape_cast %0 : vector<1x36x16xf32> to vector<36x16xf32>
    %c0_2 = arith.constant 0 : index
    %c0_3 = arith.constant 0 : index
    %2 = vector.load %arg2[%c0_2, %c0_3] : memref<1x16xf32, #tpu.memory_space<vmem>>, vector<1x16xf32>
    %3 = vector.broadcast %2 : vector<1x16xf32> to vector<36x16xf32>
    %4 = arith.mulf %1, %3 : vector<36x16xf32>
    %c0_4 = arith.constant 0 : index
    %c0_5 = arith.constant 0 : index
    %5 = vector.load %arg3[%c0_4, %c0_5] : memref<1x16xf32, #tpu.memory_space<vmem>>, vector<1x16xf32>
    %6 = vector.broadcast %5 : vector<1x16xf32> to vector<36x16xf32>
    %7 = arith.addf %4, %6 : vector<36x16xf32>
    %cst = arith.constant 0.000000e+00 : f32
    %8 = vector.broadcast %cst : f32 to vector<36x16xf32>
    %9 = arith.maximumf %7, %8 : vector<36x16xf32>
    %10 = vector.extract_strided_slice %9 {offsets = [0, 0], sizes = [35, 16], strides = [1, 1]} : vector<36x16xf32> to vector<35x16xf32>
    %11 = vector.extract_strided_slice %9 {offsets = [1, 0], sizes = [35, 16], strides = [1, 1]} : vector<36x16xf32> to vector<35x16xf32>
    %12 = arith.maximumf %10, %11 : vector<35x16xf32>
    %13 = vector.extract_strided_slice %12 {offsets = [0, 0], sizes = [29, 16], strides = [1, 1]} : vector<35x16xf32> to vector<29x16xf32>
    %14 = vector.extract_strided_slice %12 {offsets = [6, 0], sizes = [29, 16], strides = [1, 1]} : vector<35x16xf32> to vector<29x16xf32>
    %15 = arith.maximumf %13, %14 : vector<29x16xf32>
    %c0_6 = arith.constant 0 : index
    %c0_7 = arith.constant 0 : index
    %16 = vector.load %arg4[%c0_6, %c0_7] : memref<26x29xf32, #tpu.memory_space<vmem>>, vector<26x29xf32>
    %cst_8 = arith.constant dense<0.000000e+00> : vector<26x16xf32>
    %17 = tpu.matmul %16, %15, %cst_8 {dimension_numbers = #tpu.dot_dimension_numbers<[1], [0], [0], [1], [0, 0, 1, 1], [], []>} : vector<26x29xf32>, vector<29x16xf32>, vector<26x16xf32> -> vector<26x16xf32>
    %18 = arith.truncf %17 : vector<26x16xf32> to vector<26x16xbf16>
    %c0_9 = arith.constant 0 : index
    %c0_10 = arith.constant 0 : index
    %c0_11 = arith.constant 0 : index
    %19 = vector.load %arg5[%c0_9, %c0_10, %c0_11] : memref<1x26x16xbf16, #tpu.memory_space<vmem>>, vector<1x26x16xbf16>
    %20 = vector.shape_cast %19 : vector<1x26x16xbf16> to vector<26x16xbf16>
    %21 = vector.shape_cast %18 : vector<26x16xbf16> to vector<1x26x16xbf16>
    tpu.vector_store %arg5[%c0_9, %c0_10, %c0_11], %21 {strides = array<i32>} : memref<1x26x16xbf16, #tpu.memory_space<vmem>>, vector<1x26x16xbf16>,
    return
  }
  func.func @transform_0(%arg0: i32) -> (i32, i32, i32) {
    %c0_i32 = arith.constant 0 : i32
    %c0_i32_0 = arith.constant 0 : i32
    %c0_i32_1 = arith.constant 0 : i32
    return %arg0, %c0_i32, %c0_i32_0 : i32, i32, i32
  }
  func.func @transform_1(%arg0: i32) -> (i32, i32) {
    %c0_i32 = arith.constant 0 : i32
    %c0_i32_0 = arith.constant 0 : i32
    %c0_i32_1 = arith.constant 0 : i32
    return %c0_i32, %c0_i32_0 : i32, i32
  }
  func.func @transform_2(%arg0: i32) -> (i32, i32) {
    %c0_i32 = arith.constant 0 : i32
    %c0_i32_0 = arith.constant 0 : i32
    %c0_i32_1 = arith.constant 0 : i32
    return %c0_i32, %c0_i32_0 : i32, i32
  }
  func.func @transform_3(%arg0: i32) -> (i32, i32) {
    %c0_i32 = arith.constant 0 : i32
    %c0_i32_0 = arith.constant 0 : i32
    %c0_i32_1 = arith.constant 0 : i32
    return %c0_i32, %c0_i32_0 : i32, i32
  }
  func.func @transform_4(%arg0: i32) -> (i32, i32, i32) {
    %c0_i32 = arith.constant 0 : i32
    %c0_i32_0 = arith.constant 0 : i32
    %c0_i32_1 = arith.constant 0 : i32
    return %arg0, %c0_i32, %c0_i32_0 : i32, i32, i32
  }
}

module attributes {stable_mosaic.version = 11 : i64} {
  func.func @_bn_pool_kernel(%arg0: i32, %arg1: memref<1x16x16xf32, #tpu.memory_space<vmem>>, %arg2: memref<1x16xf32, #tpu.memory_space<vmem>>, %arg3: memref<1x16xf32, #tpu.memory_space<vmem>>, %arg4: memref<17x11xf32, #tpu.memory_space<vmem>>, %arg5: memref<1x17x16xf32, #tpu.memory_space<vmem>>) attributes {dimension_semantics = [#tpu.dimension_semantics<parallel>], iteration_bounds = array<i64: 4>, scalar_prefetch = 0 : i64, scratch_operands = 0 : i64, tpu.core_type = #tpu.core_type<tc>, window_params = [{transform_indices = @transform_0, window_bounds = array<i64: 1, 16, 16>}, {pipeline_mode = #tpu.pipeline_mode<synchronous>, transform_indices = @transform_1, window_bounds = array<i64: 1, 16>}, {pipeline_mode = #tpu.pipeline_mode<synchronous>, transform_indices = @transform_2, window_bounds = array<i64: 1, 16>}, {pipeline_mode = #tpu.pipeline_mode<synchronous>, transform_indices = @transform_3, window_bounds = array<i64: 17, 11>}, {transform_indices = @transform_4, window_bounds = array<i64: 1, 17, 16>}]} {
    %c0 = arith.constant 0 : index
    %c0_0 = arith.constant 0 : index
    %c0_1 = arith.constant 0 : index
    %0 = vector.load %arg1[%c0, %c0_0, %c0_1] : memref<1x16x16xf32, #tpu.memory_space<vmem>>, vector<1x16x16xf32>
    %1 = vector.shape_cast %0 : vector<1x16x16xf32> to vector<16x16xf32>
    %c0_2 = arith.constant 0 : index
    %c0_3 = arith.constant 0 : index
    %2 = vector.load %arg2[%c0_2, %c0_3] : memref<1x16xf32, #tpu.memory_space<vmem>>, vector<1x16xf32>
    %3 = vector.broadcast %2 : vector<1x16xf32> to vector<16x16xf32>
    %4 = arith.mulf %1, %3 : vector<16x16xf32>
    %c0_4 = arith.constant 0 : index
    %c0_5 = arith.constant 0 : index
    %5 = vector.load %arg3[%c0_4, %c0_5] : memref<1x16xf32, #tpu.memory_space<vmem>>, vector<1x16xf32>
    %6 = vector.broadcast %5 : vector<1x16xf32> to vector<16x16xf32>
    %7 = arith.addf %4, %6 : vector<16x16xf32>
    %cst = arith.constant 0.000000e+00 : f32
    %8 = vector.broadcast %cst : f32 to vector<16x16xf32>
    %9 = arith.maximumf %7, %8 : vector<16x16xf32>
    %10 = vector.extract_strided_slice %9 {offsets = [0, 0], sizes = [15, 16], strides = [1, 1]} : vector<16x16xf32> to vector<15x16xf32>
    %11 = vector.extract_strided_slice %9 {offsets = [1, 0], sizes = [15, 16], strides = [1, 1]} : vector<16x16xf32> to vector<15x16xf32>
    %12 = arith.maximumf %10, %11 : vector<15x16xf32>
    %13 = vector.extract_strided_slice %12 {offsets = [0, 0], sizes = [11, 16], strides = [1, 1]} : vector<15x16xf32> to vector<11x16xf32>
    %14 = vector.extract_strided_slice %12 {offsets = [4, 0], sizes = [11, 16], strides = [1, 1]} : vector<15x16xf32> to vector<11x16xf32>
    %15 = arith.maximumf %13, %14 : vector<11x16xf32>
    %c0_6 = arith.constant 0 : index
    %c0_7 = arith.constant 0 : index
    %16 = vector.load %arg4[%c0_6, %c0_7] : memref<17x11xf32, #tpu.memory_space<vmem>>, vector<17x11xf32>
    %cst_8 = arith.constant dense<0.000000e+00> : vector<17x16xf32>
    %17 = tpu.matmul %16, %15, %cst_8 {dimension_numbers = #tpu.dot_dimension_numbers<[1], [0], [0], [1], [0, 0, 1, 1], [], []>} : vector<17x11xf32>, vector<11x16xf32>, vector<17x16xf32> -> vector<17x16xf32>
    %c0_9 = arith.constant 0 : index
    %c0_10 = arith.constant 0 : index
    %c0_11 = arith.constant 0 : index
    %18 = vector.load %arg5[%c0_9, %c0_10, %c0_11] : memref<1x17x16xf32, #tpu.memory_space<vmem>>, vector<1x17x16xf32>
    %19 = vector.shape_cast %18 : vector<1x17x16xf32> to vector<17x16xf32>
    %20 = vector.shape_cast %17 : vector<17x16xf32> to vector<1x17x16xf32>
    tpu.vector_store %arg5[%c0_9, %c0_10, %c0_11], %20 {strides = array<i32>} : memref<1x17x16xf32, #tpu.memory_space<vmem>>, vector<1x17x16xf32>,
    return
  }
  func.func @transform_0(%arg0: i32) -> (i32, i32, i32) {
    %c0_i32 = arith.constant 0 : i32
    %c0_i32_0 = arith.constant 0 : i32
    %c0_i32_1 = arith.constant 0 : i32
    return %arg0, %c0_i32, %c0_i32_0 : i32, i32, i32
  }
  func.func @transform_1(%arg0: i32) -> (i32, i32) {
    %c0_i32 = arith.constant 0 : i32
    %c0_i32_0 = arith.constant 0 : i32
    %c0_i32_1 = arith.constant 0 : i32
    return %c0_i32, %c0_i32_0 : i32, i32
  }
  func.func @transform_2(%arg0: i32) -> (i32, i32) {
    %c0_i32 = arith.constant 0 : i32
    %c0_i32_0 = arith.constant 0 : i32
    %c0_i32_1 = arith.constant 0 : i32
    return %c0_i32, %c0_i32_0 : i32, i32
  }
  func.func @transform_3(%arg0: i32) -> (i32, i32) {
    %c0_i32 = arith.constant 0 : i32
    %c0_i32_0 = arith.constant 0 : i32
    %c0_i32_1 = arith.constant 0 : i32
    return %c0_i32, %c0_i32_0 : i32, i32
  }
  func.func @transform_4(%arg0: i32) -> (i32, i32, i32) {
    %c0_i32 = arith.constant 0 : i32
    %c0_i32_0 = arith.constant 0 : i32
    %c0_i32_1 = arith.constant 0 : i32
    return %arg0, %c0_i32, %c0_i32_0 : i32, i32, i32
  }
}

</mosaic_0001>

<llo_original>
// kernel: autoprotonet_embedding.9
$region0: #{autoprotonet_embedding.9}
  #allocation0 [shape = 'u32[]', space=smem, size = 0x4, offset = 0x4, fixed_abs, tag = 'smem constant byte address 0x4 - core index']
  #allocation1 [shape = 'u32[144,128]{1,0:T(1,128)}', space=vmem, size = 0x12000, scoped, tag = 'internal scratch']
  %s0 = inlined_call_operand.vmem [shape: f32[4,324,16], index: 0, kind: input, shape index: {}]
  %s1 = inlined_call_operand.vmem [shape: f32[1,16], index: 1, kind: input, shape index: {}]
  %s2 = inlined_call_operand.vmem [shape: f32[1,16], index: 2, kind: input, shape index: {}]
  %s3 = inlined_call_operand.vmem [shape: f32[122,305], index: 3, kind: input, shape index: {}]
  %s4 = inlined_call_operand.vmem [shape: bf16[4,122,16], index: 4, kind: output, shape index: {}]
  %s5 = sld [smem:[#allocation0]]
  $region49: #{autoprotonet_embedding.9} parent=0
    _
  %s7 = ssub.s32 1, %s5
  %s8 = scalar_select 0, %s7, %s5
  loop: start=0, step=1, limit=6
  $region2: #{autoprotonet_embedding.9} parent=0 // loop_pre_header
    _
  $region3: #{autoprotonet_embedding.9} parent=0 // loop_header
    %s10 = sphi 0, %s14
    %p11 = scmp.ge.s32.totalorder %s10, 6
    %s20 = sphi 0, %s22
    %s23 = sphi 0, %s20
    %s24 = sphi 0, %s23
    %s40 = sphi 0, %s24
    %s44 = sphi 0, %s44
    %s46 = sphi 0, %s44
    %s47 = sphi 0, %s46
    %s61 = sphi 0, %s47
    %s65 = sphi 0, %s65
    %s67 = sphi 0, %s65
    %s68 = sphi 0, %s67
    %s82 = sphi 0, %s68
    %s86 = sphi 0, %s86
    %s88 = sphi 0, %s86
    %s89 = sphi 0, %s88
    %s103 = sphi 0, %s89
    %s109 = sphi 0, %s111
    %s112 = sphi 0, %s109
    %s113 = sphi 0, %s112
    %s129 = sphi 0, %s113
  $region4: #{autoprotonet_embedding.9} parent=0 // loop_header_branch
    %13 = sbr.rel (%p11) target = $region8
  $region5: #{autoprotonet_embedding.9} parent=0 // loop_body
    %s15 = ssub.s32 %s10, 1
    %s16 = ssub.s32 %s10, 2
    %s17 = sadd.s32 %s10, 1
    %s18 = ssub.s32 %s10, %s17
    %p19 = scmp.eq.s32.totalorder %s18, 0
    %s21 = sadd.s32 %s20, 1
    %s22 = scalar_select %p19, %s20, %s21
    %p25 = pneg %p19
    %p26 = scmp.eq.s32.totalorder %s10, 3
    %p27 = por %p25, %p26
    %p28 = scmp.ne.s32.totalorder %s20, %s23
    %p29 = scmp.eq.s32.totalorder %s10, 0
    %p30 = por %p28, %p29
    %p31 = scmp.ne.s32.totalorder %s20, %s23
    %p32 = scmp.eq.s32.totalorder %s15, 3
    %p33 = por %p31, %p32
    %p34 = scmp.ne.s32.totalorder %s23, %s24
    %p35 = scmp.eq.s32.totalorder %s15, 0
    %p36 = por %p34, %p35
    %p37 = scmp.ne.s32.totalorder %s23, %s24
    %p38 = scmp.eq.s32.totalorder %s16, 3
    %p39 = por %p37, %p38
    %p41 = scmp.ne.s32.totalorder %s24, %s40
    %p42 = scmp.eq.s32.totalorder %s16, 0
    %p43 = por %p41, %p42
    %s45 = sadd.s32 %s44, 1
    %p48 = scmp.eq.s32.totalorder %s10, 3
    %p49 = scmp.ne.s32.totalorder %s44, %s46
    %p50 = scmp.eq.s32.totalorder %s10, 0
    %p51 = por %p49, %p50
    %p52 = scmp.ne.s32.totalorder %s44, %s46
    %p53 = scmp.eq.s32.totalorder %s15, 3
    %p54 = por %p52, %p53
    %p55 = scmp.ne.s32.totalorder %s46, %s47
    %p56 = scmp.eq.s32.totalorder %s15, 0
    %p57 = por %p55, %p56
    %p58 = scmp.ne.s32.totalorder %s46, %s47
    %p59 = scmp.eq.s32.totalorder %s16, 3
    %p60 = por %p58, %p59
    %p62 = scmp.ne.s32.totalorder %s47, %s61
    %p63 = scmp.eq.s32.totalorder %s16, 0
    %p64 = por %p62, %p63
    %s66 = sadd.s32 %s65, 1
    %p69 = scmp.eq.s32.totalorder %s10, 3
    %p70 = scmp.ne.s32.totalorder %s65, %s67
    %p71 = scmp.eq.s32.totalorder %s10, 0
    %p72 = por %p70, %p71
    %p73 = scmp.ne.s32.totalorder %s65, %s67
    %p74 = scmp.eq.s32.totalorder %s15, 3
    %p75 = por %p73, %p74
    %p76 = scmp.ne.s32.totalorder %s67, %s68
    %p77 = scmp.eq.s32.totalorder %s15, 0
    %p78 = por %p76, %p77
    %p79 = scmp.ne.s32.totalorder %s67, %s68
    %p80 = scmp.eq.s32.totalorder %s16, 3
    %p81 = por %p79, %p80
    %p83 = scmp.ne.s32.totalorder %s68, %s82
    %p84 = scmp.eq.s32.totalorder %s16, 0
    %p85 = por %p83, %p84
    %s87 = sadd.s32 %s86, 1
    %p90 = scmp.eq.s32.totalorder %s10, 3
    %p91 = scmp.ne.s32.totalorder %s86, %s88
    %p92 = scmp.eq.s32.totalorder %s10, 0
    %p93 = por %p91, %p92
    %p94 = scmp.ne.s32.totalorder %s86, %s88
    %p95 = scmp.eq.s32.totalorder %s15, 3
    %p96 = por %p94, %p95
    %p97 = scmp.ne.s32.totalorder %s88, %s89
    %p98 = scmp.eq.s32.totalorder %s15, 0
    %p99 = por %p97, %p98
    %p100 = scmp.ne.s32.totalorder %s88, %s89
    %p101 = scmp.eq.s32.totalorder %s16, 3
    %p102 = por %p100, %p101
    %p104 = scmp.ne.s32.totalorder %s89, %s103
    %p105 = scmp.eq.s32.totalorder %s16, 0
    %p106 = por %p104, %p105
    %s107 = ssub.s32 %s10, %s17
    %p108 = scmp.eq.s32.totalorder %s107, 0
    %s110 = sadd.s32 %s109, 1
    %s111 = scalar_select %p108, %s109, %s110
    %p114 = pneg %p108
    %p115 = scmp.eq.s32.totalorder %s10, 3
    %p116 = por %p114, %p115
    %p117 = scmp.ne.s32.totalorder %s109, %s112
    %p118 = scmp.eq.s32.totalorder %s10, 0
    %p119 = por %p117, %p118
    %p120 = scmp.ne.s32.totalorder %s109, %s112
    %p121 = scmp.eq.s32.totalorder %s15, 3
    %p122 = por %p120, %p121
    %p123 = scmp.ne.s32.totalorder %s112, %s113
    %p124 = scmp.eq.s32.totalorder %s15, 0
    %p125 = por %p123, %p124
    %p126 = scmp.ne.s32.totalorder %s112, %s113
    %p127 = scmp.eq.s32.totalorder %s16, 3
    %p128 = por %p126, %p127
    %p130 = scmp.ne.s32.totalorder %s113, %s129
    %p131 = scmp.eq.s32.totalorder %s16, 0
    %p132 = por %p130, %p131
    %p133 = scmp.le.s32.totalorder 1, %s10
    %p134 = scmp.lt.s32.totalorder %s10, 5
    %p135 = pnand %p133, %p134
    %p136 = pneg %p135
    // Predicated region
    $region9: #{autoprotonet_embedding.9} parent=5 // pred_check
      _
    $region10: #{autoprotonet_embedding.9} parent=5 // pred_check_branch
      %138 = sbr.rel (%p135) target = $region12
    $region11: #{autoprotonet_embedding.9} parent=5 // pred_region
      %s139 = ssub.s32 %s10, 1
      // Predicated region
      $region13: #{autoprotonet_embedding.9} parent=11 // pred_check
        %p140 = pneg %p57
      $region14: #{autoprotonet_embedding.9} parent=11 // pred_check_branch
        %142 = sbr.rel (%p140) target = $region16
      $region15: #{autoprotonet_embedding.9} parent=11 // pred_region
        _
      $region16: #{autoprotonet_embedding.9} parent=11 // pred_fallthru
        _
      // Predicated region
      $region17: #{autoprotonet_embedding.9} parent=11 // pred_check
        %p143 = pneg %p78
      $region18: #{autoprotonet_embedding.9} parent=11 // pred_check_branch
        %145 = sbr.rel (%p143) target = $region20
      $region19: #{autoprotonet_embedding.9} parent=11 // pred_region
        _
      $region20: #{autoprotonet_embedding.9} parent=11 // pred_fallthru
        _
      // Predicated region
      $region21: #{autoprotonet_embedding.9} parent=11 // pred_check
        %p146 = pneg %p99
      $region22: #{autoprotonet_embedding.9} parent=11 // pred_check_branch
        %148 = sbr.rel (%p146) target = $region24
      $region23: #{autoprotonet_embedding.9} parent=11 // pred_region
        _
      $region24: #{autoprotonet_embedding.9} parent=11 // pred_fallthru
        _
    $region12: #{autoprotonet_embedding.9} parent=5 // pred_fallthru
      _
    %p149 = scmp.lt.s32.totalorder %s10, 4
    // Predicated region
    $region25: #{autoprotonet_embedding.9} parent=5 // pred_check
      %p150 = pneg %p149
    $region26: #{autoprotonet_embedding.9} parent=5 // pred_check_branch
      %152 = sbr.rel (%p150) target = $region28
    $region27: #{autoprotonet_embedding.9} parent=5 // pred_region
      // Predicated region
      $region29: #{autoprotonet_embedding.9} parent=27 // pred_check
        %p153 = pneg %p30
      $region30: #{autoprotonet_embedding.9} parent=27 // pred_check_branch
        %155 = sbr.rel (%p153) target = $region32
      $region31: #{autoprotonet_embedding.9} parent=27 // pred_region
        %p156 = scmp.lt.s32.totalorder %s10, 3
        %s157 = scalar_select %p156, %s10, 3
        %s158 = smul.addr %s157, 41
        %s159 = smul.addr %s158, 8
        %s160 = scalar_lea.vmem %s0, %s159
      $region32: #{autoprotonet_embedding.9} parent=27 // pred_fallthru
        _
    $region28: #{autoprotonet_embedding.9} parent=5 // pred_fallthru
      _
    %p161 = scmp.le.s32.totalorder 1, %s10
    %p162 = scmp.lt.s32.totalorder %s10, 5
    %p163 = pnand %p161, %p162
    %p164 = pneg %p163
    // Predicated region
    $region33: #{autoprotonet_embedding.9} parent=5 // pred_check
      _
    $region34: #{autoprotonet_embedding.9} parent=5 // pred_check_branch
      %166 = sbr.rel (%p163) target = $region36
    $region35: #{autoprotonet_embedding.9} parent=5 // pred_region
      %s167 = ssub.s32 %s10, 1
      %p168 = scmp.lt.s32.totalorder %s15, 3
      %s169 = scalar_select %p168, %s15, 3
      %s170 = smul.addr %s169, 41
      %s171 = smul.addr %s170, 8
      %s172 = scalar_lea.vmem %s0, %s171
      %p173 = pneg %p36
      %p174 = pneg %p33
      %p175 = pneg %p57
      %p176 = pneg %p54
      %p177 = pneg %p78
      %p178 = pneg %p75
      %p179 = pneg %p99
      %p180 = pneg %p96
      %p181 = pneg %p125
      %p182 = pneg %p122
      %p183 = scmp.lt.s32.totalorder %s15, 3
      %s184 = scalar_select %p183, %s15, 3
      %s185 = smul.addr %s184, 16
      %s186 = smul.addr %s185, 4
      %s187 = scalar_lea.vmem %s4, %s186
      %p188 = scmp.lt.s32.totalorder %s15, 3
      %s189 = scalar_select %p188, %s15, 3
      %s190 = smul.addr %s189, 41
      %s191 = smul.addr %s190, 8
      %s192 = scalar_lea.vmem %s0, %s191
      %p193 = scmp.lt.s32.totalorder %s15, 3
      %s194 = scalar_select %p193, %s15, 3
      %s195 = smul.addr %s194, 16
      %s196 = smul.addr %s195, 4
      %s197 = scalar_lea.vmem %s4, %s196
      %v198 = vld [vmem:[%s192] sm:$0xff]
      %v199 = vld [vmem:[%s192 + $0x8] sm:$0xff]
      %v200 = vld [vmem:[%s192 + $0x10] sm:$0xff]
      %v201 = vld [vmem:[%s192 + $0x18] sm:$0xff]
      %v202 = vld [vmem:[%s192 + $0x20] sm:$0xff]
      %v203 = vld [vmem:[%s192 + $0x28] sm:$0xff]
      %v204 = vld [vmem:[%s192 + $0x30] sm:$0xff]
      %v205 = vld [vmem:[%s192 + $0x38] sm:$0xff]
      %v206 = vld [vmem:[%s192 + $0x40] sm:$0xff]
      %v207 = vld [vmem:[%s192 + $0x48] sm:$0xff]
      %v208 = vld [vmem:[%s192 + $0x50] sm:$0xff]
      %v209 = vld [vmem:[%s192 + $0x58] sm:$0xff]
      %v210 = vld [vmem:[%s192 + $0x60] sm:$0xff]
      %v211 = vld [vmem:[%s192 + $0x68] sm:$0xff]
      %v212 = vld [vmem:[%s192 + $0x70] sm:$0xff]
      %v213 = vld [vmem:[%s192 + $0x78] sm:$0xff]
      %v214 = vld [vmem:[%s192 + $0x80] sm:$0xff]
      %v215 = vld [vmem:[%s192 + $0x88] sm:$0xff]
      %v216 = vld [vmem:[%s192 + $0x90] sm:$0xff]
      %v217 = vld [vmem:[%s192 + $0x98] sm:$0xff]
      %v218 = vld [vmem:[%s192 + $0xa0] sm:$0xff]
      %v219 = vld [vmem:[%s192 + $0xa8] sm:$0xff]
      %v220 = vld [vmem:[%s192 + $0xb0] sm:$0xff]
      %v221 = vld [vmem:[%s192 + $0xb8] sm:$0xff]
      %v222 = vld [vmem:[%s192 + $0xc0] sm:$0xff]
      %v223 = vld [vmem:[%s192 + $0xc8] sm:$0xff]
      %v224 = vld [vmem:[%s192 + $0xd0] sm:$0xff]
      %v225 = vld [vmem:[%s192 + $0xd8] sm:$0xff]
      %v226 = vld [vmem:[%s192 + $0xe0] sm:$0xff]
      %v227 = vld [vmem:[%s192 + $0xe8] sm:$0xff]
      %v228 = vld [vmem:[%s192 + $0xf0] sm:$0xff]
      %v229 = vld [vmem:[%s192 + $0xf8] sm:$0xff]
      %v230 = vld [vmem:[%s192 + $0x100] sm:$0xff]
      %v231 = vld [vmem:[%s192 + $0x108] sm:$0xff]
      %v232 = vld [vmem:[%s192 + $0x110] sm:$0xff]
      %v233 = vld [vmem:[%s192 + $0x118] sm:$0xff]
      %v234 = vld [vmem:[%s192 + $0x120] sm:$0xff]
      %v235 = vld [vmem:[%s192 + $0x128] sm:$0xff]
      %v236 = vld [vmem:[%s192 + $0x130] sm:$0xff]
      %v237 = vld [vmem:[%s192 + $0x138] sm:$0xff]
      %v238 = vld [vmem:[%s192 + $0x140] sm:$0xf]
      %v239 = vld [vmem:[%s1] sm:$0x1]
      %v241 = vlaneseq
      %v242 = vshrl.u32 %v241, 7
      %v243 = vsub.s32 0, %v242
      %v244 = vrot.slane %v239, %v243
      %v246 = vmul.f32 %v198, %v244
      %v247 = vmul.f32 %v199, %v244
      %v248 = vmul.f32 %v200, %v244
      %v249 = vmul.f32 %v201, %v244
      %v250 = vmul.f32 %v202, %v244
      %v251 = vmul.f32 %v203, %v244
      %v252 = vmul.f32 %v204, %v244
      %v253 = vmul.f32 %v205, %v244
      %v254 = vmul.f32 %v206, %v244
      %v255 = vmul.f32 %v207, %v244
      %v256 = vmul.f32 %v208, %v244
      %v257 = vmul.f32 %v209, %v244
      %v258 = vmul.f32 %v210, %v244
      %v259 = vmul.f32 %v211, %v244
      %v260 = vmul.f32 %v212, %v244
      %v261 = vmul.f32 %v213, %v244
      %v262 = vmul.f32 %v214, %v244
      %v263 = vmul.f32 %v215, %v244
      %v264 = vmul.f32 %v216, %v244
      %v265 = vmul.f32 %v217, %v244
      %v266 = vmul.f32 %v218, %v244
      %v267 = vmul.f32 %v219, %v244
      %v268 = vmul.f32 %v220, %v244
      %v269 = vmul.f32 %v221, %v244
      %v270 = vmul.f32 %v222, %v244
      %v271 = vmul.f32 %v223, %v244
      %v272 = vmul.f32 %v224, %v244
      %v273 = vmul.f32 %v225, %v244
      %v274 = vmul.f32 %v226, %v244
      %v275 = vmul.f32 %v227, %v244
      %v276 = vmul.f32 %v228, %v244
      %v277 = vmul.f32 %v229, %v244
      %v278 = vmul.f32 %v230, %v244
      %v279 = vmul.f32 %v231, %v244
      %v280 = vmul.f32 %v232, %v244
      %v281 = vmul.f32 %v233, %v244
      %v282 = vmul.f32 %v234, %v244
      %v283 = vmul.f32 %v235, %v244
      %v284 = vmul.f32 %v236, %v244
      %v285 = vmul.f32 %v237, %v244
      %v286 = vmul.f32 %v238, %v244
      %v287 = vld [vmem:[%s2] sm:$0x1]
      %v289 = vlaneseq
      %v290 = vshrl.u32 %v289, 7
      %v291 = vsub.s32 0, %v290
      %v292 = vrot.slane %v287, %v291
      %v294 = vadd.f32 %v246, %v292
      %v295 = vadd.f32 %v247, %v292
      %v296 = vadd.f32 %v248, %v292
      %v297 = vadd.f32 %v249, %v292
      %v298 = vadd.f32 %v250, %v292
      %v299 = vadd.f32 %v251, %v292
      %v300 = vadd.f32 %v252, %v292
      %v301 = vadd.f32 %v253, %v292
      %v302 = vadd.f32 %v254, %v292
      %v303 = vadd.f32 %v255, %v292
      %v304 = vadd.f32 %v256, %v292
      %v305 = vadd.f32 %v257, %v292
      %v306 = vadd.f32 %v258, %v292
      %v307 = vadd.f32 %v259, %v292
      %v308 = vadd.f32 %v260, %v292
      %v309 = vadd.f32 %v261, %v292
      %v310 = vadd.f32 %v262, %v292
      %v311 = vadd.f32 %v263, %v292
      %v312 = vadd.f32 %v264, %v292
      %v313 = vadd.f32 %v265, %v292
      %v314 = vadd.f32 %v266, %v292
      %v315 = vadd.f32 %v267, %v292
      %v316 = vadd.f32 %v268, %v292
      %v317 = vadd.f32 %v269, %v292
      %v318 = vadd.f32 %v270, %v292
      %v319 = vadd.f32 %v271, %v292
      %v320 = vadd.f32 %v272, %v292
      %v321 = vadd.f32 %v273, %v292
      %v322 = vadd.f32 %v274, %v292
      %v323 = vadd.f32 %v275, %v292
      %v324 = vadd.f32 %v276, %v292
      %v325 = vadd.f32 %v277, %v292
      %v326 = vadd.f32 %v278, %v292
      %v327 = vadd.f32 %v279, %v292
      %v328 = vadd.f32 %v280, %v292
      %v329 = vadd.f32 %v281, %v292
      %v330 = vadd.f32 %v282, %v292
      %v331 = vadd.f32 %v283, %v292
      %v332 = vadd.f32 %v284, %v292
      %v333 = vadd.f32 %v285, %v292
      %v334 = vadd.f32 %v286, %v292
      %v335 = vmax.f32 %v294, 0.0
      %v336 = vmax.f32 %v295, 0.0
      %v337 = vmax.f32 %v296, 0.0
      %v338 = vmax.f32 %v297, 0.0
      %v339 = vmax.f32 %v298, 0.0
      %v340 = vmax.f32 %v299, 0.0
      %v341 = vmax.f32 %v300, 0.0
      %v342 = vmax.f32 %v301, 0.0
      %v343 = vmax.f32 %v302, 0.0
      %v344 = vmax.f32 %v303, 0.0
      %v345 = vmax.f32 %v304, 0.0
      %v346 = vmax.f32 %v305, 0.0
      %v347 = vmax.f32 %v306, 0.0
      %v348 = vmax.f32 %v307, 0.0
      %v349 = vmax.f32 %v308, 0.0
      %v350 = vmax.f32 %v309, 0.0
      %v351 = vmax.f32 %v310, 0.0
      %v352 = vmax.f32 %v311, 0.0
      %v353 = vmax.f32 %v312, 0.0
      %v354 = vmax.f32 %v313, 0.0
      %v355 = vmax.f32 %v314, 0.0
      %v356 = vmax.f32 %v315, 0.0
      %v357 = vmax.f32 %v316, 0.0
      %v358 = vmax.f32 %v317, 0.0
      %v359 = vmax.f32 %v318, 0.0
      %v360 = vmax.f32 %v319, 0.0
      %v361 = vmax.f32 %v320, 0.0
      %v362 = vmax.f32 %v321, 0.0
      %v363 = vmax.f32 %v322, 0.0
      %v364 = vmax.f32 %v323, 0.0
      %v365 = vmax.f32 %v324, 0.0
      %v366 = vmax.f32 %v325, 0.0
      %v367 = vmax.f32 %v326, 0.0
      %v368 = vmax.f32 %v327, 0.0
      %v369 = vmax.f32 %v328, 0.0
      %v370 = vmax.f32 %v329, 0.0
      %v371 = vmax.f32 %v330, 0.0
      %v372 = vmax.f32 %v331, 0.0
      %v373 = vmax.f32 %v332, 0.0
      %v374 = vmax.f32 %v333, 0.0
      %v375 = vmax.f32 %v334, 0.0
      %vm417 = vcmask 1046528
      %v418 = vrot.slane %v335, 1
      %v419 = vrot.slane %v336, 1
      %v420 = vsel %vm417, %v418, %v419
      %v421 = vrot.slane %v337, 1
      %v422 = vsel %vm417, %v419, %v421
      %v423 = vrot.slane %v338, 1
      %v424 = vsel %vm417, %v421, %v423
      %v425 = vrot.slane %v339, 1
      %v426 = vsel %vm417, %v423, %v425
      %v427 = vrot.slane %v340, 1
      %v428 = vsel %vm417, %v425, %v427
      %v429 = vrot.slane %v341, 1
      %v430 = vsel %vm417, %v427, %v429
      %v431 = vrot.slane %v342, 1
      %v432 = vsel %vm417, %v429, %v431
      %v433 = vrot.slane %v343, 1
      %v434 = vsel %vm417, %v431, %v433
      %v435 = vrot.slane %v344, 1
      %v436 = vsel %vm417, %v433, %v435
      %v437 = vrot.slane %v345, 1
      %v438 = vsel %vm417, %v435, %v437
      %v439 = vrot.slane %v346, 1
      %v440 = vsel %vm417, %v437, %v439
      %v441 = vrot.slane %v347, 1
      %v442 = vsel %vm417, %v439, %v441
      %v443 = vrot.slane %v348, 1
      %v444 = vsel %vm417, %v441, %v443
      %v445 = vrot.slane %v349, 1
      %v446 = vsel %vm417, %v443, %v445
      %v447 = vrot.slane %v350, 1
      %v448 = vsel %vm417, %v445, %v447
      %v449 = vrot.slane %v351, 1
      %v450 = vsel %vm417, %v447, %v449
      %v451 = vrot.slane %v352, 1
      %v452 = vsel %vm417, %v449, %v451
      %v453 = vrot.slane %v353, 1
      %v454 = vsel %vm417, %v451, %v453
      %v455 = vrot.slane %v354, 1
      %v456 = vsel %vm417, %v453, %v455
      %v457 = vrot.slane %v355, 1
      %v458 = vsel %vm417, %v455, %v457
      %v459 = vrot.slane %v356, 1
      %v460 = vsel %vm417, %v457, %v459
      %v461 = vrot.slane %v357, 1
      %v462 = vsel %vm417, %v459, %v461
      %v463 = vrot.slane %v358, 1
      %v464 = vsel %vm417, %v461, %v463
      %v465 = vrot.slane %v359, 1
      %v466 = vsel %vm417, %v463, %v465
      %v467 = vrot.slane %v360, 1
      %v468 = vsel %vm417, %v465, %v467
      %v469 = vrot.slane %v361, 1
      %v470 = vsel %vm417, %v467, %v469
      %v471 = vrot.slane %v362, 1
      %v472 = vsel %vm417, %v469, %v471
      %v473 = vrot.slane %v363, 1
      %v474 = vsel %vm417, %v471, %v473
      %v475 = vrot.slane %v364, 1
      %v476 = vsel %vm417, %v473, %v475
      %v477 = vrot.slane %v365, 1
      %v478 = vsel %vm417, %v475, %v477
      %v479 = vrot.slane %v366, 1
      %v480 = vsel %vm417, %v477, %v479
      %v481 = vrot.slane %v367, 1
      %v482 = vsel %vm417, %v479, %v481
      %v483 = vrot.slane %v368, 1
      %v484 = vsel %vm417, %v481, %v483
      %v485 = vrot.slane %v369, 1
      %v486 = vsel %vm417, %v483, %v485
      %v487 = vrot.slane %v370, 1
      %v488 = vsel %vm417, %v485, %v487
      %v489 = vrot.slane %v371, 1
      %v490 = vsel %vm417, %v487, %v489
      %v491 = vrot.slane %v372, 1
      %v492 = vsel %vm417, %v489, %v491
      %v493 = vrot.slane %v373, 1
      %v494 = vsel %vm417, %v491, %v493
      %v495 = vrot.slane %v374, 1
      %v496 = vsel %vm417, %v493, %v495
      %v497 = vrot.slane %v375, 1
      %v498 = vsel %vm417, %v495, %v497
      %v540 = vmax.f32 %v335, %v420
      %v541 = vmax.f32 %v336, %v422
      %v542 = vmax.f32 %v337, %v424
      %v543 = vmax.f32 %v338, %v426
      %v544 = vmax.f32 %v339, %v428
      %v545 = vmax.f32 %v340, %v430
      %v546 = vmax.f32 %v341, %v432
      %v547 = vmax.f32 %v342, %v434
      %v548 = vmax.f32 %v343, %v436
      %v549 = vmax.f32 %v344, %v438
      %v550 = vmax.f32 %v345, %v440
      %v551 = vmax.f32 %v346, %v442
      %v552 = vmax.f32 %v347, %v444
      %v553 = vmax.f32 %v348, %v446
      %v554 = vmax.f32 %v349, %v448
      %v555 = vmax.f32 %v350, %v450
      %v556 = vmax.f32 %v351, %v452
      %v557 = vmax.f32 %v352, %v454
      %v558 = vmax.f32 %v353, %v456
      %v559 = vmax.f32 %v354, %v458
      %v560 = vmax.f32 %v355, %v460
      %v561 = vmax.f32 %v356, %v462
      %v562 = vmax.f32 %v357, %v464
      %v563 = vmax.f32 %v358, %v466
      %v564 = vmax.f32 %v359, %v468
      %v565 = vmax.f32 %v360, %v470
      %v566 = vmax.f32 %v361, %v472
      %v567 = vmax.f32 %v362, %v474
      %v568 = vmax.f32 %v363, %v476
      %v569 = vmax.f32 %v364, %v478
      %v570 = vmax.f32 %v365, %v480
      %v571 = vmax.f32 %v366, %v482
      %v572 = vmax.f32 %v367, %v484
      %v573 = vmax.f32 %v368, %v486
      %v574 = vmax.f32 %v369, %v488
      %v575 = vmax.f32 %v370, %v490
      %v576 = vmax.f32 %v371, %v492
      %v577 = vmax.f32 %v372, %v494
      %v578 = vmax.f32 %v373, %v496
      %v579 = vmax.f32 %v374, %v498
      %v580 = vmax.f32 %v375, %v497
      %vm620 = vcmask 1045504
      %v621 = vrot.slane %v542, 2
      %v622 = vrot.slane %v543, 2
      %v623 = vsel %vm620, %v621, %v622
      %v624 = vrot.slane %v544, 2
      %v625 = vsel %vm620, %v622, %v624
      %v626 = vrot.slane %v545, 2
      %v627 = vsel %vm620, %v624, %v626
      %v628 = vrot.slane %v546, 2
      %v629 = vsel %vm620, %v626, %v628
      %v630 = vrot.slane %v547, 2
      %v631 = vsel %vm620, %v628, %v630
      %v632 = vrot.slane %v548, 2
      %v633 = vsel %vm620, %v630, %v632
      %v634 = vrot.slane %v549, 2
      %v635 = vsel %vm620, %v632, %v634
      %v636 = vrot.slane %v550, 2
      %v637 = vsel %vm620, %v634, %v636
      %v638 = vrot.slane %v551, 2
      %v639 = vsel %vm620, %v636, %v638
      %v640 = vrot.slane %v552, 2
      %v641 = vsel %vm620, %v638, %v640
      %v642 = vrot.slane %v553, 2
      %v643 = vsel %vm620, %v640, %v642
      %v644 = vrot.slane %v554, 2
      %v645 = vsel %vm620, %v642, %v644
      %v646 = vrot.slane %v555, 2
      %v647 = vsel %vm620, %v644, %v646
      %v648 = vrot.slane %v556, 2
      %v649 = vsel %vm620, %v646, %v648
      %v650 = vrot.slane %v557, 2
      %v651 = vsel %vm620, %v648, %v650
      %v652 = vrot.slane %v558, 2
      %v653 = vsel %vm620, %v650, %v652
      %v654 = vrot.slane %v559, 2
      %v655 = vsel %vm620, %v652, %v654
      %v656 = vrot.slane %v560, 2
      %v657 = vsel %vm620, %v654, %v656
      %v658 = vrot.slane %v561, 2
      %v659 = vsel %vm620, %v656, %v658
      %v660 = vrot.slane %v562, 2
      %v661 = vsel %vm620, %v658, %v660
      %v662 = vrot.slane %v563, 2
      %v663 = vsel %vm620, %v660, %v662
      %v664 = vrot.slane %v564, 2
      %v665 = vsel %vm620, %v662, %v664
      %v666 = vrot.slane %v565, 2
      %v667 = vsel %vm620, %v664, %v666
      %v668 = vrot.slane %v566, 2
      %v669 = vsel %vm620, %v666, %v668
      %v670 = vrot.slane %v567, 2
      %v671 = vsel %vm620, %v668, %v670
      %v672 = vrot.slane %v568, 2
      %v673 = vsel %vm620, %v670, %v672
      %v674 = vrot.slane %v569, 2
      %v675 = vsel %vm620, %v672, %v674
      %v676 = vrot.slane %v570, 2
      %v677 = vsel %vm620, %v674, %v676
      %v678 = vrot.slane %v571, 2
      %v679 = vsel %vm620, %v676, %v678
      %v680 = vrot.slane %v572, 2
      %v681 = vsel %vm620, %v678, %v680
      %v682 = vrot.slane %v573, 2
      %v683 = vsel %vm620, %v680, %v682
      %v684 = vrot.slane %v574, 2
      %v685 = vsel %vm620, %v682, %v684
      %v686 = vrot.slane %v575, 2
      %v687 = vsel %vm620, %v684, %v686
      %v688 = vrot.slane %v576, 2
      %v689 = vsel %vm620, %v686, %v688
      %v690 = vrot.slane %v577, 2
      %v691 = vsel %vm620, %v688, %v690
      %v692 = vrot.slane %v578, 2
      %v693 = vsel %vm620, %v690, %v692
      %v694 = vrot.slane %v579, 2
      %v695 = vsel %vm620, %v692, %v694
      %v696 = vrot.slane %v580, 2
      %v697 = vsel %vm620, %v694, %v696
      %v737 = vmax.f32 %v540, %v623
      %v738 = vmax.f32 %v541, %v625
      %v739 = vmax.f32 %v542, %v627
      %v740 = vmax.f32 %v543, %v629
      %v741 = vmax.f32 %v544, %v631
      %v742 = vmax.f32 %v545, %v633
      %v743 = vmax.f32 %v546, %v635
      %v744 = vmax.f32 %v547, %v637
      %v745 = vmax.f32 %v548, %v639
      %v746 = vmax.f32 %v549, %v641
      %v747 = vmax.f32 %v550, %v643
      %v748 = vmax.f32 %v551, %v645
      %v749 = vmax.f32 %v552, %v647
      %v750 = vmax.f32 %v553, %v649
      %v751 = vmax.f32 %v554, %v651
      %v752 = vmax.f32 %v555, %v653
      %v753 = vmax.f32 %v556, %v655
      %v754 = vmax.f32 %v557, %v657
      %v755 = vmax.f32 %v558, %v659
      %v756 = vmax.f32 %v559, %v661
      %v757 = vmax.f32 %v560, %v663
      %v758 = vmax.f32 %v561, %v665
      %v759 = vmax.f32 %v562, %v667
      %v760 = vmax.f32 %v563, %v669
      %v761 = vmax.f32 %v564, %v671
      %v762 = vmax.f32 %v565, %v673
      %v763 = vmax.f32 %v566, %v675
      %v764 = vmax.f32 %v567, %v677
      %v765 = vmax.f32 %v568, %v679
      %v766 = vmax.f32 %v569, %v681
      %v767 = vmax.f32 %v570, %v683
      %v768 = vmax.f32 %v571, %v685
      %v769 = vmax.f32 %v572, %v687
      %v770 = vmax.f32 %v573, %v689
      %v771 = vmax.f32 %v574, %v691
      %v772 = vmax.f32 %v575, %v693
      %v773 = vmax.f32 %v576, %v695
      %v774 = vmax.f32 %v577, %v697
      %v775 = vmax.f32 %v578, %v696
      %v776 = vld [vmem:[%s3] sm:$0xff]
      %v777 = vld [vmem:[%s3 + $0x8] sm:$0xff]
      %v778 = vld [vmem:[%s3 + $0x10] sm:$0xff]
      %v779 = vld [vmem:[%s3 + $0x18] sm:$0xff]
      %v780 = vld [vmem:[%s3 + $0x20] sm:$0xff]
      %v781 = vld [vmem:[%s3 + $0x28] sm:$0xff]
      %v782 = vld [vmem:[%s3 + $0x30] sm:$0xff]
      %v783 = vld [vmem:[%s3 + $0x38] sm:$0xff]
      %v784 = vld [vmem:[%s3 + $0x40] sm:$0xff]
      %v785 = vld [vmem:[%s3 + $0x48] sm:$0xff]
      %v786 = vld [vmem:[%s3 + $0x50] sm:$0xff]
      %v787 = vld [vmem:[%s3 + $0x58] sm:$0xff]
      %v788 = vld [vmem:[%s3 + $0x60] sm:$0xff]
      %v789 = vld [vmem:[%s3 + $0x68] sm:$0xff]
      %v790 = vld [vmem:[%s3 + $0x70] sm:$0xff]
      %v791 = vld [vmem:[%s3 + $0x78] sm:$0xff]
      %v792 = vld [vmem:[%s3 + $0x80] sm:$0xff]
      %v793 = vld [vmem:[%s3 + $0x88] sm:$0xff]
      %v794 = vld [vmem:[%s3 + $0x90] sm:$0xff]
      %v795 = vld [vmem:[%s3 + $0x98] sm:$0xff]
      %v796 = vld [vmem:[%s3 + $0xa0] sm:$0xff]
      %v797 = vld [vmem:[%s3 + $0xa8] sm:$0xff]
      %v798 = vld [vmem:[%s3 + $0xb0] sm:$0xff]
      %v799 = vld [vmem:[%s3 + $0xb8] sm:$0xff]
      %v800 = vld [vmem:[%s3 + $0xc0] sm:$0xff]
      %v801 = vld [vmem:[%s3 + $0xc8] sm:$0xff]
      %v802 = vld [vmem:[%s3 + $0xd0] sm:$0xff]
      %v803 = vld [vmem:[%s3 + $0xd8] sm:$0xff]
      %v804 = vld [vmem:[%s3 + $0xe0] sm:$0xff]
      %v805 = vld [vmem:[%s3 + $0xe8] sm:$0xff]
      %v806 = vld [vmem:[%s3 + $0xf0] sm:$0xff]
      %v807 = vld [vmem:[%s3 + $0xf8] sm:$0xff]
      %v808 = vld [vmem:[%s3 + $0x100] sm:$0xff]
      %v809 = vld [vmem:[%s3 + $0x108] sm:$0xff]
      %v810 = vld [vmem:[%s3 + $0x110] sm:$0xff]
      %v811 = vld [vmem:[%s3 + $0x118] sm:$0xff]
      %v812 = vld [vmem:[%s3 + $0x120] sm:$0xff]
      %v813 = vld [vmem:[%s3 + $0x128] sm:$0xff]
      %v814 = vld [vmem:[%s3 + $0x130] sm:$0xff]
      %v815 = vld [vmem:[%s3 + $0x138] sm:$0xff]
      %v816 = vld [vmem:[%s3 + $0x140] sm:$0xff]
      %v817 = vld [vmem:[%s3 + $0x148] sm:$0xff]
      %v818 = vld [vmem:[%s3 + $0x150] sm:$0xff]
      %v819 = vld [vmem:[%s3 + $0x158] sm:$0xff]
      %v820 = vld [vmem:[%s3 + $0x160] sm:$0xff]
      %v821 = vld [vmem:[%s3 + $0x168] sm:$0x3]
      %v822 = vld [vmem:[%s3 + $0x170] sm:$0x3]
      %v823 = vld [vmem:[%s3 + $0x178] sm:$0x3]
      %vm824 = vcmask 400384
      %v826 = vsel %vm824, %v778, 0
      %v829 = vsel %vm824, %v781, 0
      %v832 = vsel %vm824, %v784, 0
      %v835 = vsel %vm824, %v787, 0
      %v838 = vsel %vm824, %v790, 0
      %v841 = vsel %vm824, %v793, 0
      %v844 = vsel %vm824, %v796, 0
      %v847 = vsel %vm824, %v799, 0
      %v850 = vsel %vm824, %v802, 0
      %v853 = vsel %vm824, %v805, 0
      %v856 = vsel %vm824, %v808, 0
      %v859 = vsel %vm824, %v811, 0
      %v862 = vsel %vm824, %v814, 0
      %v865 = vsel %vm824, %v817, 0
      %v868 = vsel %vm824, %v820, 0
      %v871 = vsel %vm824, %v823, 0
      %vm873 = vcmask 1040384
      %v875 = vsel %vm873, %v775, 0
      %877 = vmatprep.subr.mxu0 0.0
      %878 = vmatpush1.msra.mxu0 %v737
      %879 = vmatprep.subr.mxu0 0.0
      %880 = vmatpush1.msra.mxu0 %v738
      %881 = vmatprep.subr.mxu0 0.0
      %882 = vmatpush1.msra.mxu0 %v739
      %883 = vmatprep.subr.mxu0 0.0
      %884 = vmatpush1.msra.mxu0 %v740
      %885 = vmatprep.subr.mxu0 0.0
      %886 = vmatpush1.msra.mxu0 %v741
      %887 = vmatprep.subr.mxu0 0.0
      %888 = vmatpush1.msra.mxu0 %v742
      %889 = vmatprep.subr.mxu0 0.0
      %890 = vmatpush1.msra.mxu0 %v743
      %891 = vmatprep.subr.mxu0 0.0
      %892 = vmatpush1.msra.mxu0 %v744
      %893 = vmatprep.subr.mxu0 0.0
      %894 = vmatpush1.msra.mxu0 %v745
      %895 = vmatprep.subr.mxu0 0.0
      %896 = vmatpush1.msra.mxu0 %v746
      %897 = vmatprep.subr.mxu0 0.0
      %898 = vmatpush1.msra.mxu0 %v747
      %899 = vmatprep.subr.mxu0 0.0
      %900 = vmatpush1.msra.mxu0 %v748
      %901 = vmatprep.subr.mxu0 0.0
      %902 = vmatpush1.msra.mxu0 %v749
      %903 = vmatprep.subr.mxu0 0.0
      %904 = vmatpush1.msra.mxu0 %v750
      %905 = vmatprep.subr.mxu0 0.0
      %906 = vmatpush1.msra.mxu0 %v751
      %907 = vmatprep.subr.mxu0 0.0
      %908 = vmatpush1.msra.mxu0 %v752
      %909 = vmatprep.subr.mxu0 0.0
      %910 = vmatpush1.msra.mxu0 %v753
      %911 = vmatprep.subr.mxu0 0.0
      %912 = vmatpush1.msra.mxu0 %v754
      %913 = vmatprep.subr.mxu0 0.0
      %914 = vmatpush1.msra.mxu0 %v755
      %915 = vmatprep.subr.mxu0 0.0
      %916 = vmatpush1.msra.mxu0 %v756
      %917 = vmatprep.subr.mxu0 0.0
      %918 = vmatpush1.msra.mxu0 %v757
      %919 = vmatprep.subr.mxu0 0.0
      %920 = vmatpush1.msra.mxu0 %v758
      %921 = vmatprep.subr.mxu0 0.0
      %922 = vmatpush1.msra.mxu0 %v759
      %923 = vmatprep.subr.mxu0 0.0
      %924 = vmatpush1.msra.mxu0 %v760
      %925 = vmatprep.subr.mxu0 0.0
      %926 = vmatpush1.msra.mxu0 %v761
      %927 = vmatprep.subr.mxu0 0.0
      %928 = vmatpush1.msra.mxu0 %v762
      %929 = vmatprep.subr.mxu0 0.0
      %930 = vmatpush1.msra.mxu0 %v763
      %931 = vmatprep.subr.mxu0 0.0
      %932 = vmatpush1.msra.mxu0 %v764
      %933 = vmatprep.subr.mxu0 0.0
      %934 = vmatpush1.msra.mxu0 %v765
      %935 = vmatprep.subr.mxu0 0.0
      %936 = vmatpush1.msra.mxu0 %v766
      %937 = vmatprep.subr.mxu0 0.0
      %938 = vmatpush1.msra.mxu0 %v767
      %939 = vmatprep.subr.mxu0 0.0
      %940 = vmatpush1.msra.mxu0 %v768
      %941 = vmatprep.mubr.f32.mxu0 %v777
      %942 = vmatmul.mubr.f32.gmra.mrb[0].mxu0 %v776
      %v943 = vpop.f32.mrb[0].mxu0
      %v944 = vadd.f32 0.0, %v943
      %v945 = vpop.f32.mrb[0].mxu0
      %946 = vmatprep.mubr.f32.mxu0 %v780
      %947 = vmatmul.mubr.f32.gmra.mrb[0].mxu0 %v779
      %v948 = vpop.f32.mrb[0].mxu0
      %v949 = vadd.f32 0.0, %v948
      %v950 = vpop.f32.mrb[0].mxu0
      %951 = vmatprep.mubr.f32.mxu0 %v783
      %952 = vmatmul.mubr.f32.gmra.mrb[0].mxu0 %v782
      %v953 = vpop.f32.mrb[0].mxu0
      %v954 = vadd.f32 0.0, %v953
      %v955 = vpop.f32.mrb[0].mxu0
      %956 = vmatprep.mubr.f32.mxu0 %v786
      %957 = vmatmul.mubr.f32.gmra.mrb[0].mxu0 %v785
      %v958 = vpop.f32.mrb[0].mxu0
      %v959 = vadd.f32 0.0, %v958
      %v960 = vpop.f32.mrb[0].mxu0
      %961 = vmatprep.mubr.f32.mxu0 %v789
      %962 = vmatmul.mubr.f32.gmra.mrb[0].mxu0 %v788
      %v963 = vpop.f32.mrb[0].mxu0
      %v964 = vadd.f32 0.0, %v963
      %v965 = vpop.f32.mrb[0].mxu0
      %966 = vmatprep.mubr.f32.mxu0 %v792
      %967 = vmatmul.mubr.f32.gmra.mrb[0].mxu0 %v791
      %v968 = vpop.f32.mrb[0].mxu0
      %v969 = vadd.f32 0.0, %v968
      %v970 = vpop.f32.mrb[0].mxu0
      %971 = vmatprep.mubr.f32.mxu0 %v795
      %972 = vmatmul.mubr.f32.gmra.mrb[0].mxu0 %v794
      %v973 = vpop.f32.mrb[0].mxu0
      %v974 = vadd.f32 0.0, %v973
      %v975 = vpop.f32.mrb[0].mxu0
      %976 = vmatprep.mubr.f32.mxu0 %v798
      %977 = vmatmul.mubr.f32.gmra.mrb[0].mxu0 %v797
      %v978 = vpop.f32.mrb[0].mxu0
      %v979 = vadd.f32 0.0, %v978
      %v980 = vpop.f32.mrb[0].mxu0
      %981 = vmatprep.mubr.f32.mxu0 %v801
      %982 = vmatmul.mubr.f32.gmra.mrb[0].mxu0 %v800
      %v983 = vpop.f32.mrb[0].mxu0
      %v984 = vadd.f32 0.0, %v983
      %v985 = vpop.f32.mrb[0].mxu0
      %986 = vmatprep.mubr.f32.mxu0 %v804
      %987 = vmatmul.mubr.f32.gmra.mrb[0].mxu0 %v803
      %v988 = vpop.f32.mrb[0].mxu0
      %v989 = vadd.f32 0.0, %v988
      %v990 = vpop.f32.mrb[0].mxu0
      %991 = vmatprep.mubr.f32.mxu0 %v807
      %992 = vmatmul.mubr.f32.gmra.mrb[0].mxu0 %v806
      %v993 = vpop.f32.mrb[0].mxu0
      %v994 = vadd.f32 0.0, %v993
      %v995 = vpop.f32.mrb[0].mxu0
      %996 = vmatprep.mubr.f32.mxu0 %v810
      %997 = vmatmul.mubr.f32.gmra.mrb[0].mxu0 %v809
      %v998 = vpop.f32.mrb[0].mxu0
      %v999 = vadd.f32 0.0, %v998
      %v1000 = vpop.f32.mrb[0].mxu0
      %1001 = vmatprep.mubr.f32.mxu0 %v813
      %1002 = vmatmul.mubr.f32.gmra.mrb[0].mxu0 %v812
      %v1003 = vpop.f32.mrb[0].mxu0
      %v1004 = vadd.f32 0.0, %v1003
      %v1005 = vpop.f32.mrb[0].mxu0
      %1006 = vmatprep.mubr.f32.mxu0 %v816
      %1007 = vmatmul.mubr.f32.gmra.mrb[0].mxu0 %v815
      %v1008 = vpop.f32.mrb[0].mxu0
      %v1009 = vadd.f32 0.0, %v1008
      %v1010 = vpop.f32.mrb[0].mxu0
      %1011 = vmatprep.mubr.f32.mxu0 %v819
      %1012 = vmatmul.mubr.f32.gmra.mrb[0].mxu0 %v818
      %v1013 = vpop.f32.mrb[0].mxu0
      %v1014 = vadd.f32 0.0, %v1013
      %v1015 = vpop.f32.mrb[0].mxu0
      %1016 = vmatprep.mubr.f32.mxu0 %v822
      %1017 = vmatmul.mubr.f32.gmra.mrb[0].mxu0 %v821
      %v1018 = vpop.f32.mrb[0].mxu0
      %v1019 = vadd.f32 0.0, %v1018
      %v1020 = vpop.f32.mrb[0].mxu0
      %1021 = vdwg.mxu0
      %1022 = vmatprep.subr.mxu0 0.0
      %1023 = vmatpush1.msra.mxu0 %v769
      %1024 = vmatprep.subr.mxu0 0.0
      %1025 = vmatpush1.msra.mxu0 %v770
      %1026 = vmatprep.subr.mxu0 0.0
      %1027 = vmatpush1.msra.mxu0 %v771
      %1028 = vmatprep.subr.mxu0 0.0
      %1029 = vmatpush1.msra.mxu0 %v772
      %1030 = vmatprep.subr.mxu0 0.0
      %1031 = vmatpush1.msra.mxu0 %v773
      %1032 = vmatprep.subr.mxu0 0.0
      %1033 = vmatpush1.msra.mxu0 %v774
      %1034 = vmatprep.subr.mxu0 0.0
      %1035 = vmatpush1.msra.mxu0 %v875
      %1036 = vmatprep.subr.mxu0 0.0
      %1037 = vmatpush1.msra.mxu0 0.0
      %1038 = vmatprep.subr.mxu0 0.0
      %1039 = vmatpush1.msra.mxu0 0.0
      %1040 = vmatprep.subr.mxu0 0.0
      %1041 = vmatpush1.msra.mxu0 0.0
      %1042 = vmatprep.subr.mxu0 0.0
      %1043 = vmatpush1.msra.mxu0 0.0
      %1044 = vmatprep.subr.mxu0 0.0
      %1045 = vmatpush1.msra.mxu0 0.0
      %1046 = vmatprep.subr.mxu0 0.0
      %1047 = vmatpush1.msra.mxu0 0.0
      %1048 = vmatprep.subr.mxu0 0.0
      %1049 = vmatpush1.msra.mxu0 0.0
      %1050 = vmatprep.subr.mxu0 0.0
      %1051 = vmatpush1.msra.mxu0 0.0
      %1052 = vmatprep.subr.mxu0 0.0
      %1053 = vmatpush1.msra.mxu0 0.0
      %1054 = vmatprep.subr.mxu0 0.0
      %1055 = vmatpush1.msra.mxu0 0.0
      %1056 = vmatprep.subr.mxu0 0.0
      %1057 = vmatpush1.msra.mxu0 0.0
      %1058 = vmatprep.subr.mxu0 0.0
      %1059 = vmatpush1.msra.mxu0 0.0
      %1060 = vmatprep.subr.mxu0 0.0
      %1061 = vmatpush1.msra.mxu0 0.0
      %1062 = vmatprep.subr.mxu0 0.0
      %1063 = vmatpush1.msra.mxu0 0.0
      %1064 = vmatprep.subr.mxu0 0.0
      %1065 = vmatpush1.msra.mxu0 0.0
      %1066 = vmatprep.subr.mxu0 0.0
      %1067 = vmatpush1.msra.mxu0 0.0
      %1068 = vmatprep.subr.mxu0 0.0
      %1069 = vmatpush1.msra.mxu0 0.0
      %1070 = vmatprep.subr.mxu0 0.0
      %1071 = vmatpush1.msra.mxu0 0.0
      %1072 = vmatprep.subr.mxu0 0.0
      %1073 = vmatpush1.msra.mxu0 0.0
      %1074 = vmatprep.subr.mxu0 0.0
      %1075 = vmatpush1.msra.mxu0 0.0
      %1076 = vmatprep.subr.mxu0 0.0
      %1077 = vmatpush1.msra.mxu0 0.0
      %1078 = vmatprep.subr.mxu0 0.0
      %1079 = vmatpush1.msra.mxu0 0.0
      %1080 = vmatprep.subr.mxu0 0.0
      %1081 = vmatpush1.msra.mxu0 0.0
      %1082 = vmatprep.subr.mxu0 0.0
      %1083 = vmatpush1.msra.mxu0 0.0
      %1084 = vmatprep.subr.mxu0 0.0
      %1085 = vmatpush1.msra.mxu0 0.0
      %1086 = vmatprep.mubr.f32.mxu0 0.0
      %1087 = vmatmul.mubr.f32.gmra.mrb[0].mxu0 %v826
      %v1088 = vpop.f32.mrb[0].mxu0
      %v1089 = vadd.f32 %v944, %v1088
      %v1090 = vpop.f32.mrb[0].mxu0
      %1091 = vmatprep.mubr.f32.mxu0 0.0
      %1092 = vmatmul.mubr.f32.gmra.mrb[0].mxu0 %v829
      %v1093 = vpop.f32.mrb[0].mxu0
      %v1094 = vadd.f32 %v949, %v1093
      %v1095 = vpop.f32.mrb[0].mxu0
      %1096 = vmatprep.mubr.f32.mxu0 0.0
      %1097 = vmatmul.mubr.f32.gmra.mrb[0].mxu0 %v832
      %v1098 = vpop.f32.mrb[0].mxu0
      %v1099 = vadd.f32 %v954, %v1098
      %v1100 = vpop.f32.mrb[0].mxu0
      %1101 = vmatprep.mubr.f32.mxu0 0.0
      %1102 = vmatmul.mubr.f32.gmra.mrb[0].mxu0 %v835
      %v1103 = vpop.f32.mrb[0].mxu0
      %v1104 = vadd.f32 %v959, %v1103
      %v1105 = vpop.f32.mrb[0].mxu0
      %1106 = vmatprep.mubr.f32.mxu0 0.0
      %1107 = vmatmul.mubr.f32.gmra.mrb[0].mxu0 %v838
      %v1108 = vpop.f32.mrb[0].mxu0
      %v1109 = vadd.f32 %v964, %v1108
      %v1110 = vpop.f32.mrb[0].mxu0
      %1111 = vmatprep.mubr.f32.mxu0 0.0
      %1112 = vmatmul.mubr.f32.gmra.mrb[0].mxu0 %v841
      %v1113 = vpop.f32.mrb[0].mxu0
      %v1114 = vadd.f32 %v969, %v1113
      %v1115 = vpop.f32.mrb[0].mxu0
      %1116 = vmatprep.mubr.f32.mxu0 0.0
      %1117 = vmatmul.mubr.f32.gmra.mrb[0].mxu0 %v844
      %v1118 = vpop.f32.mrb[0].mxu0
      %v1119 = vadd.f32 %v974, %v1118
      %v1120 = vpop.f32.mrb[0].mxu0
      %1121 = vmatprep.mubr.f32.mxu0 0.0
      %1122 = vmatmul.mubr.f32.gmra.mrb[0].mxu0 %v847
      %v1123 = vpop.f32.mrb[0].mxu0
      %v1124 = vadd.f32 %v979, %v1123
      %v1125 = vpop.f32.mrb[0].mxu0
      %1126 = vmatprep.mubr.f32.mxu0 0.0
      %1127 = vmatmul.mubr.f32.gmra.mrb[0].mxu0 %v850
      %v1128 = vpop.f32.mrb[0].mxu0
      %v1129 = vadd.f32 %v984, %v1128
      %v1130 = vpop.f32.mrb[0].mxu0
      %1131 = vmatprep.mubr.f32.mxu0 0.0
      %1132 = vmatmul.mubr.f32.gmra.mrb[0].mxu0 %v853
      %v1133 = vpop.f32.mrb[0].mxu0
      %v1134 = vadd.f32 %v989, %v1133
      %v1135 = vpop.f32.mrb[0].mxu0
      %1136 = vmatprep.mubr.f32.mxu0 0.0
      %1137 = vmatmul.mubr.f32.gmra.mrb[0].mxu0 %v856
      %v1138 = vpop.f32.mrb[0].mxu0
      %v1139 = vadd.f32 %v994, %v1138
      %v1140 = vpop.f32.mrb[0].mxu0
      %1141 = vmatprep.mubr.f32.mxu0 0.0
      %1142 = vmatmul.mubr.f32.gmra.mrb[0].mxu0 %v859
      %v1143 = vpop.f32.mrb[0].mxu0
      %v1144 = vadd.f32 %v999, %v1143
      %v1145 = vpop.f32.mrb[0].mxu0
      %1146 = vmatprep.mubr.f32.mxu0 0.0
      %1147 = vmatmul.mubr.f32.gmra.mrb[0].mxu0 %v862
      %v1148 = vpop.f32.mrb[0].mxu0
      %v1149 = vadd.f32 %v1004, %v1148
      %v1150 = vpop.f32.mrb[0].mxu0
      %1151 = vmatprep.mubr.f32.mxu0 0.0
      %1152 = vmatmul.mubr.f32.gmra.mrb[0].mxu0 %v865
      %v1153 = vpop.f32.mrb[0].mxu0
      %v1154 = vadd.f32 %v1009, %v1153
      %v1155 = vpop.f32.mrb[0].mxu0
      %1156 = vmatprep.mubr.f32.mxu0 0.0
      %1157 = vmatmul.mubr.f32.gmra.mrb[0].mxu0 %v868
      %v1158 = vpop.f32.mrb[0].mxu0
      %v1159 = vadd.f32 %v1014, %v1158
      %v1160 = vpop.f32.mrb[0].mxu0
      %1161 = vmatprep.mubr.f32.mxu0 0.0
      %1162 = vmatmul.mubr.f32.gmra.mrb[0].mxu0 %v871
      %v1163 = vpop.f32.mrb[0].mxu0
      %v1164 = vadd.f32 %v1019, %v1163
      %v1165 = vpop.f32.mrb[0].mxu0
      %1166 = vdwg.mxu0
      %v1167 = vpack.c.bf16 %v1094, %v1089
      %v1168 = vpack.c.bf16 %v1104, %v1099
      %v1169 = vpack.c.bf16 %v1114, %v1109
      %v1170 = vpack.c.bf16 %v1124, %v1119
      %v1171 = vpack.c.bf16 %v1134, %v1129
      %v1172 = vpack.c.bf16 %v1144, %v1139
      %v1173 = vpack.c.bf16 %v1154, %v1149
      %v1174 = vpack.c.bf16 %v1164, %v1159
      %v1183 = vunpack.c.l.b16 %v1167
      %v1184 = vunpack.c.h.b16 %v1167
      %v1185 = vunpack.c.l.b16 %v1168
      %v1186 = vunpack.c.h.b16 %v1168
      %v1187 = vunpack.c.l.b16 %v1169
      %v1188 = vunpack.c.h.b16 %v1169
      %v1189 = vunpack.c.l.b16 %v1170
      %v1190 = vunpack.c.h.b16 %v1170
      %v1191 = vunpack.c.l.b16 %v1171
      %v1192 = vunpack.c.h.b16 %v1171
      %v1193 = vunpack.c.l.b16 %v1172
      %v1194 = vunpack.c.h.b16 %v1172
      %v1195 = vunpack.c.l.b16 %v1173
      %v1196 = vunpack.c.h.b16 %v1173
      %v1197 = vunpack.c.l.b16 %v1174
      %v1198 = vunpack.c.h.b16 %v1174
      %v1199 = vpack.c.b16 %v1183, %v1183
      %v1200 = vpack.c.b16 %v1184, %v1184
      %v1201 = vpack.c.b16 %v1185, %v1185
      %v1202 = vpack.c.b16 %v1186, %v1186
      %v1203 = vpack.c.b16 %v1187, %v1187
      %v1204 = vpack.c.b16 %v1188, %v1188
      %v1205 = vpack.c.b16 %v1189, %v1189
      %v1206 = vpack.c.b16 %v1190, %v1190
      %v1207 = vpack.c.b16 %v1191, %v1191
      %v1208 = vpack.c.b16 %v1192, %v1192
      %v1209 = vpack.c.b16 %v1193, %v1193
      %v1210 = vpack.c.b16 %v1194, %v1194
      %v1211 = vpack.c.b16 %v1195, %v1195
      %v1212 = vpack.c.b16 %v1196, %v1196
      %v1213 = vpack.c.b16 %v1197, %v1197
      %v1214 = vpack.c.b16 %v1198, %v1198
      %vm1231 = vcmask 125952
      %1232 = vst.msk [vmem:[%s197] sm:$0xf] %vm1231, %v1199
      %1233 = vst.msk [vmem:[%s197 + $0x4] sm:$0xf] %vm1231, %v1200
      %1234 = vst.msk [vmem:[%s197 + $0x8] sm:$0xf] %vm1231, %v1201
      %1235 = vst.msk [vmem:[%s197 + $0xc] sm:$0xf] %vm1231, %v1202
      %1236 = vst.msk [vmem:[%s197 + $0x10] sm:$0xf] %vm1231, %v1203
      %1237 = vst.msk [vmem:[%s197 + $0x14] sm:$0xf] %vm1231, %v1204
      %1238 = vst.msk [vmem:[%s197 + $0x18] sm:$0xf] %vm1231, %v1205
      %1239 = vst.msk [vmem:[%s197 + $0x1c] sm:$0xf] %vm1231, %v1206
      %1240 = vst.msk [vmem:[%s197 + $0x20] sm:$0xf] %vm1231, %v1207
      %1241 = vst.msk [vmem:[%s197 + $0x24] sm:$0xf] %vm1231, %v1208
      %1242 = vst.msk [vmem:[%s197 + $0x28] sm:$0xf] %vm1231, %v1209
      %1243 = vst.msk [vmem:[%s197 + $0x2c] sm:$0xf] %vm1231, %v1210
      %1244 = vst.msk [vmem:[%s197 + $0x30] sm:$0xf] %vm1231, %v1211
      %1245 = vst.msk [vmem:[%s197 + $0x34] sm:$0xf] %vm1231, %v1212
      %1246 = vst.msk [vmem:[%s197 + $0x38] sm:$0xf] %vm1231, %v1213
      %vm1247 = vcmask 122880
      %1248 = vst.msk [vmem:[%s197 + $0x3c] sm:$0x1] %vm1247, %v1214
      %p1249 = scmp.lt.s32.totalorder %s15, 3
      %s1250 = scalar_select %p1249, %s15, 3
      %s1251 = smul.addr %s1250, 16
      %s1252 = smul.addr %s1251, 4
      %s1253 = scalar_lea.vmem %s4, %s1252
      // Predicated region
      $region37: #{autoprotonet_embedding.9} parent=35 // pred_check
        %p1254 = pneg %p122
      $region38: #{autoprotonet_embedding.9} parent=35 // pred_check_branch
        %1256 = sbr.rel (%p1254) target = $region40
      $region39: #{autoprotonet_embedding.9} parent=35 // pred_region
        _
      $region40: #{autoprotonet_embedding.9} parent=35 // pred_fallthru
        _
    $region36: #{autoprotonet_embedding.9} parent=5 // pred_fallthru
      _
    %p1257 = scmp.le.s32.totalorder 2, %s10
    // Predicated region
    $region41: #{autoprotonet_embedding.9} parent=5 // pred_check
      %p1258 = pneg %p1257
    $region42: #{autoprotonet_embedding.9} parent=5 // pred_check_branch
      %1260 = sbr.rel (%p1258) target = $region44
    $region43: #{autoprotonet_embedding.9} parent=5 // pred_region
      %s1261 = ssub.s32 %s10, 2
      // Predicated region
      $region45: #{autoprotonet_embedding.9} parent=43 // pred_check
        %p1262 = pneg %p128
      $region46: #{autoprotonet_embedding.9} parent=43 // pred_check_branch
        %1264 = sbr.rel (%p1262) target = $region48
      $region47: #{autoprotonet_embedding.9} parent=43 // pred_region
        %p1265 = scmp.lt.s32.totalorder %s16, 3
        %s1266 = scalar_select %p1265, %s16, 3
        %s1267 = smul.addr %s1266, 16
        %s1268 = smul.addr %s1267, 4
        %s1269 = scalar_lea.vmem %s4, %s1268
      $region48: #{autoprotonet_embedding.9} parent=43 // pred_fallthru
        _
    $region44: #{autoprotonet_embedding.9} parent=5 // pred_fallthru
      _
  $region6: #{autoprotonet_embedding.9} parent=0 // loop_footer
    %s14 = sadd.s32 1, %s10
  $region7: #{autoprotonet_embedding.9} parent=0 // loop_footer_branch
    %9 = sbr.rel target = $region3
  $region8: #{autoprotonet_embedding.9} parent=0 // loop_exit
    _

// kernel: autoprotonet_embedding.10
$region0: #{autoprotonet_embedding.10}
  #allocation0 [shape = 'u32[]', space=smem, size = 0x4, offset = 0x4, fixed_abs, tag = 'smem constant byte address 0x4 - core index']
  #allocation1 [shape = 'u32[144,128]{1,0:T(1,128)}', space=vmem, size = 0x12000, scoped, tag = 'internal scratch']
  %s0 = inlined_call_operand.vmem [shape: bf16[4,122,16], index: 0, kind: input, shape index: {}]
  %s1 = inlined_call_operand.vmem [shape: bf16[9,16,16], index: 1, kind: input, shape index: {}]
  %s2 = inlined_call_operand.vmem [shape: f32[1,100], index: 2, kind: input, shape index: {}]
  %s3 = inlined_call_operand.vmem [shape: f32[4,100,16], index: 3, kind: output, shape index: {0}]
  %s4 = inlined_call_operand.vmem [shape: f32[2,16], index: 4, kind: output, shape index: {1}]
  %5 = xla_tuple %s3, %s4
  %s6 = sld [smem:[#allocation0]]
  $region57: #{autoprotonet_embedding.10} parent=0
    _
  %s8 = ssub.s32 1, %s6
  %s9 = scalar_select 0, %s8, %s6
  loop: start=0, step=1, limit=6
  $region2: #{autoprotonet_embedding.10} parent=0 // loop_pre_header
    _
  $region3: #{autoprotonet_embedding.10} parent=0 // loop_header
    %s11 = sphi 0, %s15
    %p12 = scmp.ge.s32.totalorder %s11, 6
    %s21 = sphi 0, %s23
    %s24 = sphi 0, %s21
    %s25 = sphi 0, %s24
    %s41 = sphi 0, %s25
    %s45 = sphi 0, %s45
    %s47 = sphi 0, %s45
    %s48 = sphi 0, %s47
    %s62 = sphi 0, %s48
    %s66 = sphi 0, %s66
    %s68 = sphi 0, %s66
    %s69 = sphi 0, %s68
    %s83 = sphi 0, %s69
    %s89 = sphi 0, %s91
    %s92 = sphi 0, %s89
    %s93 = sphi 0, %s92
    %s109 = sphi 0, %s93
    %s113 = sphi 0, %s113
    %s115 = sphi 0, %s113
    %s116 = sphi 0, %s115
    %s130 = sphi 0, %s116
  $region4: #{autoprotonet_embedding.10} parent=0 // loop_header_branch
    %14 = sbr.rel (%p12) target = $region8
  $region5: #{autoprotonet_embedding.10} parent=0 // loop_body
    %s16 = ssub.s32 %s11, 1
    %s17 = ssub.s32 %s11, 2
    %s18 = sadd.s32 %s11, 1
    %s19 = ssub.s32 %s11, %s18
    %p20 = scmp.eq.s32.totalorder %s19, 0
    %s22 = sadd.s32 %s21, 1
    %s23 = scalar_select %p20, %s21, %s22
    %p26 = pneg %p20
    %p27 = scmp.eq.s32.totalorder %s11, 3
    %p28 = por %p26, %p27
    %p29 = scmp.ne.s32.totalorder %s21, %s24
    %p30 = scmp.eq.s32.totalorder %s11, 0
    %p31 = por %p29, %p30
    %p32 = scmp.ne.s32.totalorder %s21, %s24
    %p33 = scmp.eq.s32.totalorder %s16, 3
    %p34 = por %p32, %p33
    %p35 = scmp.ne.s32.totalorder %s24, %s25
    %p36 = scmp.eq.s32.totalorder %s16, 0
    %p37 = por %p35, %p36
    %p38 = scmp.ne.s32.totalorder %s24, %s25
    %p39 = scmp.eq.s32.totalorder %s17, 3
    %p40 = por %p38, %p39
    %p42 = scmp.ne.s32.totalorder %s25, %s41
    %p43 = scmp.eq.s32.totalorder %s17, 0
    %p44 = por %p42, %p43
    %s46 = sadd.s32 %s45, 1
    %p49 = scmp.eq.s32.totalorder %s11, 3
    %p50 = scmp.ne.s32.totalorder %s45, %s47
    %p51 = scmp.eq.s32.totalorder %s11, 0
    %p52 = por %p50, %p51
    %p53 = scmp.ne.s32.totalorder %s45, %s47
    %p54 = scmp.eq.s32.totalorder %s16, 3
    %p55 = por %p53, %p54
    %p56 = scmp.ne.s32.totalorder %s47, %s48
    %p57 = scmp.eq.s32.totalorder %s16, 0
    %p58 = por %p56, %p57
    %p59 = scmp.ne.s32.totalorder %s47, %s48
    %p60 = scmp.eq.s32.totalorder %s17, 3
    %p61 = por %p59, %p60
    %p63 = scmp.ne.s32.totalorder %s48, %s62
    %p64 = scmp.eq.s32.totalorder %s17, 0
    %p65 = por %p63, %p64
    %s67 = sadd.s32 %s66, 1
    %p70 = scmp.eq.s32.totalorder %s11, 3
    %p71 = scmp.ne.s32.totalorder %s66, %s68
    %p72 = scmp.eq.s32.totalorder %s11, 0
    %p73 = por %p71, %p72
    %p74 = scmp.ne.s32.totalorder %s66, %s68
    %p75 = scmp.eq.s32.totalorder %s16, 3
    %p76 = por %p74, %p75
    %p77 = scmp.ne.s32.totalorder %s68, %s69
    %p78 = scmp.eq.s32.totalorder %s16, 0
    %p79 = por %p77, %p78
    %p80 = scmp.ne.s32.totalorder %s68, %s69
    %p81 = scmp.eq.s32.totalorder %s17, 3
    %p82 = por %p80, %p81
    %p84 = scmp.ne.s32.totalorder %s69, %s83
    %p85 = scmp.eq.s32.totalorder %s17, 0
    %p86 = por %p84, %p85
    %s87 = ssub.s32 %s11, %s18
    %p88 = scmp.eq.s32.totalorder %s87, 0
    %s90 = sadd.s32 %s89, 1
    %s91 = scalar_select %p88, %s89, %s90
    %p94 = pneg %p88
    %p95 = scmp.eq.s32.totalorder %s11, 3
    %p96 = por %p94, %p95
    %p97 = scmp.ne.s32.totalorder %s89, %s92
    %p98 = scmp.eq.s32.totalorder %s11, 0
    %p99 = por %p97, %p98
    %p100 = scmp.ne.s32.totalorder %s89, %s92
    %p101 = scmp.eq.s32.totalorder %s16, 3
    %p102 = por %p100, %p101
    %p103 = scmp.ne.s32.totalorder %s92, %s93
    %p104 = scmp.eq.s32.totalorder %s16, 0
    %p105 = por %p103, %p104
    %p106 = scmp.ne.s32.totalorder %s92, %s93
    %p107 = scmp.eq.s32.totalorder %s17, 3
    %p108 = por %p106, %p107
    %p110 = scmp.ne.s32.totalorder %s93, %s109
    %p111 = scmp.eq.s32.totalorder %s17, 0
    %p112 = por %p110, %p111
    %s114 = sadd.s32 %s113, 1
    %p117 = scmp.eq.s32.totalorder %s11, 3
    %p118 = scmp.ne.s32.totalorder %s113, %s115
    %p119 = scmp.eq.s32.totalorder %s11, 0
    %p120 = por %p118, %p119
    %p121 = scmp.ne.s32.totalorder %s113, %s115
    %p122 = scmp.eq.s32.totalorder %s16, 3
    %p123 = por %p121, %p122
    %p124 = scmp.ne.s32.totalorder %s115, %s116
    %p125 = scmp.eq.s32.totalorder %s16, 0
    %p126 = por %p124, %p125
    %p127 = scmp.ne.s32.totalorder %s115, %s116
    %p128 = scmp.eq.s32.totalorder %s17, 3
    %p129 = por %p127, %p128
    %p131 = scmp.ne.s32.totalorder %s116, %s130
    %p132 = scmp.eq.s32.totalorder %s17, 0
    %p133 = por %p131, %p132
    %p134 = scmp.le.s32.totalorder 1, %s11
    %p135 = scmp.lt.s32.totalorder %s11, 5
    %p136 = pnand %p134, %p135
    %p137 = pneg %p136
    // Predicated region
    $region9: #{autoprotonet_embedding.10} parent=5 // pred_check
      _
    $region10: #{autoprotonet_embedding.10} parent=5 // pred_check_branch
      %139 = sbr.rel (%p136) target = $region12
    $region11: #{autoprotonet_embedding.10} parent=5 // pred_region
      %s140 = ssub.s32 %s11, 1
      // Predicated region
      $region13: #{autoprotonet_embedding.10} parent=11 // pred_check
        %p141 = pneg %p58
      $region14: #{autoprotonet_embedding.10} parent=11 // pred_check_branch
        %143 = sbr.rel (%p141) target = $region16
      $region15: #{autoprotonet_embedding.10} parent=11 // pred_region
        _
      $region16: #{autoprotonet_embedding.10} parent=11 // pred_fallthru
        _
      // Predicated region
      $region17: #{autoprotonet_embedding.10} parent=11 // pred_check
        %p144 = pneg %p79
      $region18: #{autoprotonet_embedding.10} parent=11 // pred_check_branch
        %146 = sbr.rel (%p144) target = $region20
      $region19: #{autoprotonet_embedding.10} parent=11 // pred_region
        _
      $region20: #{autoprotonet_embedding.10} parent=11 // pred_fallthru
        _
    $region12: #{autoprotonet_embedding.10} parent=5 // pred_fallthru
      _
    %p147 = scmp.lt.s32.totalorder %s11, 4
    // Predicated region
    $region21: #{autoprotonet_embedding.10} parent=5 // pred_check
      %p148 = pneg %p147
    $region22: #{autoprotonet_embedding.10} parent=5 // pred_check_branch
      %150 = sbr.rel (%p148) target = $region24
    $region23: #{autoprotonet_embedding.10} parent=5 // pred_region
      // Predicated region
      $region25: #{autoprotonet_embedding.10} parent=23 // pred_check
        %p151 = pneg %p31
      $region26: #{autoprotonet_embedding.10} parent=23 // pred_check_branch
        %153 = sbr.rel (%p151) target = $region28
      $region27: #{autoprotonet_embedding.10} parent=23 // pred_region
        %p154 = scmp.lt.s32.totalorder %s11, 3
        %s155 = scalar_select %p154, %s11, 3
        %s156 = smul.addr %s155, 16
        %s157 = smul.addr %s156, 4
        %s158 = scalar_lea.vmem %s0, %s157
      $region28: #{autoprotonet_embedding.10} parent=23 // pred_fallthru
        _
    $region24: #{autoprotonet_embedding.10} parent=5 // pred_fallthru
      _
    %p159 = scmp.le.s32.totalorder 1, %s11
    %p160 = scmp.lt.s32.totalorder %s11, 5
    %p161 = pnand %p159, %p160
    %p162 = pneg %p161
    // Predicated region
    $region29: #{autoprotonet_embedding.10} parent=5 // pred_check
      _
    $region30: #{autoprotonet_embedding.10} parent=5 // pred_check_branch
      %164 = sbr.rel (%p161) target = $region32
    $region31: #{autoprotonet_embedding.10} parent=5 // pred_region
      %s165 = ssub.s32 %s11, 1
      %p166 = scmp.lt.s32.totalorder %s16, 3
      %s167 = scalar_select %p166, %s16, 3
      %s168 = smul.addr %s167, 16
      %s169 = smul.addr %s168, 4
      %s170 = scalar_lea.vmem %s0, %s169
      %p171 = pneg %p37
      %p172 = pneg %p34
      %p173 = pneg %p58
      %p174 = pneg %p55
      %p175 = pneg %p79
      %p176 = pneg %p76
      %p177 = pneg %p105
      %p178 = pneg %p102
      %p179 = scmp.lt.s32.totalorder %s16, 3
      %s180 = scalar_select %p179, %s16, 3
      %s181 = smul.addr %s180, 13
      %s182 = smul.addr %s181, 8
      %s183 = scalar_lea.vmem %s3, %s182
      %p184 = pneg %p126
      %p185 = pneg %p123
      %p186 = scmp.lt.s32.totalorder %s16, 3
      %s187 = scalar_select %p186, %s16, 3
      %s188 = smul.addr %s187, 16
      %s189 = smul.addr %s188, 4
      %s190 = scalar_lea.vmem %s0, %s189
      %p191 = scmp.lt.s32.totalorder %s16, 3
      %s192 = scalar_select %p191, %s16, 3
      %s193 = smul.addr %s192, 13
      %s194 = smul.addr %s193, 8
      %s195 = scalar_lea.vmem %s3, %s194
      %v197 = vld [vmem:[%s190] sm:$0xf]
      %v198 = vld [vmem:[%s190 + $0x4] sm:$0xf]
      %v199 = vld [vmem:[%s190 + $0x8] sm:$0xf]
      %v200 = vld [vmem:[%s190 + $0xc] sm:$0xf]
      %v201 = vld [vmem:[%s190 + $0x10] sm:$0xf]
      %v202 = vld [vmem:[%s190 + $0x14] sm:$0xf]
      %v203 = vld [vmem:[%s190 + $0x18] sm:$0xf]
      %v204 = vld [vmem:[%s190 + $0x1c] sm:$0xf]
      %v205 = vld [vmem:[%s190 + $0x20] sm:$0xf]
      %v206 = vld [vmem:[%s190 + $0x24] sm:$0xf]
      %v207 = vld [vmem:[%s190 + $0x28] sm:$0xf]
      %v208 = vld [vmem:[%s190 + $0x2c] sm:$0xf]
      %v209 = vld [vmem:[%s190 + $0x30] sm:$0xf]
      %v210 = vld [vmem:[%s190 + $0x34] sm:$0xf]
      %v211 = vld [vmem:[%s190 + $0x38] sm:$0xf]
      %v212 = vld [vmem:[%s190 + $0x3c] sm:$0x1]
      %v213 = vld [vmem:[%s1] sm:$0xf]
      %v214 = vld [vmem:[%s1 + $0x4] sm:$0xf]
      %s215 = scalar_lea.vmem %s1, 8
      %v216 = vld [vmem:[%s215] sm:$0xf]
      %v217 = vld [vmem:[%s215 + $0x4] sm:$0xf]
      %v231 = vunpack.c.l.b16 %v197
      %v232 = vunpack.c.l.b16 %v198
      %v233 = vunpack.c.l.b16 %v199
      %v234 = vunpack.c.l.b16 %v200
      %v235 = vunpack.c.l.b16 %v201
      %v236 = vunpack.c.l.b16 %v202
      %v237 = vunpack.c.l.b16 %v203
      %v238 = vunpack.c.l.b16 %v204
      %v239 = vunpack.c.l.b16 %v205
      %v240 = vunpack.c.l.b16 %v206
      %v241 = vunpack.c.l.b16 %v207
      %v242 = vunpack.c.l.b16 %v208
      %v243 = vunpack.c.l.b16 %v209
      %v244 = vpack.c.b16 %v232, %v231
      %v245 = vpack.c.b16 %v234, %v233
      %v246 = vpack.c.b16 %v236, %v235
      %v247 = vpack.c.b16 %v238, %v237
      %v248 = vpack.c.b16 %v240, %v239
      %v249 = vpack.c.b16 %v242, %v241
      %v250 = vpack.c.b16 %v243, %v243
      %vm251 = vsmask.f32 7424
      %v253 = vshrl.u32 %v244, 16
      %v255 = vshll.u32 %v244, 16
      %v257 = vrot.slane %v255, 1
      %v258 = vor.u32 %v253, %v257
      %v260 = vshll.u32 %v245, 16
      %v262 = vrot.slane %v260, 1
      %v263 = vsel %vm251, %v258, %v262
      %v264 = vshrl.u32 %v245, 16
      %v266 = vor.u32 %v264, %v262
      %v268 = vshll.u32 %v246, 16
      %v270 = vrot.slane %v268, 1
      %v271 = vsel %vm251, %v266, %v270
      %v272 = vshrl.u32 %v246, 16
      %v274 = vor.u32 %v272, %v270
      %v276 = vshll.u32 %v247, 16
      %v278 = vrot.slane %v276, 1
      %v279 = vsel %vm251, %v274, %v278
      %v280 = vshrl.u32 %v247, 16
      %v282 = vor.u32 %v280, %v278
      %v284 = vshll.u32 %v248, 16
      %v286 = vrot.slane %v284, 1
      %v287 = vsel %vm251, %v282, %v286
      %v288 = vshrl.u32 %v248, 16
      %v290 = vor.u32 %v288, %v286
      %v292 = vshll.u32 %v249, 16
      %v294 = vrot.slane %v292, 1
      %v295 = vsel %vm251, %v290, %v294
      %v296 = vshrl.u32 %v249, 16
      %v298 = vor.u32 %v296, %v294
      %v300 = vshll.u32 %v250, 16
      %v302 = vrot.slane %v300, 1
      %v303 = vsel %vm251, %v298, %v302
      %v304 = vshrl.u32 %v250, 16
      %v306 = vor.u32 %v304, %v302
      %v309 = vunpack.c.l.b16 %v216
      %v310 = vunpack.c.l.b16 %v217
      %v311 = vpack.c.b16 %v310, %v309
      %vm313 = vcmask 130048
      %v315 = vsel %vm313, %v263, 0
      %v318 = vsel %vm313, %v271, 0
      %v321 = vsel %vm313, %v279, 0
      %v324 = vsel %vm313, %v287, 0
      %v327 = vsel %vm313, %v295, 0
      %v330 = vsel %vm313, %v303, 0
      %v333 = vsel %vm313, %v306, 0
      %335 = vmatprep.subr.bf16.mxu0 0
      %336 = vmatpush1.bf16.msra.mxu0 %v311
      %337 = vmatprep.subr.bf16.mxu0 0
      %338 = vmatpush1.bf16.msra.mxu0 0
      %339 = vmatprep.subr.bf16.mxu0 0
      %340 = vmatpush1.bf16.msra.mxu0 0
      %341 = vmatprep.subr.bf16.mxu0 0
      %342 = vmatpush1.bf16.msra.mxu0 0
      %343 = vmatprep.subr.bf16.mxu0 0
      %344 = vmatpush1.bf16.msra.mxu0 0
      %345 = vmatprep.subr.bf16.mxu0 0
      %346 = vmatpush1.bf16.msra.mxu0 0
      %347 = vmatprep.subr.bf16.mxu0 0
      %348 = vmatpush1.bf16.msra.mxu0 0
      %349 = vmatprep.subr.bf16.mxu0 0
      %350 = vmatpush1.bf16.msra.mxu0 0
      %351 = vmatprep.subr.bf16.mxu0 0
      %352 = vmatpush1.bf16.msra.mxu0 0
      %353 = vmatprep.subr.bf16.mxu0 0
      %354 = vmatpush1.bf16.msra.mxu0 0
      %355 = vmatprep.subr.bf16.mxu0 0
      %356 = vmatpush1.bf16.msra.mxu0 0
      %357 = vmatprep.subr.bf16.mxu0 0
      %358 = vmatpush1.bf16.msra.mxu0 0
      %359 = vmatprep.subr.bf16.mxu0 0
      %360 = vmatpush1.bf16.msra.mxu0 0
      %361 = vmatprep.subr.bf16.mxu0 0
      %362 = vmatpush1.bf16.msra.mxu0 0
      %363 = vmatprep.subr.bf16.mxu0 0
      %364 = vmatpush1.bf16.msra.mxu0 0
      %365 = vmatprep.subr.bf16.mxu0 0
      %366 = vmatpush1.bf16.msra.mxu0 0
      %367 = vmatprep.mubr.bf16.mxu0 0
      %368 = vmatmul.mubr.bf16.gmra.mrb[0].mxu0 %v315
      %v369 = vpop.f32.mrb[0].mxu0
      %v370 = vadd.f32 0.0, %v369
      %v371 = vpop.f32.mrb[0].mxu0
      %v372 = vpop.f32.mrb[0].mxu0
      %v373 = vadd.f32 0.0, %v372
      %v374 = vpop.f32.mrb[0].mxu0
      %375 = vmatprep.mubr.bf16.mxu0 0
      %376 = vmatmul.mubr.bf16.gmra.mrb[0].mxu0 %v318
      %v377 = vpop.f32.mrb[0].mxu0
      %v378 = vadd.f32 0.0, %v377
      %v379 = vpop.f32.mrb[0].mxu0
      %v380 = vpop.f32.mrb[0].mxu0
      %v381 = vadd.f32 0.0, %v380
      %v382 = vpop.f32.mrb[0].mxu0
      %383 = vmatprep.mubr.bf16.mxu0 0
      %384 = vmatmul.mubr.bf16.gmra.mrb[0].mxu0 %v321
      %v385 = vpop.f32.mrb[0].mxu0
      %v386 = vadd.f32 0.0, %v385
      %v387 = vpop.f32.mrb[0].mxu0
      %v388 = vpop.f32.mrb[0].mxu0
      %v389 = vadd.f32 0.0, %v388
      %v390 = vpop.f32.mrb[0].mxu0
      %391 = vmatprep.mubr.bf16.mxu0 0
      %392 = vmatmul.mubr.bf16.gmra.mrb[0].mxu0 %v324
      %v393 = vpop.f32.mrb[0].mxu0
      %v394 = vadd.f32 0.0, %v393
      %v395 = vpop.f32.mrb[0].mxu0
      %v396 = vpop.f32.mrb[0].mxu0
      %v397 = vadd.f32 0.0, %v396
      %v398 = vpop.f32.mrb[0].mxu0
      %399 = vmatprep.mubr.bf16.mxu0 0
      %400 = vmatmul.mubr.bf16.gmra.mrb[0].mxu0 %v327
      %v401 = vpop.f32.mrb[0].mxu0
      %v402 = vadd.f32 0.0, %v401
      %v403 = vpop.f32.mrb[0].mxu0
      %v404 = vpop.f32.mrb[0].mxu0
      %v405 = vadd.f32 0.0, %v404
      %v406 = vpop.f32.mrb[0].mxu0
      %407 = vmatprep.mubr.bf16.mxu0 0
      %408 = vmatmul.mubr.bf16.gmra.mrb[0].mxu0 %v330
      %v409 = vpop.f32.mrb[0].mxu0
      %v410 = vadd.f32 0.0, %v409
      %v411 = vpop.f32.mrb[0].mxu0
      %v412 = vpop.f32.mrb[0].mxu0
      %v413 = vadd.f32 0.0, %v412
      %v414 = vpop.f32.mrb[0].mxu0
      %415 = vmatprep.mubr.bf16.mxu0 0
      %416 = vmatmul.mubr.bf16.gmra.mrb[0].mxu0 %v333
      %v417 = vpop.f32.mrb[0].mxu0
      %v418 = vadd.f32 0.0, %v417
      %v419 = vpop.f32.mrb[0].mxu0
      %v420 = vpop.f32.mrb[0].mxu0
      %v421 = vpop.f32.mrb[0].mxu0
      %422 = vdwg.mxu0
      %v425 = vunpack.c.l.b16 %v213
      %v426 = vunpack.c.l.b16 %v214
      %v427 = vpack.c.b16 %v426, %v425
      %v429 = vsel %vm313, %v244, 0
      %v431 = vsel %vm313, %v245, 0
      %v433 = vsel %vm313, %v246, 0
      %v435 = vsel %vm313, %v247, 0
      %v437 = vsel %vm313, %v248, 0
      %v439 = vsel %vm313, %v249, 0
      %v441 = vsel %vm313, %v250, 0
      %443 = vmatprep.subr.bf16.mxu0 0
      %444 = vmatpush1.bf16.msra.mxu0 %v427
      %445 = vmatprep.subr.bf16.mxu0 0
      %446 = vmatpush1.bf16.msra.mxu0 0
      %447 = vmatprep.subr.bf16.mxu0 0
      %448 = vmatpush1.bf16.msra.mxu0 0
      %449 = vmatprep.subr.bf16.mxu0 0
      %450 = vmatpush1.bf16.msra.mxu0 0
      %451 = vmatprep.subr.bf16.mxu0 0
      %452 = vmatpush1.bf16.msra.mxu0 0
      %453 = vmatprep.subr.bf16.mxu0 0
      %454 = vmatpush1.bf16.msra.mxu0 0
      %455 = vmatprep.subr.bf16.mxu0 0
      %456 = vmatpush1.bf16.msra.mxu0 0
      %457 = vmatprep.subr.bf16.mxu0 0
      %458 = vmatpush1.bf16.msra.mxu0 0
      %459 = vmatprep.subr.bf16.mxu0 0
      %460 = vmatpush1.bf16.msra.mxu0 0
      %461 = vmatprep.subr.bf16.mxu0 0
      %462 = vmatpush1.bf16.msra.mxu0 0
      %463 = vmatprep.subr.bf16.mxu0 0
      %464 = vmatpush1.bf16.msra.mxu0 0
      %465 = vmatprep.subr.bf16.mxu0 0
      %466 = vmatpush1.bf16.msra.mxu0 0
      %467 = vmatprep.subr.bf16.mxu0 0
      %468 = vmatpush1.bf16.msra.mxu0 0
      %469 = vmatprep.subr.bf16.mxu0 0
      %470 = vmatpush1.bf16.msra.mxu0 0
      %471 = vmatprep.subr.bf16.mxu0 0
      %472 = vmatpush1.bf16.msra.mxu0 0
      %473 = vmatprep.subr.bf16.mxu0 0
      %474 = vmatpush1.bf16.msra.mxu0 0
      %475 = vmatprep.mubr.bf16.mxu0 0
      %476 = vmatmul.mubr.bf16.gmra.mrb[0].mxu0 %v429
      %v477 = vpop.f32.mrb[0].mxu0
      %v478 = vadd.f32 %v370, %v477
      %v479 = vpop.f32.mrb[0].mxu0
      %v480 = vpop.f32.mrb[0].mxu0
      %v481 = vadd.f32 %v373, %v480
      %v482 = vpop.f32.mrb[0].mxu0
      %483 = vmatprep.mubr.bf16.mxu0 0
      %484 = vmatmul.mubr.bf16.gmra.mrb[0].mxu0 %v431
      %v485 = vpop.f32.mrb[0].mxu0
      %v486 = vadd.f32 %v378, %v485
      %v487 = vpop.f32.mrb[0].mxu0
      %v488 = vpop.f32.mrb[0].mxu0
      %v489 = vadd.f32 %v381, %v488
      %v490 = vpop.f32.mrb[0].mxu0
      %491 = vmatprep.mubr.bf16.mxu0 0
      %492 = vmatmul.mubr.bf16.gmra.mrb[0].mxu0 %v433
      %v493 = vpop.f32.mrb[0].mxu0
      %v494 = vadd.f32 %v386, %v493
      %v495 = vpop.f32.mrb[0].mxu0
      %v496 = vpop.f32.mrb[0].mxu0
      %v497 = vadd.f32 %v389, %v496
      %v498 = vpop.f32.mrb[0].mxu0
      %499 = vmatprep.mubr.bf16.mxu0 0
      %500 = vmatmul.mubr.bf16.gmra.mrb[0].mxu0 %v435
      %v501 = vpop.f32.mrb[0].mxu0
      %v502 = vadd.f32 %v394, %v501
      %v503 = vpop.f32.mrb[0].mxu0
      %v504 = vpop.f32.mrb[0].mxu0
      %v505 = vadd.f32 %v397, %v504
      %v506 = vpop.f32.mrb[0].mxu0
      %507 = vmatprep.mubr.bf16.mxu0 0
      %508 = vmatmul.mubr.bf16.gmra.mrb[0].mxu0 %v437
      %v509 = vpop.f32.mrb[0].mxu0
      %v510 = vadd.f32 %v402, %v509
      %v511 = vpop.f32.mrb[0].mxu0
      %v512 = vpop.f32.mrb[0].mxu0
      %v513 = vadd.f32 %v405, %v512
      %v514 = vpop.f32.mrb[0].mxu0
      %515 = vmatprep.mubr.bf16.mxu0 0
      %516 = vmatmul.mubr.bf16.gmra.mrb[0].mxu0 %v439
      %v517 = vpop.f32.mrb[0].mxu0
      %v518 = vadd.f32 %v410, %v517
      %v519 = vpop.f32.mrb[0].mxu0
      %v520 = vpop.f32.mrb[0].mxu0
      %v521 = vadd.f32 %v413, %v520
      %v522 = vpop.f32.mrb[0].mxu0
      %523 = vmatprep.mubr.bf16.mxu0 0
      %524 = vmatmul.mubr.bf16.gmra.mrb[0].mxu0 %v441
      %v525 = vpop.f32.mrb[0].mxu0
      %v526 = vadd.f32 %v418, %v525
      %v527 = vpop.f32.mrb[0].mxu0
      %v528 = vpop.f32.mrb[0].mxu0
      %v529 = vpop.f32.mrb[0].mxu0
      %530 = vdwg.mxu0
      %s531 = scalar_lea.vmem %s1, 16
      %v532 = vld [vmem:[%s531] sm:$0xf]
      %v533 = vld [vmem:[%s531 + $0x4] sm:$0xf]
      %vm534 = vcmask 1046528
      %v535 = vrot.slane %v244, 1
      %v536 = vrot.slane %v245, 1
      %v537 = vsel %vm534, %v535, %v536
      %v538 = vrot.slane %v246, 1
      %v539 = vsel %vm534, %v536, %v538
      %v540 = vrot.slane %v247, 1
      %v541 = vsel %vm534, %v538, %v540
      %v542 = vrot.slane %v248, 1
      %v543 = vsel %vm534, %v540, %v542
      %v544 = vrot.slane %v249, 1
      %v545 = vsel %vm534, %v542, %v544
      %v546 = vrot.slane %v250, 1
      %v547 = vsel %vm534, %v544, %v546
      %v550 = vunpack.c.l.b16 %v532
      %v551 = vunpack.c.l.b16 %v533
      %v552 = vpack.c.b16 %v551, %v550
      %v555 = vsel %vm313, %v537, 0
      %v558 = vsel %vm313, %v539, 0
      %v561 = vsel %vm313, %v541, 0
      %v564 = vsel %vm313, %v543, 0
      %v567 = vsel %vm313, %v545, 0
      %v570 = vsel %vm313, %v547, 0
      %v573 = vsel %vm313, %v546, 0
      %575 = vmatprep.subr.bf16.mxu0 0
      %576 = vmatpush1.bf16.msra.mxu0 %v552
      %577 = vmatprep.subr.bf16.mxu0 0
      %578 = vmatpush1.bf16.msra.mxu0 0
      %579 = vmatprep.subr.bf16.mxu0 0
      %580 = vmatpush1.bf16.msra.mxu0 0
      %581 = vmatprep.subr.bf16.mxu0 0
      %582 = vmatpush1.bf16.msra.mxu0 0
      %583 = vmatprep.subr.bf16.mxu0 0
      %584 = vmatpush1.bf16.msra.mxu0 0
      %585 = vmatprep.subr.bf16.mxu0 0
      %586 = vmatpush1.bf16.msra.mxu0 0
      %587 = vmatprep.subr.bf16.mxu0 0
      %588 = vmatpush1.bf16.msra.mxu0 0
      %589 = vmatprep.subr.bf16.mxu0 0
      %590 = vmatpush1.bf16.msra.mxu0 0
      %591 = vmatprep.subr.bf16.mxu0 0
      %592 = vmatpush1.bf16.msra.mxu0 0
      %593 = vmatprep.subr.bf16.mxu0 0
      %594 = vmatpush1.bf16.msra.mxu0 0
      %595 = vmatprep.subr.bf16.mxu0 0
      %596 = vmatpush1.bf16.msra.mxu0 0
      %597 = vmatprep.subr.bf16.mxu0 0
      %598 = vmatpush1.bf16.msra.mxu0 0
      %599 = vmatprep.subr.bf16.mxu0 0
      %600 = vmatpush1.bf16.msra.mxu0 0
      %601 = vmatprep.subr.bf16.mxu0 0
      %602 = vmatpush1.bf16.msra.mxu0 0
      %603 = vmatprep.subr.bf16.mxu0 0
      %604 = vmatpush1.bf16.msra.mxu0 0
      %605 = vmatprep.subr.bf16.mxu0 0
      %606 = vmatpush1.bf16.msra.mxu0 0
      %607 = vmatprep.mubr.bf16.mxu0 0
      %608 = vmatmul.mubr.bf16.gmra.mrb[0].mxu0 %v555
      %v609 = vpop.f32.mrb[0].mxu0
      %v610 = vadd.f32 0.0, %v609
      %v611 = vpop.f32.mrb[0].mxu0
      %v612 = vpop.f32.mrb[0].mxu0
      %v613 = vadd.f32 0.0, %v612
      %v614 = vpop.f32.mrb[0].mxu0
      %615 = vmatprep.mubr.bf16.mxu0 0
      %616 = vmatmul.mubr.bf16.gmra.mrb[0].mxu0 %v558
      %v617 = vpop.f32.mrb[0].mxu0
      %v618 = vadd.f32 0.0, %v617
      %v619 = vpop.f32.mrb[0].mxu0
      %v620 = vpop.f32.mrb[0].mxu0
      %v621 = vadd.f32 0.0, %v620
      %v622 = vpop.f32.mrb[0].mxu0
      %623 = vmatprep.mubr.bf16.mxu0 0
      %624 = vmatmul.mubr.bf16.gmra.mrb[0].mxu0 %v561
      %v625 = vpop.f32.mrb[0].mxu0
      %v626 = vadd.f32 0.0, %v625
      %v627 = vpop.f32.mrb[0].mxu0
      %v628 = vpop.f32.mrb[0].mxu0
      %v629 = vadd.f32 0.0, %v628
      %v630 = vpop.f32.mrb[0].mxu0
      %631 = vmatprep.mubr.bf16.mxu0 0
      %632 = vmatmul.mubr.bf16.gmra.mrb[0].mxu0 %v564
      %v633 = vpop.f32.mrb[0].mxu0
      %v634 = vadd.f32 0.0, %v633
      %v635 = vpop.f32.mrb[0].mxu0
      %v636 = vpop.f32.mrb[0].mxu0
      %v637 = vadd.f32 0.0, %v636
      %v638 = vpop.f32.mrb[0].mxu0
      %639 = vmatprep.mubr.bf16.mxu0 0
      %640 = vmatmul.mubr.bf16.gmra.mrb[0].mxu0 %v567
      %v641 = vpop.f32.mrb[0].mxu0
      %v642 = vadd.f32 0.0, %v641
      %v643 = vpop.f32.mrb[0].mxu0
      %v644 = vpop.f32.mrb[0].mxu0
      %v645 = vadd.f32 0.0, %v644
      %v646 = vpop.f32.mrb[0].mxu0
      %647 = vmatprep.mubr.bf16.mxu0 0
      %648 = vmatmul.mubr.bf16.gmra.mrb[0].mxu0 %v570
      %v649 = vpop.f32.mrb[0].mxu0
      %v650 = vadd.f32 0.0, %v649
      %v651 = vpop.f32.mrb[0].mxu0
      %v652 = vpop.f32.mrb[0].mxu0
      %v653 = vadd.f32 0.0, %v652
      %v654 = vpop.f32.mrb[0].mxu0
      %655 = vmatprep.mubr.bf16.mxu0 0
      %656 = vmatmul.mubr.bf16.gmra.mrb[0].mxu0 %v573
      %v657 = vpop.f32.mrb[0].mxu0
      %v658 = vadd.f32 0.0, %v657
      %v659 = vpop.f32.mrb[0].mxu0
      %v660 = vpop.f32.mrb[0].mxu0
      %v661 = vpop.f32.mrb[0].mxu0
      %662 = vdwg.mxu0
      %v663 = vadd.f32 %v478, %v610
      %v664 = vadd.f32 %v481, %v613
      %v665 = vadd.f32 %v486, %v618
      %v666 = vadd.f32 %v489, %v621
      %v667 = vadd.f32 %v494, %v626
      %v668 = vadd.f32 %v497, %v629
      %v669 = vadd.f32 %v502, %v634
      %v670 = vadd.f32 %v505, %v637
      %v671 = vadd.f32 %v510, %v642
      %v672 = vadd.f32 %v513, %v645
      %v673 = vadd.f32 %v518, %v650
      %v674 = vadd.f32 %v521, %v653
      %v675 = vadd.f32 %v526, %v658
      %s676 = scalar_lea.vmem %s1, 24
      %v677 = vld [vmem:[%s676] sm:$0xf]
      %v678 = vld [vmem:[%s676 + $0x4] sm:$0xf]
      %v680 = vunpack.c.l.b16 %v210
      %v681 = vpack.c.b16 %v233, %v232
      %v682 = vpack.c.b16 %v235, %v234
      %v683 = vpack.c.b16 %v237, %v236
      %v684 = vpack.c.b16 %v239, %v238
      %v685 = vpack.c.b16 %v241, %v240
      %v686 = vpack.c.b16 %v243, %v242
      %v687 = vpack.c.b16 %v680, %v680
      %v688 = vrot.slane %v681, 1
      %v689 = vrot.slane %v682, 1
      %v690 = vsel %vm534, %v688, %v689
      %v691 = vrot.slane %v683, 1
      %v692 = vsel %vm534, %v689, %v691
      %v693 = vrot.slane %v684, 1
      %v694 = vsel %vm534, %v691, %v693
      %v695 = vrot.slane %v685, 1
      %v696 = vsel %vm534, %v693, %v695
      %v697 = vrot.slane %v686, 1
      %v698 = vsel %vm534, %v695, %v697
      %v699 = vrot.slane %v687, 1
      %v700 = vsel %vm534, %v697, %v699
      %v703 = vunpack.c.l.b16 %v677
      %v704 = vunpack.c.l.b16 %v678
      %v705 = vpack.c.b16 %v704, %v703
      %v708 = vsel %vm313, %v690, 0
      %v711 = vsel %vm313, %v692, 0
      %v714 = vsel %vm313, %v694, 0
      %v717 = vsel %vm313, %v696, 0
      %v720 = vsel %vm313, %v698, 0
      %v723 = vsel %vm313, %v700, 0
      %v726 = vsel %vm313, %v699, 0
      %728 = vmatprep.subr.bf16.mxu0 0
      %729 = vmatpush1.bf16.msra.mxu0 %v705
      %730 = vmatprep.subr.bf16.mxu0 0
      %731 = vmatpush1.bf16.msra.mxu0 0
      %732 = vmatprep.subr.bf16.mxu0 0
      %733 = vmatpush1.bf16.msra.mxu0 0
      %734 = vmatprep.subr.bf16.mxu0 0
      %735 = vmatpush1.bf16.msra.mxu0 0
      %736 = vmatprep.subr.bf16.mxu0 0
      %737 = vmatpush1.bf16.msra.mxu0 0
      %738 = vmatprep.subr.bf16.mxu0 0
      %739 = vmatpush1.bf16.msra.mxu0 0
      %740 = vmatprep.subr.bf16.mxu0 0
      %741 = vmatpush1.bf16.msra.mxu0 0
      %742 = vmatprep.subr.bf16.mxu0 0
      %743 = vmatpush1.bf16.msra.mxu0 0
      %744 = vmatprep.subr.bf16.mxu0 0
      %745 = vmatpush1.bf16.msra.mxu0 0
      %746 = vmatprep.subr.bf16.mxu0 0
      %747 = vmatpush1.bf16.msra.mxu0 0
      %748 = vmatprep.subr.bf16.mxu0 0
      %749 = vmatpush1.bf16.msra.mxu0 0
      %750 = vmatprep.subr.bf16.mxu0 0
      %751 = vmatpush1.bf16.msra.mxu0 0
      %752 = vmatprep.subr.bf16.mxu0 0
      %753 = vmatpush1.bf16.msra.mxu0 0
      %754 = vmatprep.subr.bf16.mxu0 0
      %755 = vmatpush1.bf16.msra.mxu0 0
      %756 = vmatprep.subr.bf16.mxu0 0
      %757 = vmatpush1.bf16.msra.mxu0 0
      %758 = vmatprep.subr.bf16.mxu0 0
      %759 = vmatpush1.bf16.msra.mxu0 0
      %760 = vmatprep.mubr.bf16.mxu0 0
      %761 = vmatmul.mubr.bf16.gmra.mrb[0].mxu0 %v708
      %v762 = vpop.f32.mrb[0].mxu0
      %v763 = vadd.f32 0.0, %v762
      %v764 = vpop.f32.mrb[0].mxu0
      %v765 = vpop.f32.mrb[0].mxu0
      %v766 = vadd.f32 0.0, %v765
      %v767 = vpop.f32.mrb[0].mxu0
      %768 = vmatprep.mubr.bf16.mxu0 0
      %769 = vmatmul.mubr.bf16.gmra.mrb[0].mxu0 %v711
      %v770 = vpop.f32.mrb[0].mxu0
      %v771 = vadd.f32 0.0, %v770
      %v772 = vpop.f32.mrb[0].mxu0
      %v773 = vpop.f32.mrb[0].mxu0
      %v774 = vadd.f32 0.0, %v773
      %v775 = vpop.f32.mrb[0].mxu0
      %776 = vmatprep.mubr.bf16.mxu0 0
      %777 = vmatmul.mubr.bf16.gmra.mrb[0].mxu0 %v714
      %v778 = vpop.f32.mrb[0].mxu0
      %v779 = vadd.f32 0.0, %v778
      %v780 = vpop.f32.mrb[0].mxu0
      %v781 = vpop.f32.mrb[0].mxu0
      %v782 = vadd.f32 0.0, %v781
      %v783 = vpop.f32.mrb[0].mxu0
      %784 = vmatprep.mubr.bf16.mxu0 0
      %785 = vmatmul.mubr.bf16.gmra.mrb[0].mxu0 %v717
      %v786 = vpop.f32.mrb[0].mxu0
      %v787 = vadd.f32 0.0, %v786
      %v788 = vpop.f32.mrb[0].mxu0
      %v789 = vpop.f32.mrb[0].mxu0
      %v790 = vadd.f32 0.0, %v789
      %v791 = vpop.f32.mrb[0].mxu0
      %792 = vmatprep.mubr.bf16.mxu0 0
      %793 = vmatmul.mubr.bf16.gmra.mrb[0].mxu0 %v720
      %v794 = vpop.f32.mrb[0].mxu0
      %v795 = vadd.f32 0.0, %v794
      %v796 = vpop.f32.mrb[0].mxu0
      %v797 = vpop.f32.mrb[0].mxu0
      %v798 = vadd.f32 0.0, %v797
      %v799 = vpop.f32.mrb[0].mxu0
      %800 = vmatprep.mubr.bf16.mxu0 0
      %801 = vmatmul.mubr.bf16.gmra.mrb[0].mxu0 %v723
      %v802 = vpop.f32.mrb[0].mxu0
      %v803 = vadd.f32 0.0, %v802
      %v804 = vpop.f32.mrb[0].mxu0
      %v805 = vpop.f32.mrb[0].mxu0
      %v806 = vadd.f32 0.0, %v805
      %v807 = vpop.f32.mrb[0].mxu0
      %808 = vmatprep.mubr.bf16.mxu0 0
      %809 = vmatmul.mubr.bf16.gmra.mrb[0].mxu0 %v726
      %v810 = vpop.f32.mrb[0].mxu0
      %v811 = vadd.f32 0.0, %v810
      %v812 = vpop.f32.mrb[0].mxu0
      %v813 = vpop.f32.mrb[0].mxu0
      %v814 = vpop.f32.mrb[0].mxu0
      %815 = vdwg.mxu0
      %v816 = vadd.f32 %v663, %v763
      %v817 = vadd.f32 %v664, %v766
      %v818 = vadd.f32 %v665, %v771
      %v819 = vadd.f32 %v666, %v774
      %v820 = vadd.f32 %v667, %v779
      %v821 = vadd.f32 %v668, %v782
      %v822 = vadd.f32 %v669, %v787
      %v823 = vadd.f32 %v670, %v790
      %v824 = vadd.f32 %v671, %v795
      %v825 = vadd.f32 %v672, %v798
      %v826 = vadd.f32 %v673, %v803
      %v827 = vadd.f32 %v674, %v806
      %v828 = vadd.f32 %v675, %v811
      %s829 = scalar_lea.vmem %s1, 32
      %v830 = vld [vmem:[%s829] sm:$0xf]
      %v831 = vld [vmem:[%s829 + $0x4] sm:$0xf]
      %vm832 = vsmask.f32 6400
      %v834 = vshrl.u32 %v681, 16
      %v836 = vrot.slane %v834, 1
      %v837 = vshll.u32 %v681, 16
      %v839 = vrot.slane %v837, 2
      %v840 = vor.u32 %v836, %v839
      %v842 = vshrl.u32 %v682, 16
      %v844 = vrot.slane %v842, 1
      %v845 = vshll.u32 %v682, 16
      %v847 = vrot.slane %v845, 2
      %v848 = vor.u32 %v844, %v847
      %v849 = vsel %vm832, %v840, %v848
      %v851 = vshrl.u32 %v683, 16
      %v853 = vrot.slane %v851, 1
      %v854 = vshll.u32 %v683, 16
      %v856 = vrot.slane %v854, 2
      %v857 = vor.u32 %v853, %v856
      %v858 = vsel %vm832, %v848, %v857
      %v860 = vshrl.u32 %v684, 16
      %v862 = vrot.slane %v860, 1
      %v863 = vshll.u32 %v684, 16
      %v865 = vrot.slane %v863, 2
      %v866 = vor.u32 %v862, %v865
      %v867 = vsel %vm832, %v857, %v866
      %v869 = vshrl.u32 %v685, 16
      %v871 = vrot.slane %v869, 1
      %v872 = vshll.u32 %v685, 16
      %v874 = vrot.slane %v872, 2
      %v875 = vor.u32 %v871, %v874
      %v876 = vsel %vm832, %v866, %v875
      %v878 = vshrl.u32 %v686, 16
      %v880 = vrot.slane %v878, 1
      %v881 = vshll.u32 %v686, 16
      %v883 = vrot.slane %v881, 2
      %v884 = vor.u32 %v880, %v883
      %v885 = vsel %vm832, %v875, %v884
      %v887 = vshrl.u32 %v687, 16
      %v889 = vrot.slane %v887, 1
      %v890 = vshll.u32 %v687, 16
      %v892 = vrot.slane %v890, 2
      %v893 = vor.u32 %v889, %v892
      %v894 = vsel %vm832, %v884, %v893
      %v897 = vunpack.c.l.b16 %v830
      %v898 = vunpack.c.l.b16 %v831
      %v899 = vpack.c.b16 %v898, %v897
      %v902 = vsel %vm313, %v849, 0
      %v905 = vsel %vm313, %v858, 0
      %v908 = vsel %vm313, %v867, 0
      %v911 = vsel %vm313, %v876, 0
      %v914 = vsel %vm313, %v885, 0
      %v917 = vsel %vm313, %v894, 0
      %v920 = vsel %vm313, %v893, 0
      %922 = vmatprep.subr.bf16.mxu0 0
      %923 = vmatpush1.bf16.msra.mxu0 %v899
      %924 = vmatprep.subr.bf16.mxu0 0
      %925 = vmatpush1.bf16.msra.mxu0 0
      %926 = vmatprep.subr.bf16.mxu0 0
      %927 = vmatpush1.bf16.msra.mxu0 0
      %928 = vmatprep.subr.bf16.mxu0 0
      %929 = vmatpush1.bf16.msra.mxu0 0
      %930 = vmatprep.subr.bf16.mxu0 0
      %931 = vmatpush1.bf16.msra.mxu0 0
      %932 = vmatprep.subr.bf16.mxu0 0
      %933 = vmatpush1.bf16.msra.mxu0 0
      %934 = vmatprep.subr.bf16.mxu0 0
      %935 = vmatpush1.bf16.msra.mxu0 0
      %936 = vmatprep.subr.bf16.mxu0 0
      %937 = vmatpush1.bf16.msra.mxu0 0
      %938 = vmatprep.subr.bf16.mxu0 0
      %939 = vmatpush1.bf16.msra.mxu0 0
      %940 = vmatprep.subr.bf16.mxu0 0
      %941 = vmatpush1.bf16.msra.mxu0 0
      %942 = vmatprep.subr.bf16.mxu0 0
      %943 = vmatpush1.bf16.msra.mxu0 0
      %944 = vmatprep.subr.bf16.mxu0 0
      %945 = vmatpush1.bf16.msra.mxu0 0
      %946 = vmatprep.subr.bf16.mxu0 0
      %947 = vmatpush1.bf16.msra.mxu0 0
      %948 = vmatprep.subr.bf16.mxu0 0
      %949 = vmatpush1.bf16.msra.mxu0 0
      %950 = vmatprep.subr.bf16.mxu0 0
      %951 = vmatpush1.bf16.msra.mxu0 0
      %952 = vmatprep.subr.bf16.mxu0 0
      %953 = vmatpush1.bf16.msra.mxu0 0
      %954 = vmatprep.mubr.bf16.mxu0 0
      %955 = vmatmul.mubr.bf16.gmra.mrb[0].mxu0 %v902
      %v956 = vpop.f32.mrb[0].mxu0
      %v957 = vadd.f32 0.0, %v956
      %v958 = vpop.f32.mrb[0].mxu0
      %v959 = vpop.f32.mrb[0].mxu0
      %v960 = vadd.f32 0.0, %v959
      %v961 = vpop.f32.mrb[0].mxu0
      %962 = vmatprep.mubr.bf16.mxu0 0
      %963 = vmatmul.mubr.bf16.gmra.mrb[0].mxu0 %v905
      %v964 = vpop.f32.mrb[0].mxu0
      %v965 = vadd.f32 0.0, %v964
      %v966 = vpop.f32.mrb[0].mxu0
      %v967 = vpop.f32.mrb[0].mxu0
      %v968 = vadd.f32 0.0, %v967
      %v969 = vpop.f32.mrb[0].mxu0
      %970 = vmatprep.mubr.bf16.mxu0 0
      %971 = vmatmul.mubr.bf16.gmra.mrb[0].mxu0 %v908
      %v972 = vpop.f32.mrb[0].mxu0
      %v973 = vadd.f32 0.0, %v972
      %v974 = vpop.f32.mrb[0].mxu0
      %v975 = vpop.f32.mrb[0].mxu0
      %v976 = vadd.f32 0.0, %v975
      %v977 = vpop.f32.mrb[0].mxu0
      %978 = vmatprep.mubr.bf16.mxu0 0
      %979 = vmatmul.mubr.bf16.gmra.mrb[0].mxu0 %v911
      %v980 = vpop.f32.mrb[0].mxu0
      %v981 = vadd.f32 0.0, %v980
      %v982 = vpop.f32.mrb[0].mxu0
      %v983 = vpop.f32.mrb[0].mxu0
      %v984 = vadd.f32 0.0, %v983
      %v985 = vpop.f32.mrb[0].mxu0
      %986 = vmatprep.mubr.bf16.mxu0 0
      %987 = vmatmul.mubr.bf16.gmra.mrb[0].mxu0 %v914
      %v988 = vpop.f32.mrb[0].mxu0
      %v989 = vadd.f32 0.0, %v988
      %v990 = vpop.f32.mrb[0].mxu0
      %v991 = vpop.f32.mrb[0].mxu0
      %v992 = vadd.f32 0.0, %v991
      %v993 = vpop.f32.mrb[0].mxu0
      %994 = vmatprep.mubr.bf16.mxu0 0
      %995 = vmatmul.mubr.bf16.gmra.mrb[0].mxu0 %v917
      %v996 = vpop.f32.mrb[0].mxu0
      %v997 = vadd.f32 0.0, %v996
      %v998 = vpop.f32.mrb[0].mxu0
      %v999 = vpop.f32.mrb[0].mxu0
      %v1000 = vadd.f32 0.0, %v999
      %v1001 = vpop.f32.mrb[0].mxu0
      %1002 = vmatprep.mubr.bf16.mxu0 0
      %1003 = vmatmul.mubr.bf16.gmra.mrb[0].mxu0 %v920
      %v1004 = vpop.f32.mrb[0].mxu0
      %v1005 = vadd.f32 0.0, %v1004
      %v1006 = vpop.f32.mrb[0].mxu0
      %v1007 = vpop.f32.mrb[0].mxu0
      %v1008 = vpop.f32.mrb[0].mxu0
      %1009 = vdwg.mxu0
      %v1010 = vadd.f32 %v816, %v957
      %v1011 = vadd.f32 %v817, %v960
      %v1012 = vadd.f32 %v818, %v965
      %v1013 = vadd.f32 %v819, %v968
      %v1014 = vadd.f32 %v820, %v973
      %v1015 = vadd.f32 %v821, %v976
      %v1016 = vadd.f32 %v822, %v981
      %v1017 = vadd.f32 %v823, %v984
      %v1018 = vadd.f32 %v824, %v989
      %v1019 = vadd.f32 %v825, %v992
      %v1020 = vadd.f32 %v826, %v997
      %v1021 = vadd.f32 %v827, %v1000
      %v1022 = vadd.f32 %v828, %v1005
      %s1023 = scalar_lea.vmem %s1, 40
      %v1024 = vld [vmem:[%s1023] sm:$0xf]
      %v1025 = vld [vmem:[%s1023 + $0x4] sm:$0xf]
      %vm1026 = vcmask 1045504
      %v1027 = vrot.slane %v681, 2
      %v1028 = vrot.slane %v682, 2
      %v1029 = vsel %vm1026, %v1027, %v1028
      %v1030 = vrot.slane %v683, 2
      %v1031 = vsel %vm1026, %v1028, %v1030
      %v1032 = vrot.slane %v684, 2
      %v1033 = vsel %vm1026, %v1030, %v1032
      %v1034 = vrot.slane %v685, 2
      %v1035 = vsel %vm1026, %v1032, %v1034
      %v1036 = vrot.slane %v686, 2
      %v1037 = vsel %vm1026, %v1034, %v1036
      %v1038 = vrot.slane %v687, 2
      %v1039 = vsel %vm1026, %v1036, %v1038
      %v1042 = vunpack.c.l.b16 %v1024
      %v1043 = vunpack.c.l.b16 %v1025
      %v1044 = vpack.c.b16 %v1043, %v1042
      %v1047 = vsel %vm313, %v1029, 0
      %v1050 = vsel %vm313, %v1031, 0
      %v1053 = vsel %vm313, %v1033, 0
      %v1056 = vsel %vm313, %v1035, 0
      %v1059 = vsel %vm313, %v1037, 0
      %v1062 = vsel %vm313, %v1039, 0
      %v1065 = vsel %vm313, %v1038, 0
      %1067 = vmatprep.subr.bf16.mxu0 0
      %1068 = vmatpush1.bf16.msra.mxu0 %v1044
      %1069 = vmatprep.subr.bf16.mxu0 0
      %1070 = vmatpush1.bf16.msra.mxu0 0
      %1071 = vmatprep.subr.bf16.mxu0 0
      %1072 = vmatpush1.bf16.msra.mxu0 0
      %1073 = vmatprep.subr.bf16.mxu0 0
      %1074 = vmatpush1.bf16.msra.mxu0 0
      %1075 = vmatprep.subr.bf16.mxu0 0
      %1076 = vmatpush1.bf16.msra.mxu0 0
      %1077 = vmatprep.subr.bf16.mxu0 0
      %1078 = vmatpush1.bf16.msra.mxu0 0
      %1079 = vmatprep.subr.bf16.mxu0 0
      %1080 = vmatpush1.bf16.msra.mxu0 0
      %1081 = vmatprep.subr.bf16.mxu0 0
      %1082 = vmatpush1.bf16.msra.mxu0 0
      %1083 = vmatprep.subr.bf16.mxu0 0
      %1084 = vmatpush1.bf16.msra.mxu0 0
      %1085 = vmatprep.subr.bf16.mxu0 0
      %1086 = vmatpush1.bf16.msra.mxu0 0
      %1087 = vmatprep.subr.bf16.mxu0 0
      %1088 = vmatpush1.bf16.msra.mxu0 0
      %1089 = vmatprep.subr.bf16.mxu0 0
      %1090 = vmatpush1.bf16.msra.mxu0 0
      %1091 = vmatprep.subr.bf16.mxu0 0
      %1092 = vmatpush1.bf16.msra.mxu0 0
      %1093 = vmatprep.subr.bf16.mxu0 0
      %1094 = vmatpush1.bf16.msra.mxu0 0
      %1095 = vmatprep.subr.bf16.mxu0 0
      %1096 = vmatpush1.bf16.msra.mxu0 0
      %1097 = vmatprep.subr.bf16.mxu0 0
      %1098 = vmatpush1.bf16.msra.mxu0 0
      %1099 = vmatprep.mubr.bf16.mxu0 0
      %1100 = vmatmul.mubr.bf16.gmra.mrb[0].mxu0 %v1047
      %v1101 = vpop.f32.mrb[0].mxu0
      %v1102 = vadd.f32 0.0, %v1101
      %v1103 = vpop.f32.mrb[0].mxu0
      %v1104 = vpop.f32.mrb[0].mxu0
      %v1105 = vadd.f32 0.0, %v1104
      %v1106 = vpop.f32.mrb[0].mxu0
      %1107 = vmatprep.mubr.bf16.mxu0 0
      %1108 = vmatmul.mubr.bf16.gmra.mrb[0].mxu0 %v1050
      %v1109 = vpop.f32.mrb[0].mxu0
      %v1110 = vadd.f32 0.0, %v1109
      %v1111 = vpop.f32.mrb[0].mxu0
      %v1112 = vpop.f32.mrb[0].mxu0
      %v1113 = vadd.f32 0.0, %v1112
      %v1114 = vpop.f32.mrb[0].mxu0
      %1115 = vmatprep.mubr.bf16.mxu0 0
      %1116 = vmatmul.mubr.bf16.gmra.mrb[0].mxu0 %v1053
      %v1117 = vpop.f32.mrb[0].mxu0
      %v1118 = vadd.f32 0.0, %v1117
      %v1119 = vpop.f32.mrb[0].mxu0
      %v1120 = vpop.f32.mrb[0].mxu0
      %v1121 = vadd.f32 0.0, %v1120
      %v1122 = vpop.f32.mrb[0].mxu0
      %1123 = vmatprep.mubr.bf16.mxu0 0
      %1124 = vmatmul.mubr.bf16.gmra.mrb[0].mxu0 %v1056
      %v1125 = vpop.f32.mrb[0].mxu0
      %v1126 = vadd.f32 0.0, %v1125
      %v1127 = vpop.f32.mrb[0].mxu0
      %v1128 = vpop.f32.mrb[0].mxu0
      %v1129 = vadd.f32 0.0, %v1128
      %v1130 = vpop.f32.mrb[0].mxu0
      %1131 = vmatprep.mubr.bf16.mxu0 0
      %1132 = vmatmul.mubr.bf16.gmra.mrb[0].mxu0 %v1059
      %v1133 = vpop.f32.mrb[0].mxu0
      %v1134 = vadd.f32 0.0, %v1133
      %v1135 = vpop.f32.mrb[0].mxu0
      %v1136 = vpop.f32.mrb[0].mxu0
      %v1137 = vadd.f32 0.0, %v1136
      %v1138 = vpop.f32.mrb[0].mxu0
      %1139 = vmatprep.mubr.bf16.mxu0 0
      %1140 = vmatmul.mubr.bf16.gmra.mrb[0].mxu0 %v1062
      %v1141 = vpop.f32.mrb[0].mxu0
      %v1142 = vadd.f32 0.0, %v1141
      %v1143 = vpop.f32.mrb[0].mxu0
      %v1144 = vpop.f32.mrb[0].mxu0
      %v1145 = vadd.f32 0.0, %v1144
      %v1146 = vpop.f32.mrb[0].mxu0
      %1147 = vmatprep.mubr.bf16.mxu0 0
      %1148 = vmatmul.mubr.bf16.gmra.mrb[0].mxu0 %v1065
      %v1149 = vpop.f32.mrb[0].mxu0
      %v1150 = vadd.f32 0.0, %v1149
      %v1151 = vpop.f32.mrb[0].mxu0
      %v1152 = vpop.f32.mrb[0].mxu0
      %v1153 = vpop.f32.mrb[0].mxu0
      %1154 = vdwg.mxu0
      %v1155 = vadd.f32 %v1010, %v1102
      %v1156 = vadd.f32 %v1011, %v1105
      %v1157 = vadd.f32 %v1012, %v1110
      %v1158 = vadd.f32 %v1013, %v1113
      %v1159 = vadd.f32 %v1014, %v1118
      %v1160 = vadd.f32 %v1015, %v1121
      %v1161 = vadd.f32 %v1016, %v1126
      %v1162 = vadd.f32 %v1017, %v1129
      %v1163 = vadd.f32 %v1018, %v1134
      %v1164 = vadd.f32 %v1019, %v1137
      %v1165 = vadd.f32 %v1020, %v1142
      %v1166 = vadd.f32 %v1021, %v1145
      %v1167 = vadd.f32 %v1022, %v1150
      %s1168 = scalar_lea.vmem %s1, 48
      %v1169 = vld [vmem:[%s1168] sm:$0xf]
      %v1170 = vld [vmem:[%s1168 + $0x4] sm:$0xf]
      %v1172 = vunpack.c.l.b16 %v211
      %v1173 = vpack.c.b16 %v680, %v243
      %v1174 = vpack.c.b16 %v1172, %v1172
      %v1175 = vrot.slane %v245, 2
      %v1176 = vrot.slane %v246, 2
      %v1177 = vsel %vm1026, %v1175, %v1176
      %v1178 = vrot.slane %v247, 2
      %v1179 = vsel %vm1026, %v1176, %v1178
      %v1180 = vrot.slane %v248, 2
      %v1181 = vsel %vm1026, %v1178, %v1180
      %v1182 = vrot.slane %v249, 2
      %v1183 = vsel %vm1026, %v1180, %v1182
      %v1184 = vrot.slane %v1173, 2
      %v1185 = vsel %vm1026, %v1182, %v1184
      %v1186 = vrot.slane %v1174, 2
      %v1187 = vsel %vm1026, %v1184, %v1186
      %v1190 = vunpack.c.l.b16 %v1169
      %v1191 = vunpack.c.l.b16 %v1170
      %v1192 = vpack.c.b16 %v1191, %v1190
      %v1195 = vsel %vm313, %v1177, 0
      %v1198 = vsel %vm313, %v1179, 0
      %v1201 = vsel %vm313, %v1181, 0
      %v1204 = vsel %vm313, %v1183, 0
      %v1207 = vsel %vm313, %v1185, 0
      %v1210 = vsel %vm313, %v1187, 0
      %v1213 = vsel %vm313, %v1186, 0
      %1215 = vmatprep.subr.bf16.mxu0 0
      %1216 = vmatpush1.bf16.msra.mxu0 %v1192
      %1217 = vmatprep.subr.bf16.mxu0 0
      %1218 = vmatpush1.bf16.msra.mxu0 0
      %1219 = vmatprep.subr.bf16.mxu0 0
      %1220 = vmatpush1.bf16.msra.mxu0 0
      %1221 = vmatprep.subr.bf16.mxu0 0
      %1222 = vmatpush1.bf16.msra.mxu0 0
      %1223 = vmatprep.subr.bf16.mxu0 0
      %1224 = vmatpush1.bf16.msra.mxu0 0
      %1225 = vmatprep.subr.bf16.mxu0 0
      %1226 = vmatpush1.bf16.msra.mxu0 0
      %1227 = vmatprep.subr.bf16.mxu0 0
      %1228 = vmatpush1.bf16.msra.mxu0 0
      %1229 = vmatprep.subr.bf16.mxu0 0
      %1230 = vmatpush1.bf16.msra.mxu0 0
      %1231 = vmatprep.subr.bf16.mxu0 0
      %1232 = vmatpush1.bf16.msra.mxu0 0
      %1233 = vmatprep.subr.bf16.mxu0 0
      %1234 = vmatpush1.bf16.msra.mxu0 0
      %1235 = vmatprep.subr.bf16.mxu0 0
      %1236 = vmatpush1.bf16.msra.mxu0 0
      %1237 = vmatprep.subr.bf16.mxu0 0
      %1238 = vmatpush1.bf16.msra.mxu0 0
      %1239 = vmatprep.subr.bf16.mxu0 0
      %1240 = vmatpush1.bf16.msra.mxu0 0
      %1241 = vmatprep.subr.bf16.mxu0 0
      %1242 = vmatpush1.bf16.msra.mxu0 0
      %1243 = vmatprep.subr.bf16.mxu0 0
      %1244 = vmatpush1.bf16.msra.mxu0 0
      %1245 = vmatprep.subr.bf16.mxu0 0
      %1246 = vmatpush1.bf16.msra.mxu0 0
      %1247 = vmatprep.mubr.bf16.mxu0 0
      %1248 = vmatmul.mubr.bf16.gmra.mrb[0].mxu0 %v1195
      %v1249 = vpop.f32.mrb[0].mxu0
      %v1250 = vadd.f32 0.0, %v1249
      %v1251 = vpop.f32.mrb[0].mxu0
      %v1252 = vpop.f32.mrb[0].mxu0
      %v1253 = vadd.f32 0.0, %v1252
      %v1254 = vpop.f32.mrb[0].mxu0
      %1255 = vmatprep.mubr.bf16.mxu0 0
      %1256 = vmatmul.mubr.bf16.gmra.mrb[0].mxu0 %v1198
      %v1257 = vpop.f32.mrb[0].mxu0
      %v1258 = vadd.f32 0.0, %v1257
      %v1259 = vpop.f32.mrb[0].mxu0
      %v1260 = vpop.f32.mrb[0].mxu0
      %v1261 = vadd.f32 0.0, %v1260
      %v1262 = vpop.f32.mrb[0].mxu0
      %1263 = vmatprep.mubr.bf16.mxu0 0
      %1264 = vmatmul.mubr.bf16.gmra.mrb[0].mxu0 %v1201
      %v1265 = vpop.f32.mrb[0].mxu0
      %v1266 = vadd.f32 0.0, %v1265
      %v1267 = vpop.f32.mrb[0].mxu0
      %v1268 = vpop.f32.mrb[0].mxu0
      %v1269 = vadd.f32 0.0, %v1268
      %v1270 = vpop.f32.mrb[0].mxu0
      %1271 = vmatprep.mubr.bf16.mxu0 0
      %1272 = vmatmul.mubr.bf16.gmra.mrb[0].mxu0 %v1204
      %v1273 = vpop.f32.mrb[0].mxu0
      %v1274 = vadd.f32 0.0, %v1273
      %v1275 = vpop.f32.mrb[0].mxu0
      %v1276 = vpop.f32.mrb[0].mxu0
      %v1277 = vadd.f32 0.0, %v1276
      %v1278 = vpop.f32.mrb[0].mxu0
      %1279 = vmatprep.mubr.bf16.mxu0 0
      %1280 = vmatmul.mubr.bf16.gmra.mrb[0].mxu0 %v1207
      %v1281 = vpop.f32.mrb[0].mxu0
      %v1282 = vadd.f32 0.0, %v1281
      %v1283 = vpop.f32.mrb[0].mxu0
      %v1284 = vpop.f32.mrb[0].mxu0
      %v1285 = vadd.f32 0.0, %v1284
      %v1286 = vpop.f32.mrb[0].mxu0
      %1287 = vmatprep.mubr.bf16.mxu0 0
      %1288 = vmatmul.mubr.bf16.gmra.mrb[0].mxu0 %v1210
      %v1289 = vpop.f32.mrb[0].mxu0
      %v1290 = vadd.f32 0.0, %v1289
      %v1291 = vpop.f32.mrb[0].mxu0
      %v1292 = vpop.f32.mrb[0].mxu0
      %v1293 = vadd.f32 0.0, %v1292
      %v1294 = vpop.f32.mrb[0].mxu0
      %1295 = vmatprep.mubr.bf16.mxu0 0
      %1296 = vmatmul.mubr.bf16.gmra.mrb[0].mxu0 %v1213
      %v1297 = vpop.f32.mrb[0].mxu0
      %v1298 = vadd.f32 0.0, %v1297
      %v1299 = vpop.f32.mrb[0].mxu0
      %v1300 = vpop.f32.mrb[0].mxu0
      %v1301 = vpop.f32.mrb[0].mxu0
      %1302 = vdwg.mxu0
      %v1303 = vadd.f32 %v1155, %v1250
      %v1304 = vadd.f32 %v1156, %v1253
      %v1305 = vadd.f32 %v1157, %v1258
      %v1306 = vadd.f32 %v1158, %v1261
      %v1307 = vadd.f32 %v1159, %v1266
      %v1308 = vadd.f32 %v1160, %v1269
      %v1309 = vadd.f32 %v1161, %v1274
      %v1310 = vadd.f32 %v1162, %v1277
      %v1311 = vadd.f32 %v1163, %v1282
      %v1312 = vadd.f32 %v1164, %v1285
      %v1313 = vadd.f32 %v1165, %v1290
      %v1314 = vadd.f32 %v1166, %v1293
      %v1315 = vadd.f32 %v1167, %v1298
      %s1316 = scalar_lea.vmem %s1, 56
      %v1317 = vld [vmem:[%s1316] sm:$0xf]
      %v1318 = vld [vmem:[%s1316 + $0x4] sm:$0xf]
      %v1320 = vunpack.c.l.b16 %v212
      %v1321 = vpack.c.b16 %v1320, %v1172
      %vm1322 = vsmask.f32 5376
      %v1323 = vrot.slane %v264, 2
      %v1324 = vrot.slane %v260, 3
      %v1325 = vor.u32 %v1323, %v1324
      %v1326 = vrot.slane %v272, 2
      %v1327 = vrot.slane %v268, 3
      %v1328 = vor.u32 %v1326, %v1327
      %v1329 = vsel %vm1322, %v1325, %v1328
      %v1330 = vrot.slane %v280, 2
      %v1331 = vrot.slane %v276, 3
      %v1332 = vor.u32 %v1330, %v1331
      %v1333 = vsel %vm1322, %v1328, %v1332
      %v1334 = vrot.slane %v288, 2
      %v1335 = vrot.slane %v284, 3
      %v1336 = vor.u32 %v1334, %v1335
      %v1337 = vsel %vm1322, %v1332, %v1336
      %v1338 = vrot.slane %v296, 2
      %v1339 = vrot.slane %v292, 3
      %v1340 = vor.u32 %v1338, %v1339
      %v1341 = vsel %vm1322, %v1336, %v1340
      %v1343 = vshrl.u32 %v1173, 16
      %v1345 = vrot.slane %v1343, 2
      %v1346 = vshll.u32 %v1173, 16
      %v1348 = vrot.slane %v1346, 3
      %v1349 = vor.u32 %v1345, %v1348
      %v1350 = vsel %vm1322, %v1340, %v1349
      %v1352 = vshrl.u32 %v1321, 16
      %v1354 = vrot.slane %v1352, 2
      %v1355 = vshll.u32 %v1321, 16
      %v1357 = vrot.slane %v1355, 3
      %v1358 = vor.u32 %v1354, %v1357
      %v1359 = vsel %vm1322, %v1349, %v1358
      %v1362 = vunpack.c.l.b16 %v1317
      %v1363 = vunpack.c.l.b16 %v1318
      %v1364 = vpack.c.b16 %v1363, %v1362
      %v1367 = vsel %vm313, %v1329, 0
      %v1370 = vsel %vm313, %v1333, 0
      %v1373 = vsel %vm313, %v1337, 0
      %v1376 = vsel %vm313, %v1341, 0
      %v1379 = vsel %vm313, %v1350, 0
      %v1382 = vsel %vm313, %v1359, 0
      %v1385 = vsel %vm313, %v1358, 0
      %1387 = vmatprep.subr.bf16.mxu0 0
      %1388 = vmatpush1.bf16.msra.mxu0 %v1364
      %1389 = vmatprep.subr.bf16.mxu0 0
      %1390 = vmatpush1.bf16.msra.mxu0 0
      %1391 = vmatprep.subr.bf16.mxu0 0
      %1392 = vmatpush1.bf16.msra.mxu0 0
      %1393 = vmatprep.subr.bf16.mxu0 0
      %1394 = vmatpush1.bf16.msra.mxu0 0
      %1395 = vmatprep.subr.bf16.mxu0 0
      %1396 = vmatpush1.bf16.msra.mxu0 0
      %1397 = vmatprep.subr.bf16.mxu0 0
      %1398 = vmatpush1.bf16.msra.mxu0 0
      %1399 = vmatprep.subr.bf16.mxu0 0
      %1400 = vmatpush1.bf16.msra.mxu0 0
      %1401 = vmatprep.subr.bf16.mxu0 0
      %1402 = vmatpush1.bf16.msra.mxu0 0
      %1403 = vmatprep.subr.bf16.mxu0 0
      %1404 = vmatpush1.bf16.msra.mxu0 0
      %1405 = vmatprep.subr.bf16.mxu0 0
      %1406 = vmatpush1.bf16.msra.mxu0 0
      %1407 = vmatprep.subr.bf16.mxu0 0
      %1408 = vmatpush1.bf16.msra.mxu0 0
      %1409 = vmatprep.subr.bf16.mxu0 0
      %1410 = vmatpush1.bf16.msra.mxu0 0
      %1411 = vmatprep.subr.bf16.mxu0 0
      %1412 = vmatpush1.bf16.msra.mxu0 0
      %1413 = vmatprep.subr.bf16.mxu0 0
      %1414 = vmatpush1.bf16.msra.mxu0 0
      %1415 = vmatprep.subr.bf16.mxu0 0
      %1416 = vmatpush1.bf16.msra.mxu0 0
      %1417 = vmatprep.subr.bf16.mxu0 0
      %1418 = vmatpush1.bf16.msra.mxu0 0
      %1419 = vmatprep.mubr.bf16.mxu0 0
      %1420 = vmatmul.mubr.bf16.gmra.mrb[0].mxu0 %v1367
      %v1421 = vpop.f32.mrb[0].mxu0
      %v1422 = vadd.f32 0.0, %v1421
      %v1423 = vpop.f32.mrb[0].mxu0
      %v1424 = vpop.f32.mrb[0].mxu0
      %v1425 = vadd.f32 0.0, %v1424
      %v1426 = vpop.f32.mrb[0].mxu0
      %1427 = vmatprep.mubr.bf16.mxu0 0
      %1428 = vmatmul.mubr.bf16.gmra.mrb[0].mxu0 %v1370
      %v1429 = vpop.f32.mrb[0].mxu0
      %v1430 = vadd.f32 0.0, %v1429
      %v1431 = vpop.f32.mrb[0].mxu0
      %v1432 = vpop.f32.mrb[0].mxu0
      %v1433 = vadd.f32 0.0, %v1432
      %v1434 = vpop.f32.mrb[0].mxu0
      %1435 = vmatprep.mubr.bf16.mxu0 0
      %1436 = vmatmul.mubr.bf16.gmra.mrb[0].mxu0 %v1373
      %v1437 = vpop.f32.mrb[0].mxu0
      %v1438 = vadd.f32 0.0, %v1437
      %v1439 = vpop.f32.mrb[0].mxu0
      %v1440 = vpop.f32.mrb[0].mxu0
      %v1441 = vadd.f32 0.0, %v1440
      %v1442 = vpop.f32.mrb[0].mxu0
      %1443 = vmatprep.mubr.bf16.mxu0 0
      %1444 = vmatmul.mubr.bf16.gmra.mrb[0].mxu0 %v1376
      %v1445 = vpop.f32.mrb[0].mxu0
      %v1446 = vadd.f32 0.0, %v1445
      %v1447 = vpop.f32.mrb[0].mxu0
      %v1448 = vpop.f32.mrb[0].mxu0
      %v1449 = vadd.f32 0.0, %v1448
      %v1450 = vpop.f32.mrb[0].mxu0
      %1451 = vmatprep.mubr.bf16.mxu0 0
      %1452 = vmatmul.mubr.bf16.gmra.mrb[0].mxu0 %v1379
      %v1453 = vpop.f32.mrb[0].mxu0
      %v1454 = vadd.f32 0.0, %v1453
      %v1455 = vpop.f32.mrb[0].mxu0
      %v1456 = vpop.f32.mrb[0].mxu0
      %v1457 = vadd.f32 0.0, %v1456
      %v1458 = vpop.f32.mrb[0].mxu0
      %1459 = vmatprep.mubr.bf16.mxu0 0
      %1460 = vmatmul.mubr.bf16.gmra.mrb[0].mxu0 %v1382
      %v1461 = vpop.f32.mrb[0].mxu0
      %v1462 = vadd.f32 0.0, %v1461
      %v1463 = vpop.f32.mrb[0].mxu0
      %v1464 = vpop.f32.mrb[0].mxu0
      %v1465 = vadd.f32 0.0, %v1464
      %v1466 = vpop.f32.mrb[0].mxu0
      %1467 = vmatprep.mubr.bf16.mxu0 0
      %1468 = vmatmul.mubr.bf16.gmra.mrb[0].mxu0 %v1385
      %v1469 = vpop.f32.mrb[0].mxu0
      %v1470 = vadd.f32 0.0, %v1469
      %v1471 = vpop.f32.mrb[0].mxu0
      %v1472 = vpop.f32.mrb[0].mxu0
      %v1473 = vpop.f32.mrb[0].mxu0
      %1474 = vdwg.mxu0
      %v1475 = vadd.f32 %v1303, %v1422
      %v1476 = vadd.f32 %v1304, %v1425
      %v1477 = vadd.f32 %v1305, %v1430
      %v1478 = vadd.f32 %v1306, %v1433
      %v1479 = vadd.f32 %v1307, %v1438
      %v1480 = vadd.f32 %v1308, %v1441
      %v1481 = vadd.f32 %v1309, %v1446
      %v1482 = vadd.f32 %v1310, %v1449
      %v1483 = vadd.f32 %v1311, %v1454
      %v1484 = vadd.f32 %v1312, %v1457
      %v1485 = vadd.f32 %v1313, %v1462
      %v1486 = vadd.f32 %v1314, %v1465
      %v1487 = vadd.f32 %v1315, %v1470
      %s1488 = scalar_lea.vmem %s1, 64
      %v1489 = vld [vmem:[%s1488] sm:$0xf]
      %v1490 = vld [vmem:[%s1488 + $0x4] sm:$0xf]
      %vm1491 = vcmask 1044480
      %v1492 = vrot.slane %v245, 3
      %v1493 = vrot.slane %v246, 3
      %v1494 = vsel %vm1491, %v1492, %v1493
      %v1495 = vrot.slane %v247, 3
      %v1496 = vsel %vm1491, %v1493, %v1495
      %v1497 = vrot.slane %v248, 3
      %v1498 = vsel %vm1491, %v1495, %v1497
      %v1499 = vrot.slane %v249, 3
      %v1500 = vsel %vm1491, %v1497, %v1499
      %v1501 = vrot.slane %v1173, 3
      %v1502 = vsel %vm1491, %v1499, %v1501
      %v1503 = vrot.slane %v1321, 3
      %v1504 = vsel %vm1491, %v1501, %v1503
      %v1507 = vunpack.c.l.b16 %v1489
      %v1508 = vunpack.c.l.b16 %v1490
      %v1509 = vpack.c.b16 %v1508, %v1507
      %v1512 = vsel %vm313, %v1494, 0
      %v1515 = vsel %vm313, %v1496, 0
      %v1518 = vsel %vm313, %v1498, 0
      %v1521 = vsel %vm313, %v1500, 0
      %v1524 = vsel %vm313, %v1502, 0
      %v1527 = vsel %vm313, %v1504, 0
      %v1530 = vsel %vm313, %v1503, 0
      %1532 = vmatprep.subr.bf16.mxu0 0
      %1533 = vmatpush1.bf16.msra.mxu0 %v1509
      %1534 = vmatprep.subr.bf16.mxu0 0
      %1535 = vmatpush1.bf16.msra.mxu0 0
      %1536 = vmatprep.subr.bf16.mxu0 0
      %1537 = vmatpush1.bf16.msra.mxu0 0
      %1538 = vmatprep.subr.bf16.mxu0 0
      %1539 = vmatpush1.bf16.msra.mxu0 0
      %1540 = vmatprep.subr.bf16.mxu0 0
      %1541 = vmatpush1.bf16.msra.mxu0 0
      %1542 = vmatprep.subr.bf16.mxu0 0
      %1543 = vmatpush1.bf16.msra.mxu0 0
      %1544 = vmatprep.subr.bf16.mxu0 0
      %1545 = vmatpush1.bf16.msra.mxu0 0
      %1546 = vmatprep.subr.bf16.mxu0 0
      %1547 = vmatpush1.bf16.msra.mxu0 0
      %1548 = vmatprep.subr.bf16.mxu0 0
      %1549 = vmatpush1.bf16.msra.mxu0 0
      %1550 = vmatprep.subr.bf16.mxu0 0
      %1551 = vmatpush1.bf16.msra.mxu0 0
      %1552 = vmatprep.subr.bf16.mxu0 0
      %1553 = vmatpush1.bf16.msra.mxu0 0
      %1554 = vmatprep.subr.bf16.mxu0 0
      %1555 = vmatpush1.bf16.msra.mxu0 0
      %1556 = vmatprep.subr.bf16.mxu0 0
      %1557 = vmatpush1.bf16.msra.mxu0 0
      %1558 = vmatprep.subr.bf16.mxu0 0
      %1559 = vmatpush1.bf16.msra.mxu0 0
      %1560 = vmatprep.subr.bf16.mxu0 0
      %1561 = vmatpush1.bf16.msra.mxu0 0
      %1562 = vmatprep.subr.bf16.mxu0 0
      %1563 = vmatpush1.bf16.msra.mxu0 0
      %1564 = vmatprep.mubr.bf16.mxu0 0
      %1565 = vmatmul.mubr.bf16.gmra.mrb[0].mxu0 %v1512
      %v1566 = vpop.f32.mrb[0].mxu0
      %v1567 = vadd.f32 0.0, %v1566
      %v1568 = vpop.f32.mrb[0].mxu0
      %v1569 = vpop.f32.mrb[0].mxu0
      %v1570 = vadd.f32 0.0, %v1569
      %v1571 = vpop.f32.mrb[0].mxu0
      %1572 = vmatprep.mubr.bf16.mxu0 0
      %1573 = vmatmul.mubr.bf16.gmra.mrb[0].mxu0 %v1515
      %v1574 = vpop.f32.mrb[0].mxu0
      %v1575 = vadd.f32 0.0, %v1574
      %v1576 = vpop.f32.mrb[0].mxu0
      %v1577 = vpop.f32.mrb[0].mxu0
      %v1578 = vadd.f32 0.0, %v1577
      %v1579 = vpop.f32.mrb[0].mxu0
      %1580 = vmatprep.mubr.bf16.mxu0 0
      %1581 = vmatmul.mubr.bf16.gmra.mrb[0].mxu0 %v1518
      %v1582 = vpop.f32.mrb[0].mxu0
      %v1583 = vadd.f32 0.0, %v1582
      %v1584 = vpop.f32.mrb[0].mxu0
      %v1585 = vpop.f32.mrb[0].mxu0
      %v1586 = vadd.f32 0.0, %v1585
      %v1587 = vpop.f32.mrb[0].mxu0
      %1588 = vmatprep.mubr.bf16.mxu0 0
      %1589 = vmatmul.mubr.bf16.gmra.mrb[0].mxu0 %v1521
      %v1590 = vpop.f32.mrb[0].mxu0
      %v1591 = vadd.f32 0.0, %v1590
      %v1592 = vpop.f32.mrb[0].mxu0
      %v1593 = vpop.f32.mrb[0].mxu0
      %v1594 = vadd.f32 0.0, %v1593
      %v1595 = vpop.f32.mrb[0].mxu0
      %1596 = vmatprep.mubr.bf16.mxu0 0
      %1597 = vmatmul.mubr.bf16.gmra.mrb[0].mxu0 %v1524
      %v1598 = vpop.f32.mrb[0].mxu0
      %v1599 = vadd.f32 0.0, %v1598
      %v1600 = vpop.f32.mrb[0].mxu0
      %v1601 = vpop.f32.mrb[0].mxu0
      %v1602 = vadd.f32 0.0, %v1601
      %v1603 = vpop.f32.mrb[0].mxu0
      %1604 = vmatprep.mubr.bf16.mxu0 0
      %1605 = vmatmul.mubr.bf16.gmra.mrb[0].mxu0 %v1527
      %v1606 = vpop.f32.mrb[0].mxu0
      %v1607 = vadd.f32 0.0, %v1606
      %v1608 = vpop.f32.mrb[0].mxu0
      %v1609 = vpop.f32.mrb[0].mxu0
      %v1610 = vadd.f32 0.0, %v1609
      %v1611 = vpop.f32.mrb[0].mxu0
      %1612 = vmatprep.mubr.bf16.mxu0 0
      %1613 = vmatmul.mubr.bf16.gmra.mrb[0].mxu0 %v1530
      %v1614 = vpop.f32.mrb[0].mxu0
      %v1615 = vadd.f32 0.0, %v1614
      %v1616 = vpop.f32.mrb[0].mxu0
      %v1617 = vpop.f32.mrb[0].mxu0
      %v1618 = vpop.f32.mrb[0].mxu0
      %1619 = vdwg.mxu0
      %v1620 = vadd.f32 %v1475, %v1567
      %v1621 = vadd.f32 %v1476, %v1570
      %v1622 = vadd.f32 %v1477, %v1575
      %v1623 = vadd.f32 %v1478, %v1578
      %v1624 = vadd.f32 %v1479, %v1583
      %v1625 = vadd.f32 %v1480, %v1586
      %v1626 = vadd.f32 %v1481, %v1591
      %v1627 = vadd.f32 %v1482, %v1594
      %v1628 = vadd.f32 %v1483, %v1599
      %v1629 = vadd.f32 %v1484, %v1602
      %v1630 = vadd.f32 %v1485, %v1607
      %v1631 = vadd.f32 %v1486, %v1610
      %v1632 = vadd.f32 %v1487, %v1615
      %1633 = vst.msk [vmem:[%s195] sm:$0xff] %vm313, %v1620
      %1634 = vst.msk [vmem:[%s195 + $0x8] sm:$0xff] %vm313, %v1621
      %1635 = vst.msk [vmem:[%s195 + $0x10] sm:$0xff] %vm313, %v1622
      %1636 = vst.msk [vmem:[%s195 + $0x18] sm:$0xff] %vm313, %v1623
      %1637 = vst.msk [vmem:[%s195 + $0x20] sm:$0xff] %vm313, %v1624
      %1638 = vst.msk [vmem:[%s195 + $0x28] sm:$0xff] %vm313, %v1625
      %1639 = vst.msk [vmem:[%s195 + $0x30] sm:$0xff] %vm313, %v1626
      %1640 = vst.msk [vmem:[%s195 + $0x38] sm:$0xff] %vm313, %v1627
      %1641 = vst.msk [vmem:[%s195 + $0x40] sm:$0xff] %vm313, %v1628
      %1642 = vst.msk [vmem:[%s195 + $0x48] sm:$0xff] %vm313, %v1629
      %1643 = vst.msk [vmem:[%s195 + $0x50] sm:$0xff] %vm313, %v1630
      %1644 = vst.msk [vmem:[%s195 + $0x58] sm:$0xff] %vm313, %v1631
      %vm1645 = vcmask 125952
      %1646 = vst.msk [vmem:[%s195 + $0x60] sm:$0xf] %vm1645, %v1632
      %v1647 = vld [vmem:[%s2] sm:$0x1]
      %vm1648 = vcmask 818176
      %v1650 = vsel %vm1648, %v1647, 0
      %vm1652 = vcmask 1043456
      %v1654 = vsel %vm1652, %v1632, 0
      %1656 = vmatprep.subr.mxu0 0.0
      %1657 = vmatpush1.msra.mxu0 %v1620
      %1658 = vmatprep.subr.mxu0 0.0
      %1659 = vmatpush1.msra.mxu0 %v1621
      %1660 = vmatprep.subr.mxu0 0.0
      %1661 = vmatpush1.msra.mxu0 %v1622
      %1662 = vmatprep.subr.mxu0 0.0
      %1663 = vmatpush1.msra.mxu0 %v1623
      %1664 = vmatprep.subr.mxu0 0.0
      %1665 = vmatpush1.msra.mxu0 %v1624
      %1666 = vmatprep.subr.mxu0 0.0
      %1667 = vmatpush1.msra.mxu0 %v1625
      %1668 = vmatprep.subr.mxu0 0.0
      %1669 = vmatpush1.msra.mxu0 %v1626
      %1670 = vmatprep.subr.mxu0 0.0
      %1671 = vmatpush1.msra.mxu0 %v1627
      %1672 = vmatprep.subr.mxu0 0.0
      %1673 = vmatpush1.msra.mxu0 %v1628
      %1674 = vmatprep.subr.mxu0 0.0
      %1675 = vmatpush1.msra.mxu0 %v1629
      %1676 = vmatprep.subr.mxu0 0.0
      %1677 = vmatpush1.msra.mxu0 %v1630
      %1678 = vmatprep.subr.mxu0 0.0
      %1679 = vmatpush1.msra.mxu0 %v1631
      %1680 = vmatprep.subr.mxu0 0.0
      %1681 = vmatpush1.msra.mxu0 %v1654
      %1682 = vmatprep.subr.mxu0 0.0
      %1683 = vmatpush1.msra.mxu0 0.0
      %1684 = vmatprep.subr.mxu0 0.0
      %1685 = vmatpush1.msra.mxu0 0.0
      %1686 = vmatprep.subr.mxu0 0.0
      %1687 = vmatpush1.msra.mxu0 0.0
      %1688 = vmatprep.subr.mxu0 0.0
      %1689 = vmatpush1.msra.mxu0 0.0
      %1690 = vmatprep.subr.mxu0 0.0
      %1691 = vmatpush1.msra.mxu0 0.0
      %1692 = vmatprep.subr.mxu0 0.0
      %1693 = vmatpush1.msra.mxu0 0.0
      %1694 = vmatprep.subr.mxu0 0.0
      %1695 = vmatpush1.msra.mxu0 0.0
      %1696 = vmatprep.subr.mxu0 0.0
      %1697 = vmatpush1.msra.mxu0 0.0
      %1698 = vmatprep.subr.mxu0 0.0
      %1699 = vmatpush1.msra.mxu0 0.0
      %1700 = vmatprep.subr.mxu0 0.0
      %1701 = vmatpush1.msra.mxu0 0.0
      %1702 = vmatprep.subr.mxu0 0.0
      %1703 = vmatpush1.msra.mxu0 0.0
      %1704 = vmatprep.subr.mxu0 0.0
      %1705 = vmatpush1.msra.mxu0 0.0
      %1706 = vmatprep.subr.mxu0 0.0
      %1707 = vmatpush1.msra.mxu0 0.0
      %1708 = vmatprep.subr.mxu0 0.0
      %1709 = vmatpush1.msra.mxu0 0.0
      %1710 = vmatprep.subr.mxu0 0.0
      %1711 = vmatpush1.msra.mxu0 0.0
      %1712 = vmatprep.subr.mxu0 0.0
      %1713 = vmatpush1.msra.mxu0 0.0
      %1714 = vmatprep.subr.mxu0 0.0
      %1715 = vmatpush1.msra.mxu0 0.0
      %1716 = vmatprep.subr.mxu0 0.0
      %1717 = vmatpush1.msra.mxu0 0.0
      %1718 = vmatprep.subr.mxu0 0.0
      %1719 = vmatpush1.msra.mxu0 0.0
      %1720 = vmatprep.mubr.f32.mxu0 0.0
      %1721 = vmatmul.mubr.f32.gmra.mrb[0].mxu0 %v1650
      %v1722 = vpop.f32.mrb[0].mxu0
      %v1723 = vadd.f32 0.0, %v1722
      %v1724 = vpop.f32.mrb[0].mxu0
      %1725 = vdwg.mxu0
      %v1726 = vmul.f32 %v1620, %v1620
      %v1727 = vmul.f32 %v1621, %v1621
      %v1728 = vmul.f32 %v1622, %v1622
      %v1729 = vmul.f32 %v1623, %v1623
      %v1730 = vmul.f32 %v1624, %v1624
      %v1731 = vmul.f32 %v1625, %v1625
      %v1732 = vmul.f32 %v1626, %v1626
      %v1733 = vmul.f32 %v1627, %v1627
      %v1734 = vmul.f32 %v1628, %v1628
      %v1735 = vmul.f32 %v1629, %v1629
      %v1736 = vmul.f32 %v1630, %v1630
      %v1737 = vmul.f32 %v1631, %v1631
      %v1738 = vmul.f32 %v1632, %v1632
      %v1740 = vsel %vm1652, %v1738, 0
      %1742 = vmatprep.subr.mxu0 0.0
      %1743 = vmatpush1.msra.mxu0 %v1726
      %1744 = vmatprep.subr.mxu0 0.0
      %1745 = vmatpush1.msra.mxu0 %v1727
      %1746 = vmatprep.subr.mxu0 0.0
      %1747 = vmatpush1.msra.mxu0 %v1728
      %1748 = vmatprep.subr.mxu0 0.0
      %1749 = vmatpush1.msra.mxu0 %v1729
      %1750 = vmatprep.subr.mxu0 0.0
      %1751 = vmatpush1.msra.mxu0 %v1730
      %1752 = vmatprep.subr.mxu0 0.0
      %1753 = vmatpush1.msra.mxu0 %v1731
      %1754 = vmatprep.subr.mxu0 0.0
      %1755 = vmatpush1.msra.mxu0 %v1732
      %1756 = vmatprep.subr.mxu0 0.0
      %1757 = vmatpush1.msra.mxu0 %v1733
      %1758 = vmatprep.subr.mxu0 0.0
      %1759 = vmatpush1.msra.mxu0 %v1734
      %1760 = vmatprep.subr.mxu0 0.0
      %1761 = vmatpush1.msra.mxu0 %v1735
      %1762 = vmatprep.subr.mxu0 0.0
      %1763 = vmatpush1.msra.mxu0 %v1736
      %1764 = vmatprep.subr.mxu0 0.0
      %1765 = vmatpush1.msra.mxu0 %v1737
      %1766 = vmatprep.subr.mxu0 0.0
      %1767 = vmatpush1.msra.mxu0 %v1740
      %1768 = vmatprep.subr.mxu0 0.0
      %1769 = vmatpush1.msra.mxu0 0.0
      %1770 = vmatprep.subr.mxu0 0.0
      %1771 = vmatpush1.msra.mxu0 0.0
      %1772 = vmatprep.subr.mxu0 0.0
      %1773 = vmatpush1.msra.mxu0 0.0
      %1774 = vmatprep.subr.mxu0 0.0
      %1775 = vmatpush1.msra.mxu0 0.0
      %1776 = vmatprep.subr.mxu0 0.0
      %1777 = vmatpush1.msra.mxu0 0.0
      %1778 = vmatprep.subr.mxu0 0.0
      %1779 = vmatpush1.msra.mxu0 0.0
      %1780 = vmatprep.subr.mxu0 0.0
      %1781 = vmatpush1.msra.mxu0 0.0
      %1782 = vmatprep.subr.mxu0 0.0
      %1783 = vmatpush1.msra.mxu0 0.0
      %1784 = vmatprep.subr.mxu0 0.0
      %1785 = vmatpush1.msra.mxu0 0.0
      %1786 = vmatprep.subr.mxu0 0.0
      %1787 = vmatpush1.msra.mxu0 0.0
      %1788 = vmatprep.subr.mxu0 0.0
      %1789 = vmatpush1.msra.mxu0 0.0
      %1790 = vmatprep.subr.mxu0 0.0
      %1791 = vmatpush1.msra.mxu0 0.0
      %1792 = vmatprep.subr.mxu0 0.0
      %1793 = vmatpush1.msra.mxu0 0.0
      %1794 = vmatprep.subr.mxu0 0.0
      %1795 = vmatpush1.msra.mxu0 0.0
      %1796 = vmatprep.subr.mxu0 0.0
      %1797 = vmatpush1.msra.mxu0 0.0
      %1798 = vmatprep.subr.mxu0 0.0
      %1799 = vmatpush1.msra.mxu0 0.0
      %1800 = vmatprep.subr.mxu0 0.0
      %1801 = vmatpush1.msra.mxu0 0.0
      %1802 = vmatprep.subr.mxu0 0.0
      %1803 = vmatpush1.msra.mxu0 0.0
      %1804 = vmatprep.subr.mxu0 0.0
      %1805 = vmatpush1.msra.mxu0 0.0
      %1806 = vmatprep.mubr.f32.mxu0 0.0
      %1807 = vmatmul.mubr.f32.gmra.mrb[0].mxu0 %v1650
      %v1808 = vpop.f32.mrb[0].mxu0
      %v1809 = vadd.f32 0.0, %v1808
      %v1810 = vpop.f32.mrb[0].mxu0
      %1811 = vdwg.mxu0
      %p1812 = scmp.eq.s32.totalorder %s16, 0
      // Predicated region
      $region33: #{autoprotonet_embedding.10} parent=31 // pred_check
        %p1813 = pneg %p1812
      $region34: #{autoprotonet_embedding.10} parent=31 // pred_check_branch
        %1815 = sbr.rel (%p1813) target = $region36
      $region35: #{autoprotonet_embedding.10} parent=31 // pred_region
        %vm1816 = vcmask 123904
        %1817 = vst.msk [vmem:[%s4] sm:$0x3] %vm1816, 0.0
      $region36: #{autoprotonet_embedding.10} parent=31 // pred_fallthru
        _
      %v1818 = vld [vmem:[%s4] sm:$0x3]
      %v1820 = vrot.slane %v1809, 7
      %vm1822 = vcmask 1040384
      %v1823 = vsel %vm1822, %v1723, %v1820
      %v1824 = vadd.f32 %v1818, %v1823
      %vm1825 = vcmask 123904
      %1826 = vst.msk [vmem:[%s4] sm:$0x3] %vm1825, %v1824
      %p1827 = scmp.lt.s32.totalorder %s16, 3
      %s1828 = scalar_select %p1827, %s16, 3
      %s1829 = smul.addr %s1828, 13
      %s1830 = smul.addr %s1829, 8
      %s1831 = scalar_lea.vmem %s3, %s1830
      // Predicated region
      $region37: #{autoprotonet_embedding.10} parent=31 // pred_check
        %p1832 = pneg %p102
      $region38: #{autoprotonet_embedding.10} parent=31 // pred_check_branch
        %1834 = sbr.rel (%p1832) target = $region40
      $region39: #{autoprotonet_embedding.10} parent=31 // pred_region
        _
      $region40: #{autoprotonet_embedding.10} parent=31 // pred_fallthru
        _
      // Predicated region
      $region41: #{autoprotonet_embedding.10} parent=31 // pred_check
        %p1835 = pneg %p123
      $region42: #{autoprotonet_embedding.10} parent=31 // pred_check_branch
        %1837 = sbr.rel (%p1835) target = $region44
      $region43: #{autoprotonet_embedding.10} parent=31 // pred_region
        _
      $region44: #{autoprotonet_embedding.10} parent=31 // pred_fallthru
        _
      // Predicated region
      $region45: #{autoprotonet_embedding.10} parent=31 // pred_check
        %p1838 = pneg %p123
      $region46: #{autoprotonet_embedding.10} parent=31 // pred_check_branch
        %1840 = sbr.rel (%p1838) target = $region48
      $region47: #{autoprotonet_embedding.10} parent=31 // pred_region
        _
      $region48: #{autoprotonet_embedding.10} parent=31 // pred_fallthru
        _
    $region32: #{autoprotonet_embedding.10} parent=5 // pred_fallthru
      _
    %p1841 = scmp.le.s32.totalorder 2, %s11
    // Predicated region
    $region49: #{autoprotonet_embedding.10} parent=5 // pred_check
      %p1842 = pneg %p1841
    $region50: #{autoprotonet_embedding.10} parent=5 // pred_check_branch
      %1844 = sbr.rel (%p1842) target = $region52
    $region51: #{autoprotonet_embedding.10} parent=5 // pred_region
      %s1845 = ssub.s32 %s11, 2
      // Predicated region
      $region53: #{autoprotonet_embedding.10} parent=51 // pred_check
        %p1846 = pneg %p108
      $region54: #{autoprotonet_embedding.10} parent=51 // pred_check_branch
        %1848 = sbr.rel (%p1846) target = $region56
      $region55: #{autoprotonet_embedding.10} parent=51 // pred_region
        %p1849 = scmp.lt.s32.totalorder %s17, 3
        %s1850 = scalar_select %p1849, %s17, 3
        %s1851 = smul.addr %s1850, 13
        %s1852 = smul.addr %s1851, 8
        %s1853 = scalar_lea.vmem %s3, %s1852
      $region56: #{autoprotonet_embedding.10} parent=51 // pred_fallthru
        _
    $region52: #{autoprotonet_embedding.10} parent=5 // pred_fallthru
      _
  $region6: #{autoprotonet_embedding.10} parent=0 // loop_footer
    %s15 = sadd.s32 1, %s11
  $region7: #{autoprotonet_embedding.10} parent=0 // loop_footer_branch
    %10 = sbr.rel target = $region3
  $region8: #{autoprotonet_embedding.10} parent=0 // loop_exit
    _

// kernel: autoprotonet_embedding.11
$region0: #{autoprotonet_embedding.11}
  #allocation0 [shape = 'u32[]', space=smem, size = 0x4, offset = 0x4, fixed_abs, tag = 'smem constant byte address 0x4 - core index']
  #allocation1 [shape = 'u32[144,128]{1,0:T(1,128)}', space=vmem, size = 0x12000, scoped, tag = 'internal scratch']
  %s0 = inlined_call_operand.vmem [shape: f32[4,100,16], index: 0, kind: input, shape index: {}]
  %s1 = inlined_call_operand.vmem [shape: f32[1,16], index: 1, kind: input, shape index: {}]
  %s2 = inlined_call_operand.vmem [shape: f32[1,16], index: 2, kind: input, shape index: {}]
  %s3 = inlined_call_operand.vmem [shape: f32[50,89], index: 3, kind: input, shape index: {}]
  %s4 = inlined_call_operand.vmem [shape: bf16[4,50,16], index: 4, kind: output, shape index: {}]
  %s5 = sld [smem:[#allocation0]]
  $region49: #{autoprotonet_embedding.11} parent=0
    _
  %s7 = ssub.s32 1, %s5
  %s8 = scalar_select 0, %s7, %s5
  loop: start=0, step=1, limit=6
  $region2: #{autoprotonet_embedding.11} parent=0 // loop_pre_header
    _
  $region3: #{autoprotonet_embedding.11} parent=0 // loop_header
    %s10 = sphi 0, %s14
    %p11 = scmp.ge.s32.totalorder %s10, 6
    %s20 = sphi 0, %s22
    %s23 = sphi 0, %s20
    %s24 = sphi 0, %s23
    %s40 = sphi 0, %s24
    %s44 = sphi 0, %s44
    %s46 = sphi 0, %s44
    %s47 = sphi 0, %s46
    %s61 = sphi 0, %s47
    %s65 = sphi 0, %s65
    %s67 = sphi 0, %s65
    %s68 = sphi 0, %s67
    %s82 = sphi 0, %s68
    %s86 = sphi 0, %s86
    %s88 = sphi 0, %s86
    %s89 = sphi 0, %s88
    %s103 = sphi 0, %s89
    %s109 = sphi 0, %s111
    %s112 = sphi 0, %s109
    %s113 = sphi 0, %s112
    %s129 = sphi 0, %s113
  $region4: #{autoprotonet_embedding.11} parent=0 // loop_header_branch
    %13 = sbr.rel (%p11) target = $region8
  $region5: #{autoprotonet_embedding.11} parent=0 // loop_body
    %s15 = ssub.s32 %s10, 1
    %s16 = ssub.s32 %s10, 2
    %s17 = sadd.s32 %s10, 1
    %s18 = ssub.s32 %s10, %s17
    %p19 = scmp.eq.s32.totalorder %s18, 0
    %s21 = sadd.s32 %s20, 1
    %s22 = scalar_select %p19, %s20, %s21
    %p25 = pneg %p19
    %p26 = scmp.eq.s32.totalorder %s10, 3
    %p27 = por %p25, %p26
    %p28 = scmp.ne.s32.totalorder %s20, %s23
    %p29 = scmp.eq.s32.totalorder %s10, 0
    %p30 = por %p28, %p29
    %p31 = scmp.ne.s32.totalorder %s20, %s23
    %p32 = scmp.eq.s32.totalorder %s15, 3
    %p33 = por %p31, %p32
    %p34 = scmp.ne.s32.totalorder %s23, %s24
    %p35 = scmp.eq.s32.totalorder %s15, 0
    %p36 = por %p34, %p35
    %p37 = scmp.ne.s32.totalorder %s23, %s24
    %p38 = scmp.eq.s32.totalorder %s16, 3
    %p39 = por %p37, %p38
    %p41 = scmp.ne.s32.totalorder %s24, %s40
    %p42 = scmp.eq.s32.totalorder %s16, 0
    %p43 = por %p41, %p42
    %s45 = sadd.s32 %s44, 1
    %p48 = scmp.eq.s32.totalorder %s10, 3
    %p49 = scmp.ne.s32.totalorder %s44, %s46
    %p50 = scmp.eq.s32.totalorder %s10, 0
    %p51 = por %p49, %p50
    %p52 = scmp.ne.s32.totalorder %s44, %s46
    %p53 = scmp.eq.s32.totalorder %s15, 3
    %p54 = por %p52, %p53
    %p55 = scmp.ne.s32.totalorder %s46, %s47
    %p56 = scmp.eq.s32.totalorder %s15, 0
    %p57 = por %p55, %p56
    %p58 = scmp.ne.s32.totalorder %s46, %s47
    %p59 = scmp.eq.s32.totalorder %s16, 3
    %p60 = por %p58, %p59
    %p62 = scmp.ne.s32.totalorder %s47, %s61
    %p63 = scmp.eq.s32.totalorder %s16, 0
    %p64 = por %p62, %p63
    %s66 = sadd.s32 %s65, 1
    %p69 = scmp.eq.s32.totalorder %s10, 3
    %p70 = scmp.ne.s32.totalorder %s65, %s67
    %p71 = scmp.eq.s32.totalorder %s10, 0
    %p72 = por %p70, %p71
    %p73 = scmp.ne.s32.totalorder %s65, %s67
    %p74 = scmp.eq.s32.totalorder %s15, 3
    %p75 = por %p73, %p74
    %p76 = scmp.ne.s32.totalorder %s67, %s68
    %p77 = scmp.eq.s32.totalorder %s15, 0
    %p78 = por %p76, %p77
    %p79 = scmp.ne.s32.totalorder %s67, %s68
    %p80 = scmp.eq.s32.totalorder %s16, 3
    %p81 = por %p79, %p80
    %p83 = scmp.ne.s32.totalorder %s68, %s82
    %p84 = scmp.eq.s32.totalorder %s16, 0
    %p85 = por %p83, %p84
    %s87 = sadd.s32 %s86, 1
    %p90 = scmp.eq.s32.totalorder %s10, 3
    %p91 = scmp.ne.s32.totalorder %s86, %s88
    %p92 = scmp.eq.s32.totalorder %s10, 0
    %p93 = por %p91, %p92
    %p94 = scmp.ne.s32.totalorder %s86, %s88
    %p95 = scmp.eq.s32.totalorder %s15, 3
    %p96 = por %p94, %p95
    %p97 = scmp.ne.s32.totalorder %s88, %s89
    %p98 = scmp.eq.s32.totalorder %s15, 0
    %p99 = por %p97, %p98
    %p100 = scmp.ne.s32.totalorder %s88, %s89
    %p101 = scmp.eq.s32.totalorder %s16, 3
    %p102 = por %p100, %p101
    %p104 = scmp.ne.s32.totalorder %s89, %s103
    %p105 = scmp.eq.s32.totalorder %s16, 0
    %p106 = por %p104, %p105
    %s107 = ssub.s32 %s10, %s17
    %p108 = scmp.eq.s32.totalorder %s107, 0
    %s110 = sadd.s32 %s109, 1
    %s111 = scalar_select %p108, %s109, %s110
    %p114 = pneg %p108
    %p115 = scmp.eq.s32.totalorder %s10, 3
    %p116 = por %p114, %p115
    %p117 = scmp.ne.s32.totalorder %s109, %s112
    %p118 = scmp.eq.s32.totalorder %s10, 0
    %p119 = por %p117, %p118
    %p120 = scmp.ne.s32.totalorder %s109, %s112
    %p121 = scmp.eq.s32.totalorder %s15, 3
    %p122 = por %p120, %p121
    %p123 = scmp.ne.s32.totalorder %s112, %s113
    %p124 = scmp.eq.s32.totalorder %s15, 0
    %p125 = por %p123, %p124
    %p126 = scmp.ne.s32.totalorder %s112, %s113
    %p127 = scmp.eq.s32.totalorder %s16, 3
    %p128 = por %p126, %p127
    %p130 = scmp.ne.s32.totalorder %s113, %s129
    %p131 = scmp.eq.s32.totalorder %s16, 0
    %p132 = por %p130, %p131
    %p133 = scmp.le.s32.totalorder 1, %s10
    %p134 = scmp.lt.s32.totalorder %s10, 5
    %p135 = pnand %p133, %p134
    %p136 = pneg %p135
    // Predicated region
    $region9: #{autoprotonet_embedding.11} parent=5 // pred_check
      _
    $region10: #{autoprotonet_embedding.11} parent=5 // pred_check_branch
      %138 = sbr.rel (%p135) target = $region12
    $region11: #{autoprotonet_embedding.11} parent=5 // pred_region
      %s139 = ssub.s32 %s10, 1
      // Predicated region
      $region13: #{autoprotonet_embedding.11} parent=11 // pred_check
        %p140 = pneg %p57
      $region14: #{autoprotonet_embedding.11} parent=11 // pred_check_branch
        %142 = sbr.rel (%p140) target = $region16
      $region15: #{autoprotonet_embedding.11} parent=11 // pred_region
        _
      $region16: #{autoprotonet_embedding.11} parent=11 // pred_fallthru
        _
      // Predicated region
      $region17: #{autoprotonet_embedding.11} parent=11 // pred_check
        %p143 = pneg %p78
      $region18: #{autoprotonet_embedding.11} parent=11 // pred_check_branch
        %145 = sbr.rel (%p143) target = $region20
      $region19: #{autoprotonet_embedding.11} parent=11 // pred_region
        _
      $region20: #{autoprotonet_embedding.11} parent=11 // pred_fallthru
        _
      // Predicated region
      $region21: #{autoprotonet_embedding.11} parent=11 // pred_check
        %p146 = pneg %p99
      $region22: #{autoprotonet_embedding.11} parent=11 // pred_check_branch
        %148 = sbr.rel (%p146) target = $region24
      $region23: #{autoprotonet_embedding.11} parent=11 // pred_region
        _
      $region24: #{autoprotonet_embedding.11} parent=11 // pred_fallthru
        _
    $region12: #{autoprotonet_embedding.11} parent=5 // pred_fallthru
      _
    %p149 = scmp.lt.s32.totalorder %s10, 4
    // Predicated region
    $region25: #{autoprotonet_embedding.11} parent=5 // pred_check
      %p150 = pneg %p149
    $region26: #{autoprotonet_embedding.11} parent=5 // pred_check_branch
      %152 = sbr.rel (%p150) target = $region28
    $region27: #{autoprotonet_embedding.11} parent=5 // pred_region
      // Predicated region
      $region29: #{autoprotonet_embedding.11} parent=27 // pred_check
        %p153 = pneg %p30
      $region30: #{autoprotonet_embedding.11} parent=27 // pred_check_branch
        %155 = sbr.rel (%p153) target = $region32
      $region31: #{autoprotonet_embedding.11} parent=27 // pred_region
        %p156 = scmp.lt.s32.totalorder %s10, 3
        %s157 = scalar_select %p156, %s10, 3
        %s158 = smul.addr %s157, 13
        %s159 = smul.addr %s158, 8
        %s160 = scalar_lea.vmem %s0, %s159
      $region32: #{autoprotonet_embedding.11} parent=27 // pred_fallthru
        _
    $region28: #{autoprotonet_embedding.11} parent=5 // pred_fallthru
      _
    %p161 = scmp.le.s32.totalorder 1, %s10
    %p162 = scmp.lt.s32.totalorder %s10, 5
    %p163 = pnand %p161, %p162
    %p164 = pneg %p163
    // Predicated region
    $region33: #{autoprotonet_embedding.11} parent=5 // pred_check
      _
    $region34: #{autoprotonet_embedding.11} parent=5 // pred_check_branch
      %166 = sbr.rel (%p163) target = $region36
    $region35: #{autoprotonet_embedding.11} parent=5 // pred_region
      %s167 = ssub.s32 %s10, 1
      %p168 = scmp.lt.s32.totalorder %s15, 3
      %s169 = scalar_select %p168, %s15, 3
      %s170 = smul.addr %s169, 13
      %s171 = smul.addr %s170, 8
      %s172 = scalar_lea.vmem %s0, %s171
      %p173 = pneg %p36
      %p174 = pneg %p33
      %p175 = pneg %p57
      %p176 = pneg %p54
      %p177 = pneg %p78
      %p178 = pneg %p75
      %p179 = pneg %p99
      %p180 = pneg %p96
      %p181 = pneg %p125
      %p182 = pneg %p122
      %p183 = scmp.lt.s32.totalorder %s15, 3
      %s184 = scalar_select %p183, %s15, 3
      %s185 = smul.addr %s184, 7
      %s186 = smul.addr %s185, 4
      %s187 = scalar_lea.vmem %s4, %s186
      %p188 = scmp.lt.s32.totalorder %s15, 3
      %s189 = scalar_select %p188, %s15, 3
      %s190 = smul.addr %s189, 13
      %s191 = smul.addr %s190, 8
      %s192 = scalar_lea.vmem %s0, %s191
      %p193 = scmp.lt.s32.totalorder %s15, 3
      %s194 = scalar_select %p193, %s15, 3
      %s195 = smul.addr %s194, 7
      %s196 = smul.addr %s195, 4
      %s197 = scalar_lea.vmem %s4, %s196
      %v198 = vld [vmem:[%s192] sm:$0xff]
      %v199 = vld [vmem:[%s192 + $0x8] sm:$0xff]
      %v200 = vld [vmem:[%s192 + $0x10] sm:$0xff]
      %v201 = vld [vmem:[%s192 + $0x18] sm:$0xff]
      %v202 = vld [vmem:[%s192 + $0x20] sm:$0xff]
      %v203 = vld [vmem:[%s192 + $0x28] sm:$0xff]
      %v204 = vld [vmem:[%s192 + $0x30] sm:$0xff]
      %v205 = vld [vmem:[%s192 + $0x38] sm:$0xff]
      %v206 = vld [vmem:[%s192 + $0x40] sm:$0xff]
      %v207 = vld [vmem:[%s192 + $0x48] sm:$0xff]
      %v208 = vld [vmem:[%s192 + $0x50] sm:$0xff]
      %v209 = vld [vmem:[%s192 + $0x58] sm:$0xff]
      %v210 = vld [vmem:[%s192 + $0x60] sm:$0xf]
      %v211 = vld [vmem:[%s1] sm:$0x1]
      %v213 = vlaneseq
      %v214 = vshrl.u32 %v213, 7
      %v215 = vsub.s32 0, %v214
      %v216 = vrot.slane %v211, %v215
      %v218 = vmul.f32 %v198, %v216
      %v219 = vmul.f32 %v199, %v216
      %v220 = vmul.f32 %v200, %v216
      %v221 = vmul.f32 %v201, %v216
      %v222 = vmul.f32 %v202, %v216
      %v223 = vmul.f32 %v203, %v216
      %v224 = vmul.f32 %v204, %v216
      %v225 = vmul.f32 %v205, %v216
      %v226 = vmul.f32 %v206, %v216
      %v227 = vmul.f32 %v207, %v216
      %v228 = vmul.f32 %v208, %v216
      %v229 = vmul.f32 %v209, %v216
      %v230 = vmul.f32 %v210, %v216
      %v231 = vld [vmem:[%s2] sm:$0x1]
      %v233 = vlaneseq
      %v234 = vshrl.u32 %v233, 7
      %v235 = vsub.s32 0, %v234
      %v236 = vrot.slane %v231, %v235
      %v238 = vadd.f32 %v218, %v236
      %v239 = vadd.f32 %v219, %v236
      %v240 = vadd.f32 %v220, %v236
      %v241 = vadd.f32 %v221, %v236
      %v242 = vadd.f32 %v222, %v236
      %v243 = vadd.f32 %v223, %v236
      %v244 = vadd.f32 %v224, %v236
      %v245 = vadd.f32 %v225, %v236
      %v246 = vadd.f32 %v226, %v236
      %v247 = vadd.f32 %v227, %v236
      %v248 = vadd.f32 %v228, %v236
      %v249 = vadd.f32 %v229, %v236
      %v250 = vadd.f32 %v230, %v236
      %v251 = vmax.f32 %v238, 0.0
      %v252 = vmax.f32 %v239, 0.0
      %v253 = vmax.f32 %v240, 0.0
      %v254 = vmax.f32 %v241, 0.0
      %v255 = vmax.f32 %v242, 0.0
      %v256 = vmax.f32 %v243, 0.0
      %v257 = vmax.f32 %v244, 0.0
      %v258 = vmax.f32 %v245, 0.0
      %v259 = vmax.f32 %v246, 0.0
      %v260 = vmax.f32 %v247, 0.0
      %v261 = vmax.f32 %v248, 0.0
      %v262 = vmax.f32 %v249, 0.0
      %v263 = vmax.f32 %v250, 0.0
      %vm277 = vcmask 1046528
      %v278 = vrot.slane %v251, 1
      %v279 = vrot.slane %v252, 1
      %v280 = vsel %vm277, %v278, %v279
      %v281 = vrot.slane %v253, 1
      %v282 = vsel %vm277, %v279, %v281
      %v283 = vrot.slane %v254, 1
      %v284 = vsel %vm277, %v281, %v283
      %v285 = vrot.slane %v255, 1
      %v286 = vsel %vm277, %v283, %v285
      %v287 = vrot.slane %v256, 1
      %v288 = vsel %vm277, %v285, %v287
      %v289 = vrot.slane %v257, 1
      %v290 = vsel %vm277, %v287, %v289
      %v291 = vrot.slane %v258, 1
      %v292 = vsel %vm277, %v289, %v291
      %v293 = vrot.slane %v259, 1
      %v294 = vsel %vm277, %v291, %v293
      %v295 = vrot.slane %v260, 1
      %v296 = vsel %vm277, %v293, %v295
      %v297 = vrot.slane %v261, 1
      %v298 = vsel %vm277, %v295, %v297
      %v299 = vrot.slane %v262, 1
      %v300 = vsel %vm277, %v297, %v299
      %v301 = vrot.slane %v263, 1
      %v302 = vsel %vm277, %v299, %v301
      %v316 = vmax.f32 %v251, %v280
      %v317 = vmax.f32 %v252, %v282
      %v318 = vmax.f32 %v253, %v284
      %v319 = vmax.f32 %v254, %v286
      %v320 = vmax.f32 %v255, %v288
      %v321 = vmax.f32 %v256, %v290
      %v322 = vmax.f32 %v257, %v292
      %v323 = vmax.f32 %v258, %v294
      %v324 = vmax.f32 %v259, %v296
      %v325 = vmax.f32 %v260, %v298
      %v326 = vmax.f32 %v261, %v300
      %v327 = vmax.f32 %v262, %v302
      %v328 = vmax.f32 %v263, %v301
      %vm341 = vcmask 1045504
      %v342 = vrot.slane %v317, 2
      %v343 = vrot.slane %v318, 2
      %v344 = vsel %vm341, %v342, %v343
      %v345 = vrot.slane %v319, 2
      %v346 = vsel %vm341, %v343, %v345
      %v347 = vrot.slane %v320, 2
      %v348 = vsel %vm341, %v345, %v347
      %v349 = vrot.slane %v321, 2
      %v350 = vsel %vm341, %v347, %v349
      %v351 = vrot.slane %v322, 2
      %v352 = vsel %vm341, %v349, %v351
      %v353 = vrot.slane %v323, 2
      %v354 = vsel %vm341, %v351, %v353
      %v355 = vrot.slane %v324, 2
      %v356 = vsel %vm341, %v353, %v355
      %v357 = vrot.slane %v325, 2
      %v358 = vsel %vm341, %v355, %v357
      %v359 = vrot.slane %v326, 2
      %v360 = vsel %vm341, %v357, %v359
      %v361 = vrot.slane %v327, 2
      %v362 = vsel %vm341, %v359, %v361
      %v363 = vrot.slane %v328, 2
      %v364 = vsel %vm341, %v361, %v363
      %v377 = vmax.f32 %v316, %v344
      %v378 = vmax.f32 %v317, %v346
      %v379 = vmax.f32 %v318, %v348
      %v380 = vmax.f32 %v319, %v350
      %v381 = vmax.f32 %v320, %v352
      %v382 = vmax.f32 %v321, %v354
      %v383 = vmax.f32 %v322, %v356
      %v384 = vmax.f32 %v323, %v358
      %v385 = vmax.f32 %v324, %v360
      %v386 = vmax.f32 %v325, %v362
      %v387 = vmax.f32 %v326, %v364
      %v388 = vmax.f32 %v327, %v363
      %v389 = vld [vmem:[%s3] sm:$0xff]
      %v390 = vld [vmem:[%s3 + $0x8] sm:$0xff]
      %v391 = vld [vmem:[%s3 + $0x10] sm:$0xff]
      %v392 = vld [vmem:[%s3 + $0x18] sm:$0xff]
      %v393 = vld [vmem:[%s3 + $0x20] sm:$0xff]
      %v394 = vld [vmem:[%s3 + $0x28] sm:$0xff]
      %v395 = vld [vmem:[%s3 + $0x30] sm:$0x3]
      %vm396 = vcmask 728064
      %v398 = vsel %vm396, %v389, 0
      %v401 = vsel %vm396, %v390, 0
      %v404 = vsel %vm396, %v391, 0
      %v407 = vsel %vm396, %v392, 0
      %v410 = vsel %vm396, %v393, 0
      %v413 = vsel %vm396, %v394, 0
      %v416 = vsel %vm396, %v395, 0
      %vm418 = vcmask 1040384
      %v420 = vsel %vm418, %v388, 0
      %422 = vmatprep.subr.mxu0 0.0
      %423 = vmatpush1.msra.mxu0 %v377
      %424 = vmatprep.subr.mxu0 0.0
      %425 = vmatpush1.msra.mxu0 %v378
      %426 = vmatprep.subr.mxu0 0.0
      %427 = vmatpush1.msra.mxu0 %v379
      %428 = vmatprep.subr.mxu0 0.0
      %429 = vmatpush1.msra.mxu0 %v380
      %430 = vmatprep.subr.mxu0 0.0
      %431 = vmatpush1.msra.mxu0 %v381
      %432 = vmatprep.subr.mxu0 0.0
      %433 = vmatpush1.msra.mxu0 %v382
      %434 = vmatprep.subr.mxu0 0.0
      %435 = vmatpush1.msra.mxu0 %v383
      %436 = vmatprep.subr.mxu0 0.0
      %437 = vmatpush1.msra.mxu0 %v384
      %438 = vmatprep.subr.mxu0 0.0
      %439 = vmatpush1.msra.mxu0 %v385
      %440 = vmatprep.subr.mxu0 0.0
      %441 = vmatpush1.msra.mxu0 %v386
      %442 = vmatprep.subr.mxu0 0.0
      %443 = vmatpush1.msra.mxu0 %v387
      %444 = vmatprep.subr.mxu0 0.0
      %445 = vmatpush1.msra.mxu0 %v420
      %446 = vmatprep.subr.mxu0 0.0
      %447 = vmatpush1.msra.mxu0 0.0
      %448 = vmatprep.subr.mxu0 0.0
      %449 = vmatpush1.msra.mxu0 0.0
      %450 = vmatprep.subr.mxu0 0.0
      %451 = vmatpush1.msra.mxu0 0.0
      %452 = vmatprep.subr.mxu0 0.0
      %453 = vmatpush1.msra.mxu0 0.0
      %454 = vmatprep.subr.mxu0 0.0
      %455 = vmatpush1.msra.mxu0 0.0
      %456 = vmatprep.subr.mxu0 0.0
      %457 = vmatpush1.msra.mxu0 0.0
      %458 = vmatprep.subr.mxu0 0.0
      %459 = vmatpush1.msra.mxu0 0.0
      %460 = vmatprep.subr.mxu0 0.0
      %461 = vmatpush1.msra.mxu0 0.0
      %462 = vmatprep.subr.mxu0 0.0
      %463 = vmatpush1.msra.mxu0 0.0
      %464 = vmatprep.subr.mxu0 0.0
      %465 = vmatpush1.msra.mxu0 0.0
      %466 = vmatprep.subr.mxu0 0.0
      %467 = vmatpush1.msra.mxu0 0.0
      %468 = vmatprep.subr.mxu0 0.0
      %469 = vmatpush1.msra.mxu0 0.0
      %470 = vmatprep.subr.mxu0 0.0
      %471 = vmatpush1.msra.mxu0 0.0
      %472 = vmatprep.subr.mxu0 0.0
      %473 = vmatpush1.msra.mxu0 0.0
      %474 = vmatprep.subr.mxu0 0.0
      %475 = vmatpush1.msra.mxu0 0.0
      %476 = vmatprep.subr.mxu0 0.0
      %477 = vmatpush1.msra.mxu0 0.0
      %478 = vmatprep.subr.mxu0 0.0
      %479 = vmatpush1.msra.mxu0 0.0
      %480 = vmatprep.subr.mxu0 0.0
      %481 = vmatpush1.msra.mxu0 0.0
      %482 = vmatprep.subr.mxu0 0.0
      %483 = vmatpush1.msra.mxu0 0.0
      %484 = vmatprep.subr.mxu0 0.0
      %485 = vmatpush1.msra.mxu0 0.0
      %486 = vmatprep.mubr.f32.mxu0 0.0
      %487 = vmatmul.mubr.f32.gmra.mrb[0].mxu0 %v398
      %v488 = vpop.f32.mrb[0].mxu0
      %v489 = vadd.f32 0.0, %v488
      %v490 = vpop.f32.mrb[0].mxu0
      %491 = vmatprep.mubr.f32.mxu0 0.0
      %492 = vmatmul.mubr.f32.gmra.mrb[0].mxu0 %v401
      %v493 = vpop.f32.mrb[0].mxu0
      %v494 = vadd.f32 0.0, %v493
      %v495 = vpop.f32.mrb[0].mxu0
      %496 = vmatprep.mubr.f32.mxu0 0.0
      %497 = vmatmul.mubr.f32.gmra.mrb[0].mxu0 %v404
      %v498 = vpop.f32.mrb[0].mxu0
      %v499 = vadd.f32 0.0, %v498
      %v500 = vpop.f32.mrb[0].mxu0
      %501 = vmatprep.mubr.f32.mxu0 0.0
      %502 = vmatmul.mubr.f32.gmra.mrb[0].mxu0 %v407
      %v503 = vpop.f32.mrb[0].mxu0
      %v504 = vadd.f32 0.0, %v503
      %v505 = vpop.f32.mrb[0].mxu0
      %506 = vmatprep.mubr.f32.mxu0 0.0
      %507 = vmatmul.mubr.f32.gmra.mrb[0].mxu0 %v410
      %v508 = vpop.f32.mrb[0].mxu0
      %v509 = vadd.f32 0.0, %v508
      %v510 = vpop.f32.mrb[0].mxu0
      %511 = vmatprep.mubr.f32.mxu0 0.0
      %512 = vmatmul.mubr.f32.gmra.mrb[0].mxu0 %v413
      %v513 = vpop.f32.mrb[0].mxu0
      %v514 = vadd.f32 0.0, %v513
      %v515 = vpop.f32.mrb[0].mxu0
      %516 = vmatprep.mubr.f32.mxu0 0.0
      %517 = vmatmul.mubr.f32.gmra.mrb[0].mxu0 %v416
      %v518 = vpop.f32.mrb[0].mxu0
      %v519 = vadd.f32 0.0, %v518
      %v520 = vpop.f32.mrb[0].mxu0
      %521 = vdwg.mxu0
      %v522 = vpack.c.bf16 %v494, %v489
      %v523 = vpack.c.bf16 %v504, %v499
      %v524 = vpack.c.bf16 %v514, %v509
      %v525 = vpack.c.bf16 %v519, %v519
      %v530 = vunpack.c.l.b16 %v522
      %v531 = vunpack.c.h.b16 %v522
      %v532 = vunpack.c.l.b16 %v523
      %v533 = vunpack.c.h.b16 %v523
      %v534 = vunpack.c.l.b16 %v524
      %v535 = vunpack.c.h.b16 %v524
      %v536 = vunpack.c.l.b16 %v525
      %v537 = vpack.c.b16 %v530, %v530
      %v538 = vpack.c.b16 %v531, %v531
      %v539 = vpack.c.b16 %v532, %v532
      %v540 = vpack.c.b16 %v533, %v533
      %v541 = vpack.c.b16 %v534, %v534
      %v542 = vpack.c.b16 %v535, %v535
      %v543 = vpack.c.b16 %v536, %v536
      %vm551 = vcmask 125952
      %552 = vst.msk [vmem:[%s197] sm:$0xf] %vm551, %v537
      %553 = vst.msk [vmem:[%s197 + $0x4] sm:$0xf] %vm551, %v538
      %554 = vst.msk [vmem:[%s197 + $0x8] sm:$0xf] %vm551, %v539
      %555 = vst.msk [vmem:[%s197 + $0xc] sm:$0xf] %vm551, %v540
      %556 = vst.msk [vmem:[%s197 + $0x10] sm:$0xf] %vm551, %v541
      %557 = vst.msk [vmem:[%s197 + $0x14] sm:$0xf] %vm551, %v542
      %vm558 = vcmask 122880
      %559 = vst.msk [vmem:[%s197 + $0x18] sm:$0x1] %vm558, %v543
      %p560 = scmp.lt.s32.totalorder %s15, 3
      %s561 = scalar_select %p560, %s15, 3
      %s562 = smul.addr %s561, 7
      %s563 = smul.addr %s562, 4
      %s564 = scalar_lea.vmem %s4, %s563
      // Predicated region
      $region37: #{autoprotonet_embedding.11} parent=35 // pred_check
        %p565 = pneg %p122
      $region38: #{autoprotonet_embedding.11} parent=35 // pred_check_branch
        %567 = sbr.rel (%p565) target = $region40
      $region39: #{autoprotonet_embedding.11} parent=35 // pred_region
        _
      $region40: #{autoprotonet_embedding.11} parent=35 // pred_fallthru
        _
    $region36: #{autoprotonet_embedding.11} parent=5 // pred_fallthru
      _
    %p568 = scmp.le.s32.totalorder 2, %s10
    // Predicated region
    $region41: #{autoprotonet_embedding.11} parent=5 // pred_check
      %p569 = pneg %p568
    $region42: #{autoprotonet_embedding.11} parent=5 // pred_check_branch
      %571 = sbr.rel (%p569) target = $region44
    $region43: #{autoprotonet_embedding.11} parent=5 // pred_region
      %s572 = ssub.s32 %s10, 2
      // Predicated region
      $region45: #{autoprotonet_embedding.11} parent=43 // pred_check
        %p573 = pneg %p128
      $region46: #{autoprotonet_embedding.11} parent=43 // pred_check_branch
        %575 = sbr.rel (%p573) target = $region48
      $region47: #{autoprotonet_embedding.11} parent=43 // pred_region
        %p576 = scmp.lt.s32.totalorder %s16, 3
        %s577 = scalar_select %p576, %s16, 3
        %s578 = smul.addr %s577, 7
        %s579 = smul.addr %s578, 4
        %s580 = scalar_lea.vmem %s4, %s579
      $region48: #{autoprotonet_embedding.11} parent=43 // pred_fallthru
        _
    $region44: #{autoprotonet_embedding.11} parent=5 // pred_fallthru
      _
  $region6: #{autoprotonet_embedding.11} parent=0 // loop_footer
    %s14 = sadd.s32 1, %s10
  $region7: #{autoprotonet_embedding.11} parent=0 // loop_footer_branch
    %9 = sbr.rel target = $region3
  $region8: #{autoprotonet_embedding.11} parent=0 // loop_exit
    _

// kernel: autoprotonet_embedding.8
$region0: #{autoprotonet_embedding.8}
  #allocation0 [shape = 'u32[]', space=smem, size = 0x4, offset = 0x4, fixed_abs, tag = 'smem constant byte address 0x4 - core index']
  #allocation1 [shape = 'u32[144,128]{1,0:T(1,128)}', space=vmem, size = 0x12000, scoped, tag = 'internal scratch']
  %s0 = inlined_call_operand.vmem [shape: bf16[4,362,3], index: 0, kind: input, shape index: {}]
  %s1 = inlined_call_operand.vmem [shape: bf16[9,3,16], index: 1, kind: input, shape index: {}]
  %s2 = inlined_call_operand.vmem [shape: f32[1,324], index: 2, kind: input, shape index: {}]
  %s3 = inlined_call_operand.vmem [shape: f32[4,324,16], index: 3, kind: output, shape index: {0}]
  %s4 = inlined_call_operand.vmem [shape: f32[2,16], index: 4, kind: output, shape index: {1}]
  %5 = xla_tuple %s3, %s4
  %s6 = sld [smem:[#allocation0]]
  $region57: #{autoprotonet_embedding.8} parent=0
    _
  %s8 = ssub.s32 1, %s6
  %s9 = scalar_select 0, %s8, %s6
  loop: start=0, step=1, limit=6
  $region2: #{autoprotonet_embedding.8} parent=0 // loop_pre_header
    _
  $region3: #{autoprotonet_embedding.8} parent=0 // loop_header
    %s11 = sphi 0, %s15
    %p12 = scmp.ge.s32.totalorder %s11, 6
    %s21 = sphi 0, %s23
    %s24 = sphi 0, %s21
    %s25 = sphi 0, %s24
    %s41 = sphi 0, %s25
    %s45 = sphi 0, %s45
    %s47 = sphi 0, %s45
    %s48 = sphi 0, %s47
    %s62 = sphi 0, %s48
    %s66 = sphi 0, %s66
    %s68 = sphi 0, %s66
    %s69 = sphi 0, %s68
    %s83 = sphi 0, %s69
    %s89 = sphi 0, %s91
    %s92 = sphi 0, %s89
    %s93 = sphi 0, %s92
    %s109 = sphi 0, %s93
    %s113 = sphi 0, %s113
    %s115 = sphi 0, %s113
    %s116 = sphi 0, %s115
    %s130 = sphi 0, %s116
  $region4: #{autoprotonet_embedding.8} parent=0 // loop_header_branch
    %14 = sbr.rel (%p12) target = $region8
  $region5: #{autoprotonet_embedding.8} parent=0 // loop_body
    %s16 = ssub.s32 %s11, 1
    %s17 = ssub.s32 %s11, 2
    %s18 = sadd.s32 %s11, 1
    %s19 = ssub.s32 %s11, %s18
    %p20 = scmp.eq.s32.totalorder %s19, 0
    %s22 = sadd.s32 %s21, 1
    %s23 = scalar_select %p20, %s21, %s22
    %p26 = pneg %p20
    %p27 = scmp.eq.s32.totalorder %s11, 3
    %p28 = por %p26, %p27
    %p29 = scmp.ne.s32.totalorder %s21, %s24
    %p30 = scmp.eq.s32.totalorder %s11, 0
    %p31 = por %p29, %p30
    %p32 = scmp.ne.s32.totalorder %s21, %s24
    %p33 = scmp.eq.s32.totalorder %s16, 3
    %p34 = por %p32, %p33
    %p35 = scmp.ne.s32.totalorder %s24, %s25
    %p36 = scmp.eq.s32.totalorder %s16, 0
    %p37 = por %p35, %p36
    %p38 = scmp.ne.s32.totalorder %s24, %s25
    %p39 = scmp.eq.s32.totalorder %s17, 3
    %p40 = por %p38, %p39
    %p42 = scmp.ne.s32.totalorder %s25, %s41
    %p43 = scmp.eq.s32.totalorder %s17, 0
    %p44 = por %p42, %p43
    %s46 = sadd.s32 %s45, 1
    %p49 = scmp.eq.s32.totalorder %s11, 3
    %p50 = scmp.ne.s32.totalorder %s45, %s47
    %p51 = scmp.eq.s32.totalorder %s11, 0
    %p52 = por %p50, %p51
    %p53 = scmp.ne.s32.totalorder %s45, %s47
    %p54 = scmp.eq.s32.totalorder %s16, 3
    %p55 = por %p53, %p54
    %p56 = scmp.ne.s32.totalorder %s47, %s48
    %p57 = scmp.eq.s32.totalorder %s16, 0
    %p58 = por %p56, %p57
    %p59 = scmp.ne.s32.totalorder %s47, %s48
    %p60 = scmp.eq.s32.totalorder %s17, 3
    %p61 = por %p59, %p60
    %p63 = scmp.ne.s32.totalorder %s48, %s62
    %p64 = scmp.eq.s32.totalorder %s17, 0
    %p65 = por %p63, %p64
    %s67 = sadd.s32 %s66, 1
    %p70 = scmp.eq.s32.totalorder %s11, 3
    %p71 = scmp.ne.s32.totalorder %s66, %s68
    %p72 = scmp.eq.s32.totalorder %s11, 0
    %p73 = por %p71, %p72
    %p74 = scmp.ne.s32.totalorder %s66, %s68
    %p75 = scmp.eq.s32.totalorder %s16, 3
    %p76 = por %p74, %p75
    %p77 = scmp.ne.s32.totalorder %s68, %s69
    %p78 = scmp.eq.s32.totalorder %s16, 0
    %p79 = por %p77, %p78
    %p80 = scmp.ne.s32.totalorder %s68, %s69
    %p81 = scmp.eq.s32.totalorder %s17, 3
    %p82 = por %p80, %p81
    %p84 = scmp.ne.s32.totalorder %s69, %s83
    %p85 = scmp.eq.s32.totalorder %s17, 0
    %p86 = por %p84, %p85
    %s87 = ssub.s32 %s11, %s18
    %p88 = scmp.eq.s32.totalorder %s87, 0
    %s90 = sadd.s32 %s89, 1
    %s91 = scalar_select %p88, %s89, %s90
    %p94 = pneg %p88
    %p95 = scmp.eq.s32.totalorder %s11, 3
    %p96 = por %p94, %p95
    %p97 = scmp.ne.s32.totalorder %s89, %s92
    %p98 = scmp.eq.s32.totalorder %s11, 0
    %p99 = por %p97, %p98
    %p100 = scmp.ne.s32.totalorder %s89, %s92
    %p101 = scmp.eq.s32.totalorder %s16, 3
    %p102 = por %p100, %p101
    %p103 = scmp.ne.s32.totalorder %s92, %s93
    %p104 = scmp.eq.s32.totalorder %s16, 0
    %p105 = por %p103, %p104
    %p106 = scmp.ne.s32.totalorder %s92, %s93
    %p107 = scmp.eq.s32.totalorder %s17, 3
    %p108 = por %p106, %p107
    %p110 = scmp.ne.s32.totalorder %s93, %s109
    %p111 = scmp.eq.s32.totalorder %s17, 0
    %p112 = por %p110, %p111
    %s114 = sadd.s32 %s113, 1
    %p117 = scmp.eq.s32.totalorder %s11, 3
    %p118 = scmp.ne.s32.totalorder %s113, %s115
    %p119 = scmp.eq.s32.totalorder %s11, 0
    %p120 = por %p118, %p119
    %p121 = scmp.ne.s32.totalorder %s113, %s115
    %p122 = scmp.eq.s32.totalorder %s16, 3
    %p123 = por %p121, %p122
    %p124 = scmp.ne.s32.totalorder %s115, %s116
    %p125 = scmp.eq.s32.totalorder %s16, 0
    %p126 = por %p124, %p125
    %p127 = scmp.ne.s32.totalorder %s115, %s116
    %p128 = scmp.eq.s32.totalorder %s17, 3
    %p129 = por %p127, %p128
    %p131 = scmp.ne.s32.totalorder %s116, %s130
    %p132 = scmp.eq.s32.totalorder %s17, 0
    %p133 = por %p131, %p132
    %p134 = scmp.le.s32.totalorder 1, %s11
    %p135 = scmp.lt.s32.totalorder %s11, 5
    %p136 = pnand %p134, %p135
    %p137 = pneg %p136
    // Predicated region
    $region9: #{autoprotonet_embedding.8} parent=5 // pred_check
      _
    $region10: #{autoprotonet_embedding.8} parent=5 // pred_check_branch
      %139 = sbr.rel (%p136) target = $region12
    $region11: #{autoprotonet_embedding.8} parent=5 // pred_region
      %s140 = ssub.s32 %s11, 1
      // Predicated region
      $region13: #{autoprotonet_embedding.8} parent=11 // pred_check
        %p141 = pneg %p58
      $region14: #{autoprotonet_embedding.8} parent=11 // pred_check_branch
        %143 = sbr.rel (%p141) target = $region16
      $region15: #{autoprotonet_embedding.8} parent=11 // pred_region
        _
      $region16: #{autoprotonet_embedding.8} parent=11 // pred_fallthru
        _
      // Predicated region
      $region17: #{autoprotonet_embedding.8} parent=11 // pred_check
        %p144 = pneg %p79
      $region18: #{autoprotonet_embedding.8} parent=11 // pred_check_branch
        %146 = sbr.rel (%p144) target = $region20
      $region19: #{autoprotonet_embedding.8} parent=11 // pred_region
        _
      $region20: #{autoprotonet_embedding.8} parent=11 // pred_fallthru
        _
    $region12: #{autoprotonet_embedding.8} parent=5 // pred_fallthru
      _
    %p147 = scmp.lt.s32.totalorder %s11, 4
    // Predicated region
    $region21: #{autoprotonet_embedding.8} parent=5 // pred_check
      %p148 = pneg %p147
    $region22: #{autoprotonet_embedding.8} parent=5 // pred_check_branch
      %150 = sbr.rel (%p148) target = $region24
    $region23: #{autoprotonet_embedding.8} parent=5 // pred_region
      // Predicated region
      $region25: #{autoprotonet_embedding.8} parent=23 // pred_check
        %p151 = pneg %p31
      $region26: #{autoprotonet_embedding.8} parent=23 // pred_check_branch
        %153 = sbr.rel (%p151) target = $region28
      $region27: #{autoprotonet_embedding.8} parent=23 // pred_region
        %p154 = scmp.lt.s32.totalorder %s11, 3
        %s155 = scalar_select %p154, %s11, 3
        %s156 = smul.addr %s155, 46
        %s157 = smul.addr %s156, 4
        %s158 = scalar_lea.vmem %s0, %s157
      $region28: #{autoprotonet_embedding.8} parent=23 // pred_fallthru
        _
    $region24: #{autoprotonet_embedding.8} parent=5 // pred_fallthru
      _
    %p159 = scmp.le.s32.totalorder 1, %s11
    %p160 = scmp.lt.s32.totalorder %s11, 5
    %p161 = pnand %p159, %p160
    %p162 = pneg %p161
    // Predicated region
    $region29: #{autoprotonet_embedding.8} parent=5 // pred_check
      _
    $region30: #{autoprotonet_embedding.8} parent=5 // pred_check_branch
      %164 = sbr.rel (%p161) target = $region32
    $region31: #{autoprotonet_embedding.8} parent=5 // pred_region
      %s165 = ssub.s32 %s11, 1
      %p166 = scmp.lt.s32.totalorder %s16, 3
      %s167 = scalar_select %p166, %s16, 3
      %s168 = smul.addr %s167, 46
      %s169 = smul.addr %s168, 4
      %s170 = scalar_lea.vmem %s0, %s169
      %p171 = pneg %p37
      %p172 = pneg %p34
      %p173 = pneg %p58
      %p174 = pneg %p55
      %p175 = pneg %p79
      %p176 = pneg %p76
      %p177 = pneg %p105
      %p178 = pneg %p102
      %p179 = scmp.lt.s32.totalorder %s16, 3
      %s180 = scalar_select %p179, %s16, 3
      %s181 = smul.addr %s180, 41
      %s182 = smul.addr %s181, 8
      %s183 = scalar_lea.vmem %s3, %s182
      %p184 = pneg %p126
      %p185 = pneg %p123
      %p186 = scmp.lt.s32.totalorder %s16, 3
      %s187 = scalar_select %p186, %s16, 3
      %s188 = smul.addr %s187, 46
      %s189 = smul.addr %s188, 4
      %s190 = scalar_lea.vmem %s0, %s189
      %p191 = scmp.lt.s32.totalorder %s16, 3
      %s192 = scalar_select %p191, %s16, 3
      %s193 = smul.addr %s192, 41
      %s194 = smul.addr %s193, 8
      %s195 = scalar_lea.vmem %s3, %s194
      %v197 = vld [vmem:[%s190] sm:$0xf]
      %v198 = vld [vmem:[%s190 + $0x4] sm:$0xf]
      %v199 = vld [vmem:[%s190 + $0x8] sm:$0xf]
      %v200 = vld [vmem:[%s190 + $0xc] sm:$0xf]
      %v201 = vld [vmem:[%s190 + $0x10] sm:$0xf]
      %v202 = vld [vmem:[%s190 + $0x14] sm:$0xf]
      %v203 = vld [vmem:[%s190 + $0x18] sm:$0xf]
      %v204 = vld [vmem:[%s190 + $0x1c] sm:$0xf]
      %v205 = vld [vmem:[%s190 + $0x20] sm:$0xf]
      %v206 = vld [vmem:[%s190 + $0x24] sm:$0xf]
      %v207 = vld [vmem:[%s190 + $0x28] sm:$0xf]
      %v208 = vld [vmem:[%s190 + $0x2c] sm:$0xf]
      %v209 = vld [vmem:[%s190 + $0x30] sm:$0xf]
      %v210 = vld [vmem:[%s190 + $0x34] sm:$0xf]
      %v211 = vld [vmem:[%s190 + $0x38] sm:$0xf]
      %v212 = vld [vmem:[%s190 + $0x3c] sm:$0xf]
      %v213 = vld [vmem:[%s190 + $0x40] sm:$0xf]
      %v214 = vld [vmem:[%s190 + $0x44] sm:$0xf]
      %v215 = vld [vmem:[%s190 + $0x48] sm:$0xf]
      %v216 = vld [vmem:[%s190 + $0x4c] sm:$0xf]
      %v217 = vld [vmem:[%s190 + $0x50] sm:$0xf]
      %v218 = vld [vmem:[%s190 + $0x54] sm:$0xf]
      %v219 = vld [vmem:[%s190 + $0x58] sm:$0xf]
      %v220 = vld [vmem:[%s190 + $0x5c] sm:$0xf]
      %v221 = vld [vmem:[%s190 + $0x60] sm:$0xf]
      %v222 = vld [vmem:[%s190 + $0x64] sm:$0xf]
      %v223 = vld [vmem:[%s190 + $0x68] sm:$0xf]
      %v224 = vld [vmem:[%s190 + $0x6c] sm:$0xf]
      %v225 = vld [vmem:[%s190 + $0x70] sm:$0xf]
      %v226 = vld [vmem:[%s190 + $0x74] sm:$0xf]
      %v227 = vld [vmem:[%s190 + $0x78] sm:$0xf]
      %v228 = vld [vmem:[%s190 + $0x7c] sm:$0xf]
      %v229 = vld [vmem:[%s190 + $0x80] sm:$0xf]
      %v230 = vld [vmem:[%s190 + $0x84] sm:$0xf]
      %v231 = vld [vmem:[%s190 + $0x88] sm:$0xf]
      %v232 = vld [vmem:[%s190 + $0x8c] sm:$0xf]
      %v233 = vld [vmem:[%s190 + $0x90] sm:$0xf]
      %v234 = vld [vmem:[%s190 + $0x94] sm:$0xf]
      %v235 = vld [vmem:[%s190 + $0x98] sm:$0xf]
      %v236 = vld [vmem:[%s190 + $0x9c] sm:$0xf]
      %v237 = vld [vmem:[%s190 + $0xa0] sm:$0xf]
      %v238 = vld [vmem:[%s190 + $0xa4] sm:$0xf]
      %v239 = vld [vmem:[%s190 + $0xa8] sm:$0xf]
      %v240 = vld [vmem:[%s190 + $0xac] sm:$0xf]
      %v241 = vld [vmem:[%s190 + $0xb0] sm:$0xf]
      %v242 = vld [vmem:[%s190 + $0xb4] sm:$0x1]
      %v243 = vld [vmem:[%s1] sm:$0x3]
      %s244 = scalar_lea.vmem %s1, 2
      %v245 = vld [vmem:[%s244] sm:$0x3]
      %v287 = vunpack.c.l.b16 %v197
      %v288 = vunpack.c.l.b16 %v198
      %v289 = vunpack.c.l.b16 %v199
      %v290 = vunpack.c.l.b16 %v200
      %v291 = vunpack.c.l.b16 %v201
      %v292 = vunpack.c.l.b16 %v202
      %v293 = vunpack.c.l.b16 %v203
      %v294 = vunpack.c.l.b16 %v204
      %v295 = vunpack.c.l.b16 %v205
      %v296 = vunpack.c.l.b16 %v206
      %v297 = vunpack.c.l.b16 %v207
      %v298 = vunpack.c.l.b16 %v208
      %v299 = vunpack.c.l.b16 %v209
      %v300 = vunpack.c.l.b16 %v210
      %v301 = vunpack.c.l.b16 %v211
      %v302 = vunpack.c.l.b16 %v212
      %v303 = vunpack.c.l.b16 %v213
      %v304 = vunpack.c.l.b16 %v214
      %v305 = vunpack.c.l.b16 %v215
      %v306 = vunpack.c.l.b16 %v216
      %v307 = vunpack.c.l.b16 %v217
      %v308 = vunpack.c.l.b16 %v218
      %v309 = vunpack.c.l.b16 %v219
      %v310 = vunpack.c.l.b16 %v220
      %v311 = vunpack.c.l.b16 %v221
      %v312 = vunpack.c.l.b16 %v222
      %v313 = vunpack.c.l.b16 %v223
      %v314 = vunpack.c.l.b16 %v224
      %v315 = vunpack.c.l.b16 %v225
      %v316 = vunpack.c.l.b16 %v226
      %v317 = vunpack.c.l.b16 %v227
      %v318 = vunpack.c.l.b16 %v228
      %v319 = vunpack.c.l.b16 %v229
      %v320 = vunpack.c.l.b16 %v230
      %v321 = vunpack.c.l.b16 %v231
      %v322 = vunpack.c.l.b16 %v232
      %v323 = vunpack.c.l.b16 %v233
      %v324 = vunpack.c.l.b16 %v234
      %v325 = vunpack.c.l.b16 %v235
      %v326 = vunpack.c.l.b16 %v236
      %v327 = vunpack.c.l.b16 %v237
      %v328 = vpack.c.b16 %v288, %v287
      %v329 = vpack.c.b16 %v290, %v289
      %v330 = vpack.c.b16 %v292, %v291
      %v331 = vpack.c.b16 %v294, %v293
      %v332 = vpack.c.b16 %v296, %v295
      %v333 = vpack.c.b16 %v298, %v297
      %v334 = vpack.c.b16 %v300, %v299
      %v335 = vpack.c.b16 %v302, %v301
      %v336 = vpack.c.b16 %v304, %v303
      %v337 = vpack.c.b16 %v306, %v305
      %v338 = vpack.c.b16 %v308, %v307
      %v339 = vpack.c.b16 %v310, %v309
      %v340 = vpack.c.b16 %v312, %v311
      %v341 = vpack.c.b16 %v314, %v313
      %v342 = vpack.c.b16 %v316, %v315
      %v343 = vpack.c.b16 %v318, %v317
      %v344 = vpack.c.b16 %v320, %v319
      %v345 = vpack.c.b16 %v322, %v321
      %v346 = vpack.c.b16 %v324, %v323
      %v347 = vpack.c.b16 %v326, %v325
      %v348 = vpack.c.b16 %v327, %v327
      %vm349 = vsmask.f32 7424
      %v351 = vshrl.u32 %v328, 16
      %v353 = vshll.u32 %v328, 16
      %v355 = vrot.slane %v353, 1
      %v356 = vor.u32 %v351, %v355
      %v358 = vshll.u32 %v329, 16
      %v360 = vrot.slane %v358, 1
      %v361 = vsel %vm349, %v356, %v360
      %v362 = vshrl.u32 %v329, 16
      %v364 = vor.u32 %v362, %v360
      %v366 = vshll.u32 %v330, 16
      %v368 = vrot.slane %v366, 1
      %v369 = vsel %vm349, %v364, %v368
      %v370 = vshrl.u32 %v330, 16
      %v372 = vor.u32 %v370, %v368
      %v374 = vshll.u32 %v331, 16
      %v376 = vrot.slane %v374, 1
      %v377 = vsel %vm349, %v372, %v376
      %v378 = vshrl.u32 %v331, 16
      %v380 = vor.u32 %v378, %v376
      %v382 = vshll.u32 %v332, 16
      %v384 = vrot.slane %v382, 1
      %v385 = vsel %vm349, %v380, %v384
      %v386 = vshrl.u32 %v332, 16
      %v388 = vor.u32 %v386, %v384
      %v390 = vshll.u32 %v333, 16
      %v392 = vrot.slane %v390, 1
      %v393 = vsel %vm349, %v388, %v392
      %v394 = vshrl.u32 %v333, 16
      %v396 = vor.u32 %v394, %v392
      %v398 = vshll.u32 %v334, 16
      %v400 = vrot.slane %v398, 1
      %v401 = vsel %vm349, %v396, %v400
      %v402 = vshrl.u32 %v334, 16
      %v404 = vor.u32 %v402, %v400
      %v406 = vshll.u32 %v335, 16
      %v408 = vrot.slane %v406, 1
      %v409 = vsel %vm349, %v404, %v408
      %v410 = vshrl.u32 %v335, 16
      %v412 = vor.u32 %v410, %v408
      %v414 = vshll.u32 %v336, 16
      %v416 = vrot.slane %v414, 1
      %v417 = vsel %vm349, %v412, %v416
      %v418 = vshrl.u32 %v336, 16
      %v420 = vor.u32 %v418, %v416
      %v422 = vshll.u32 %v337, 16
      %v424 = vrot.slane %v422, 1
      %v425 = vsel %vm349, %v420, %v424
      %v426 = vshrl.u32 %v337, 16
      %v428 = vor.u32 %v426, %v424
      %v430 = vshll.u32 %v338, 16
      %v432 = vrot.slane %v430, 1
      %v433 = vsel %vm349, %v428, %v432
      %v434 = vshrl.u32 %v338, 16
      %v436 = vor.u32 %v434, %v432
      %v438 = vshll.u32 %v339, 16
      %v440 = vrot.slane %v438, 1
      %v441 = vsel %vm349, %v436, %v440
      %v442 = vshrl.u32 %v339, 16
      %v444 = vor.u32 %v442, %v440
      %v446 = vshll.u32 %v340, 16
      %v448 = vrot.slane %v446, 1
      %v449 = vsel %vm349, %v444, %v448
      %v450 = vshrl.u32 %v340, 16
      %v452 = vor.u32 %v450, %v448
      %v454 = vshll.u32 %v341, 16
      %v456 = vrot.slane %v454, 1
      %v457 = vsel %vm349, %v452, %v456
      %v458 = vshrl.u32 %v341, 16
      %v460 = vor.u32 %v458, %v456
      %v462 = vshll.u32 %v342, 16
      %v464 = vrot.slane %v462, 1
      %v465 = vsel %vm349, %v460, %v464
      %v466 = vshrl.u32 %v342, 16
      %v468 = vor.u32 %v466, %v464
      %v470 = vshll.u32 %v343, 16
      %v472 = vrot.slane %v470, 1
      %v473 = vsel %vm349, %v468, %v472
      %v474 = vshrl.u32 %v343, 16
      %v476 = vor.u32 %v474, %v472
      %v478 = vshll.u32 %v344, 16
      %v480 = vrot.slane %v478, 1
      %v481 = vsel %vm349, %v476, %v480
      %v482 = vshrl.u32 %v344, 16
      %v484 = vor.u32 %v482, %v480
      %v486 = vshll.u32 %v345, 16
      %v488 = vrot.slane %v486, 1
      %v489 = vsel %vm349, %v484, %v488
      %v490 = vshrl.u32 %v345, 16
      %v492 = vor.u32 %v490, %v488
      %v494 = vshll.u32 %v346, 16
      %v496 = vrot.slane %v494, 1
      %v497 = vsel %vm349, %v492, %v496
      %v498 = vshrl.u32 %v346, 16
      %v500 = vor.u32 %v498, %v496
      %v502 = vshll.u32 %v347, 16
      %v504 = vrot.slane %v502, 1
      %v505 = vsel %vm349, %v500, %v504
      %v506 = vshrl.u32 %v347, 16
      %v508 = vor.u32 %v506, %v504
      %v510 = vshll.u32 %v348, 16
      %v512 = vrot.slane %v510, 1
      %v513 = vsel %vm349, %v508, %v512
      %v514 = vshrl.u32 %v348, 16
      %v516 = vor.u32 %v514, %v512
      %vm517 = vcmask 23552
      %v519 = vsel %vm517, %v361, 0
      %v522 = vsel %vm517, %v369, 0
      %v525 = vsel %vm517, %v377, 0
      %v528 = vsel %vm517, %v385, 0
      %v531 = vsel %vm517, %v393, 0
      %v534 = vsel %vm517, %v401, 0
      %v537 = vsel %vm517, %v409, 0
      %v540 = vsel %vm517, %v417, 0
      %v543 = vsel %vm517, %v425, 0
      %v546 = vsel %vm517, %v433, 0
      %v549 = vsel %vm517, %v441, 0
      %v552 = vsel %vm517, %v449, 0
      %v555 = vsel %vm517, %v457, 0
      %v558 = vsel %vm517, %v465, 0
      %v561 = vsel %vm517, %v473, 0
      %v564 = vsel %vm517, %v481, 0
      %v567 = vsel %vm517, %v489, 0
      %v570 = vsel %vm517, %v497, 0
      %v573 = vsel %vm517, %v505, 0
      %v576 = vsel %vm517, %v513, 0
      %v579 = vsel %vm517, %v516, 0
      %vm581 = vcmask 1040384
      %vm582 = vcmask 1041408
      %v583 = vsel %vm581, 4294967295, 65535
      %v584 = vsel %vm582, %v583, 0
      %v586 = vand.u32 %v245, %v584
      %588 = vmatprep.subr.bf16.mxu0 0
      %589 = vmatpush1.bf16.msra.mxu0 %v586
      %590 = vmatprep.subr.bf16.mxu0 0
      %591 = vmatpush1.bf16.msra.mxu0 0
      %592 = vmatprep.subr.bf16.mxu0 0
      %593 = vmatpush1.bf16.msra.mxu0 0
      %594 = vmatprep.subr.bf16.mxu0 0
      %595 = vmatpush1.bf16.msra.mxu0 0
      %596 = vmatprep.subr.bf16.mxu0 0
      %597 = vmatpush1.bf16.msra.mxu0 0
      %598 = vmatprep.subr.bf16.mxu0 0
      %599 = vmatpush1.bf16.msra.mxu0 0
      %600 = vmatprep.subr.bf16.mxu0 0
      %601 = vmatpush1.bf16.msra.mxu0 0
      %602 = vmatprep.subr.bf16.mxu0 0
      %603 = vmatpush1.bf16.msra.mxu0 0
      %604 = vmatprep.subr.bf16.mxu0 0
      %605 = vmatpush1.bf16.msra.mxu0 0
      %606 = vmatprep.subr.bf16.mxu0 0
      %607 = vmatpush1.bf16.msra.mxu0 0
      %608 = vmatprep.subr.bf16.mxu0 0
      %609 = vmatpush1.bf16.msra.mxu0 0
      %610 = vmatprep.subr.bf16.mxu0 0
      %611 = vmatpush1.bf16.msra.mxu0 0
      %612 = vmatprep.subr.bf16.mxu0 0
      %613 = vmatpush1.bf16.msra.mxu0 0
      %614 = vmatprep.subr.bf16.mxu0 0
      %615 = vmatpush1.bf16.msra.mxu0 0
      %616 = vmatprep.subr.bf16.mxu0 0
      %617 = vmatpush1.bf16.msra.mxu0 0
      %618 = vmatprep.subr.bf16.mxu0 0
      %619 = vmatpush1.bf16.msra.mxu0 0
      %620 = vmatprep.mubr.bf16.mxu0 0
      %621 = vmatmul.mubr.bf16.gmra.mrb[0].mxu0 %v519
      %v622 = vpop.f32.mrb[0].mxu0
      %v623 = vadd.f32 0.0, %v622
      %v624 = vpop.f32.mrb[0].mxu0
      %v625 = vpop.f32.mrb[0].mxu0
      %v626 = vadd.f32 0.0, %v625
      %v627 = vpop.f32.mrb[0].mxu0
      %628 = vmatprep.mubr.bf16.mxu0 0
      %629 = vmatmul.mubr.bf16.gmra.mrb[0].mxu0 %v522
      %v630 = vpop.f32.mrb[0].mxu0
      %v631 = vadd.f32 0.0, %v630
      %v632 = vpop.f32.mrb[0].mxu0
      %v633 = vpop.f32.mrb[0].mxu0
      %v634 = vadd.f32 0.0, %v633
      %v635 = vpop.f32.mrb[0].mxu0
      %636 = vmatprep.mubr.bf16.mxu0 0
      %637 = vmatmul.mubr.bf16.gmra.mrb[0].mxu0 %v525
      %v638 = vpop.f32.mrb[0].mxu0
      %v639 = vadd.f32 0.0, %v638
      %v640 = vpop.f32.mrb[0].mxu0
      %v641 = vpop.f32.mrb[0].mxu0
      %v642 = vadd.f32 0.0, %v641
      %v643 = vpop.f32.mrb[0].mxu0
      %644 = vmatprep.mubr.bf16.mxu0 0
      %645 = vmatmul.mubr.bf16.gmra.mrb[0].mxu0 %v528
      %v646 = vpop.f32.mrb[0].mxu0
      %v647 = vadd.f32 0.0, %v646
      %v648 = vpop.f32.mrb[0].mxu0
      %v649 = vpop.f32.mrb[0].mxu0
      %v650 = vadd.f32 0.0, %v649
      %v651 = vpop.f32.mrb[0].mxu0
      %652 = vmatprep.mubr.bf16.mxu0 0
      %653 = vmatmul.mubr.bf16.gmra.mrb[0].mxu0 %v531
      %v654 = vpop.f32.mrb[0].mxu0
      %v655 = vadd.f32 0.0, %v654
      %v656 = vpop.f32.mrb[0].mxu0
      %v657 = vpop.f32.mrb[0].mxu0
      %v658 = vadd.f32 0.0, %v657
      %v659 = vpop.f32.mrb[0].mxu0
      %660 = vmatprep.mubr.bf16.mxu0 0
      %661 = vmatmul.mubr.bf16.gmra.mrb[0].mxu0 %v534
      %v662 = vpop.f32.mrb[0].mxu0
      %v663 = vadd.f32 0.0, %v662
      %v664 = vpop.f32.mrb[0].mxu0
      %v665 = vpop.f32.mrb[0].mxu0
      %v666 = vadd.f32 0.0, %v665
      %v667 = vpop.f32.mrb[0].mxu0
      %668 = vmatprep.mubr.bf16.mxu0 0
      %669 = vmatmul.mubr.bf16.gmra.mrb[0].mxu0 %v537
      %v670 = vpop.f32.mrb[0].mxu0
      %v671 = vadd.f32 0.0, %v670
      %v672 = vpop.f32.mrb[0].mxu0
      %v673 = vpop.f32.mrb[0].mxu0
      %v674 = vadd.f32 0.0, %v673
      %v675 = vpop.f32.mrb[0].mxu0
      %676 = vmatprep.mubr.bf16.mxu0 0
      %677 = vmatmul.mubr.bf16.gmra.mrb[0].mxu0 %v540
      %v678 = vpop.f32.mrb[0].mxu0
      %v679 = vadd.f32 0.0, %v678
      %v680 = vpop.f32.mrb[0].mxu0
      %v681 = vpop.f32.mrb[0].mxu0
      %v682 = vadd.f32 0.0, %v681
      %v683 = vpop.f32.mrb[0].mxu0
      %684 = vmatprep.mubr.bf16.mxu0 0
      %685 = vmatmul.mubr.bf16.gmra.mrb[0].mxu0 %v543
      %v686 = vpop.f32.mrb[0].mxu0
      %v687 = vadd.f32 0.0, %v686
      %v688 = vpop.f32.mrb[0].mxu0
      %v689 = vpop.f32.mrb[0].mxu0
      %v690 = vadd.f32 0.0, %v689
      %v691 = vpop.f32.mrb[0].mxu0
      %692 = vmatprep.mubr.bf16.mxu0 0
      %693 = vmatmul.mubr.bf16.gmra.mrb[0].mxu0 %v546
      %v694 = vpop.f32.mrb[0].mxu0
      %v695 = vadd.f32 0.0, %v694
      %v696 = vpop.f32.mrb[0].mxu0
      %v697 = vpop.f32.mrb[0].mxu0
      %v698 = vadd.f32 0.0, %v697
      %v699 = vpop.f32.mrb[0].mxu0
      %700 = vmatprep.mubr.bf16.mxu0 0
      %701 = vmatmul.mubr.bf16.gmra.mrb[0].mxu0 %v549
      %v702 = vpop.f32.mrb[0].mxu0
      %v703 = vadd.f32 0.0, %v702
      %v704 = vpop.f32.mrb[0].mxu0
      %v705 = vpop.f32.mrb[0].mxu0
      %v706 = vadd.f32 0.0, %v705
      %v707 = vpop.f32.mrb[0].mxu0
      %708 = vmatprep.mubr.bf16.mxu0 0
      %709 = vmatmul.mubr.bf16.gmra.mrb[0].mxu0 %v552
      %v710 = vpop.f32.mrb[0].mxu0
      %v711 = vadd.f32 0.0, %v710
      %v712 = vpop.f32.mrb[0].mxu0
      %v713 = vpop.f32.mrb[0].mxu0
      %v714 = vadd.f32 0.0, %v713
      %v715 = vpop.f32.mrb[0].mxu0
      %716 = vmatprep.mubr.bf16.mxu0 0
      %717 = vmatmul.mubr.bf16.gmra.mrb[0].mxu0 %v555
      %v718 = vpop.f32.mrb[0].mxu0
      %v719 = vadd.f32 0.0, %v718
      %v720 = vpop.f32.mrb[0].mxu0
      %v721 = vpop.f32.mrb[0].mxu0
      %v722 = vadd.f32 0.0, %v721
      %v723 = vpop.f32.mrb[0].mxu0
      %724 = vmatprep.mubr.bf16.mxu0 0
      %725 = vmatmul.mubr.bf16.gmra.mrb[0].mxu0 %v558
      %v726 = vpop.f32.mrb[0].mxu0
      %v727 = vadd.f32 0.0, %v726
      %v728 = vpop.f32.mrb[0].mxu0
      %v729 = vpop.f32.mrb[0].mxu0
      %v730 = vadd.f32 0.0, %v729
      %v731 = vpop.f32.mrb[0].mxu0
      %732 = vmatprep.mubr.bf16.mxu0 0
      %733 = vmatmul.mubr.bf16.gmra.mrb[0].mxu0 %v561
      %v734 = vpop.f32.mrb[0].mxu0
      %v735 = vadd.f32 0.0, %v734
      %v736 = vpop.f32.mrb[0].mxu0
      %v737 = vpop.f32.mrb[0].mxu0
      %v738 = vadd.f32 0.0, %v737
      %v739 = vpop.f32.mrb[0].mxu0
      %740 = vmatprep.mubr.bf16.mxu0 0
      %741 = vmatmul.mubr.bf16.gmra.mrb[0].mxu0 %v564
      %v742 = vpop.f32.mrb[0].mxu0
      %v743 = vadd.f32 0.0, %v742
      %v744 = vpop.f32.mrb[0].mxu0
      %v745 = vpop.f32.mrb[0].mxu0
      %v746 = vadd.f32 0.0, %v745
      %v747 = vpop.f32.mrb[0].mxu0
      %748 = vmatprep.mubr.bf16.mxu0 0
      %749 = vmatmul.mubr.bf16.gmra.mrb[0].mxu0 %v567
      %v750 = vpop.f32.mrb[0].mxu0
      %v751 = vadd.f32 0.0, %v750
      %v752 = vpop.f32.mrb[0].mxu0
      %v753 = vpop.f32.mrb[0].mxu0
      %v754 = vadd.f32 0.0, %v753
      %v755 = vpop.f32.mrb[0].mxu0
      %756 = vmatprep.mubr.bf16.mxu0 0
      %757 = vmatmul.mubr.bf16.gmra.mrb[0].mxu0 %v570
      %v758 = vpop.f32.mrb[0].mxu0
      %v759 = vadd.f32 0.0, %v758
      %v760 = vpop.f32.mrb[0].mxu0
      %v761 = vpop.f32.mrb[0].mxu0
      %v762 = vadd.f32 0.0, %v761
      %v763 = vpop.f32.mrb[0].mxu0
      %764 = vmatprep.mubr.bf16.mxu0 0
      %765 = vmatmul.mubr.bf16.gmra.mrb[0].mxu0 %v573
      %v766 = vpop.f32.mrb[0].mxu0
      %v767 = vadd.f32 0.0, %v766
      %v768 = vpop.f32.mrb[0].mxu0
      %v769 = vpop.f32.mrb[0].mxu0
      %v770 = vadd.f32 0.0, %v769
      %v771 = vpop.f32.mrb[0].mxu0
      %772 = vmatprep.mubr.bf16.mxu0 0
      %773 = vmatmul.mubr.bf16.gmra.mrb[0].mxu0 %v576
      %v774 = vpop.f32.mrb[0].mxu0
      %v775 = vadd.f32 0.0, %v774
      %v776 = vpop.f32.mrb[0].mxu0
      %v777 = vpop.f32.mrb[0].mxu0
      %v778 = vadd.f32 0.0, %v777
      %v779 = vpop.f32.mrb[0].mxu0
      %780 = vmatprep.mubr.bf16.mxu0 0
      %781 = vmatmul.mubr.bf16.gmra.mrb[0].mxu0 %v579
      %v782 = vpop.f32.mrb[0].mxu0
      %v783 = vadd.f32 0.0, %v782
      %v784 = vpop.f32.mrb[0].mxu0
      %v785 = vpop.f32.mrb[0].mxu0
      %v786 = vpop.f32.mrb[0].mxu0
      %787 = vdwg.mxu0
      %v788 = vsel %vm517, %v328, 0
      %v790 = vsel %vm517, %v329, 0
      %v792 = vsel %vm517, %v330, 0
      %v794 = vsel %vm517, %v331, 0
      %v796 = vsel %vm517, %v332, 0
      %v798 = vsel %vm517, %v333, 0
      %v800 = vsel %vm517, %v334, 0
      %v802 = vsel %vm517, %v335, 0
      %v804 = vsel %vm517, %v336, 0
      %v806 = vsel %vm517, %v337, 0
      %v808 = vsel %vm517, %v338, 0
      %v810 = vsel %vm517, %v339, 0
      %v812 = vsel %vm517, %v340, 0
      %v814 = vsel %vm517, %v341, 0
      %v816 = vsel %vm517, %v342, 0
      %v818 = vsel %vm517, %v343, 0
      %v820 = vsel %vm517, %v344, 0
      %v822 = vsel %vm517, %v345, 0
      %v824 = vsel %vm517, %v346, 0
      %v826 = vsel %vm517, %v347, 0
      %v828 = vsel %vm517, %v348, 0
      %v831 = vand.u32 %v243, %v584
      %833 = vmatprep.subr.bf16.mxu0 0
      %834 = vmatpush1.bf16.msra.mxu0 %v831
      %835 = vmatprep.subr.bf16.mxu0 0
      %836 = vmatpush1.bf16.msra.mxu0 0
      %837 = vmatprep.subr.bf16.mxu0 0
      %838 = vmatpush1.bf16.msra.mxu0 0
      %839 = vmatprep.subr.bf16.mxu0 0
      %840 = vmatpush1.bf16.msra.mxu0 0
      %841 = vmatprep.subr.bf16.mxu0 0
      %842 = vmatpush1.bf16.msra.mxu0 0
      %843 = vmatprep.subr.bf16.mxu0 0
      %844 = vmatpush1.bf16.msra.mxu0 0
      %845 = vmatprep.subr.bf16.mxu0 0
      %846 = vmatpush1.bf16.msra.mxu0 0
      %847 = vmatprep.subr.bf16.mxu0 0
      %848 = vmatpush1.bf16.msra.mxu0 0
      %849 = vmatprep.subr.bf16.mxu0 0
      %850 = vmatpush1.bf16.msra.mxu0 0
      %851 = vmatprep.subr.bf16.mxu0 0
      %852 = vmatpush1.bf16.msra.mxu0 0
      %853 = vmatprep.subr.bf16.mxu0 0
      %854 = vmatpush1.bf16.msra.mxu0 0
      %855 = vmatprep.subr.bf16.mxu0 0
      %856 = vmatpush1.bf16.msra.mxu0 0
      %857 = vmatprep.subr.bf16.mxu0 0
      %858 = vmatpush1.bf16.msra.mxu0 0
      %859 = vmatprep.subr.bf16.mxu0 0
      %860 = vmatpush1.bf16.msra.mxu0 0
      %861 = vmatprep.subr.bf16.mxu0 0
      %862 = vmatpush1.bf16.msra.mxu0 0
      %863 = vmatprep.subr.bf16.mxu0 0
      %864 = vmatpush1.bf16.msra.mxu0 0
      %865 = vmatprep.mubr.bf16.mxu0 0
      %866 = vmatmul.mubr.bf16.gmra.mrb[0].mxu0 %v788
      %v867 = vpop.f32.mrb[0].mxu0
      %v868 = vadd.f32 %v623, %v867
      %v869 = vpop.f32.mrb[0].mxu0
      %v870 = vpop.f32.mrb[0].mxu0
      %v871 = vadd.f32 %v626, %v870
      %v872 = vpop.f32.mrb[0].mxu0
      %873 = vmatprep.mubr.bf16.mxu0 0
      %874 = vmatmul.mubr.bf16.gmra.mrb[0].mxu0 %v790
      %v875 = vpop.f32.mrb[0].mxu0
      %v876 = vadd.f32 %v631, %v875
      %v877 = vpop.f32.mrb[0].mxu0
      %v878 = vpop.f32.mrb[0].mxu0
      %v879 = vadd.f32 %v634, %v878
      %v880 = vpop.f32.mrb[0].mxu0
      %881 = vmatprep.mubr.bf16.mxu0 0
      %882 = vmatmul.mubr.bf16.gmra.mrb[0].mxu0 %v792
      %v883 = vpop.f32.mrb[0].mxu0
      %v884 = vadd.f32 %v639, %v883
      %v885 = vpop.f32.mrb[0].mxu0
      %v886 = vpop.f32.mrb[0].mxu0
      %v887 = vadd.f32 %v642, %v886
      %v888 = vpop.f32.mrb[0].mxu0
      %889 = vmatprep.mubr.bf16.mxu0 0
      %890 = vmatmul.mubr.bf16.gmra.mrb[0].mxu0 %v794
      %v891 = vpop.f32.mrb[0].mxu0
      %v892 = vadd.f32 %v647, %v891
      %v893 = vpop.f32.mrb[0].mxu0
      %v894 = vpop.f32.mrb[0].mxu0
      %v895 = vadd.f32 %v650, %v894
      %v896 = vpop.f32.mrb[0].mxu0
      %897 = vmatprep.mubr.bf16.mxu0 0
      %898 = vmatmul.mubr.bf16.gmra.mrb[0].mxu0 %v796
      %v899 = vpop.f32.mrb[0].mxu0
      %v900 = vadd.f32 %v655, %v899
      %v901 = vpop.f32.mrb[0].mxu0
      %v902 = vpop.f32.mrb[0].mxu0
      %v903 = vadd.f32 %v658, %v902
      %v904 = vpop.f32.mrb[0].mxu0
      %905 = vmatprep.mubr.bf16.mxu0 0
      %906 = vmatmul.mubr.bf16.gmra.mrb[0].mxu0 %v798
      %v907 = vpop.f32.mrb[0].mxu0
      %v908 = vadd.f32 %v663, %v907
      %v909 = vpop.f32.mrb[0].mxu0
      %v910 = vpop.f32.mrb[0].mxu0
      %v911 = vadd.f32 %v666, %v910
      %v912 = vpop.f32.mrb[0].mxu0
      %913 = vmatprep.mubr.bf16.mxu0 0
      %914 = vmatmul.mubr.bf16.gmra.mrb[0].mxu0 %v800
      %v915 = vpop.f32.mrb[0].mxu0
      %v916 = vadd.f32 %v671, %v915
      %v917 = vpop.f32.mrb[0].mxu0
      %v918 = vpop.f32.mrb[0].mxu0
      %v919 = vadd.f32 %v674, %v918
      %v920 = vpop.f32.mrb[0].mxu0
      %921 = vmatprep.mubr.bf16.mxu0 0
      %922 = vmatmul.mubr.bf16.gmra.mrb[0].mxu0 %v802
      %v923 = vpop.f32.mrb[0].mxu0
      %v924 = vadd.f32 %v679, %v923
      %v925 = vpop.f32.mrb[0].mxu0
      %v926 = vpop.f32.mrb[0].mxu0
      %v927 = vadd.f32 %v682, %v926
      %v928 = vpop.f32.mrb[0].mxu0
      %929 = vmatprep.mubr.bf16.mxu0 0
      %930 = vmatmul.mubr.bf16.gmra.mrb[0].mxu0 %v804
      %v931 = vpop.f32.mrb[0].mxu0
      %v932 = vadd.f32 %v687, %v931
      %v933 = vpop.f32.mrb[0].mxu0
      %v934 = vpop.f32.mrb[0].mxu0
      %v935 = vadd.f32 %v690, %v934
      %v936 = vpop.f32.mrb[0].mxu0
      %937 = vmatprep.mubr.bf16.mxu0 0
      %938 = vmatmul.mubr.bf16.gmra.mrb[0].mxu0 %v806
      %v939 = vpop.f32.mrb[0].mxu0
      %v940 = vadd.f32 %v695, %v939
      %v941 = vpop.f32.mrb[0].mxu0
      %v942 = vpop.f32.mrb[0].mxu0
      %v943 = vadd.f32 %v698, %v942
      %v944 = vpop.f32.mrb[0].mxu0
      %945 = vmatprep.mubr.bf16.mxu0 0
      %946 = vmatmul.mubr.bf16.gmra.mrb[0].mxu0 %v808
      %v947 = vpop.f32.mrb[0].mxu0
      %v948 = vadd.f32 %v703, %v947
      %v949 = vpop.f32.mrb[0].mxu0
      %v950 = vpop.f32.mrb[0].mxu0
      %v951 = vadd.f32 %v706, %v950
      %v952 = vpop.f32.mrb[0].mxu0
      %953 = vmatprep.mubr.bf16.mxu0 0
      %954 = vmatmul.mubr.bf16.gmra.mrb[0].mxu0 %v810
      %v955 = vpop.f32.mrb[0].mxu0
      %v956 = vadd.f32 %v711, %v955
      %v957 = vpop.f32.mrb[0].mxu0
      %v958 = vpop.f32.mrb[0].mxu0
      %v959 = vadd.f32 %v714, %v958
      %v960 = vpop.f32.mrb[0].mxu0
      %961 = vmatprep.mubr.bf16.mxu0 0
      %962 = vmatmul.mubr.bf16.gmra.mrb[0].mxu0 %v812
      %v963 = vpop.f32.mrb[0].mxu0
      %v964 = vadd.f32 %v719, %v963
      %v965 = vpop.f32.mrb[0].mxu0
      %v966 = vpop.f32.mrb[0].mxu0
      %v967 = vadd.f32 %v722, %v966
      %v968 = vpop.f32.mrb[0].mxu0
      %969 = vmatprep.mubr.bf16.mxu0 0
      %970 = vmatmul.mubr.bf16.gmra.mrb[0].mxu0 %v814
      %v971 = vpop.f32.mrb[0].mxu0
      %v972 = vadd.f32 %v727, %v971
      %v973 = vpop.f32.mrb[0].mxu0
      %v974 = vpop.f32.mrb[0].mxu0
      %v975 = vadd.f32 %v730, %v974
      %v976 = vpop.f32.mrb[0].mxu0
      %977 = vmatprep.mubr.bf16.mxu0 0
      %978 = vmatmul.mubr.bf16.gmra.mrb[0].mxu0 %v816
      %v979 = vpop.f32.mrb[0].mxu0
      %v980 = vadd.f32 %v735, %v979
      %v981 = vpop.f32.mrb[0].mxu0
      %v982 = vpop.f32.mrb[0].mxu0
      %v983 = vadd.f32 %v738, %v982
      %v984 = vpop.f32.mrb[0].mxu0
      %985 = vmatprep.mubr.bf16.mxu0 0
      %986 = vmatmul.mubr.bf16.gmra.mrb[0].mxu0 %v818
      %v987 = vpop.f32.mrb[0].mxu0
      %v988 = vadd.f32 %v743, %v987
      %v989 = vpop.f32.mrb[0].mxu0
      %v990 = vpop.f32.mrb[0].mxu0
      %v991 = vadd.f32 %v746, %v990
      %v992 = vpop.f32.mrb[0].mxu0
      %993 = vmatprep.mubr.bf16.mxu0 0
      %994 = vmatmul.mubr.bf16.gmra.mrb[0].mxu0 %v820
      %v995 = vpop.f32.mrb[0].mxu0
      %v996 = vadd.f32 %v751, %v995
      %v997 = vpop.f32.mrb[0].mxu0
      %v998 = vpop.f32.mrb[0].mxu0
      %v999 = vadd.f32 %v754, %v998
      %v1000 = vpop.f32.mrb[0].mxu0
      %1001 = vmatprep.mubr.bf16.mxu0 0
      %1002 = vmatmul.mubr.bf16.gmra.mrb[0].mxu0 %v822
      %v1003 = vpop.f32.mrb[0].mxu0
      %v1004 = vadd.f32 %v759, %v1003
      %v1005 = vpop.f32.mrb[0].mxu0
      %v1006 = vpop.f32.mrb[0].mxu0
      %v1007 = vadd.f32 %v762, %v1006
      %v1008 = vpop.f32.mrb[0].mxu0
      %1009 = vmatprep.mubr.bf16.mxu0 0
      %1010 = vmatmul.mubr.bf16.gmra.mrb[0].mxu0 %v824
      %v1011 = vpop.f32.mrb[0].mxu0
      %v1012 = vadd.f32 %v767, %v1011
      %v1013 = vpop.f32.mrb[0].mxu0
      %v1014 = vpop.f32.mrb[0].mxu0
      %v1015 = vadd.f32 %v770, %v1014
      %v1016 = vpop.f32.mrb[0].mxu0
      %1017 = vmatprep.mubr.bf16.mxu0 0
      %1018 = vmatmul.mubr.bf16.gmra.mrb[0].mxu0 %v826
      %v1019 = vpop.f32.mrb[0].mxu0
      %v1020 = vadd.f32 %v775, %v1019
      %v1021 = vpop.f32.mrb[0].mxu0
      %v1022 = vpop.f32.mrb[0].mxu0
      %v1023 = vadd.f32 %v778, %v1022
      %v1024 = vpop.f32.mrb[0].mxu0
      %1025 = vmatprep.mubr.bf16.mxu0 0
      %1026 = vmatmul.mubr.bf16.gmra.mrb[0].mxu0 %v828
      %v1027 = vpop.f32.mrb[0].mxu0
      %v1028 = vadd.f32 %v783, %v1027
      %v1029 = vpop.f32.mrb[0].mxu0
      %v1030 = vpop.f32.mrb[0].mxu0
      %v1031 = vpop.f32.mrb[0].mxu0
      %1032 = vdwg.mxu0
      %s1033 = scalar_lea.vmem %s1, 4
      %v1034 = vld [vmem:[%s1033] sm:$0x3]
      %vm1035 = vcmask 1046528
      %v1036 = vrot.slane %v328, 1
      %v1037 = vrot.slane %v329, 1
      %v1038 = vsel %vm1035, %v1036, %v1037
      %v1039 = vrot.slane %v330, 1
      %v1040 = vsel %vm1035, %v1037, %v1039
      %v1041 = vrot.slane %v331, 1
      %v1042 = vsel %vm1035, %v1039, %v1041
      %v1043 = vrot.slane %v332, 1
      %v1044 = vsel %vm1035, %v1041, %v1043
      %v1045 = vrot.slane %v333, 1
      %v1046 = vsel %vm1035, %v1043, %v1045
      %v1047 = vrot.slane %v334, 1
      %v1048 = vsel %vm1035, %v1045, %v1047
      %v1049 = vrot.slane %v335, 1
      %v1050 = vsel %vm1035, %v1047, %v1049
      %v1051 = vrot.slane %v336, 1
      %v1052 = vsel %vm1035, %v1049, %v1051
      %v1053 = vrot.slane %v337, 1
      %v1054 = vsel %vm1035, %v1051, %v1053
      %v1055 = vrot.slane %v338, 1
      %v1056 = vsel %vm1035, %v1053, %v1055
      %v1057 = vrot.slane %v339, 1
      %v1058 = vsel %vm1035, %v1055, %v1057
      %v1059 = vrot.slane %v340, 1
      %v1060 = vsel %vm1035, %v1057, %v1059
      %v1061 = vrot.slane %v341, 1
      %v1062 = vsel %vm1035, %v1059, %v1061
      %v1063 = vrot.slane %v342, 1
      %v1064 = vsel %vm1035, %v1061, %v1063
      %v1065 = vrot.slane %v343, 1
      %v1066 = vsel %vm1035, %v1063, %v1065
      %v1067 = vrot.slane %v344, 1
      %v1068 = vsel %vm1035, %v1065, %v1067
      %v1069 = vrot.slane %v345, 1
      %v1070 = vsel %vm1035, %v1067, %v1069
      %v1071 = vrot.slane %v346, 1
      %v1072 = vsel %vm1035, %v1069, %v1071
      %v1073 = vrot.slane %v347, 1
      %v1074 = vsel %vm1035, %v1071, %v1073
      %v1075 = vrot.slane %v348, 1
      %v1076 = vsel %vm1035, %v1073, %v1075
      %v1078 = vsel %vm517, %v1038, 0
      %v1081 = vsel %vm517, %v1040, 0
      %v1084 = vsel %vm517, %v1042, 0
      %v1087 = vsel %vm517, %v1044, 0
      %v1090 = vsel %vm517, %v1046, 0
      %v1093 = vsel %vm517, %v1048, 0
      %v1096 = vsel %vm517, %v1050, 0
      %v1099 = vsel %vm517, %v1052, 0
      %v1102 = vsel %vm517, %v1054, 0
      %v1105 = vsel %vm517, %v1056, 0
      %v1108 = vsel %vm517, %v1058, 0
      %v1111 = vsel %vm517, %v1060, 0
      %v1114 = vsel %vm517, %v1062, 0
      %v1117 = vsel %vm517, %v1064, 0
      %v1120 = vsel %vm517, %v1066, 0
      %v1123 = vsel %vm517, %v1068, 0
      %v1126 = vsel %vm517, %v1070, 0
      %v1129 = vsel %vm517, %v1072, 0
      %v1132 = vsel %vm517, %v1074, 0
      %v1135 = vsel %vm517, %v1076, 0
      %v1138 = vsel %vm517, %v1075, 0
      %v1141 = vand.u32 %v1034, %v584
      %1143 = vmatprep.subr.bf16.mxu0 0
      %1144 = vmatpush1.bf16.msra.mxu0 %v1141
      %1145 = vmatprep.subr.bf16.mxu0 0
      %1146 = vmatpush1.bf16.msra.mxu0 0
      %1147 = vmatprep.subr.bf16.mxu0 0
      %1148 = vmatpush1.bf16.msra.mxu0 0
      %1149 = vmatprep.subr.bf16.mxu0 0
      %1150 = vmatpush1.bf16.msra.mxu0 0
      %1151 = vmatprep.subr.bf16.mxu0 0
      %1152 = vmatpush1.bf16.msra.mxu0 0
      %1153 = vmatprep.subr.bf16.mxu0 0
      %1154 = vmatpush1.bf16.msra.mxu0 0
      %1155 = vmatprep.subr.bf16.mxu0 0
      %1156 = vmatpush1.bf16.msra.mxu0 0
      %1157 = vmatprep.subr.bf16.mxu0 0
      %1158 = vmatpush1.bf16.msra.mxu0 0
      %1159 = vmatprep.subr.bf16.mxu0 0
      %1160 = vmatpush1.bf16.msra.mxu0 0
      %1161 = vmatprep.subr.bf16.mxu0 0
      %1162 = vmatpush1.bf16.msra.mxu0 0
      %1163 = vmatprep.subr.bf16.mxu0 0
      %1164 = vmatpush1.bf16.msra.mxu0 0
      %1165 = vmatprep.subr.bf16.mxu0 0
      %1166 = vmatpush1.bf16.msra.mxu0 0
      %1167 = vmatprep.subr.bf16.mxu0 0
      %1168 = vmatpush1.bf16.msra.mxu0 0
      %1169 = vmatprep.subr.bf16.mxu0 0
      %1170 = vmatpush1.bf16.msra.mxu0 0
      %1171 = vmatprep.subr.bf16.mxu0 0
      %1172 = vmatpush1.bf16.msra.mxu0 0
      %1173 = vmatprep.subr.bf16.mxu0 0
      %1174 = vmatpush1.bf16.msra.mxu0 0
      %1175 = vmatprep.mubr.bf16.mxu0 0
      %1176 = vmatmul.mubr.bf16.gmra.mrb[0].mxu0 %v1078
      %v1177 = vpop.f32.mrb[0].mxu0
      %v1178 = vadd.f32 0.0, %v1177
      %v1179 = vpop.f32.mrb[0].mxu0
      %v1180 = vpop.f32.mrb[0].mxu0
      %v1181 = vadd.f32 0.0, %v1180
      %v1182 = vpop.f32.mrb[0].mxu0
      %1183 = vmatprep.mubr.bf16.mxu0 0
      %1184 = vmatmul.mubr.bf16.gmra.mrb[0].mxu0 %v1081
      %v1185 = vpop.f32.mrb[0].mxu0
      %v1186 = vadd.f32 0.0, %v1185
      %v1187 = vpop.f32.mrb[0].mxu0
      %v1188 = vpop.f32.mrb[0].mxu0
      %v1189 = vadd.f32 0.0, %v1188
      %v1190 = vpop.f32.mrb[0].mxu0
      %1191 = vmatprep.mubr.bf16.mxu0 0
      %1192 = vmatmul.mubr.bf16.gmra.mrb[0].mxu0 %v1084
      %v1193 = vpop.f32.mrb[0].mxu0
      %v1194 = vadd.f32 0.0, %v1193
      %v1195 = vpop.f32.mrb[0].mxu0
      %v1196 = vpop.f32.mrb[0].mxu0
      %v1197 = vadd.f32 0.0, %v1196
      %v1198 = vpop.f32.mrb[0].mxu0
      %1199 = vmatprep.mubr.bf16.mxu0 0
      %1200 = vmatmul.mubr.bf16.gmra.mrb[0].mxu0 %v1087
      %v1201 = vpop.f32.mrb[0].mxu0
      %v1202 = vadd.f32 0.0, %v1201
      %v1203 = vpop.f32.mrb[0].mxu0
      %v1204 = vpop.f32.mrb[0].mxu0
      %v1205 = vadd.f32 0.0, %v1204
      %v1206 = vpop.f32.mrb[0].mxu0
      %1207 = vmatprep.mubr.bf16.mxu0 0
      %1208 = vmatmul.mubr.bf16.gmra.mrb[0].mxu0 %v1090
      %v1209 = vpop.f32.mrb[0].mxu0
      %v1210 = vadd.f32 0.0, %v1209
      %v1211 = vpop.f32.mrb[0].mxu0
      %v1212 = vpop.f32.mrb[0].mxu0
      %v1213 = vadd.f32 0.0, %v1212
      %v1214 = vpop.f32.mrb[0].mxu0
      %1215 = vmatprep.mubr.bf16.mxu0 0
      %1216 = vmatmul.mubr.bf16.gmra.mrb[0].mxu0 %v1093
      %v1217 = vpop.f32.mrb[0].mxu0
      %v1218 = vadd.f32 0.0, %v1217
      %v1219 = vpop.f32.mrb[0].mxu0
      %v1220 = vpop.f32.mrb[0].mxu0
      %v1221 = vadd.f32 0.0, %v1220
      %v1222 = vpop.f32.mrb[0].mxu0
      %1223 = vmatprep.mubr.bf16.mxu0 0
      %1224 = vmatmul.mubr.bf16.gmra.mrb[0].mxu0 %v1096
      %v1225 = vpop.f32.mrb[0].mxu0
      %v1226 = vadd.f32 0.0, %v1225
      %v1227 = vpop.f32.mrb[0].mxu0
      %v1228 = vpop.f32.mrb[0].mxu0
      %v1229 = vadd.f32 0.0, %v1228
      %v1230 = vpop.f32.mrb[0].mxu0
      %1231 = vmatprep.mubr.bf16.mxu0 0
      %1232 = vmatmul.mubr.bf16.gmra.mrb[0].mxu0 %v1099
      %v1233 = vpop.f32.mrb[0].mxu0
      %v1234 = vadd.f32 0.0, %v1233
      %v1235 = vpop.f32.mrb[0].mxu0
      %v1236 = vpop.f32.mrb[0].mxu0
      %v1237 = vadd.f32 0.0, %v1236
      %v1238 = vpop.f32.mrb[0].mxu0
      %1239 = vmatprep.mubr.bf16.mxu0 0
      %1240 = vmatmul.mubr.bf16.gmra.mrb[0].mxu0 %v1102
      %v1241 = vpop.f32.mrb[0].mxu0
      %v1242 = vadd.f32 0.0, %v1241
      %v1243 = vpop.f32.mrb[0].mxu0
      %v1244 = vpop.f32.mrb[0].mxu0
      %v1245 = vadd.f32 0.0, %v1244
      %v1246 = vpop.f32.mrb[0].mxu0
      %1247 = vmatprep.mubr.bf16.mxu0 0
      %1248 = vmatmul.mubr.bf16.gmra.mrb[0].mxu0 %v1105
      %v1249 = vpop.f32.mrb[0].mxu0
      %v1250 = vadd.f32 0.0, %v1249
      %v1251 = vpop.f32.mrb[0].mxu0
      %v1252 = vpop.f32.mrb[0].mxu0
      %v1253 = vadd.f32 0.0, %v1252
      %v1254 = vpop.f32.mrb[0].mxu0
      %1255 = vmatprep.mubr.bf16.mxu0 0
      %1256 = vmatmul.mubr.bf16.gmra.mrb[0].mxu0 %v1108
      %v1257 = vpop.f32.mrb[0].mxu0
      %v1258 = vadd.f32 0.0, %v1257
      %v1259 = vpop.f32.mrb[0].mxu0
      %v1260 = vpop.f32.mrb[0].mxu0
      %v1261 = vadd.f32 0.0, %v1260
      %v1262 = vpop.f32.mrb[0].mxu0
      %1263 = vmatprep.mubr.bf16.mxu0 0
      %1264 = vmatmul.mubr.bf16.gmra.mrb[0].mxu0 %v1111
      %v1265 = vpop.f32.mrb[0].mxu0
      %v1266 = vadd.f32 0.0, %v1265
      %v1267 = vpop.f32.mrb[0].mxu0
      %v1268 = vpop.f32.mrb[0].mxu0
      %v1269 = vadd.f32 0.0, %v1268
      %v1270 = vpop.f32.mrb[0].mxu0
      %1271 = vmatprep.mubr.bf16.mxu0 0
      %1272 = vmatmul.mubr.bf16.gmra.mrb[0].mxu0 %v1114
      %v1273 = vpop.f32.mrb[0].mxu0
      %v1274 = vadd.f32 0.0, %v1273
      %v1275 = vpop.f32.mrb[0].mxu0
      %v1276 = vpop.f32.mrb[0].mxu0
      %v1277 = vadd.f32 0.0, %v1276
      %v1278 = vpop.f32.mrb[0].mxu0
      %1279 = vmatprep.mubr.bf16.mxu0 0
      %1280 = vmatmul.mubr.bf16.gmra.mrb[0].mxu0 %v1117
      %v1281 = vpop.f32.mrb[0].mxu0
      %v1282 = vadd.f32 0.0, %v1281
      %v1283 = vpop.f32.mrb[0].mxu0
      %v1284 = vpop.f32.mrb[0].mxu0
      %v1285 = vadd.f32 0.0, %v1284
      %v1286 = vpop.f32.mrb[0].mxu0
      %1287 = vmatprep.mubr.bf16.mxu0 0
      %1288 = vmatmul.mubr.bf16.gmra.mrb[0].mxu0 %v1120
      %v1289 = vpop.f32.mrb[0].mxu0
      %v1290 = vadd.f32 0.0, %v1289
      %v1291 = vpop.f32.mrb[0].mxu0
      %v1292 = vpop.f32.mrb[0].mxu0
      %v1293 = vadd.f32 0.0, %v1292
      %v1294 = vpop.f32.mrb[0].mxu0
      %1295 = vmatprep.mubr.bf16.mxu0 0
      %1296 = vmatmul.mubr.bf16.gmra.mrb[0].mxu0 %v1123
      %v1297 = vpop.f32.mrb[0].mxu0
      %v1298 = vadd.f32 0.0, %v1297
      %v1299 = vpop.f32.mrb[0].mxu0
      %v1300 = vpop.f32.mrb[0].mxu0
      %v1301 = vadd.f32 0.0, %v1300
      %v1302 = vpop.f32.mrb[0].mxu0
      %1303 = vmatprep.mubr.bf16.mxu0 0
      %1304 = vmatmul.mubr.bf16.gmra.mrb[0].mxu0 %v1126
      %v1305 = vpop.f32.mrb[0].mxu0
      %v1306 = vadd.f32 0.0, %v1305
      %v1307 = vpop.f32.mrb[0].mxu0
      %v1308 = vpop.f32.mrb[0].mxu0
      %v1309 = vadd.f32 0.0, %v1308
      %v1310 = vpop.f32.mrb[0].mxu0
      %1311 = vmatprep.mubr.bf16.mxu0 0
      %1312 = vmatmul.mubr.bf16.gmra.mrb[0].mxu0 %v1129
      %v1313 = vpop.f32.mrb[0].mxu0
      %v1314 = vadd.f32 0.0, %v1313
      %v1315 = vpop.f32.mrb[0].mxu0
      %v1316 = vpop.f32.mrb[0].mxu0
      %v1317 = vadd.f32 0.0, %v1316
      %v1318 = vpop.f32.mrb[0].mxu0
      %1319 = vmatprep.mubr.bf16.mxu0 0
      %1320 = vmatmul.mubr.bf16.gmra.mrb[0].mxu0 %v1132
      %v1321 = vpop.f32.mrb[0].mxu0
      %v1322 = vadd.f32 0.0, %v1321
      %v1323 = vpop.f32.mrb[0].mxu0
      %v1324 = vpop.f32.mrb[0].mxu0
      %v1325 = vadd.f32 0.0, %v1324
      %v1326 = vpop.f32.mrb[0].mxu0
      %1327 = vmatprep.mubr.bf16.mxu0 0
      %1328 = vmatmul.mubr.bf16.gmra.mrb[0].mxu0 %v1135
      %v1329 = vpop.f32.mrb[0].mxu0
      %v1330 = vadd.f32 0.0, %v1329
      %v1331 = vpop.f32.mrb[0].mxu0
      %v1332 = vpop.f32.mrb[0].mxu0
      %v1333 = vadd.f32 0.0, %v1332
      %v1334 = vpop.f32.mrb[0].mxu0
      %1335 = vmatprep.mubr.bf16.mxu0 0
      %1336 = vmatmul.mubr.bf16.gmra.mrb[0].mxu0 %v1138
      %v1337 = vpop.f32.mrb[0].mxu0
      %v1338 = vadd.f32 0.0, %v1337
      %v1339 = vpop.f32.mrb[0].mxu0
      %v1340 = vpop.f32.mrb[0].mxu0
      %v1341 = vpop.f32.mrb[0].mxu0
      %1342 = vdwg.mxu0
      %v1343 = vadd.f32 %v868, %v1178
      %v1344 = vadd.f32 %v871, %v1181
      %v1345 = vadd.f32 %v876, %v1186
      %v1346 = vadd.f32 %v879, %v1189
      %v1347 = vadd.f32 %v884, %v1194
      %v1348 = vadd.f32 %v887, %v1197
      %v1349 = vadd.f32 %v892, %v1202
      %v1350 = vadd.f32 %v895, %v1205
      %v1351 = vadd.f32 %v900, %v1210
      %v1352 = vadd.f32 %v903, %v1213
      %v1353 = vadd.f32 %v908, %v1218
      %v1354 = vadd.f32 %v911, %v1221
      %v1355 = vadd.f32 %v916, %v1226
      %v1356 = vadd.f32 %v919, %v1229
      %v1357 = vadd.f32 %v924, %v1234
      %v1358 = vadd.f32 %v927, %v1237
      %v1359 = vadd.f32 %v932, %v1242
      %v1360 = vadd.f32 %v935, %v1245
      %v1361 = vadd.f32 %v940, %v1250
      %v1362 = vadd.f32 %v943, %v1253
      %v1363 = vadd.f32 %v948, %v1258
      %v1364 = vadd.f32 %v951, %v1261
      %v1365 = vadd.f32 %v956, %v1266
      %v1366 = vadd.f32 %v959, %v1269
      %v1367 = vadd.f32 %v964, %v1274
      %v1368 = vadd.f32 %v967, %v1277
      %v1369 = vadd.f32 %v972, %v1282
      %v1370 = vadd.f32 %v975, %v1285
      %v1371 = vadd.f32 %v980, %v1290
      %v1372 = vadd.f32 %v983, %v1293
      %v1373 = vadd.f32 %v988, %v1298
      %v1374 = vadd.f32 %v991, %v1301
      %v1375 = vadd.f32 %v996, %v1306
      %v1376 = vadd.f32 %v999, %v1309
      %v1377 = vadd.f32 %v1004, %v1314
      %v1378 = vadd.f32 %v1007, %v1317
      %v1379 = vadd.f32 %v1012, %v1322
      %v1380 = vadd.f32 %v1015, %v1325
      %v1381 = vadd.f32 %v1020, %v1330
      %v1382 = vadd.f32 %v1023, %v1333
      %v1383 = vadd.f32 %v1028, %v1338
      %s1384 = scalar_lea.vmem %s1, 6
      %v1385 = vld [vmem:[%s1384] sm:$0x3]
      %v1388 = vunpack.c.l.b16 %v238
      %v1389 = vunpack.c.l.b16 %v239
      %v1390 = vpack.c.b16 %v1388, %v327
      %v1391 = vpack.c.b16 %v1389, %v1389
      %v1392 = vrot.slane %v1390, 1
      %v1393 = vsel %vm1035, %v1073, %v1392
      %v1394 = vrot.slane %v1391, 1
      %v1395 = vsel %vm1035, %v1392, %v1394
      %v1397 = vsel %vm517, %v1393, 0
      %v1400 = vsel %vm517, %v1395, 0
      %v1403 = vsel %vm517, %v1394, 0
      %v1406 = vand.u32 %v1385, %v584
      %1408 = vmatprep.subr.bf16.mxu0 0
      %1409 = vmatpush1.bf16.msra.mxu0 %v1406
      %1410 = vmatprep.subr.bf16.mxu0 0
      %1411 = vmatpush1.bf16.msra.mxu0 0
      %1412 = vmatprep.subr.bf16.mxu0 0
      %1413 = vmatpush1.bf16.msra.mxu0 0
      %1414 = vmatprep.subr.bf16.mxu0 0
      %1415 = vmatpush1.bf16.msra.mxu0 0
      %1416 = vmatprep.subr.bf16.mxu0 0
      %1417 = vmatpush1.bf16.msra.mxu0 0
      %1418 = vmatprep.subr.bf16.mxu0 0
      %1419 = vmatpush1.bf16.msra.mxu0 0
      %1420 = vmatprep.subr.bf16.mxu0 0
      %1421 = vmatpush1.bf16.msra.mxu0 0
      %1422 = vmatprep.subr.bf16.mxu0 0
      %1423 = vmatpush1.bf16.msra.mxu0 0
      %1424 = vmatprep.subr.bf16.mxu0 0
      %1425 = vmatpush1.bf16.msra.mxu0 0
      %1426 = vmatprep.subr.bf16.mxu0 0
      %1427 = vmatpush1.bf16.msra.mxu0 0
      %1428 = vmatprep.subr.bf16.mxu0 0
      %1429 = vmatpush1.bf16.msra.mxu0 0
      %1430 = vmatprep.subr.bf16.mxu0 0
      %1431 = vmatpush1.bf16.msra.mxu0 0
      %1432 = vmatprep.subr.bf16.mxu0 0
      %1433 = vmatpush1.bf16.msra.mxu0 0
      %1434 = vmatprep.subr.bf16.mxu0 0
      %1435 = vmatpush1.bf16.msra.mxu0 0
      %1436 = vmatprep.subr.bf16.mxu0 0
      %1437 = vmatpush1.bf16.msra.mxu0 0
      %1438 = vmatprep.subr.bf16.mxu0 0
      %1439 = vmatpush1.bf16.msra.mxu0 0
      %1440 = vmatprep.mubr.bf16.mxu0 0
      %1441 = vmatmul.mubr.bf16.gmra.mrb[0].mxu0 %v1081
      %v1442 = vpop.f32.mrb[0].mxu0
      %v1443 = vadd.f32 0.0, %v1442
      %v1444 = vpop.f32.mrb[0].mxu0
      %v1445 = vpop.f32.mrb[0].mxu0
      %v1446 = vadd.f32 0.0, %v1445
      %v1447 = vpop.f32.mrb[0].mxu0
      %1448 = vmatprep.mubr.bf16.mxu0 0
      %1449 = vmatmul.mubr.bf16.gmra.mrb[0].mxu0 %v1084
      %v1450 = vpop.f32.mrb[0].mxu0
      %v1451 = vadd.f32 0.0, %v1450
      %v1452 = vpop.f32.mrb[0].mxu0
      %v1453 = vpop.f32.mrb[0].mxu0
      %v1454 = vadd.f32 0.0, %v1453
      %v1455 = vpop.f32.mrb[0].mxu0
      %1456 = vmatprep.mubr.bf16.mxu0 0
      %1457 = vmatmul.mubr.bf16.gmra.mrb[0].mxu0 %v1087
      %v1458 = vpop.f32.mrb[0].mxu0
      %v1459 = vadd.f32 0.0, %v1458
      %v1460 = vpop.f32.mrb[0].mxu0
      %v1461 = vpop.f32.mrb[0].mxu0
      %v1462 = vadd.f32 0.0, %v1461
      %v1463 = vpop.f32.mrb[0].mxu0
      %1464 = vmatprep.mubr.bf16.mxu0 0
      %1465 = vmatmul.mubr.bf16.gmra.mrb[0].mxu0 %v1090
      %v1466 = vpop.f32.mrb[0].mxu0
      %v1467 = vadd.f32 0.0, %v1466
      %v1468 = vpop.f32.mrb[0].mxu0
      %v1469 = vpop.f32.mrb[0].mxu0
      %v1470 = vadd.f32 0.0, %v1469
      %v1471 = vpop.f32.mrb[0].mxu0
      %1472 = vmatprep.mubr.bf16.mxu0 0
      %1473 = vmatmul.mubr.bf16.gmra.mrb[0].mxu0 %v1093
      %v1474 = vpop.f32.mrb[0].mxu0
      %v1475 = vadd.f32 0.0, %v1474
      %v1476 = vpop.f32.mrb[0].mxu0
      %v1477 = vpop.f32.mrb[0].mxu0
      %v1478 = vadd.f32 0.0, %v1477
      %v1479 = vpop.f32.mrb[0].mxu0
      %1480 = vmatprep.mubr.bf16.mxu0 0
      %1481 = vmatmul.mubr.bf16.gmra.mrb[0].mxu0 %v1096
      %v1482 = vpop.f32.mrb[0].mxu0
      %v1483 = vadd.f32 0.0, %v1482
      %v1484 = vpop.f32.mrb[0].mxu0
      %v1485 = vpop.f32.mrb[0].mxu0
      %v1486 = vadd.f32 0.0, %v1485
      %v1487 = vpop.f32.mrb[0].mxu0
      %1488 = vmatprep.mubr.bf16.mxu0 0
      %1489 = vmatmul.mubr.bf16.gmra.mrb[0].mxu0 %v1099
      %v1490 = vpop.f32.mrb[0].mxu0
      %v1491 = vadd.f32 0.0, %v1490
      %v1492 = vpop.f32.mrb[0].mxu0
      %v1493 = vpop.f32.mrb[0].mxu0
      %v1494 = vadd.f32 0.0, %v1493
      %v1495 = vpop.f32.mrb[0].mxu0
      %1496 = vmatprep.mubr.bf16.mxu0 0
      %1497 = vmatmul.mubr.bf16.gmra.mrb[0].mxu0 %v1102
      %v1498 = vpop.f32.mrb[0].mxu0
      %v1499 = vadd.f32 0.0, %v1498
      %v1500 = vpop.f32.mrb[0].mxu0
      %v1501 = vpop.f32.mrb[0].mxu0
      %v1502 = vadd.f32 0.0, %v1501
      %v1503 = vpop.f32.mrb[0].mxu0
      %1504 = vmatprep.mubr.bf16.mxu0 0
      %1505 = vmatmul.mubr.bf16.gmra.mrb[0].mxu0 %v1105
      %v1506 = vpop.f32.mrb[0].mxu0
      %v1507 = vadd.f32 0.0, %v1506
      %v1508 = vpop.f32.mrb[0].mxu0
      %v1509 = vpop.f32.mrb[0].mxu0
      %v1510 = vadd.f32 0.0, %v1509
      %v1511 = vpop.f32.mrb[0].mxu0
      %1512 = vmatprep.mubr.bf16.mxu0 0
      %1513 = vmatmul.mubr.bf16.gmra.mrb[0].mxu0 %v1108
      %v1514 = vpop.f32.mrb[0].mxu0
      %v1515 = vadd.f32 0.0, %v1514
      %v1516 = vpop.f32.mrb[0].mxu0
      %v1517 = vpop.f32.mrb[0].mxu0
      %v1518 = vadd.f32 0.0, %v1517
      %v1519 = vpop.f32.mrb[0].mxu0
      %1520 = vmatprep.mubr.bf16.mxu0 0
      %1521 = vmatmul.mubr.bf16.gmra.mrb[0].mxu0 %v1111
      %v1522 = vpop.f32.mrb[0].mxu0
      %v1523 = vadd.f32 0.0, %v1522
      %v1524 = vpop.f32.mrb[0].mxu0
      %v1525 = vpop.f32.mrb[0].mxu0
      %v1526 = vadd.f32 0.0, %v1525
      %v1527 = vpop.f32.mrb[0].mxu0
      %1528 = vmatprep.mubr.bf16.mxu0 0
      %1529 = vmatmul.mubr.bf16.gmra.mrb[0].mxu0 %v1114
      %v1530 = vpop.f32.mrb[0].mxu0
      %v1531 = vadd.f32 0.0, %v1530
      %v1532 = vpop.f32.mrb[0].mxu0
      %v1533 = vpop.f32.mrb[0].mxu0
      %v1534 = vadd.f32 0.0, %v1533
      %v1535 = vpop.f32.mrb[0].mxu0
      %1536 = vmatprep.mubr.bf16.mxu0 0
      %1537 = vmatmul.mubr.bf16.gmra.mrb[0].mxu0 %v1117
      %v1538 = vpop.f32.mrb[0].mxu0
      %v1539 = vadd.f32 0.0, %v1538
      %v1540 = vpop.f32.mrb[0].mxu0
      %v1541 = vpop.f32.mrb[0].mxu0
      %v1542 = vadd.f32 0.0, %v1541
      %v1543 = vpop.f32.mrb[0].mxu0
      %1544 = vmatprep.mubr.bf16.mxu0 0
      %1545 = vmatmul.mubr.bf16.gmra.mrb[0].mxu0 %v1120
      %v1546 = vpop.f32.mrb[0].mxu0
      %v1547 = vadd.f32 0.0, %v1546
      %v1548 = vpop.f32.mrb[0].mxu0
      %v1549 = vpop.f32.mrb[0].mxu0
      %v1550 = vadd.f32 0.0, %v1549
      %v1551 = vpop.f32.mrb[0].mxu0
      %1552 = vmatprep.mubr.bf16.mxu0 0
      %1553 = vmatmul.mubr.bf16.gmra.mrb[0].mxu0 %v1123
      %v1554 = vpop.f32.mrb[0].mxu0
      %v1555 = vadd.f32 0.0, %v1554
      %v1556 = vpop.f32.mrb[0].mxu0
      %v1557 = vpop.f32.mrb[0].mxu0
      %v1558 = vadd.f32 0.0, %v1557
      %v1559 = vpop.f32.mrb[0].mxu0
      %1560 = vmatprep.mubr.bf16.mxu0 0
      %1561 = vmatmul.mubr.bf16.gmra.mrb[0].mxu0 %v1126
      %v1562 = vpop.f32.mrb[0].mxu0
      %v1563 = vadd.f32 0.0, %v1562
      %v1564 = vpop.f32.mrb[0].mxu0
      %v1565 = vpop.f32.mrb[0].mxu0
      %v1566 = vadd.f32 0.0, %v1565
      %v1567 = vpop.f32.mrb[0].mxu0
      %1568 = vmatprep.mubr.bf16.mxu0 0
      %1569 = vmatmul.mubr.bf16.gmra.mrb[0].mxu0 %v1129
      %v1570 = vpop.f32.mrb[0].mxu0
      %v1571 = vadd.f32 0.0, %v1570
      %v1572 = vpop.f32.mrb[0].mxu0
      %v1573 = vpop.f32.mrb[0].mxu0
      %v1574 = vadd.f32 0.0, %v1573
      %v1575 = vpop.f32.mrb[0].mxu0
      %1576 = vmatprep.mubr.bf16.mxu0 0
      %1577 = vmatmul.mubr.bf16.gmra.mrb[0].mxu0 %v1132
      %v1578 = vpop.f32.mrb[0].mxu0
      %v1579 = vadd.f32 0.0, %v1578
      %v1580 = vpop.f32.mrb[0].mxu0
      %v1581 = vpop.f32.mrb[0].mxu0
      %v1582 = vadd.f32 0.0, %v1581
      %v1583 = vpop.f32.mrb[0].mxu0
      %1584 = vmatprep.mubr.bf16.mxu0 0
      %1585 = vmatmul.mubr.bf16.gmra.mrb[0].mxu0 %v1397
      %v1586 = vpop.f32.mrb[0].mxu0
      %v1587 = vadd.f32 0.0, %v1586
      %v1588 = vpop.f32.mrb[0].mxu0
      %v1589 = vpop.f32.mrb[0].mxu0
      %v1590 = vadd.f32 0.0, %v1589
      %v1591 = vpop.f32.mrb[0].mxu0
      %1592 = vmatprep.mubr.bf16.mxu0 0
      %1593 = vmatmul.mubr.bf16.gmra.mrb[0].mxu0 %v1400
      %v1594 = vpop.f32.mrb[0].mxu0
      %v1595 = vadd.f32 0.0, %v1594
      %v1596 = vpop.f32.mrb[0].mxu0
      %v1597 = vpop.f32.mrb[0].mxu0
      %v1598 = vadd.f32 0.0, %v1597
      %v1599 = vpop.f32.mrb[0].mxu0
      %1600 = vmatprep.mubr.bf16.mxu0 0
      %1601 = vmatmul.mubr.bf16.gmra.mrb[0].mxu0 %v1403
      %v1602 = vpop.f32.mrb[0].mxu0
      %v1603 = vadd.f32 0.0, %v1602
      %v1604 = vpop.f32.mrb[0].mxu0
      %v1605 = vpop.f32.mrb[0].mxu0
      %v1606 = vpop.f32.mrb[0].mxu0
      %1607 = vdwg.mxu0
      %v1608 = vadd.f32 %v1343, %v1443
      %v1609 = vadd.f32 %v1344, %v1446
      %v1610 = vadd.f32 %v1345, %v1451
      %v1611 = vadd.f32 %v1346, %v1454
      %v1612 = vadd.f32 %v1347, %v1459
      %v1613 = vadd.f32 %v1348, %v1462
      %v1614 = vadd.f32 %v1349, %v1467
      %v1615 = vadd.f32 %v1350, %v1470
      %v1616 = vadd.f32 %v1351, %v1475
      %v1617 = vadd.f32 %v1352, %v1478
      %v1618 = vadd.f32 %v1353, %v1483
      %v1619 = vadd.f32 %v1354, %v1486
      %v1620 = vadd.f32 %v1355, %v1491
      %v1621 = vadd.f32 %v1356, %v1494
      %v1622 = vadd.f32 %v1357, %v1499
      %v1623 = vadd.f32 %v1358, %v1502
      %v1624 = vadd.f32 %v1359, %v1507
      %v1625 = vadd.f32 %v1360, %v1510
      %v1626 = vadd.f32 %v1361, %v1515
      %v1627 = vadd.f32 %v1362, %v1518
      %v1628 = vadd.f32 %v1363, %v1523
      %v1629 = vadd.f32 %v1364, %v1526
      %v1630 = vadd.f32 %v1365, %v1531
      %v1631 = vadd.f32 %v1366, %v1534
      %v1632 = vadd.f32 %v1367, %v1539
      %v1633 = vadd.f32 %v1368, %v1542
      %v1634 = vadd.f32 %v1369, %v1547
      %v1635 = vadd.f32 %v1370, %v1550
      %v1636 = vadd.f32 %v1371, %v1555
      %v1637 = vadd.f32 %v1372, %v1558
      %v1638 = vadd.f32 %v1373, %v1563
      %v1639 = vadd.f32 %v1374, %v1566
      %v1640 = vadd.f32 %v1375, %v1571
      %v1641 = vadd.f32 %v1376, %v1574
      %v1642 = vadd.f32 %v1377, %v1579
      %v1643 = vadd.f32 %v1378, %v1582
      %v1644 = vadd.f32 %v1379, %v1587
      %v1645 = vadd.f32 %v1380, %v1590
      %v1646 = vadd.f32 %v1381, %v1595
      %v1647 = vadd.f32 %v1382, %v1598
      %v1648 = vadd.f32 %v1383, %v1603
      %s1649 = scalar_lea.vmem %s1, 8
      %v1650 = vld [vmem:[%s1649] sm:$0x3]
      %vm1651 = vsmask.f32 6400
      %v1652 = vrot.slane %v362, 1
      %v1653 = vrot.slane %v358, 2
      %v1654 = vor.u32 %v1652, %v1653
      %v1655 = vrot.slane %v370, 1
      %v1656 = vrot.slane %v366, 2
      %v1657 = vor.u32 %v1655, %v1656
      %v1658 = vsel %vm1651, %v1654, %v1657
      %v1659 = vrot.slane %v378, 1
      %v1660 = vrot.slane %v374, 2
      %v1661 = vor.u32 %v1659, %v1660
      %v1662 = vsel %vm1651, %v1657, %v1661
      %v1663 = vrot.slane %v386, 1
      %v1664 = vrot.slane %v382, 2
      %v1665 = vor.u32 %v1663, %v1664
      %v1666 = vsel %vm1651, %v1661, %v1665
      %v1667 = vrot.slane %v394, 1
      %v1668 = vrot.slane %v390, 2
      %v1669 = vor.u32 %v1667, %v1668
      %v1670 = vsel %vm1651, %v1665, %v1669
      %v1671 = vrot.slane %v402, 1
      %v1672 = vrot.slane %v398, 2
      %v1673 = vor.u32 %v1671, %v1672
      %v1674 = vsel %vm1651, %v1669, %v1673
      %v1675 = vrot.slane %v410, 1
      %v1676 = vrot.slane %v406, 2
      %v1677 = vor.u32 %v1675, %v1676
      %v1678 = vsel %vm1651, %v1673, %v1677
      %v1679 = vrot.slane %v418, 1
      %v1680 = vrot.slane %v414, 2
      %v1681 = vor.u32 %v1679, %v1680
      %v1682 = vsel %vm1651, %v1677, %v1681
      %v1683 = vrot.slane %v426, 1
      %v1684 = vrot.slane %v422, 2
      %v1685 = vor.u32 %v1683, %v1684
      %v1686 = vsel %vm1651, %v1681, %v1685
      %v1687 = vrot.slane %v434, 1
      %v1688 = vrot.slane %v430, 2
      %v1689 = vor.u32 %v1687, %v1688
      %v1690 = vsel %vm1651, %v1685, %v1689
      %v1691 = vrot.slane %v442, 1
      %v1692 = vrot.slane %v438, 2
      %v1693 = vor.u32 %v1691, %v1692
      %v1694 = vsel %vm1651, %v1689, %v1693
      %v1695 = vrot.slane %v450, 1
      %v1696 = vrot.slane %v446, 2
      %v1697 = vor.u32 %v1695, %v1696
      %v1698 = vsel %vm1651, %v1693, %v1697
      %v1699 = vrot.slane %v458, 1
      %v1700 = vrot.slane %v454, 2
      %v1701 = vor.u32 %v1699, %v1700
      %v1702 = vsel %vm1651, %v1697, %v1701
      %v1703 = vrot.slane %v466, 1
      %v1704 = vrot.slane %v462, 2
      %v1705 = vor.u32 %v1703, %v1704
      %v1706 = vsel %vm1651, %v1701, %v1705
      %v1707 = vrot.slane %v474, 1
      %v1708 = vrot.slane %v470, 2
      %v1709 = vor.u32 %v1707, %v1708
      %v1710 = vsel %vm1651, %v1705, %v1709
      %v1711 = vrot.slane %v482, 1
      %v1712 = vrot.slane %v478, 2
      %v1713 = vor.u32 %v1711, %v1712
      %v1714 = vsel %vm1651, %v1709, %v1713
      %v1715 = vrot.slane %v490, 1
      %v1716 = vrot.slane %v486, 2
      %v1717 = vor.u32 %v1715, %v1716
      %v1718 = vsel %vm1651, %v1713, %v1717
      %v1719 = vrot.slane %v498, 1
      %v1720 = vrot.slane %v494, 2
      %v1721 = vor.u32 %v1719, %v1720
      %v1722 = vsel %vm1651, %v1717, %v1721
      %v1723 = vrot.slane %v506, 1
      %v1724 = vrot.slane %v502, 2
      %v1725 = vor.u32 %v1723, %v1724
      %v1726 = vsel %vm1651, %v1721, %v1725
      %v1728 = vshrl.u32 %v1390, 16
      %v1730 = vrot.slane %v1728, 1
      %v1731 = vshll.u32 %v1390, 16
      %v1733 = vrot.slane %v1731, 2
      %v1734 = vor.u32 %v1730, %v1733
      %v1735 = vsel %vm1651, %v1725, %v1734
      %v1737 = vshrl.u32 %v1391, 16
      %v1739 = vrot.slane %v1737, 1
      %v1740 = vshll.u32 %v1391, 16
      %v1742 = vrot.slane %v1740, 2
      %v1743 = vor.u32 %v1739, %v1742
      %v1744 = vsel %vm1651, %v1734, %v1743
      %v1746 = vsel %vm517, %v1658, 0
      %v1749 = vsel %vm517, %v1662, 0
      %v1752 = vsel %vm517, %v1666, 0
      %v1755 = vsel %vm517, %v1670, 0
      %v1758 = vsel %vm517, %v1674, 0
      %v1761 = vsel %vm517, %v1678, 0
      %v1764 = vsel %vm517, %v1682, 0
      %v1767 = vsel %vm517, %v1686, 0
      %v1770 = vsel %vm517, %v1690, 0
      %v1773 = vsel %vm517, %v1694, 0
      %v1776 = vsel %vm517, %v1698, 0
      %v1779 = vsel %vm517, %v1702, 0
      %v1782 = vsel %vm517, %v1706, 0
      %v1785 = vsel %vm517, %v1710, 0
      %v1788 = vsel %vm517, %v1714, 0
      %v1791 = vsel %vm517, %v1718, 0
      %v1794 = vsel %vm517, %v1722, 0
      %v1797 = vsel %vm517, %v1726, 0
      %v1800 = vsel %vm517, %v1735, 0
      %v1803 = vsel %vm517, %v1744, 0
      %v1806 = vsel %vm517, %v1743, 0
      %v1809 = vand.u32 %v1650, %v584
      %1811 = vmatprep.subr.bf16.mxu0 0
      %1812 = vmatpush1.bf16.msra.mxu0 %v1809
      %1813 = vmatprep.subr.bf16.mxu0 0
      %1814 = vmatpush1.bf16.msra.mxu0 0
      %1815 = vmatprep.subr.bf16.mxu0 0
      %1816 = vmatpush1.bf16.msra.mxu0 0
      %1817 = vmatprep.subr.bf16.mxu0 0
      %1818 = vmatpush1.bf16.msra.mxu0 0
      %1819 = vmatprep.subr.bf16.mxu0 0
      %1820 = vmatpush1.bf16.msra.mxu0 0
      %1821 = vmatprep.subr.bf16.mxu0 0
      %1822 = vmatpush1.bf16.msra.mxu0 0
      %1823 = vmatprep.subr.bf16.mxu0 0
      %1824 = vmatpush1.bf16.msra.mxu0 0
      %1825 = vmatprep.subr.bf16.mxu0 0
      %1826 = vmatpush1.bf16.msra.mxu0 0
      %1827 = vmatprep.subr.bf16.mxu0 0
      %1828 = vmatpush1.bf16.msra.mxu0 0
      %1829 = vmatprep.subr.bf16.mxu0 0
      %1830 = vmatpush1.bf16.msra.mxu0 0
      %1831 = vmatprep.subr.bf16.mxu0 0
      %1832 = vmatpush1.bf16.msra.mxu0 0
      %1833 = vmatprep.subr.bf16.mxu0 0
      %1834 = vmatpush1.bf16.msra.mxu0 0
      %1835 = vmatprep.subr.bf16.mxu0 0
      %1836 = vmatpush1.bf16.msra.mxu0 0
      %1837 = vmatprep.subr.bf16.mxu0 0
      %1838 = vmatpush1.bf16.msra.mxu0 0
      %1839 = vmatprep.subr.bf16.mxu0 0
      %1840 = vmatpush1.bf16.msra.mxu0 0
      %1841 = vmatprep.subr.bf16.mxu0 0
      %1842 = vmatpush1.bf16.msra.mxu0 0
      %1843 = vmatprep.mubr.bf16.mxu0 0
      %1844 = vmatmul.mubr.bf16.gmra.mrb[0].mxu0 %v1746
      %v1845 = vpop.f32.mrb[0].mxu0
      %v1846 = vadd.f32 0.0, %v1845
      %v1847 = vpop.f32.mrb[0].mxu0
      %v1848 = vpop.f32.mrb[0].mxu0
      %v1849 = vadd.f32 0.0, %v1848
      %v1850 = vpop.f32.mrb[0].mxu0
      %1851 = vmatprep.mubr.bf16.mxu0 0
      %1852 = vmatmul.mubr.bf16.gmra.mrb[0].mxu0 %v1749
      %v1853 = vpop.f32.mrb[0].mxu0
      %v1854 = vadd.f32 0.0, %v1853
      %v1855 = vpop.f32.mrb[0].mxu0
      %v1856 = vpop.f32.mrb[0].mxu0
      %v1857 = vadd.f32 0.0, %v1856
      %v1858 = vpop.f32.mrb[0].mxu0
      %1859 = vmatprep.mubr.bf16.mxu0 0
      %1860 = vmatmul.mubr.bf16.gmra.mrb[0].mxu0 %v1752
      %v1861 = vpop.f32.mrb[0].mxu0
      %v1862 = vadd.f32 0.0, %v1861
      %v1863 = vpop.f32.mrb[0].mxu0
      %v1864 = vpop.f32.mrb[0].mxu0
      %v1865 = vadd.f32 0.0, %v1864
      %v1866 = vpop.f32.mrb[0].mxu0
      %1867 = vmatprep.mubr.bf16.mxu0 0
      %1868 = vmatmul.mubr.bf16.gmra.mrb[0].mxu0 %v1755
      %v1869 = vpop.f32.mrb[0].mxu0
      %v1870 = vadd.f32 0.0, %v1869
      %v1871 = vpop.f32.mrb[0].mxu0
      %v1872 = vpop.f32.mrb[0].mxu0
      %v1873 = vadd.f32 0.0, %v1872
      %v1874 = vpop.f32.mrb[0].mxu0
      %1875 = vmatprep.mubr.bf16.mxu0 0
      %1876 = vmatmul.mubr.bf16.gmra.mrb[0].mxu0 %v1758
      %v1877 = vpop.f32.mrb[0].mxu0
      %v1878 = vadd.f32 0.0, %v1877
      %v1879 = vpop.f32.mrb[0].mxu0
      %v1880 = vpop.f32.mrb[0].mxu0
      %v1881 = vadd.f32 0.0, %v1880
      %v1882 = vpop.f32.mrb[0].mxu0
      %1883 = vmatprep.mubr.bf16.mxu0 0
      %1884 = vmatmul.mubr.bf16.gmra.mrb[0].mxu0 %v1761
      %v1885 = vpop.f32.mrb[0].mxu0
      %v1886 = vadd.f32 0.0, %v1885
      %v1887 = vpop.f32.mrb[0].mxu0
      %v1888 = vpop.f32.mrb[0].mxu0
      %v1889 = vadd.f32 0.0, %v1888
      %v1890 = vpop.f32.mrb[0].mxu0
      %1891 = vmatprep.mubr.bf16.mxu0 0
      %1892 = vmatmul.mubr.bf16.gmra.mrb[0].mxu0 %v1764
      %v1893 = vpop.f32.mrb[0].mxu0
      %v1894 = vadd.f32 0.0, %v1893
      %v1895 = vpop.f32.mrb[0].mxu0
      %v1896 = vpop.f32.mrb[0].mxu0
      %v1897 = vadd.f32 0.0, %v1896
      %v1898 = vpop.f32.mrb[0].mxu0
      %1899 = vmatprep.mubr.bf16.mxu0 0
      %1900 = vmatmul.mubr.bf16.gmra.mrb[0].mxu0 %v1767
      %v1901 = vpop.f32.mrb[0].mxu0
      %v1902 = vadd.f32 0.0, %v1901
      %v1903 = vpop.f32.mrb[0].mxu0
      %v1904 = vpop.f32.mrb[0].mxu0
      %v1905 = vadd.f32 0.0, %v1904
      %v1906 = vpop.f32.mrb[0].mxu0
      %1907 = vmatprep.mubr.bf16.mxu0 0
      %1908 = vmatmul.mubr.bf16.gmra.mrb[0].mxu0 %v1770
      %v1909 = vpop.f32.mrb[0].mxu0
      %v1910 = vadd.f32 0.0, %v1909
      %v1911 = vpop.f32.mrb[0].mxu0
      %v1912 = vpop.f32.mrb[0].mxu0
      %v1913 = vadd.f32 0.0, %v1912
      %v1914 = vpop.f32.mrb[0].mxu0
      %1915 = vmatprep.mubr.bf16.mxu0 0
      %1916 = vmatmul.mubr.bf16.gmra.mrb[0].mxu0 %v1773
      %v1917 = vpop.f32.mrb[0].mxu0
      %v1918 = vadd.f32 0.0, %v1917
      %v1919 = vpop.f32.mrb[0].mxu0
      %v1920 = vpop.f32.mrb[0].mxu0
      %v1921 = vadd.f32 0.0, %v1920
      %v1922 = vpop.f32.mrb[0].mxu0
      %1923 = vmatprep.mubr.bf16.mxu0 0
      %1924 = vmatmul.mubr.bf16.gmra.mrb[0].mxu0 %v1776
      %v1925 = vpop.f32.mrb[0].mxu0
      %v1926 = vadd.f32 0.0, %v1925
      %v1927 = vpop.f32.mrb[0].mxu0
      %v1928 = vpop.f32.mrb[0].mxu0
      %v1929 = vadd.f32 0.0, %v1928
      %v1930 = vpop.f32.mrb[0].mxu0
      %1931 = vmatprep.mubr.bf16.mxu0 0
      %1932 = vmatmul.mubr.bf16.gmra.mrb[0].mxu0 %v1779
      %v1933 = vpop.f32.mrb[0].mxu0
      %v1934 = vadd.f32 0.0, %v1933
      %v1935 = vpop.f32.mrb[0].mxu0
      %v1936 = vpop.f32.mrb[0].mxu0
      %v1937 = vadd.f32 0.0, %v1936
      %v1938 = vpop.f32.mrb[0].mxu0
      %1939 = vmatprep.mubr.bf16.mxu0 0
      %1940 = vmatmul.mubr.bf16.gmra.mrb[0].mxu0 %v1782
      %v1941 = vpop.f32.mrb[0].mxu0
      %v1942 = vadd.f32 0.0, %v1941
      %v1943 = vpop.f32.mrb[0].mxu0
      %v1944 = vpop.f32.mrb[0].mxu0
      %v1945 = vadd.f32 0.0, %v1944
      %v1946 = vpop.f32.mrb[0].mxu0
      %1947 = vmatprep.mubr.bf16.mxu0 0
      %1948 = vmatmul.mubr.bf16.gmra.mrb[0].mxu0 %v1785
      %v1949 = vpop.f32.mrb[0].mxu0
      %v1950 = vadd.f32 0.0, %v1949
      %v1951 = vpop.f32.mrb[0].mxu0
      %v1952 = vpop.f32.mrb[0].mxu0
      %v1953 = vadd.f32 0.0, %v1952
      %v1954 = vpop.f32.mrb[0].mxu0
      %1955 = vmatprep.mubr.bf16.mxu0 0
      %1956 = vmatmul.mubr.bf16.gmra.mrb[0].mxu0 %v1788
      %v1957 = vpop.f32.mrb[0].mxu0
      %v1958 = vadd.f32 0.0, %v1957
      %v1959 = vpop.f32.mrb[0].mxu0
      %v1960 = vpop.f32.mrb[0].mxu0
      %v1961 = vadd.f32 0.0, %v1960
      %v1962 = vpop.f32.mrb[0].mxu0
      %1963 = vmatprep.mubr.bf16.mxu0 0
      %1964 = vmatmul.mubr.bf16.gmra.mrb[0].mxu0 %v1791
      %v1965 = vpop.f32.mrb[0].mxu0
      %v1966 = vadd.f32 0.0, %v1965
      %v1967 = vpop.f32.mrb[0].mxu0
      %v1968 = vpop.f32.mrb[0].mxu0
      %v1969 = vadd.f32 0.0, %v1968
      %v1970 = vpop.f32.mrb[0].mxu0
      %1971 = vmatprep.mubr.bf16.mxu0 0
      %1972 = vmatmul.mubr.bf16.gmra.mrb[0].mxu0 %v1794
      %v1973 = vpop.f32.mrb[0].mxu0
      %v1974 = vadd.f32 0.0, %v1973
      %v1975 = vpop.f32.mrb[0].mxu0
      %v1976 = vpop.f32.mrb[0].mxu0
      %v1977 = vadd.f32 0.0, %v1976
      %v1978 = vpop.f32.mrb[0].mxu0
      %1979 = vmatprep.mubr.bf16.mxu0 0
      %1980 = vmatmul.mubr.bf16.gmra.mrb[0].mxu0 %v1797
      %v1981 = vpop.f32.mrb[0].mxu0
      %v1982 = vadd.f32 0.0, %v1981
      %v1983 = vpop.f32.mrb[0].mxu0
      %v1984 = vpop.f32.mrb[0].mxu0
      %v1985 = vadd.f32 0.0, %v1984
      %v1986 = vpop.f32.mrb[0].mxu0
      %1987 = vmatprep.mubr.bf16.mxu0 0
      %1988 = vmatmul.mubr.bf16.gmra.mrb[0].mxu0 %v1800
      %v1989 = vpop.f32.mrb[0].mxu0
      %v1990 = vadd.f32 0.0, %v1989
      %v1991 = vpop.f32.mrb[0].mxu0
      %v1992 = vpop.f32.mrb[0].mxu0
      %v1993 = vadd.f32 0.0, %v1992
      %v1994 = vpop.f32.mrb[0].mxu0
      %1995 = vmatprep.mubr.bf16.mxu0 0
      %1996 = vmatmul.mubr.bf16.gmra.mrb[0].mxu0 %v1803
      %v1997 = vpop.f32.mrb[0].mxu0
      %v1998 = vadd.f32 0.0, %v1997
      %v1999 = vpop.f32.mrb[0].mxu0
      %v2000 = vpop.f32.mrb[0].mxu0
      %v2001 = vadd.f32 0.0, %v2000
      %v2002 = vpop.f32.mrb[0].mxu0
      %2003 = vmatprep.mubr.bf16.mxu0 0
      %2004 = vmatmul.mubr.bf16.gmra.mrb[0].mxu0 %v1806
      %v2005 = vpop.f32.mrb[0].mxu0
      %v2006 = vadd.f32 0.0, %v2005
      %v2007 = vpop.f32.mrb[0].mxu0
      %v2008 = vpop.f32.mrb[0].mxu0
      %v2009 = vpop.f32.mrb[0].mxu0
      %2010 = vdwg.mxu0
      %v2011 = vadd.f32 %v1608, %v1846
      %v2012 = vadd.f32 %v1609, %v1849
      %v2013 = vadd.f32 %v1610, %v1854
      %v2014 = vadd.f32 %v1611, %v1857
      %v2015 = vadd.f32 %v1612, %v1862
      %v2016 = vadd.f32 %v1613, %v1865
      %v2017 = vadd.f32 %v1614, %v1870
      %v2018 = vadd.f32 %v1615, %v1873
      %v2019 = vadd.f32 %v1616, %v1878
      %v2020 = vadd.f32 %v1617, %v1881
      %v2021 = vadd.f32 %v1618, %v1886
      %v2022 = vadd.f32 %v1619, %v1889
      %v2023 = vadd.f32 %v1620, %v1894
      %v2024 = vadd.f32 %v1621, %v1897
      %v2025 = vadd.f32 %v1622, %v1902
      %v2026 = vadd.f32 %v1623, %v1905
      %v2027 = vadd.f32 %v1624, %v1910
      %v2028 = vadd.f32 %v1625, %v1913
      %v2029 = vadd.f32 %v1626, %v1918
      %v2030 = vadd.f32 %v1627, %v1921
      %v2031 = vadd.f32 %v1628, %v1926
      %v2032 = vadd.f32 %v1629, %v1929
      %v2033 = vadd.f32 %v1630, %v1934
      %v2034 = vadd.f32 %v1631, %v1937
      %v2035 = vadd.f32 %v1632, %v1942
      %v2036 = vadd.f32 %v1633, %v1945
      %v2037 = vadd.f32 %v1634, %v1950
      %v2038 = vadd.f32 %v1635, %v1953
      %v2039 = vadd.f32 %v1636, %v1958
      %v2040 = vadd.f32 %v1637, %v1961
      %v2041 = vadd.f32 %v1638, %v1966
      %v2042 = vadd.f32 %v1639, %v1969
      %v2043 = vadd.f32 %v1640, %v1974
      %v2044 = vadd.f32 %v1641, %v1977
      %v2045 = vadd.f32 %v1642, %v1982
      %v2046 = vadd.f32 %v1643, %v1985
      %v2047 = vadd.f32 %v1644, %v1990
      %v2048 = vadd.f32 %v1645, %v1993
      %v2049 = vadd.f32 %v1646, %v1998
      %v2050 = vadd.f32 %v1647, %v2001
      %v2051 = vadd.f32 %v1648, %v2006
      %s2052 = scalar_lea.vmem %s1, 10
      %v2053 = vld [vmem:[%s2052] sm:$0x3]
      %vm2054 = vcmask 1045504
      %v2055 = vrot.slane %v329, 2
      %v2056 = vrot.slane %v330, 2
      %v2057 = vsel %vm2054, %v2055, %v2056
      %v2058 = vrot.slane %v331, 2
      %v2059 = vsel %vm2054, %v2056, %v2058
      %v2060 = vrot.slane %v332, 2
      %v2061 = vsel %vm2054, %v2058, %v2060
      %v2062 = vrot.slane %v333, 2
      %v2063 = vsel %vm2054, %v2060, %v2062
      %v2064 = vrot.slane %v334, 2
      %v2065 = vsel %vm2054, %v2062, %v2064
      %v2066 = vrot.slane %v335, 2
      %v2067 = vsel %vm2054, %v2064, %v2066
      %v2068 = vrot.slane %v336, 2
      %v2069 = vsel %vm2054, %v2066, %v2068
      %v2070 = vrot.slane %v337, 2
      %v2071 = vsel %vm2054, %v2068, %v2070
      %v2072 = vrot.slane %v338, 2
      %v2073 = vsel %vm2054, %v2070, %v2072
      %v2074 = vrot.slane %v339, 2
      %v2075 = vsel %vm2054, %v2072, %v2074
      %v2076 = vrot.slane %v340, 2
      %v2077 = vsel %vm2054, %v2074, %v2076
      %v2078 = vrot.slane %v341, 2
      %v2079 = vsel %vm2054, %v2076, %v2078
      %v2080 = vrot.slane %v342, 2
      %v2081 = vsel %vm2054, %v2078, %v2080
      %v2082 = vrot.slane %v343, 2
      %v2083 = vsel %vm2054, %v2080, %v2082
      %v2084 = vrot.slane %v344, 2
      %v2085 = vsel %vm2054, %v2082, %v2084
      %v2086 = vrot.slane %v345, 2
      %v2087 = vsel %vm2054, %v2084, %v2086
      %v2088 = vrot.slane %v346, 2
      %v2089 = vsel %vm2054, %v2086, %v2088
      %v2090 = vrot.slane %v347, 2
      %v2091 = vsel %vm2054, %v2088, %v2090
      %v2092 = vrot.slane %v1390, 2
      %v2093 = vsel %vm2054, %v2090, %v2092
      %v2094 = vrot.slane %v1391, 2
      %v2095 = vsel %vm2054, %v2092, %v2094
      %v2097 = vsel %vm517, %v2057, 0
      %v2100 = vsel %vm517, %v2059, 0
      %v2103 = vsel %vm517, %v2061, 0
      %v2106 = vsel %vm517, %v2063, 0
      %v2109 = vsel %vm517, %v2065, 0
      %v2112 = vsel %vm517, %v2067, 0
      %v2115 = vsel %vm517, %v2069, 0
      %v2118 = vsel %vm517, %v2071, 0
      %v2121 = vsel %vm517, %v2073, 0
      %v2124 = vsel %vm517, %v2075, 0
      %v2127 = vsel %vm517, %v2077, 0
      %v2130 = vsel %vm517, %v2079, 0
      %v2133 = vsel %vm517, %v2081, 0
      %v2136 = vsel %vm517, %v2083, 0
      %v2139 = vsel %vm517, %v2085, 0
      %v2142 = vsel %vm517, %v2087, 0
      %v2145 = vsel %vm517, %v2089, 0
      %v2148 = vsel %vm517, %v2091, 0
      %v2151 = vsel %vm517, %v2093, 0
      %v2154 = vsel %vm517, %v2095, 0
      %v2157 = vsel %vm517, %v2094, 0
      %v2160 = vand.u32 %v2053, %v584
      %2162 = vmatprep.subr.bf16.mxu0 0
      %2163 = vmatpush1.bf16.msra.mxu0 %v2160
      %2164 = vmatprep.subr.bf16.mxu0 0
      %2165 = vmatpush1.bf16.msra.mxu0 0
      %2166 = vmatprep.subr.bf16.mxu0 0
      %2167 = vmatpush1.bf16.msra.mxu0 0
      %2168 = vmatprep.subr.bf16.mxu0 0
      %2169 = vmatpush1.bf16.msra.mxu0 0
      %2170 = vmatprep.subr.bf16.mxu0 0
      %2171 = vmatpush1.bf16.msra.mxu0 0
      %2172 = vmatprep.subr.bf16.mxu0 0
      %2173 = vmatpush1.bf16.msra.mxu0 0
      %2174 = vmatprep.subr.bf16.mxu0 0
      %2175 = vmatpush1.bf16.msra.mxu0 0
      %2176 = vmatprep.subr.bf16.mxu0 0
      %2177 = vmatpush1.bf16.msra.mxu0 0
      %2178 = vmatprep.subr.bf16.mxu0 0
      %2179 = vmatpush1.bf16.msra.mxu0 0
      %2180 = vmatprep.subr.bf16.mxu0 0
      %2181 = vmatpush1.bf16.msra.mxu0 0
      %2182 = vmatprep.subr.bf16.mxu0 0
      %2183 = vmatpush1.bf16.msra.mxu0 0
      %2184 = vmatprep.subr.bf16.mxu0 0
      %2185 = vmatpush1.bf16.msra.mxu0 0
      %2186 = vmatprep.subr.bf16.mxu0 0
      %2187 = vmatpush1.bf16.msra.mxu0 0
      %2188 = vmatprep.subr.bf16.mxu0 0
      %2189 = vmatpush1.bf16.msra.mxu0 0
      %2190 = vmatprep.subr.bf16.mxu0 0
      %2191 = vmatpush1.bf16.msra.mxu0 0
      %2192 = vmatprep.subr.bf16.mxu0 0
      %2193 = vmatpush1.bf16.msra.mxu0 0
      %2194 = vmatprep.mubr.bf16.mxu0 0
      %2195 = vmatmul.mubr.bf16.gmra.mrb[0].mxu0 %v2097
      %v2196 = vpop.f32.mrb[0].mxu0
      %v2197 = vadd.f32 0.0, %v2196
      %v2198 = vpop.f32.mrb[0].mxu0
      %v2199 = vpop.f32.mrb[0].mxu0
      %v2200 = vadd.f32 0.0, %v2199
      %v2201 = vpop.f32.mrb[0].mxu0
      %2202 = vmatprep.mubr.bf16.mxu0 0
      %2203 = vmatmul.mubr.bf16.gmra.mrb[0].mxu0 %v2100
      %v2204 = vpop.f32.mrb[0].mxu0
      %v2205 = vadd.f32 0.0, %v2204
      %v2206 = vpop.f32.mrb[0].mxu0
      %v2207 = vpop.f32.mrb[0].mxu0
      %v2208 = vadd.f32 0.0, %v2207
      %v2209 = vpop.f32.mrb[0].mxu0
      %2210 = vmatprep.mubr.bf16.mxu0 0
      %2211 = vmatmul.mubr.bf16.gmra.mrb[0].mxu0 %v2103
      %v2212 = vpop.f32.mrb[0].mxu0
      %v2213 = vadd.f32 0.0, %v2212
      %v2214 = vpop.f32.mrb[0].mxu0
      %v2215 = vpop.f32.mrb[0].mxu0
      %v2216 = vadd.f32 0.0, %v2215
      %v2217 = vpop.f32.mrb[0].mxu0
      %2218 = vmatprep.mubr.bf16.mxu0 0
      %2219 = vmatmul.mubr.bf16.gmra.mrb[0].mxu0 %v2106
      %v2220 = vpop.f32.mrb[0].mxu0
      %v2221 = vadd.f32 0.0, %v2220
      %v2222 = vpop.f32.mrb[0].mxu0
      %v2223 = vpop.f32.mrb[0].mxu0
      %v2224 = vadd.f32 0.0, %v2223
      %v2225 = vpop.f32.mrb[0].mxu0
      %2226 = vmatprep.mubr.bf16.mxu0 0
      %2227 = vmatmul.mubr.bf16.gmra.mrb[0].mxu0 %v2109
      %v2228 = vpop.f32.mrb[0].mxu0
      %v2229 = vadd.f32 0.0, %v2228
      %v2230 = vpop.f32.mrb[0].mxu0
      %v2231 = vpop.f32.mrb[0].mxu0
      %v2232 = vadd.f32 0.0, %v2231
      %v2233 = vpop.f32.mrb[0].mxu0
      %2234 = vmatprep.mubr.bf16.mxu0 0
      %2235 = vmatmul.mubr.bf16.gmra.mrb[0].mxu0 %v2112
      %v2236 = vpop.f32.mrb[0].mxu0
      %v2237 = vadd.f32 0.0, %v2236
      %v2238 = vpop.f32.mrb[0].mxu0
      %v2239 = vpop.f32.mrb[0].mxu0
      %v2240 = vadd.f32 0.0, %v2239
      %v2241 = vpop.f32.mrb[0].mxu0
      %2242 = vmatprep.mubr.bf16.mxu0 0
      %2243 = vmatmul.mubr.bf16.gmra.mrb[0].mxu0 %v2115
      %v2244 = vpop.f32.mrb[0].mxu0
      %v2245 = vadd.f32 0.0, %v2244
      %v2246 = vpop.f32.mrb[0].mxu0
      %v2247 = vpop.f32.mrb[0].mxu0
      %v2248 = vadd.f32 0.0, %v2247
      %v2249 = vpop.f32.mrb[0].mxu0
      %2250 = vmatprep.mubr.bf16.mxu0 0
      %2251 = vmatmul.mubr.bf16.gmra.mrb[0].mxu0 %v2118
      %v2252 = vpop.f32.mrb[0].mxu0
      %v2253 = vadd.f32 0.0, %v2252
      %v2254 = vpop.f32.mrb[0].mxu0
      %v2255 = vpop.f32.mrb[0].mxu0
      %v2256 = vadd.f32 0.0, %v2255
      %v2257 = vpop.f32.mrb[0].mxu0
      %2258 = vmatprep.mubr.bf16.mxu0 0
      %2259 = vmatmul.mubr.bf16.gmra.mrb[0].mxu0 %v2121
      %v2260 = vpop.f32.mrb[0].mxu0
      %v2261 = vadd.f32 0.0, %v2260
      %v2262 = vpop.f32.mrb[0].mxu0
      %v2263 = vpop.f32.mrb[0].mxu0
      %v2264 = vadd.f32 0.0, %v2263
      %v2265 = vpop.f32.mrb[0].mxu0
      %2266 = vmatprep.mubr.bf16.mxu0 0
      %2267 = vmatmul.mubr.bf16.gmra.mrb[0].mxu0 %v2124
      %v2268 = vpop.f32.mrb[0].mxu0
      %v2269 = vadd.f32 0.0, %v2268
      %v2270 = vpop.f32.mrb[0].mxu0
      %v2271 = vpop.f32.mrb[0].mxu0
      %v2272 = vadd.f32 0.0, %v2271
      %v2273 = vpop.f32.mrb[0].mxu0
      %2274 = vmatprep.mubr.bf16.mxu0 0
      %2275 = vmatmul.mubr.bf16.gmra.mrb[0].mxu0 %v2127
      %v2276 = vpop.f32.mrb[0].mxu0
      %v2277 = vadd.f32 0.0, %v2276
      %v2278 = vpop.f32.mrb[0].mxu0
      %v2279 = vpop.f32.mrb[0].mxu0
      %v2280 = vadd.f32 0.0, %v2279
      %v2281 = vpop.f32.mrb[0].mxu0
      %2282 = vmatprep.mubr.bf16.mxu0 0
      %2283 = vmatmul.mubr.bf16.gmra.mrb[0].mxu0 %v2130
      %v2284 = vpop.f32.mrb[0].mxu0
      %v2285 = vadd.f32 0.0, %v2284
      %v2286 = vpop.f32.mrb[0].mxu0
      %v2287 = vpop.f32.mrb[0].mxu0
      %v2288 = vadd.f32 0.0, %v2287
      %v2289 = vpop.f32.mrb[0].mxu0
      %2290 = vmatprep.mubr.bf16.mxu0 0
      %2291 = vmatmul.mubr.bf16.gmra.mrb[0].mxu0 %v2133
      %v2292 = vpop.f32.mrb[0].mxu0
      %v2293 = vadd.f32 0.0, %v2292
      %v2294 = vpop.f32.mrb[0].mxu0
      %v2295 = vpop.f32.mrb[0].mxu0
      %v2296 = vadd.f32 0.0, %v2295
      %v2297 = vpop.f32.mrb[0].mxu0
      %2298 = vmatprep.mubr.bf16.mxu0 0
      %2299 = vmatmul.mubr.bf16.gmra.mrb[0].mxu0 %v2136
      %v2300 = vpop.f32.mrb[0].mxu0
      %v2301 = vadd.f32 0.0, %v2300
      %v2302 = vpop.f32.mrb[0].mxu0
      %v2303 = vpop.f32.mrb[0].mxu0
      %v2304 = vadd.f32 0.0, %v2303
      %v2305 = vpop.f32.mrb[0].mxu0
      %2306 = vmatprep.mubr.bf16.mxu0 0
      %2307 = vmatmul.mubr.bf16.gmra.mrb[0].mxu0 %v2139
      %v2308 = vpop.f32.mrb[0].mxu0
      %v2309 = vadd.f32 0.0, %v2308
      %v2310 = vpop.f32.mrb[0].mxu0
      %v2311 = vpop.f32.mrb[0].mxu0
      %v2312 = vadd.f32 0.0, %v2311
      %v2313 = vpop.f32.mrb[0].mxu0
      %2314 = vmatprep.mubr.bf16.mxu0 0
      %2315 = vmatmul.mubr.bf16.gmra.mrb[0].mxu0 %v2142
      %v2316 = vpop.f32.mrb[0].mxu0
      %v2317 = vadd.f32 0.0, %v2316
      %v2318 = vpop.f32.mrb[0].mxu0
      %v2319 = vpop.f32.mrb[0].mxu0
      %v2320 = vadd.f32 0.0, %v2319
      %v2321 = vpop.f32.mrb[0].mxu0
      %2322 = vmatprep.mubr.bf16.mxu0 0
      %2323 = vmatmul.mubr.bf16.gmra.mrb[0].mxu0 %v2145
      %v2324 = vpop.f32.mrb[0].mxu0
      %v2325 = vadd.f32 0.0, %v2324
      %v2326 = vpop.f32.mrb[0].mxu0
      %v2327 = vpop.f32.mrb[0].mxu0
      %v2328 = vadd.f32 0.0, %v2327
      %v2329 = vpop.f32.mrb[0].mxu0
      %2330 = vmatprep.mubr.bf16.mxu0 0
      %2331 = vmatmul.mubr.bf16.gmra.mrb[0].mxu0 %v2148
      %v2332 = vpop.f32.mrb[0].mxu0
      %v2333 = vadd.f32 0.0, %v2332
      %v2334 = vpop.f32.mrb[0].mxu0
      %v2335 = vpop.f32.mrb[0].mxu0
      %v2336 = vadd.f32 0.0, %v2335
      %v2337 = vpop.f32.mrb[0].mxu0
      %2338 = vmatprep.mubr.bf16.mxu0 0
      %2339 = vmatmul.mubr.bf16.gmra.mrb[0].mxu0 %v2151
      %v2340 = vpop.f32.mrb[0].mxu0
      %v2341 = vadd.f32 0.0, %v2340
      %v2342 = vpop.f32.mrb[0].mxu0
      %v2343 = vpop.f32.mrb[0].mxu0
      %v2344 = vadd.f32 0.0, %v2343
      %v2345 = vpop.f32.mrb[0].mxu0
      %2346 = vmatprep.mubr.bf16.mxu0 0
      %2347 = vmatmul.mubr.bf16.gmra.mrb[0].mxu0 %v2154
      %v2348 = vpop.f32.mrb[0].mxu0
      %v2349 = vadd.f32 0.0, %v2348
      %v2350 = vpop.f32.mrb[0].mxu0
      %v2351 = vpop.f32.mrb[0].mxu0
      %v2352 = vadd.f32 0.0, %v2351
      %v2353 = vpop.f32.mrb[0].mxu0
      %2354 = vmatprep.mubr.bf16.mxu0 0
      %2355 = vmatmul.mubr.bf16.gmra.mrb[0].mxu0 %v2157
      %v2356 = vpop.f32.mrb[0].mxu0
      %v2357 = vadd.f32 0.0, %v2356
      %v2358 = vpop.f32.mrb[0].mxu0
      %v2359 = vpop.f32.mrb[0].mxu0
      %v2360 = vpop.f32.mrb[0].mxu0
      %2361 = vdwg.mxu0
      %v2362 = vadd.f32 %v2011, %v2197
      %v2363 = vadd.f32 %v2012, %v2200
      %v2364 = vadd.f32 %v2013, %v2205
      %v2365 = vadd.f32 %v2014, %v2208
      %v2366 = vadd.f32 %v2015, %v2213
      %v2367 = vadd.f32 %v2016, %v2216
      %v2368 = vadd.f32 %v2017, %v2221
      %v2369 = vadd.f32 %v2018, %v2224
      %v2370 = vadd.f32 %v2019, %v2229
      %v2371 = vadd.f32 %v2020, %v2232
      %v2372 = vadd.f32 %v2021, %v2237
      %v2373 = vadd.f32 %v2022, %v2240
      %v2374 = vadd.f32 %v2023, %v2245
      %v2375 = vadd.f32 %v2024, %v2248
      %v2376 = vadd.f32 %v2025, %v2253
      %v2377 = vadd.f32 %v2026, %v2256
      %v2378 = vadd.f32 %v2027, %v2261
      %v2379 = vadd.f32 %v2028, %v2264
      %v2380 = vadd.f32 %v2029, %v2269
      %v2381 = vadd.f32 %v2030, %v2272
      %v2382 = vadd.f32 %v2031, %v2277
      %v2383 = vadd.f32 %v2032, %v2280
      %v2384 = vadd.f32 %v2033, %v2285
      %v2385 = vadd.f32 %v2034, %v2288
      %v2386 = vadd.f32 %v2035, %v2293
      %v2387 = vadd.f32 %v2036, %v2296
      %v2388 = vadd.f32 %v2037, %v2301
      %v2389 = vadd.f32 %v2038, %v2304
      %v2390 = vadd.f32 %v2039, %v2309
      %v2391 = vadd.f32 %v2040, %v2312
      %v2392 = vadd.f32 %v2041, %v2317
      %v2393 = vadd.f32 %v2042, %v2320
      %v2394 = vadd.f32 %v2043, %v2325
      %v2395 = vadd.f32 %v2044, %v2328
      %v2396 = vadd.f32 %v2045, %v2333
      %v2397 = vadd.f32 %v2046, %v2336
      %v2398 = vadd.f32 %v2047, %v2341
      %v2399 = vadd.f32 %v2048, %v2344
      %v2400 = vadd.f32 %v2049, %v2349
      %v2401 = vadd.f32 %v2050, %v2352
      %v2402 = vadd.f32 %v2051, %v2357
      %s2403 = scalar_lea.vmem %s1, 12
      %v2404 = vld [vmem:[%s2403] sm:$0x3]
      %v2407 = vunpack.c.l.b16 %v240
      %v2408 = vunpack.c.l.b16 %v241
      %v2409 = vpack.c.b16 %v2407, %v1389
      %v2410 = vpack.c.b16 %v2408, %v2408
      %v2411 = vrot.slane %v2409, 2
      %v2412 = vsel %vm2054, %v2092, %v2411
      %v2413 = vrot.slane %v2410, 2
      %v2414 = vsel %vm2054, %v2411, %v2413
      %v2416 = vsel %vm517, %v2412, 0
      %v2419 = vsel %vm517, %v2414, 0
      %v2422 = vsel %vm517, %v2413, 0
      %v2425 = vand.u32 %v2404, %v584
      %2427 = vmatprep.subr.bf16.mxu0 0
      %2428 = vmatpush1.bf16.msra.mxu0 %v2425
      %2429 = vmatprep.subr.bf16.mxu0 0
      %2430 = vmatpush1.bf16.msra.mxu0 0
      %2431 = vmatprep.subr.bf16.mxu0 0
      %2432 = vmatpush1.bf16.msra.mxu0 0
      %2433 = vmatprep.subr.bf16.mxu0 0
      %2434 = vmatpush1.bf16.msra.mxu0 0
      %2435 = vmatprep.subr.bf16.mxu0 0
      %2436 = vmatpush1.bf16.msra.mxu0 0
      %2437 = vmatprep.subr.bf16.mxu0 0
      %2438 = vmatpush1.bf16.msra.mxu0 0
      %2439 = vmatprep.subr.bf16.mxu0 0
      %2440 = vmatpush1.bf16.msra.mxu0 0
      %2441 = vmatprep.subr.bf16.mxu0 0
      %2442 = vmatpush1.bf16.msra.mxu0 0
      %2443 = vmatprep.subr.bf16.mxu0 0
      %2444 = vmatpush1.bf16.msra.mxu0 0
      %2445 = vmatprep.subr.bf16.mxu0 0
      %2446 = vmatpush1.bf16.msra.mxu0 0
      %2447 = vmatprep.subr.bf16.mxu0 0
      %2448 = vmatpush1.bf16.msra.mxu0 0
      %2449 = vmatprep.subr.bf16.mxu0 0
      %2450 = vmatpush1.bf16.msra.mxu0 0
      %2451 = vmatprep.subr.bf16.mxu0 0
      %2452 = vmatpush1.bf16.msra.mxu0 0
      %2453 = vmatprep.subr.bf16.mxu0 0
      %2454 = vmatpush1.bf16.msra.mxu0 0
      %2455 = vmatprep.subr.bf16.mxu0 0
      %2456 = vmatpush1.bf16.msra.mxu0 0
      %2457 = vmatprep.subr.bf16.mxu0 0
      %2458 = vmatpush1.bf16.msra.mxu0 0
      %2459 = vmatprep.mubr.bf16.mxu0 0
      %2460 = vmatmul.mubr.bf16.gmra.mrb[0].mxu0 %v2100
      %v2461 = vpop.f32.mrb[0].mxu0
      %v2462 = vadd.f32 0.0, %v2461
      %v2463 = vpop.f32.mrb[0].mxu0
      %v2464 = vpop.f32.mrb[0].mxu0
      %v2465 = vadd.f32 0.0, %v2464
      %v2466 = vpop.f32.mrb[0].mxu0
      %2467 = vmatprep.mubr.bf16.mxu0 0
      %2468 = vmatmul.mubr.bf16.gmra.mrb[0].mxu0 %v2103
      %v2469 = vpop.f32.mrb[0].mxu0
      %v2470 = vadd.f32 0.0, %v2469
      %v2471 = vpop.f32.mrb[0].mxu0
      %v2472 = vpop.f32.mrb[0].mxu0
      %v2473 = vadd.f32 0.0, %v2472
      %v2474 = vpop.f32.mrb[0].mxu0
      %2475 = vmatprep.mubr.bf16.mxu0 0
      %2476 = vmatmul.mubr.bf16.gmra.mrb[0].mxu0 %v2106
      %v2477 = vpop.f32.mrb[0].mxu0
      %v2478 = vadd.f32 0.0, %v2477
      %v2479 = vpop.f32.mrb[0].mxu0
      %v2480 = vpop.f32.mrb[0].mxu0
      %v2481 = vadd.f32 0.0, %v2480
      %v2482 = vpop.f32.mrb[0].mxu0
      %2483 = vmatprep.mubr.bf16.mxu0 0
      %2484 = vmatmul.mubr.bf16.gmra.mrb[0].mxu0 %v2109
      %v2485 = vpop.f32.mrb[0].mxu0
      %v2486 = vadd.f32 0.0, %v2485
      %v2487 = vpop.f32.mrb[0].mxu0
      %v2488 = vpop.f32.mrb[0].mxu0
      %v2489 = vadd.f32 0.0, %v2488
      %v2490 = vpop.f32.mrb[0].mxu0
      %2491 = vmatprep.mubr.bf16.mxu0 0
      %2492 = vmatmul.mubr.bf16.gmra.mrb[0].mxu0 %v2112
      %v2493 = vpop.f32.mrb[0].mxu0
      %v2494 = vadd.f32 0.0, %v2493
      %v2495 = vpop.f32.mrb[0].mxu0
      %v2496 = vpop.f32.mrb[0].mxu0
      %v2497 = vadd.f32 0.0, %v2496
      %v2498 = vpop.f32.mrb[0].mxu0
      %2499 = vmatprep.mubr.bf16.mxu0 0
      %2500 = vmatmul.mubr.bf16.gmra.mrb[0].mxu0 %v2115
      %v2501 = vpop.f32.mrb[0].mxu0
      %v2502 = vadd.f32 0.0, %v2501
      %v2503 = vpop.f32.mrb[0].mxu0
      %v2504 = vpop.f32.mrb[0].mxu0
      %v2505 = vadd.f32 0.0, %v2504
      %v2506 = vpop.f32.mrb[0].mxu0
      %2507 = vmatprep.mubr.bf16.mxu0 0
      %2508 = vmatmul.mubr.bf16.gmra.mrb[0].mxu0 %v2118
      %v2509 = vpop.f32.mrb[0].mxu0
      %v2510 = vadd.f32 0.0, %v2509
      %v2511 = vpop.f32.mrb[0].mxu0
      %v2512 = vpop.f32.mrb[0].mxu0
      %v2513 = vadd.f32 0.0, %v2512
      %v2514 = vpop.f32.mrb[0].mxu0
      %2515 = vmatprep.mubr.bf16.mxu0 0
      %2516 = vmatmul.mubr.bf16.gmra.mrb[0].mxu0 %v2121
      %v2517 = vpop.f32.mrb[0].mxu0
      %v2518 = vadd.f32 0.0, %v2517
      %v2519 = vpop.f32.mrb[0].mxu0
      %v2520 = vpop.f32.mrb[0].mxu0
      %v2521 = vadd.f32 0.0, %v2520
      %v2522 = vpop.f32.mrb[0].mxu0
      %2523 = vmatprep.mubr.bf16.mxu0 0
      %2524 = vmatmul.mubr.bf16.gmra.mrb[0].mxu0 %v2124
      %v2525 = vpop.f32.mrb[0].mxu0
      %v2526 = vadd.f32 0.0, %v2525
      %v2527 = vpop.f32.mrb[0].mxu0
      %v2528 = vpop.f32.mrb[0].mxu0
      %v2529 = vadd.f32 0.0, %v2528
      %v2530 = vpop.f32.mrb[0].mxu0
      %2531 = vmatprep.mubr.bf16.mxu0 0
      %2532 = vmatmul.mubr.bf16.gmra.mrb[0].mxu0 %v2127
      %v2533 = vpop.f32.mrb[0].mxu0
      %v2534 = vadd.f32 0.0, %v2533
      %v2535 = vpop.f32.mrb[0].mxu0
      %v2536 = vpop.f32.mrb[0].mxu0
      %v2537 = vadd.f32 0.0, %v2536
      %v2538 = vpop.f32.mrb[0].mxu0
      %2539 = vmatprep.mubr.bf16.mxu0 0
      %2540 = vmatmul.mubr.bf16.gmra.mrb[0].mxu0 %v2130
      %v2541 = vpop.f32.mrb[0].mxu0
      %v2542 = vadd.f32 0.0, %v2541
      %v2543 = vpop.f32.mrb[0].mxu0
      %v2544 = vpop.f32.mrb[0].mxu0
      %v2545 = vadd.f32 0.0, %v2544
      %v2546 = vpop.f32.mrb[0].mxu0
      %2547 = vmatprep.mubr.bf16.mxu0 0
      %2548 = vmatmul.mubr.bf16.gmra.mrb[0].mxu0 %v2133
      %v2549 = vpop.f32.mrb[0].mxu0
      %v2550 = vadd.f32 0.0, %v2549
      %v2551 = vpop.f32.mrb[0].mxu0
      %v2552 = vpop.f32.mrb[0].mxu0
      %v2553 = vadd.f32 0.0, %v2552
      %v2554 = vpop.f32.mrb[0].mxu0
      %2555 = vmatprep.mubr.bf16.mxu0 0
      %2556 = vmatmul.mubr.bf16.gmra.mrb[0].mxu0 %v2136
      %v2557 = vpop.f32.mrb[0].mxu0
      %v2558 = vadd.f32 0.0, %v2557
      %v2559 = vpop.f32.mrb[0].mxu0
      %v2560 = vpop.f32.mrb[0].mxu0
      %v2561 = vadd.f32 0.0, %v2560
      %v2562 = vpop.f32.mrb[0].mxu0
      %2563 = vmatprep.mubr.bf16.mxu0 0
      %2564 = vmatmul.mubr.bf16.gmra.mrb[0].mxu0 %v2139
      %v2565 = vpop.f32.mrb[0].mxu0
      %v2566 = vadd.f32 0.0, %v2565
      %v2567 = vpop.f32.mrb[0].mxu0
      %v2568 = vpop.f32.mrb[0].mxu0
      %v2569 = vadd.f32 0.0, %v2568
      %v2570 = vpop.f32.mrb[0].mxu0
      %2571 = vmatprep.mubr.bf16.mxu0 0
      %2572 = vmatmul.mubr.bf16.gmra.mrb[0].mxu0 %v2142
      %v2573 = vpop.f32.mrb[0].mxu0
      %v2574 = vadd.f32 0.0, %v2573
      %v2575 = vpop.f32.mrb[0].mxu0
      %v2576 = vpop.f32.mrb[0].mxu0
      %v2577 = vadd.f32 0.0, %v2576
      %v2578 = vpop.f32.mrb[0].mxu0
      %2579 = vmatprep.mubr.bf16.mxu0 0
      %2580 = vmatmul.mubr.bf16.gmra.mrb[0].mxu0 %v2145
      %v2581 = vpop.f32.mrb[0].mxu0
      %v2582 = vadd.f32 0.0, %v2581
      %v2583 = vpop.f32.mrb[0].mxu0
      %v2584 = vpop.f32.mrb[0].mxu0
      %v2585 = vadd.f32 0.0, %v2584
      %v2586 = vpop.f32.mrb[0].mxu0
      %2587 = vmatprep.mubr.bf16.mxu0 0
      %2588 = vmatmul.mubr.bf16.gmra.mrb[0].mxu0 %v2148
      %v2589 = vpop.f32.mrb[0].mxu0
      %v2590 = vadd.f32 0.0, %v2589
      %v2591 = vpop.f32.mrb[0].mxu0
      %v2592 = vpop.f32.mrb[0].mxu0
      %v2593 = vadd.f32 0.0, %v2592
      %v2594 = vpop.f32.mrb[0].mxu0
      %2595 = vmatprep.mubr.bf16.mxu0 0
      %2596 = vmatmul.mubr.bf16.gmra.mrb[0].mxu0 %v2151
      %v2597 = vpop.f32.mrb[0].mxu0
      %v2598 = vadd.f32 0.0, %v2597
      %v2599 = vpop.f32.mrb[0].mxu0
      %v2600 = vpop.f32.mrb[0].mxu0
      %v2601 = vadd.f32 0.0, %v2600
      %v2602 = vpop.f32.mrb[0].mxu0
      %2603 = vmatprep.mubr.bf16.mxu0 0
      %2604 = vmatmul.mubr.bf16.gmra.mrb[0].mxu0 %v2416
      %v2605 = vpop.f32.mrb[0].mxu0
      %v2606 = vadd.f32 0.0, %v2605
      %v2607 = vpop.f32.mrb[0].mxu0
      %v2608 = vpop.f32.mrb[0].mxu0
      %v2609 = vadd.f32 0.0, %v2608
      %v2610 = vpop.f32.mrb[0].mxu0
      %2611 = vmatprep.mubr.bf16.mxu0 0
      %2612 = vmatmul.mubr.bf16.gmra.mrb[0].mxu0 %v2419
      %v2613 = vpop.f32.mrb[0].mxu0
      %v2614 = vadd.f32 0.0, %v2613
      %v2615 = vpop.f32.mrb[0].mxu0
      %v2616 = vpop.f32.mrb[0].mxu0
      %v2617 = vadd.f32 0.0, %v2616
      %v2618 = vpop.f32.mrb[0].mxu0
      %2619 = vmatprep.mubr.bf16.mxu0 0
      %2620 = vmatmul.mubr.bf16.gmra.mrb[0].mxu0 %v2422
      %v2621 = vpop.f32.mrb[0].mxu0
      %v2622 = vadd.f32 0.0, %v2621
      %v2623 = vpop.f32.mrb[0].mxu0
      %v2624 = vpop.f32.mrb[0].mxu0
      %v2625 = vpop.f32.mrb[0].mxu0
      %2626 = vdwg.mxu0
      %v2627 = vadd.f32 %v2362, %v2462
      %v2628 = vadd.f32 %v2363, %v2465
      %v2629 = vadd.f32 %v2364, %v2470
      %v2630 = vadd.f32 %v2365, %v2473
      %v2631 = vadd.f32 %v2366, %v2478
      %v2632 = vadd.f32 %v2367, %v2481
      %v2633 = vadd.f32 %v2368, %v2486
      %v2634 = vadd.f32 %v2369, %v2489
      %v2635 = vadd.f32 %v2370, %v2494
      %v2636 = vadd.f32 %v2371, %v2497
      %v2637 = vadd.f32 %v2372, %v2502
      %v2638 = vadd.f32 %v2373, %v2505
      %v2639 = vadd.f32 %v2374, %v2510
      %v2640 = vadd.f32 %v2375, %v2513
      %v2641 = vadd.f32 %v2376, %v2518
      %v2642 = vadd.f32 %v2377, %v2521
      %v2643 = vadd.f32 %v2378, %v2526
      %v2644 = vadd.f32 %v2379, %v2529
      %v2645 = vadd.f32 %v2380, %v2534
      %v2646 = vadd.f32 %v2381, %v2537
      %v2647 = vadd.f32 %v2382, %v2542
      %v2648 = vadd.f32 %v2383, %v2545
      %v2649 = vadd.f32 %v2384, %v2550
      %v2650 = vadd.f32 %v2385, %v2553
      %v2651 = vadd.f32 %v2386, %v2558
      %v2652 = vadd.f32 %v2387, %v2561
      %v2653 = vadd.f32 %v2388, %v2566
      %v2654 = vadd.f32 %v2389, %v2569
      %v2655 = vadd.f32 %v2390, %v2574
      %v2656 = vadd.f32 %v2391, %v2577
      %v2657 = vadd.f32 %v2392, %v2582
      %v2658 = vadd.f32 %v2393, %v2585
      %v2659 = vadd.f32 %v2394, %v2590
      %v2660 = vadd.f32 %v2395, %v2593
      %v2661 = vadd.f32 %v2396, %v2598
      %v2662 = vadd.f32 %v2397, %v2601
      %v2663 = vadd.f32 %v2398, %v2606
      %v2664 = vadd.f32 %v2399, %v2609
      %v2665 = vadd.f32 %v2400, %v2614
      %v2666 = vadd.f32 %v2401, %v2617
      %v2667 = vadd.f32 %v2402, %v2622
      %s2668 = scalar_lea.vmem %s1, 14
      %v2669 = vld [vmem:[%s2668] sm:$0x3]
      %v2671 = vunpack.c.l.b16 %v242
      %v2672 = vpack.c.b16 %v2671, %v2408
      %vm2673 = vsmask.f32 5376
      %v2674 = vrot.slane %v370, 2
      %v2675 = vrot.slane %v366, 3
      %v2676 = vor.u32 %v2674, %v2675
      %v2677 = vrot.slane %v378, 2
      %v2678 = vrot.slane %v374, 3
      %v2679 = vor.u32 %v2677, %v2678
      %v2680 = vsel %vm2673, %v2676, %v2679
      %v2681 = vrot.slane %v386, 2
      %v2682 = vrot.slane %v382, 3
      %v2683 = vor.u32 %v2681, %v2682
      %v2684 = vsel %vm2673, %v2679, %v2683
      %v2685 = vrot.slane %v394, 2
      %v2686 = vrot.slane %v390, 3
      %v2687 = vor.u32 %v2685, %v2686
      %v2688 = vsel %vm2673, %v2683, %v2687
      %v2689 = vrot.slane %v402, 2
      %v2690 = vrot.slane %v398, 3
      %v2691 = vor.u32 %v2689, %v2690
      %v2692 = vsel %vm2673, %v2687, %v2691
      %v2693 = vrot.slane %v410, 2
      %v2694 = vrot.slane %v406, 3
      %v2695 = vor.u32 %v2693, %v2694
      %v2696 = vsel %vm2673, %v2691, %v2695
      %v2697 = vrot.slane %v418, 2
      %v2698 = vrot.slane %v414, 3
      %v2699 = vor.u32 %v2697, %v2698
      %v2700 = vsel %vm2673, %v2695, %v2699
      %v2701 = vrot.slane %v426, 2
      %v2702 = vrot.slane %v422, 3
      %v2703 = vor.u32 %v2701, %v2702
      %v2704 = vsel %vm2673, %v2699, %v2703
      %v2705 = vrot.slane %v434, 2
      %v2706 = vrot.slane %v430, 3
      %v2707 = vor.u32 %v2705, %v2706
      %v2708 = vsel %vm2673, %v2703, %v2707
      %v2709 = vrot.slane %v442, 2
      %v2710 = vrot.slane %v438, 3
      %v2711 = vor.u32 %v2709, %v2710
      %v2712 = vsel %vm2673, %v2707, %v2711
      %v2713 = vrot.slane %v450, 2
      %v2714 = vrot.slane %v446, 3
      %v2715 = vor.u32 %v2713, %v2714
      %v2716 = vsel %vm2673, %v2711, %v2715
      %v2717 = vrot.slane %v458, 2
      %v2718 = vrot.slane %v454, 3
      %v2719 = vor.u32 %v2717, %v2718
      %v2720 = vsel %vm2673, %v2715, %v2719
      %v2721 = vrot.slane %v466, 2
      %v2722 = vrot.slane %v462, 3
      %v2723 = vor.u32 %v2721, %v2722
      %v2724 = vsel %vm2673, %v2719, %v2723
      %v2725 = vrot.slane %v474, 2
      %v2726 = vrot.slane %v470, 3
      %v2727 = vor.u32 %v2725, %v2726
      %v2728 = vsel %vm2673, %v2723, %v2727
      %v2729 = vrot.slane %v482, 2
      %v2730 = vrot.slane %v478, 3
      %v2731 = vor.u32 %v2729, %v2730
      %v2732 = vsel %vm2673, %v2727, %v2731
      %v2733 = vrot.slane %v490, 2
      %v2734 = vrot.slane %v486, 3
      %v2735 = vor.u32 %v2733, %v2734
      %v2736 = vsel %vm2673, %v2731, %v2735
      %v2737 = vrot.slane %v498, 2
      %v2738 = vrot.slane %v494, 3
      %v2739 = vor.u32 %v2737, %v2738
      %v2740 = vsel %vm2673, %v2735, %v2739
      %v2741 = vrot.slane %v506, 2
      %v2742 = vrot.slane %v502, 3
      %v2743 = vor.u32 %v2741, %v2742
      %v2744 = vsel %vm2673, %v2739, %v2743
      %v2745 = vrot.slane %v1728, 2
      %v2746 = vrot.slane %v1731, 3
      %v2747 = vor.u32 %v2745, %v2746
      %v2748 = vsel %vm2673, %v2743, %v2747
      %v2750 = vshrl.u32 %v2409, 16
      %v2752 = vrot.slane %v2750, 2
      %v2753 = vshll.u32 %v2409, 16
      %v2755 = vrot.slane %v2753, 3
      %v2756 = vor.u32 %v2752, %v2755
      %v2757 = vsel %vm2673, %v2747, %v2756
      %v2759 = vshrl.u32 %v2672, 16
      %v2761 = vrot.slane %v2759, 2
      %v2762 = vshll.u32 %v2672, 16
      %v2764 = vrot.slane %v2762, 3
      %v2765 = vor.u32 %v2761, %v2764
      %v2766 = vsel %vm2673, %v2756, %v2765
      %v2768 = vsel %vm517, %v2680, 0
      %v2771 = vsel %vm517, %v2684, 0
      %v2774 = vsel %vm517, %v2688, 0
      %v2777 = vsel %vm517, %v2692, 0
      %v2780 = vsel %vm517, %v2696, 0
      %v2783 = vsel %vm517, %v2700, 0
      %v2786 = vsel %vm517, %v2704, 0
      %v2789 = vsel %vm517, %v2708, 0
      %v2792 = vsel %vm517, %v2712, 0
      %v2795 = vsel %vm517, %v2716, 0
      %v2798 = vsel %vm517, %v2720, 0
      %v2801 = vsel %vm517, %v2724, 0
      %v2804 = vsel %vm517, %v2728, 0
      %v2807 = vsel %vm517, %v2732, 0
      %v2810 = vsel %vm517, %v2736, 0
      %v2813 = vsel %vm517, %v2740, 0
      %v2816 = vsel %vm517, %v2744, 0
      %v2819 = vsel %vm517, %v2748, 0
      %v2822 = vsel %vm517, %v2757, 0
      %v2825 = vsel %vm517, %v2766, 0
      %v2828 = vsel %vm517, %v2765, 0
      %v2831 = vand.u32 %v2669, %v584
      %2833 = vmatprep.subr.bf16.mxu0 0
      %2834 = vmatpush1.bf16.msra.mxu0 %v2831
      %2835 = vmatprep.subr.bf16.mxu0 0
      %2836 = vmatpush1.bf16.msra.mxu0 0
      %2837 = vmatprep.subr.bf16.mxu0 0
      %2838 = vmatpush1.bf16.msra.mxu0 0
      %2839 = vmatprep.subr.bf16.mxu0 0
      %2840 = vmatpush1.bf16.msra.mxu0 0
      %2841 = vmatprep.subr.bf16.mxu0 0
      %2842 = vmatpush1.bf16.msra.mxu0 0
      %2843 = vmatprep.subr.bf16.mxu0 0
      %2844 = vmatpush1.bf16.msra.mxu0 0
      %2845 = vmatprep.subr.bf16.mxu0 0
      %2846 = vmatpush1.bf16.msra.mxu0 0
      %2847 = vmatprep.subr.bf16.mxu0 0
      %2848 = vmatpush1.bf16.msra.mxu0 0
      %2849 = vmatprep.subr.bf16.mxu0 0
      %2850 = vmatpush1.bf16.msra.mxu0 0
      %2851 = vmatprep.subr.bf16.mxu0 0
      %2852 = vmatpush1.bf16.msra.mxu0 0
      %2853 = vmatprep.subr.bf16.mxu0 0
      %2854 = vmatpush1.bf16.msra.mxu0 0
      %2855 = vmatprep.subr.bf16.mxu0 0
      %2856 = vmatpush1.bf16.msra.mxu0 0
      %2857 = vmatprep.subr.bf16.mxu0 0
      %2858 = vmatpush1.bf16.msra.mxu0 0
      %2859 = vmatprep.subr.bf16.mxu0 0
      %2860 = vmatpush1.bf16.msra.mxu0 0
      %2861 = vmatprep.subr.bf16.mxu0 0
      %2862 = vmatpush1.bf16.msra.mxu0 0
      %2863 = vmatprep.subr.bf16.mxu0 0
      %2864 = vmatpush1.bf16.msra.mxu0 0
      %2865 = vmatprep.mubr.bf16.mxu0 0
      %2866 = vmatmul.mubr.bf16.gmra.mrb[0].mxu0 %v2768
      %v2867 = vpop.f32.mrb[0].mxu0
      %v2868 = vadd.f32 0.0, %v2867
      %v2869 = vpop.f32.mrb[0].mxu0
      %v2870 = vpop.f32.mrb[0].mxu0
      %v2871 = vadd.f32 0.0, %v2870
      %v2872 = vpop.f32.mrb[0].mxu0
      %2873 = vmatprep.mubr.bf16.mxu0 0
      %2874 = vmatmul.mubr.bf16.gmra.mrb[0].mxu0 %v2771
      %v2875 = vpop.f32.mrb[0].mxu0
      %v2876 = vadd.f32 0.0, %v2875
      %v2877 = vpop.f32.mrb[0].mxu0
      %v2878 = vpop.f32.mrb[0].mxu0
      %v2879 = vadd.f32 0.0, %v2878
      %v2880 = vpop.f32.mrb[0].mxu0
      %2881 = vmatprep.mubr.bf16.mxu0 0
      %2882 = vmatmul.mubr.bf16.gmra.mrb[0].mxu0 %v2774
      %v2883 = vpop.f32.mrb[0].mxu0
      %v2884 = vadd.f32 0.0, %v2883
      %v2885 = vpop.f32.mrb[0].mxu0
      %v2886 = vpop.f32.mrb[0].mxu0
      %v2887 = vadd.f32 0.0, %v2886
      %v2888 = vpop.f32.mrb[0].mxu0
      %2889 = vmatprep.mubr.bf16.mxu0 0
      %2890 = vmatmul.mubr.bf16.gmra.mrb[0].mxu0 %v2777
      %v2891 = vpop.f32.mrb[0].mxu0
      %v2892 = vadd.f32 0.0, %v2891
      %v2893 = vpop.f32.mrb[0].mxu0
      %v2894 = vpop.f32.mrb[0].mxu0
      %v2895 = vadd.f32 0.0, %v2894
      %v2896 = vpop.f32.mrb[0].mxu0
      %2897 = vmatprep.mubr.bf16.mxu0 0
      %2898 = vmatmul.mubr.bf16.gmra.mrb[0].mxu0 %v2780
      %v2899 = vpop.f32.mrb[0].mxu0
      %v2900 = vadd.f32 0.0, %v2899
      %v2901 = vpop.f32.mrb[0].mxu0
      %v2902 = vpop.f32.mrb[0].mxu0
      %v2903 = vadd.f32 0.0, %v2902
      %v2904 = vpop.f32.mrb[0].mxu0
      %2905 = vmatprep.mubr.bf16.mxu0 0
      %2906 = vmatmul.mubr.bf16.gmra.mrb[0].mxu0 %v2783
      %v2907 = vpop.f32.mrb[0].mxu0
      %v2908 = vadd.f32 0.0, %v2907
      %v2909 = vpop.f32.mrb[0].mxu0
      %v2910 = vpop.f32.mrb[0].mxu0
      %v2911 = vadd.f32 0.0, %v2910
      %v2912 = vpop.f32.mrb[0].mxu0
      %2913 = vmatprep.mubr.bf16.mxu0 0
      %2914 = vmatmul.mubr.bf16.gmra.mrb[0].mxu0 %v2786
      %v2915 = vpop.f32.mrb[0].mxu0
      %v2916 = vadd.f32 0.0, %v2915
      %v2917 = vpop.f32.mrb[0].mxu0
      %v2918 = vpop.f32.mrb[0].mxu0
      %v2919 = vadd.f32 0.0, %v2918
      %v2920 = vpop.f32.mrb[0].mxu0
      %2921 = vmatprep.mubr.bf16.mxu0 0
      %2922 = vmatmul.mubr.bf16.gmra.mrb[0].mxu0 %v2789
      %v2923 = vpop.f32.mrb[0].mxu0
      %v2924 = vadd.f32 0.0, %v2923
      %v2925 = vpop.f32.mrb[0].mxu0
      %v2926 = vpop.f32.mrb[0].mxu0
      %v2927 = vadd.f32 0.0, %v2926
      %v2928 = vpop.f32.mrb[0].mxu0
      %2929 = vmatprep.mubr.bf16.mxu0 0
      %2930 = vmatmul.mubr.bf16.gmra.mrb[0].mxu0 %v2792
      %v2931 = vpop.f32.mrb[0].mxu0
      %v2932 = vadd.f32 0.0, %v2931
      %v2933 = vpop.f32.mrb[0].mxu0
      %v2934 = vpop.f32.mrb[0].mxu0
      %v2935 = vadd.f32 0.0, %v2934
      %v2936 = vpop.f32.mrb[0].mxu0
      %2937 = vmatprep.mubr.bf16.mxu0 0
      %2938 = vmatmul.mubr.bf16.gmra.mrb[0].mxu0 %v2795
      %v2939 = vpop.f32.mrb[0].mxu0
      %v2940 = vadd.f32 0.0, %v2939
      %v2941 = vpop.f32.mrb[0].mxu0
      %v2942 = vpop.f32.mrb[0].mxu0
      %v2943 = vadd.f32 0.0, %v2942
      %v2944 = vpop.f32.mrb[0].mxu0
      %2945 = vmatprep.mubr.bf16.mxu0 0
      %2946 = vmatmul.mubr.bf16.gmra.mrb[0].mxu0 %v2798
      %v2947 = vpop.f32.mrb[0].mxu0
      %v2948 = vadd.f32 0.0, %v2947
      %v2949 = vpop.f32.mrb[0].mxu0
      %v2950 = vpop.f32.mrb[0].mxu0
      %v2951 = vadd.f32 0.0, %v2950
      %v2952 = vpop.f32.mrb[0].mxu0
      %2953 = vmatprep.mubr.bf16.mxu0 0
      %2954 = vmatmul.mubr.bf16.gmra.mrb[0].mxu0 %v2801
      %v2955 = vpop.f32.mrb[0].mxu0
      %v2956 = vadd.f32 0.0, %v2955
      %v2957 = vpop.f32.mrb[0].mxu0
      %v2958 = vpop.f32.mrb[0].mxu0
      %v2959 = vadd.f32 0.0, %v2958
      %v2960 = vpop.f32.mrb[0].mxu0
      %2961 = vmatprep.mubr.bf16.mxu0 0
      %2962 = vmatmul.mubr.bf16.gmra.mrb[0].mxu0 %v2804
      %v2963 = vpop.f32.mrb[0].mxu0
      %v2964 = vadd.f32 0.0, %v2963
      %v2965 = vpop.f32.mrb[0].mxu0
      %v2966 = vpop.f32.mrb[0].mxu0
      %v2967 = vadd.f32 0.0, %v2966
      %v2968 = vpop.f32.mrb[0].mxu0
      %2969 = vmatprep.mubr.bf16.mxu0 0
      %2970 = vmatmul.mubr.bf16.gmra.mrb[0].mxu0 %v2807
      %v2971 = vpop.f32.mrb[0].mxu0
      %v2972 = vadd.f32 0.0, %v2971
      %v2973 = vpop.f32.mrb[0].mxu0
      %v2974 = vpop.f32.mrb[0].mxu0
      %v2975 = vadd.f32 0.0, %v2974
      %v2976 = vpop.f32.mrb[0].mxu0
      %2977 = vmatprep.mubr.bf16.mxu0 0
      %2978 = vmatmul.mubr.bf16.gmra.mrb[0].mxu0 %v2810
      %v2979 = vpop.f32.mrb[0].mxu0
      %v2980 = vadd.f32 0.0, %v2979
      %v2981 = vpop.f32.mrb[0].mxu0
      %v2982 = vpop.f32.mrb[0].mxu0
      %v2983 = vadd.f32 0.0, %v2982
      %v2984 = vpop.f32.mrb[0].mxu0
      %2985 = vmatprep.mubr.bf16.mxu0 0
      %2986 = vmatmul.mubr.bf16.gmra.mrb[0].mxu0 %v2813
      %v2987 = vpop.f32.mrb[0].mxu0
      %v2988 = vadd.f32 0.0, %v2987
      %v2989 = vpop.f32.mrb[0].mxu0
      %v2990 = vpop.f32.mrb[0].mxu0
      %v2991 = vadd.f32 0.0, %v2990
      %v2992 = vpop.f32.mrb[0].mxu0
      %2993 = vmatprep.mubr.bf16.mxu0 0
      %2994 = vmatmul.mubr.bf16.gmra.mrb[0].mxu0 %v2816
      %v2995 = vpop.f32.mrb[0].mxu0
      %v2996 = vadd.f32 0.0, %v2995
      %v2997 = vpop.f32.mrb[0].mxu0
      %v2998 = vpop.f32.mrb[0].mxu0
      %v2999 = vadd.f32 0.0, %v2998
      %v3000 = vpop.f32.mrb[0].mxu0
      %3001 = vmatprep.mubr.bf16.mxu0 0
      %3002 = vmatmul.mubr.bf16.gmra.mrb[0].mxu0 %v2819
      %v3003 = vpop.f32.mrb[0].mxu0
      %v3004 = vadd.f32 0.0, %v3003
      %v3005 = vpop.f32.mrb[0].mxu0
      %v3006 = vpop.f32.mrb[0].mxu0
      %v3007 = vadd.f32 0.0, %v3006
      %v3008 = vpop.f32.mrb[0].mxu0
      %3009 = vmatprep.mubr.bf16.mxu0 0
      %3010 = vmatmul.mubr.bf16.gmra.mrb[0].mxu0 %v2822
      %v3011 = vpop.f32.mrb[0].mxu0
      %v3012 = vadd.f32 0.0, %v3011
      %v3013 = vpop.f32.mrb[0].mxu0
      %v3014 = vpop.f32.mrb[0].mxu0
      %v3015 = vadd.f32 0.0, %v3014
      %v3016 = vpop.f32.mrb[0].mxu0
      %3017 = vmatprep.mubr.bf16.mxu0 0
      %3018 = vmatmul.mubr.bf16.gmra.mrb[0].mxu0 %v2825
      %v3019 = vpop.f32.mrb[0].mxu0
      %v3020 = vadd.f32 0.0, %v3019
      %v3021 = vpop.f32.mrb[0].mxu0
      %v3022 = vpop.f32.mrb[0].mxu0
      %v3023 = vadd.f32 0.0, %v3022
      %v3024 = vpop.f32.mrb[0].mxu0
      %3025 = vmatprep.mubr.bf16.mxu0 0
      %3026 = vmatmul.mubr.bf16.gmra.mrb[0].mxu0 %v2828
      %v3027 = vpop.f32.mrb[0].mxu0
      %v3028 = vadd.f32 0.0, %v3027
      %v3029 = vpop.f32.mrb[0].mxu0
      %v3030 = vpop.f32.mrb[0].mxu0
      %v3031 = vpop.f32.mrb[0].mxu0
      %3032 = vdwg.mxu0
      %v3033 = vadd.f32 %v2627, %v2868
      %v3034 = vadd.f32 %v2628, %v2871
      %v3035 = vadd.f32 %v2629, %v2876
      %v3036 = vadd.f32 %v2630, %v2879
      %v3037 = vadd.f32 %v2631, %v2884
      %v3038 = vadd.f32 %v2632, %v2887
      %v3039 = vadd.f32 %v2633, %v2892
      %v3040 = vadd.f32 %v2634, %v2895
      %v3041 = vadd.f32 %v2635, %v2900
      %v3042 = vadd.f32 %v2636, %v2903
      %v3043 = vadd.f32 %v2637, %v2908
      %v3044 = vadd.f32 %v2638, %v2911
      %v3045 = vadd.f32 %v2639, %v2916
      %v3046 = vadd.f32 %v2640, %v2919
      %v3047 = vadd.f32 %v2641, %v2924
      %v3048 = vadd.f32 %v2642, %v2927
      %v3049 = vadd.f32 %v2643, %v2932
      %v3050 = vadd.f32 %v2644, %v2935
      %v3051 = vadd.f32 %v2645, %v2940
      %v3052 = vadd.f32 %v2646, %v2943
      %v3053 = vadd.f32 %v2647, %v2948
      %v3054 = vadd.f32 %v2648, %v2951
      %v3055 = vadd.f32 %v2649, %v2956
      %v3056 = vadd.f32 %v2650, %v2959
      %v3057 = vadd.f32 %v2651, %v2964
      %v3058 = vadd.f32 %v2652, %v2967
      %v3059 = vadd.f32 %v2653, %v2972
      %v3060 = vadd.f32 %v2654, %v2975
      %v3061 = vadd.f32 %v2655, %v2980
      %v3062 = vadd.f32 %v2656, %v2983
      %v3063 = vadd.f32 %v2657, %v2988
      %v3064 = vadd.f32 %v2658, %v2991
      %v3065 = vadd.f32 %v2659, %v2996
      %v3066 = vadd.f32 %v2660, %v2999
      %v3067 = vadd.f32 %v2661, %v3004
      %v3068 = vadd.f32 %v2662, %v3007
      %v3069 = vadd.f32 %v2663, %v3012
      %v3070 = vadd.f32 %v2664, %v3015
      %v3071 = vadd.f32 %v2665, %v3020
      %v3072 = vadd.f32 %v2666, %v3023
      %v3073 = vadd.f32 %v2667, %v3028
      %s3074 = scalar_lea.vmem %s1, 16
      %v3075 = vld [vmem:[%s3074] sm:$0x3]
      %vm3076 = vcmask 1044480
      %v3077 = vrot.slane %v330, 3
      %v3078 = vrot.slane %v331, 3
      %v3079 = vsel %vm3076, %v3077, %v3078
      %v3080 = vrot.slane %v332, 3
      %v3081 = vsel %vm3076, %v3078, %v3080
      %v3082 = vrot.slane %v333, 3
      %v3083 = vsel %vm3076, %v3080, %v3082
      %v3084 = vrot.slane %v334, 3
      %v3085 = vsel %vm3076, %v3082, %v3084
      %v3086 = vrot.slane %v335, 3
      %v3087 = vsel %vm3076, %v3084, %v3086
      %v3088 = vrot.slane %v336, 3
      %v3089 = vsel %vm3076, %v3086, %v3088
      %v3090 = vrot.slane %v337, 3
      %v3091 = vsel %vm3076, %v3088, %v3090
      %v3092 = vrot.slane %v338, 3
      %v3093 = vsel %vm3076, %v3090, %v3092
      %v3094 = vrot.slane %v339, 3
      %v3095 = vsel %vm3076, %v3092, %v3094
      %v3096 = vrot.slane %v340, 3
      %v3097 = vsel %vm3076, %v3094, %v3096
      %v3098 = vrot.slane %v341, 3
      %v3099 = vsel %vm3076, %v3096, %v3098
      %v3100 = vrot.slane %v342, 3
      %v3101 = vsel %vm3076, %v3098, %v3100
      %v3102 = vrot.slane %v343, 3
      %v3103 = vsel %vm3076, %v3100, %v3102
      %v3104 = vrot.slane %v344, 3
      %v3105 = vsel %vm3076, %v3102, %v3104
      %v3106 = vrot.slane %v345, 3
      %v3107 = vsel %vm3076, %v3104, %v3106
      %v3108 = vrot.slane %v346, 3
      %v3109 = vsel %vm3076, %v3106, %v3108
      %v3110 = vrot.slane %v347, 3
      %v3111 = vsel %vm3076, %v3108, %v3110
      %v3112 = vrot.slane %v1390, 3
      %v3113 = vsel %vm3076, %v3110, %v3112
      %v3114 = vrot.slane %v2409, 3
      %v3115 = vsel %vm3076, %v3112, %v3114
      %v3116 = vrot.slane %v2672, 3
      %v3117 = vsel %vm3076, %v3114, %v3116
      %v3119 = vsel %vm517, %v3079, 0
      %v3122 = vsel %vm517, %v3081, 0
      %v3125 = vsel %vm517, %v3083, 0
      %v3128 = vsel %vm517, %v3085, 0
      %v3131 = vsel %vm517, %v3087, 0
      %v3134 = vsel %vm517, %v3089, 0
      %v3137 = vsel %vm517, %v3091, 0
      %v3140 = vsel %vm517, %v3093, 0
      %v3143 = vsel %vm517, %v3095, 0
      %v3146 = vsel %vm517, %v3097, 0
      %v3149 = vsel %vm517, %v3099, 0
      %v3152 = vsel %vm517, %v3101, 0
      %v3155 = vsel %vm517, %v3103, 0
      %v3158 = vsel %vm517, %v3105, 0
      %v3161 = vsel %vm517, %v3107, 0
      %v3164 = vsel %vm517, %v3109, 0
      %v3167 = vsel %vm517, %v3111, 0
      %v3170 = vsel %vm517, %v3113, 0
      %v3173 = vsel %vm517, %v3115, 0
      %v3176 = vsel %vm517, %v3117, 0
      %v3179 = vsel %vm517, %v3116, 0
      %v3182 = vand.u32 %v3075, %v584
      %3184 = vmatprep.subr.bf16.mxu0 0
      %3185 = vmatpush1.bf16.msra.mxu0 %v3182
      %3186 = vmatprep.subr.bf16.mxu0 0
      %3187 = vmatpush1.bf16.msra.mxu0 0
      %3188 = vmatprep.subr.bf16.mxu0 0
      %3189 = vmatpush1.bf16.msra.mxu0 0
      %3190 = vmatprep.subr.bf16.mxu0 0
      %3191 = vmatpush1.bf16.msra.mxu0 0
      %3192 = vmatprep.subr.bf16.mxu0 0
      %3193 = vmatpush1.bf16.msra.mxu0 0
      %3194 = vmatprep.subr.bf16.mxu0 0
      %3195 = vmatpush1.bf16.msra.mxu0 0
      %3196 = vmatprep.subr.bf16.mxu0 0
      %3197 = vmatpush1.bf16.msra.mxu0 0
      %3198 = vmatprep.subr.bf16.mxu0 0
      %3199 = vmatpush1.bf16.msra.mxu0 0
      %3200 = vmatprep.subr.bf16.mxu0 0
      %3201 = vmatpush1.bf16.msra.mxu0 0
      %3202 = vmatprep.subr.bf16.mxu0 0
      %3203 = vmatpush1.bf16.msra.mxu0 0
      %3204 = vmatprep.subr.bf16.mxu0 0
      %3205 = vmatpush1.bf16.msra.mxu0 0
      %3206 = vmatprep.subr.bf16.mxu0 0
      %3207 = vmatpush1.bf16.msra.mxu0 0
      %3208 = vmatprep.subr.bf16.mxu0 0
      %3209 = vmatpush1.bf16.msra.mxu0 0
      %3210 = vmatprep.subr.bf16.mxu0 0
      %3211 = vmatpush1.bf16.msra.mxu0 0
      %3212 = vmatprep.subr.bf16.mxu0 0
      %3213 = vmatpush1.bf16.msra.mxu0 0
      %3214 = vmatprep.subr.bf16.mxu0 0
      %3215 = vmatpush1.bf16.msra.mxu0 0
      %3216 = vmatprep.mubr.bf16.mxu0 0
      %3217 = vmatmul.mubr.bf16.gmra.mrb[0].mxu0 %v3119
      %v3218 = vpop.f32.mrb[0].mxu0
      %v3219 = vadd.f32 0.0, %v3218
      %v3220 = vpop.f32.mrb[0].mxu0
      %v3221 = vpop.f32.mrb[0].mxu0
      %v3222 = vadd.f32 0.0, %v3221
      %v3223 = vpop.f32.mrb[0].mxu0
      %3224 = vmatprep.mubr.bf16.mxu0 0
      %3225 = vmatmul.mubr.bf16.gmra.mrb[0].mxu0 %v3122
      %v3226 = vpop.f32.mrb[0].mxu0
      %v3227 = vadd.f32 0.0, %v3226
      %v3228 = vpop.f32.mrb[0].mxu0
      %v3229 = vpop.f32.mrb[0].mxu0
      %v3230 = vadd.f32 0.0, %v3229
      %v3231 = vpop.f32.mrb[0].mxu0
      %3232 = vmatprep.mubr.bf16.mxu0 0
      %3233 = vmatmul.mubr.bf16.gmra.mrb[0].mxu0 %v3125
      %v3234 = vpop.f32.mrb[0].mxu0
      %v3235 = vadd.f32 0.0, %v3234
      %v3236 = vpop.f32.mrb[0].mxu0
      %v3237 = vpop.f32.mrb[0].mxu0
      %v3238 = vadd.f32 0.0, %v3237
      %v3239 = vpop.f32.mrb[0].mxu0
      %3240 = vmatprep.mubr.bf16.mxu0 0
      %3241 = vmatmul.mubr.bf16.gmra.mrb[0].mxu0 %v3128
      %v3242 = vpop.f32.mrb[0].mxu0
      %v3243 = vadd.f32 0.0, %v3242
      %v3244 = vpop.f32.mrb[0].mxu0
      %v3245 = vpop.f32.mrb[0].mxu0
      %v3246 = vadd.f32 0.0, %v3245
      %v3247 = vpop.f32.mrb[0].mxu0
      %3248 = vmatprep.mubr.bf16.mxu0 0
      %3249 = vmatmul.mubr.bf16.gmra.mrb[0].mxu0 %v3131
      %v3250 = vpop.f32.mrb[0].mxu0
      %v3251 = vadd.f32 0.0, %v3250
      %v3252 = vpop.f32.mrb[0].mxu0
      %v3253 = vpop.f32.mrb[0].mxu0
      %v3254 = vadd.f32 0.0, %v3253
      %v3255 = vpop.f32.mrb[0].mxu0
      %3256 = vmatprep.mubr.bf16.mxu0 0
      %3257 = vmatmul.mubr.bf16.gmra.mrb[0].mxu0 %v3134
      %v3258 = vpop.f32.mrb[0].mxu0
      %v3259 = vadd.f32 0.0, %v3258
      %v3260 = vpop.f32.mrb[0].mxu0
      %v3261 = vpop.f32.mrb[0].mxu0
      %v3262 = vadd.f32 0.0, %v3261
      %v3263 = vpop.f32.mrb[0].mxu0
      %3264 = vmatprep.mubr.bf16.mxu0 0
      %3265 = vmatmul.mubr.bf16.gmra.mrb[0].mxu0 %v3137
      %v3266 = vpop.f32.mrb[0].mxu0
      %v3267 = vadd.f32 0.0, %v3266
      %v3268 = vpop.f32.mrb[0].mxu0
      %v3269 = vpop.f32.mrb[0].mxu0
      %v3270 = vadd.f32 0.0, %v3269
      %v3271 = vpop.f32.mrb[0].mxu0
      %3272 = vmatprep.mubr.bf16.mxu0 0
      %3273 = vmatmul.mubr.bf16.gmra.mrb[0].mxu0 %v3140
      %v3274 = vpop.f32.mrb[0].mxu0
      %v3275 = vadd.f32 0.0, %v3274
      %v3276 = vpop.f32.mrb[0].mxu0
      %v3277 = vpop.f32.mrb[0].mxu0
      %v3278 = vadd.f32 0.0, %v3277
      %v3279 = vpop.f32.mrb[0].mxu0
      %3280 = vmatprep.mubr.bf16.mxu0 0
      %3281 = vmatmul.mubr.bf16.gmra.mrb[0].mxu0 %v3143
      %v3282 = vpop.f32.mrb[0].mxu0
      %v3283 = vadd.f32 0.0, %v3282
      %v3284 = vpop.f32.mrb[0].mxu0
      %v3285 = vpop.f32.mrb[0].mxu0
      %v3286 = vadd.f32 0.0, %v3285
      %v3287 = vpop.f32.mrb[0].mxu0
      %3288 = vmatprep.mubr.bf16.mxu0 0
      %3289 = vmatmul.mubr.bf16.gmra.mrb[0].mxu0 %v3146
      %v3290 = vpop.f32.mrb[0].mxu0
      %v3291 = vadd.f32 0.0, %v3290
      %v3292 = vpop.f32.mrb[0].mxu0
      %v3293 = vpop.f32.mrb[0].mxu0
      %v3294 = vadd.f32 0.0, %v3293
      %v3295 = vpop.f32.mrb[0].mxu0
      %3296 = vmatprep.mubr.bf16.mxu0 0
      %3297 = vmatmul.mubr.bf16.gmra.mrb[0].mxu0 %v3149
      %v3298 = vpop.f32.mrb[0].mxu0
      %v3299 = vadd.f32 0.0, %v3298
      %v3300 = vpop.f32.mrb[0].mxu0
      %v3301 = vpop.f32.mrb[0].mxu0
      %v3302 = vadd.f32 0.0, %v3301
      %v3303 = vpop.f32.mrb[0].mxu0
      %3304 = vmatprep.mubr.bf16.mxu0 0
      %3305 = vmatmul.mubr.bf16.gmra.mrb[0].mxu0 %v3152
      %v3306 = vpop.f32.mrb[0].mxu0
      %v3307 = vadd.f32 0.0, %v3306
      %v3308 = vpop.f32.mrb[0].mxu0
      %v3309 = vpop.f32.mrb[0].mxu0
      %v3310 = vadd.f32 0.0, %v3309
      %v3311 = vpop.f32.mrb[0].mxu0
      %3312 = vmatprep.mubr.bf16.mxu0 0
      %3313 = vmatmul.mubr.bf16.gmra.mrb[0].mxu0 %v3155
      %v3314 = vpop.f32.mrb[0].mxu0
      %v3315 = vadd.f32 0.0, %v3314
      %v3316 = vpop.f32.mrb[0].mxu0
      %v3317 = vpop.f32.mrb[0].mxu0
      %v3318 = vadd.f32 0.0, %v3317
      %v3319 = vpop.f32.mrb[0].mxu0
      %3320 = vmatprep.mubr.bf16.mxu0 0
      %3321 = vmatmul.mubr.bf16.gmra.mrb[0].mxu0 %v3158
      %v3322 = vpop.f32.mrb[0].mxu0
      %v3323 = vadd.f32 0.0, %v3322
      %v3324 = vpop.f32.mrb[0].mxu0
      %v3325 = vpop.f32.mrb[0].mxu0
      %v3326 = vadd.f32 0.0, %v3325
      %v3327 = vpop.f32.mrb[0].mxu0
      %3328 = vmatprep.mubr.bf16.mxu0 0
      %3329 = vmatmul.mubr.bf16.gmra.mrb[0].mxu0 %v3161
      %v3330 = vpop.f32.mrb[0].mxu0
      %v3331 = vadd.f32 0.0, %v3330
      %v3332 = vpop.f32.mrb[0].mxu0
      %v3333 = vpop.f32.mrb[0].mxu0
      %v3334 = vadd.f32 0.0, %v3333
      %v3335 = vpop.f32.mrb[0].mxu0
      %3336 = vmatprep.mubr.bf16.mxu0 0
      %3337 = vmatmul.mubr.bf16.gmra.mrb[0].mxu0 %v3164
      %v3338 = vpop.f32.mrb[0].mxu0
      %v3339 = vadd.f32 0.0, %v3338
      %v3340 = vpop.f32.mrb[0].mxu0
      %v3341 = vpop.f32.mrb[0].mxu0
      %v3342 = vadd.f32 0.0, %v3341
      %v3343 = vpop.f32.mrb[0].mxu0
      %3344 = vmatprep.mubr.bf16.mxu0 0
      %3345 = vmatmul.mubr.bf16.gmra.mrb[0].mxu0 %v3167
      %v3346 = vpop.f32.mrb[0].mxu0
      %v3347 = vadd.f32 0.0, %v3346
      %v3348 = vpop.f32.mrb[0].mxu0
      %v3349 = vpop.f32.mrb[0].mxu0
      %v3350 = vadd.f32 0.0, %v3349
      %v3351 = vpop.f32.mrb[0].mxu0
      %3352 = vmatprep.mubr.bf16.mxu0 0
      %3353 = vmatmul.mubr.bf16.gmra.mrb[0].mxu0 %v3170
      %v3354 = vpop.f32.mrb[0].mxu0
      %v3355 = vadd.f32 0.0, %v3354
      %v3356 = vpop.f32.mrb[0].mxu0
      %v3357 = vpop.f32.mrb[0].mxu0
      %v3358 = vadd.f32 0.0, %v3357
      %v3359 = vpop.f32.mrb[0].mxu0
      %3360 = vmatprep.mubr.bf16.mxu0 0
      %3361 = vmatmul.mubr.bf16.gmra.mrb[0].mxu0 %v3173
      %v3362 = vpop.f32.mrb[0].mxu0
      %v3363 = vadd.f32 0.0, %v3362
      %v3364 = vpop.f32.mrb[0].mxu0
      %v3365 = vpop.f32.mrb[0].mxu0
      %v3366 = vadd.f32 0.0, %v3365
      %v3367 = vpop.f32.mrb[0].mxu0
      %3368 = vmatprep.mubr.bf16.mxu0 0
      %3369 = vmatmul.mubr.bf16.gmra.mrb[0].mxu0 %v3176
      %v3370 = vpop.f32.mrb[0].mxu0
      %v3371 = vadd.f32 0.0, %v3370
      %v3372 = vpop.f32.mrb[0].mxu0
      %v3373 = vpop.f32.mrb[0].mxu0
      %v3374 = vadd.f32 0.0, %v3373
      %v3375 = vpop.f32.mrb[0].mxu0
      %3376 = vmatprep.mubr.bf16.mxu0 0
      %3377 = vmatmul.mubr.bf16.gmra.mrb[0].mxu0 %v3179
      %v3378 = vpop.f32.mrb[0].mxu0
      %v3379 = vadd.f32 0.0, %v3378
      %v3380 = vpop.f32.mrb[0].mxu0
      %v3381 = vpop.f32.mrb[0].mxu0
      %v3382 = vpop.f32.mrb[0].mxu0
      %3383 = vdwg.mxu0
      %v3384 = vadd.f32 %v3033, %v3219
      %v3385 = vadd.f32 %v3034, %v3222
      %v3386 = vadd.f32 %v3035, %v3227
      %v3387 = vadd.f32 %v3036, %v3230
      %v3388 = vadd.f32 %v3037, %v3235
      %v3389 = vadd.f32 %v3038, %v3238
      %v3390 = vadd.f32 %v3039, %v3243
      %v3391 = vadd.f32 %v3040, %v3246
      %v3392 = vadd.f32 %v3041, %v3251
      %v3393 = vadd.f32 %v3042, %v3254
      %v3394 = vadd.f32 %v3043, %v3259
      %v3395 = vadd.f32 %v3044, %v3262
      %v3396 = vadd.f32 %v3045, %v3267
      %v3397 = vadd.f32 %v3046, %v3270
      %v3398 = vadd.f32 %v3047, %v3275
      %v3399 = vadd.f32 %v3048, %v3278
      %v3400 = vadd.f32 %v3049, %v3283
      %v3401 = vadd.f32 %v3050, %v3286
      %v3402 = vadd.f32 %v3051, %v3291
      %v3403 = vadd.f32 %v3052, %v3294
      %v3404 = vadd.f32 %v3053, %v3299
      %v3405 = vadd.f32 %v3054, %v3302
      %v3406 = vadd.f32 %v3055, %v3307
      %v3407 = vadd.f32 %v3056, %v3310
      %v3408 = vadd.f32 %v3057, %v3315
      %v3409 = vadd.f32 %v3058, %v3318
      %v3410 = vadd.f32 %v3059, %v3323
      %v3411 = vadd.f32 %v3060, %v3326
      %v3412 = vadd.f32 %v3061, %v3331
      %v3413 = vadd.f32 %v3062, %v3334
      %v3414 = vadd.f32 %v3063, %v3339
      %v3415 = vadd.f32 %v3064, %v3342
      %v3416 = vadd.f32 %v3065, %v3347
      %v3417 = vadd.f32 %v3066, %v3350
      %v3418 = vadd.f32 %v3067, %v3355
      %v3419 = vadd.f32 %v3068, %v3358
      %v3420 = vadd.f32 %v3069, %v3363
      %v3421 = vadd.f32 %v3070, %v3366
      %v3422 = vadd.f32 %v3071, %v3371
      %v3423 = vadd.f32 %v3072, %v3374
      %v3424 = vadd.f32 %v3073, %v3379
      %vm3425 = vcmask 130048
      %3426 = vst.msk [vmem:[%s195] sm:$0xff] %vm3425, %v3384
      %3427 = vst.msk [vmem:[%s195 + $0x8] sm:$0xff] %vm3425, %v3385
      %3428 = vst.msk [vmem:[%s195 + $0x10] sm:$0xff] %vm3425, %v3386
      %3429 = vst.msk [vmem:[%s195 + $0x18] sm:$0xff] %vm3425, %v3387
      %3430 = vst.msk [vmem:[%s195 + $0x20] sm:$0xff] %vm3425, %v3388
      %3431 = vst.msk [vmem:[%s195 + $0x28] sm:$0xff] %vm3425, %v3389
      %3432 = vst.msk [vmem:[%s195 + $0x30] sm:$0xff] %vm3425, %v3390
      %3433 = vst.msk [vmem:[%s195 + $0x38] sm:$0xff] %vm3425, %v3391
      %3434 = vst.msk [vmem:[%s195 + $0x40] sm:$0xff] %vm3425, %v3392
      %3435 = vst.msk [vmem:[%s195 + $0x48] sm:$0xff] %vm3425, %v3393
      %3436 = vst.msk [vmem:[%s195 + $0x50] sm:$0xff] %vm3425, %v3394
      %3437 = vst.msk [vmem:[%s195 + $0x58] sm:$0xff] %vm3425, %v3395
      %3438 = vst.msk [vmem:[%s195 + $0x60] sm:$0xff] %vm3425, %v3396
      %3439 = vst.msk [vmem:[%s195 + $0x68] sm:$0xff] %vm3425, %v3397
      %3440 = vst.msk [vmem:[%s195 + $0x70] sm:$0xff] %vm3425, %v3398
      %3441 = vst.msk [vmem:[%s195 + $0x78] sm:$0xff] %vm3425, %v3399
      %3442 = vst.msk [vmem:[%s195 + $0x80] sm:$0xff] %vm3425, %v3400
      %3443 = vst.msk [vmem:[%s195 + $0x88] sm:$0xff] %vm3425, %v3401
      %3444 = vst.msk [vmem:[%s195 + $0x90] sm:$0xff] %vm3425, %v3402
      %3445 = vst.msk [vmem:[%s195 + $0x98] sm:$0xff] %vm3425, %v3403
      %3446 = vst.msk [vmem:[%s195 + $0xa0] sm:$0xff] %vm3425, %v3404
      %3447 = vst.msk [vmem:[%s195 + $0xa8] sm:$0xff] %vm3425, %v3405
      %3448 = vst.msk [vmem:[%s195 + $0xb0] sm:$0xff] %vm3425, %v3406
      %3449 = vst.msk [vmem:[%s195 + $0xb8] sm:$0xff] %vm3425, %v3407
      %3450 = vst.msk [vmem:[%s195 + $0xc0] sm:$0xff] %vm3425, %v3408
      %3451 = vst.msk [vmem:[%s195 + $0xc8] sm:$0xff] %vm3425, %v3409
      %3452 = vst.msk [vmem:[%s195 + $0xd0] sm:$0xff] %vm3425, %v3410
      %3453 = vst.msk [vmem:[%s195 + $0xd8] sm:$0xff] %vm3425, %v3411
      %3454 = vst.msk [vmem:[%s195 + $0xe0] sm:$0xff] %vm3425, %v3412
      %3455 = vst.msk [vmem:[%s195 + $0xe8] sm:$0xff] %vm3425, %v3413
      %3456 = vst.msk [vmem:[%s195 + $0xf0] sm:$0xff] %vm3425, %v3414
      %3457 = vst.msk [vmem:[%s195 + $0xf8] sm:$0xff] %vm3425, %v3415
      %3458 = vst.msk [vmem:[%s195 + $0x100] sm:$0xff] %vm3425, %v3416
      %3459 = vst.msk [vmem:[%s195 + $0x108] sm:$0xff] %vm3425, %v3417
      %3460 = vst.msk [vmem:[%s195 + $0x110] sm:$0xff] %vm3425, %v3418
      %3461 = vst.msk [vmem:[%s195 + $0x118] sm:$0xff] %vm3425, %v3419
      %3462 = vst.msk [vmem:[%s195 + $0x120] sm:$0xff] %vm3425, %v3420
      %3463 = vst.msk [vmem:[%s195 + $0x128] sm:$0xff] %vm3425, %v3421
      %3464 = vst.msk [vmem:[%s195 + $0x130] sm:$0xff] %vm3425, %v3422
      %3465 = vst.msk [vmem:[%s195 + $0x138] sm:$0xff] %vm3425, %v3423
      %vm3466 = vcmask 125952
      %3467 = vst.msk [vmem:[%s195 + $0x140] sm:$0xf] %vm3466, %v3424
      %v3468 = vld [vmem:[%s2] sm:$0x7]
      %v3470 = vlaneseq
      %v3471 = vshrl.u32 %v3470, 7
      %v3472 = vsub.s32 0, %v3471
      %v3473 = vrot.slane %v3468, %v3472
      %v3474 = vlaneseq
      %v3475 = vshrl.u32 %v3474, 7
      %v3476 = vsub.s32 1, %v3475
      %v3477 = vrot.slane %v3468, %v3476
      %v3478 = vlaneseq
      %v3479 = vshrl.u32 %v3478, 7
      %v3480 = vsub.s32 2, %v3479
      %v3481 = vrot.slane %v3468, %v3480
      %vm3484 = vcmask 556032
      %v3485 = vsel %vm3484, %v3481, 0
      %vm3487 = vcmask 1043456
      %v3489 = vsel %vm3487, %v3424, 0
      %3491 = vmatprep.subr.mxu0 0.0
      %3492 = vmatpush1.msra.mxu0 %v3384
      %3493 = vmatprep.subr.mxu0 0.0
      %3494 = vmatpush1.msra.mxu0 %v3385
      %3495 = vmatprep.subr.mxu0 0.0
      %3496 = vmatpush1.msra.mxu0 %v3386
      %3497 = vmatprep.subr.mxu0 0.0
      %3498 = vmatpush1.msra.mxu0 %v3387
      %3499 = vmatprep.subr.mxu0 0.0
      %3500 = vmatpush1.msra.mxu0 %v3388
      %3501 = vmatprep.subr.mxu0 0.0
      %3502 = vmatpush1.msra.mxu0 %v3389
      %3503 = vmatprep.subr.mxu0 0.0
      %3504 = vmatpush1.msra.mxu0 %v3390
      %3505 = vmatprep.subr.mxu0 0.0
      %3506 = vmatpush1.msra.mxu0 %v3391
      %3507 = vmatprep.subr.mxu0 0.0
      %3508 = vmatpush1.msra.mxu0 %v3392
      %3509 = vmatprep.subr.mxu0 0.0
      %3510 = vmatpush1.msra.mxu0 %v3393
      %3511 = vmatprep.subr.mxu0 0.0
      %3512 = vmatpush1.msra.mxu0 %v3394
      %3513 = vmatprep.subr.mxu0 0.0
      %3514 = vmatpush1.msra.mxu0 %v3395
      %3515 = vmatprep.subr.mxu0 0.0
      %3516 = vmatpush1.msra.mxu0 %v3396
      %3517 = vmatprep.subr.mxu0 0.0
      %3518 = vmatpush1.msra.mxu0 %v3397
      %3519 = vmatprep.subr.mxu0 0.0
      %3520 = vmatpush1.msra.mxu0 %v3398
      %3521 = vmatprep.subr.mxu0 0.0
      %3522 = vmatpush1.msra.mxu0 %v3399
      %3523 = vmatprep.subr.mxu0 0.0
      %3524 = vmatpush1.msra.mxu0 %v3400
      %3525 = vmatprep.subr.mxu0 0.0
      %3526 = vmatpush1.msra.mxu0 %v3401
      %3527 = vmatprep.subr.mxu0 0.0
      %3528 = vmatpush1.msra.mxu0 %v3402
      %3529 = vmatprep.subr.mxu0 0.0
      %3530 = vmatpush1.msra.mxu0 %v3403
      %3531 = vmatprep.subr.mxu0 0.0
      %3532 = vmatpush1.msra.mxu0 %v3404
      %3533 = vmatprep.subr.mxu0 0.0
      %3534 = vmatpush1.msra.mxu0 %v3405
      %3535 = vmatprep.subr.mxu0 0.0
      %3536 = vmatpush1.msra.mxu0 %v3406
      %3537 = vmatprep.subr.mxu0 0.0
      %3538 = vmatpush1.msra.mxu0 %v3407
      %3539 = vmatprep.subr.mxu0 0.0
      %3540 = vmatpush1.msra.mxu0 %v3408
      %3541 = vmatprep.subr.mxu0 0.0
      %3542 = vmatpush1.msra.mxu0 %v3409
      %3543 = vmatprep.subr.mxu0 0.0
      %3544 = vmatpush1.msra.mxu0 %v3410
      %3545 = vmatprep.subr.mxu0 0.0
      %3546 = vmatpush1.msra.mxu0 %v3411
      %3547 = vmatprep.subr.mxu0 0.0
      %3548 = vmatpush1.msra.mxu0 %v3412
      %3549 = vmatprep.subr.mxu0 0.0
      %3550 = vmatpush1.msra.mxu0 %v3413
      %3551 = vmatprep.subr.mxu0 0.0
      %3552 = vmatpush1.msra.mxu0 %v3414
      %3553 = vmatprep.subr.mxu0 0.0
      %3554 = vmatpush1.msra.mxu0 %v3415
      %3555 = vmatprep.mubr.f32.mxu0 %v3477
      %3556 = vmatmul.mubr.f32.gmra.mrb[0].mxu0 %v3473
      %v3557 = vpop.f32.mrb[0].mxu0
      %v3558 = vadd.f32 0.0, %v3557
      %v3559 = vpop.f32.mrb[0].mxu0
      %3560 = vdwg.mxu0
      %3561 = vmatprep.subr.mxu0 0.0
      %3562 = vmatpush1.msra.mxu0 %v3416
      %3563 = vmatprep.subr.mxu0 0.0
      %3564 = vmatpush1.msra.mxu0 %v3417
      %3565 = vmatprep.subr.mxu0 0.0
      %3566 = vmatpush1.msra.mxu0 %v3418
      %3567 = vmatprep.subr.mxu0 0.0
      %3568 = vmatpush1.msra.mxu0 %v3419
      %3569 = vmatprep.subr.mxu0 0.0
      %3570 = vmatpush1.msra.mxu0 %v3420
      %3571 = vmatprep.subr.mxu0 0.0
      %3572 = vmatpush1.msra.mxu0 %v3421
      %3573 = vmatprep.subr.mxu0 0.0
      %3574 = vmatpush1.msra.mxu0 %v3422
      %3575 = vmatprep.subr.mxu0 0.0
      %3576 = vmatpush1.msra.mxu0 %v3423
      %3577 = vmatprep.subr.mxu0 0.0
      %3578 = vmatpush1.msra.mxu0 %v3489
      %3579 = vmatprep.subr.mxu0 0.0
      %3580 = vmatpush1.msra.mxu0 0.0
      %3581 = vmatprep.subr.mxu0 0.0
      %3582 = vmatpush1.msra.mxu0 0.0
      %3583 = vmatprep.subr.mxu0 0.0
      %3584 = vmatpush1.msra.mxu0 0.0
      %3585 = vmatprep.subr.mxu0 0.0
      %3586 = vmatpush1.msra.mxu0 0.0
      %3587 = vmatprep.subr.mxu0 0.0
      %3588 = vmatpush1.msra.mxu0 0.0
      %3589 = vmatprep.subr.mxu0 0.0
      %3590 = vmatpush1.msra.mxu0 0.0
      %3591 = vmatprep.subr.mxu0 0.0
      %3592 = vmatpush1.msra.mxu0 0.0
      %3593 = vmatprep.subr.mxu0 0.0
      %3594 = vmatpush1.msra.mxu0 0.0
      %3595 = vmatprep.subr.mxu0 0.0
      %3596 = vmatpush1.msra.mxu0 0.0
      %3597 = vmatprep.subr.mxu0 0.0
      %3598 = vmatpush1.msra.mxu0 0.0
      %3599 = vmatprep.subr.mxu0 0.0
      %3600 = vmatpush1.msra.mxu0 0.0
      %3601 = vmatprep.subr.mxu0 0.0
      %3602 = vmatpush1.msra.mxu0 0.0
      %3603 = vmatprep.subr.mxu0 0.0
      %3604 = vmatpush1.msra.mxu0 0.0
      %3605 = vmatprep.subr.mxu0 0.0
      %3606 = vmatpush1.msra.mxu0 0.0
      %3607 = vmatprep.subr.mxu0 0.0
      %3608 = vmatpush1.msra.mxu0 0.0
      %3609 = vmatprep.subr.mxu0 0.0
      %3610 = vmatpush1.msra.mxu0 0.0
      %3611 = vmatprep.subr.mxu0 0.0
      %3612 = vmatpush1.msra.mxu0 0.0
      %3613 = vmatprep.subr.mxu0 0.0
      %3614 = vmatpush1.msra.mxu0 0.0
      %3615 = vmatprep.subr.mxu0 0.0
      %3616 = vmatpush1.msra.mxu0 0.0
      %3617 = vmatprep.subr.mxu0 0.0
      %3618 = vmatpush1.msra.mxu0 0.0
      %3619 = vmatprep.subr.mxu0 0.0
      %3620 = vmatpush1.msra.mxu0 0.0
      %3621 = vmatprep.subr.mxu0 0.0
      %3622 = vmatpush1.msra.mxu0 0.0
      %3623 = vmatprep.subr.mxu0 0.0
      %3624 = vmatpush1.msra.mxu0 0.0
      %3625 = vmatprep.mubr.f32.mxu0 0.0
      %3626 = vmatmul.mubr.f32.gmra.mrb[0].mxu0 %v3485
      %v3627 = vpop.f32.mrb[0].mxu0
      %v3628 = vadd.f32 %v3558, %v3627
      %v3629 = vpop.f32.mrb[0].mxu0
      %3630 = vdwg.mxu0
      %v3631 = vmul.f32 %v3384, %v3384
      %v3632 = vmul.f32 %v3385, %v3385
      %v3633 = vmul.f32 %v3386, %v3386
      %v3634 = vmul.f32 %v3387, %v3387
      %v3635 = vmul.f32 %v3388, %v3388
      %v3636 = vmul.f32 %v3389, %v3389
      %v3637 = vmul.f32 %v3390, %v3390
      %v3638 = vmul.f32 %v3391, %v3391
      %v3639 = vmul.f32 %v3392, %v3392
      %v3640 = vmul.f32 %v3393, %v3393
      %v3641 = vmul.f32 %v3394, %v3394
      %v3642 = vmul.f32 %v3395, %v3395
      %v3643 = vmul.f32 %v3396, %v3396
      %v3644 = vmul.f32 %v3397, %v3397
      %v3645 = vmul.f32 %v3398, %v3398
      %v3646 = vmul.f32 %v3399, %v3399
      %v3647 = vmul.f32 %v3400, %v3400
      %v3648 = vmul.f32 %v3401, %v3401
      %v3649 = vmul.f32 %v3402, %v3402
      %v3650 = vmul.f32 %v3403, %v3403
      %v3651 = vmul.f32 %v3404, %v3404
      %v3652 = vmul.f32 %v3405, %v3405
      %v3653 = vmul.f32 %v3406, %v3406
      %v3654 = vmul.f32 %v3407, %v3407
      %v3655 = vmul.f32 %v3408, %v3408
      %v3656 = vmul.f32 %v3409, %v3409
      %v3657 = vmul.f32 %v3410, %v3410
      %v3658 = vmul.f32 %v3411, %v3411
      %v3659 = vmul.f32 %v3412, %v3412
      %v3660 = vmul.f32 %v3413, %v3413
      %v3661 = vmul.f32 %v3414, %v3414
      %v3662 = vmul.f32 %v3415, %v3415
      %v3663 = vmul.f32 %v3416, %v3416
      %v3664 = vmul.f32 %v3417, %v3417
      %v3665 = vmul.f32 %v3418, %v3418
      %v3666 = vmul.f32 %v3419, %v3419
      %v3667 = vmul.f32 %v3420, %v3420
      %v3668 = vmul.f32 %v3421, %v3421
      %v3669 = vmul.f32 %v3422, %v3422
      %v3670 = vmul.f32 %v3423, %v3423
      %v3671 = vmul.f32 %v3424, %v3424
      %v3673 = vsel %vm3487, %v3671, 0
      %3675 = vmatprep.subr.mxu0 0.0
      %3676 = vmatpush1.msra.mxu0 %v3631
      %3677 = vmatprep.subr.mxu0 0.0
      %3678 = vmatpush1.msra.mxu0 %v3632
      %3679 = vmatprep.subr.mxu0 0.0
      %3680 = vmatpush1.msra.mxu0 %v3633
      %3681 = vmatprep.subr.mxu0 0.0
      %3682 = vmatpush1.msra.mxu0 %v3634
      %3683 = vmatprep.subr.mxu0 0.0
      %3684 = vmatpush1.msra.mxu0 %v3635
      %3685 = vmatprep.subr.mxu0 0.0
      %3686 = vmatpush1.msra.mxu0 %v3636
      %3687 = vmatprep.subr.mxu0 0.0
      %3688 = vmatpush1.msra.mxu0 %v3637
      %3689 = vmatprep.subr.mxu0 0.0
      %3690 = vmatpush1.msra.mxu0 %v3638
      %3691 = vmatprep.subr.mxu0 0.0
      %3692 = vmatpush1.msra.mxu0 %v3639
      %3693 = vmatprep.subr.mxu0 0.0
      %3694 = vmatpush1.msra.mxu0 %v3640
      %3695 = vmatprep.subr.mxu0 0.0
      %3696 = vmatpush1.msra.mxu0 %v3641
      %3697 = vmatprep.subr.mxu0 0.0
      %3698 = vmatpush1.msra.mxu0 %v3642
      %3699 = vmatprep.subr.mxu0 0.0
      %3700 = vmatpush1.msra.mxu0 %v3643
      %3701 = vmatprep.subr.mxu0 0.0
      %3702 = vmatpush1.msra.mxu0 %v3644
      %3703 = vmatprep.subr.mxu0 0.0
      %3704 = vmatpush1.msra.mxu0 %v3645
      %3705 = vmatprep.subr.mxu0 0.0
      %3706 = vmatpush1.msra.mxu0 %v3646
      %3707 = vmatprep.subr.mxu0 0.0
      %3708 = vmatpush1.msra.mxu0 %v3647
      %3709 = vmatprep.subr.mxu0 0.0
      %3710 = vmatpush1.msra.mxu0 %v3648
      %3711 = vmatprep.subr.mxu0 0.0
      %3712 = vmatpush1.msra.mxu0 %v3649
      %3713 = vmatprep.subr.mxu0 0.0
      %3714 = vmatpush1.msra.mxu0 %v3650
      %3715 = vmatprep.subr.mxu0 0.0
      %3716 = vmatpush1.msra.mxu0 %v3651
      %3717 = vmatprep.subr.mxu0 0.0
      %3718 = vmatpush1.msra.mxu0 %v3652
      %3719 = vmatprep.subr.mxu0 0.0
      %3720 = vmatpush1.msra.mxu0 %v3653
      %3721 = vmatprep.subr.mxu0 0.0
      %3722 = vmatpush1.msra.mxu0 %v3654
      %3723 = vmatprep.subr.mxu0 0.0
      %3724 = vmatpush1.msra.mxu0 %v3655
      %3725 = vmatprep.subr.mxu0 0.0
      %3726 = vmatpush1.msra.mxu0 %v3656
      %3727 = vmatprep.subr.mxu0 0.0
      %3728 = vmatpush1.msra.mxu0 %v3657
      %3729 = vmatprep.subr.mxu0 0.0
      %3730 = vmatpush1.msra.mxu0 %v3658
      %3731 = vmatprep.subr.mxu0 0.0
      %3732 = vmatpush1.msra.mxu0 %v3659
      %3733 = vmatprep.subr.mxu0 0.0
      %3734 = vmatpush1.msra.mxu0 %v3660
      %3735 = vmatprep.subr.mxu0 0.0
      %3736 = vmatpush1.msra.mxu0 %v3661
      %3737 = vmatprep.subr.mxu0 0.0
      %3738 = vmatpush1.msra.mxu0 %v3662
      %3739 = vmatprep.mubr.f32.mxu0 %v3477
      %3740 = vmatmul.mubr.f32.gmra.mrb[0].mxu0 %v3473
      %v3741 = vpop.f32.mrb[0].mxu0
      %v3742 = vadd.f32 0.0, %v3741
      %v3743 = vpop.f32.mrb[0].mxu0
      %3744 = vdwg.mxu0
      %3745 = vmatprep.subr.mxu0 0.0
      %3746 = vmatpush1.msra.mxu0 %v3663
      %3747 = vmatprep.subr.mxu0 0.0
      %3748 = vmatpush1.msra.mxu0 %v3664
      %3749 = vmatprep.subr.mxu0 0.0
      %3750 = vmatpush1.msra.mxu0 %v3665
      %3751 = vmatprep.subr.mxu0 0.0
      %3752 = vmatpush1.msra.mxu0 %v3666
      %3753 = vmatprep.subr.mxu0 0.0
      %3754 = vmatpush1.msra.mxu0 %v3667
      %3755 = vmatprep.subr.mxu0 0.0
      %3756 = vmatpush1.msra.mxu0 %v3668
      %3757 = vmatprep.subr.mxu0 0.0
      %3758 = vmatpush1.msra.mxu0 %v3669
      %3759 = vmatprep.subr.mxu0 0.0
      %3760 = vmatpush1.msra.mxu0 %v3670
      %3761 = vmatprep.subr.mxu0 0.0
      %3762 = vmatpush1.msra.mxu0 %v3673
      %3763 = vmatprep.subr.mxu0 0.0
      %3764 = vmatpush1.msra.mxu0 0.0
      %3765 = vmatprep.subr.mxu0 0.0
      %3766 = vmatpush1.msra.mxu0 0.0
      %3767 = vmatprep.subr.mxu0 0.0
      %3768 = vmatpush1.msra.mxu0 0.0
      %3769 = vmatprep.subr.mxu0 0.0
      %3770 = vmatpush1.msra.mxu0 0.0
      %3771 = vmatprep.subr.mxu0 0.0
      %3772 = vmatpush1.msra.mxu0 0.0
      %3773 = vmatprep.subr.mxu0 0.0
      %3774 = vmatpush1.msra.mxu0 0.0
      %3775 = vmatprep.subr.mxu0 0.0
      %3776 = vmatpush1.msra.mxu0 0.0
      %3777 = vmatprep.subr.mxu0 0.0
      %3778 = vmatpush1.msra.mxu0 0.0
      %3779 = vmatprep.subr.mxu0 0.0
      %3780 = vmatpush1.msra.mxu0 0.0
      %3781 = vmatprep.subr.mxu0 0.0
      %3782 = vmatpush1.msra.mxu0 0.0
      %3783 = vmatprep.subr.mxu0 0.0
      %3784 = vmatpush1.msra.mxu0 0.0
      %3785 = vmatprep.subr.mxu0 0.0
      %3786 = vmatpush1.msra.mxu0 0.0
      %3787 = vmatprep.subr.mxu0 0.0
      %3788 = vmatpush1.msra.mxu0 0.0
      %3789 = vmatprep.subr.mxu0 0.0
      %3790 = vmatpush1.msra.mxu0 0.0
      %3791 = vmatprep.subr.mxu0 0.0
      %3792 = vmatpush1.msra.mxu0 0.0
      %3793 = vmatprep.subr.mxu0 0.0
      %3794 = vmatpush1.msra.mxu0 0.0
      %3795 = vmatprep.subr.mxu0 0.0
      %3796 = vmatpush1.msra.mxu0 0.0
      %3797 = vmatprep.subr.mxu0 0.0
      %3798 = vmatpush1.msra.mxu0 0.0
      %3799 = vmatprep.subr.mxu0 0.0
      %3800 = vmatpush1.msra.mxu0 0.0
      %3801 = vmatprep.subr.mxu0 0.0
      %3802 = vmatpush1.msra.mxu0 0.0
      %3803 = vmatprep.subr.mxu0 0.0
      %3804 = vmatpush1.msra.mxu0 0.0
      %3805 = vmatprep.subr.mxu0 0.0
      %3806 = vmatpush1.msra.mxu0 0.0
      %3807 = vmatprep.subr.mxu0 0.0
      %3808 = vmatpush1.msra.mxu0 0.0
      %3809 = vmatprep.mubr.f32.mxu0 0.0
      %3810 = vmatmul.mubr.f32.gmra.mrb[0].mxu0 %v3485
      %v3811 = vpop.f32.mrb[0].mxu0
      %v3812 = vadd.f32 %v3742, %v3811
      %v3813 = vpop.f32.mrb[0].mxu0
      %3814 = vdwg.mxu0
      %p3815 = scmp.eq.s32.totalorder %s16, 0
      // Predicated region
      $region33: #{autoprotonet_embedding.8} parent=31 // pred_check
        %p3816 = pneg %p3815
      $region34: #{autoprotonet_embedding.8} parent=31 // pred_check_branch
        %3818 = sbr.rel (%p3816) target = $region36
      $region35: #{autoprotonet_embedding.8} parent=31 // pred_region
        %vm3819 = vcmask 123904
        %3820 = vst.msk [vmem:[%s4] sm:$0x3] %vm3819, 0.0
      $region36: #{autoprotonet_embedding.8} parent=31 // pred_fallthru
        _
      %v3821 = vld [vmem:[%s4] sm:$0x3]
      %v3823 = vrot.slane %v3812, 7
      %v3825 = vsel %vm581, %v3628, %v3823
      %v3826 = vadd.f32 %v3821, %v3825
      %vm3827 = vcmask 123904
      %3828 = vst.msk [vmem:[%s4] sm:$0x3] %vm3827, %v3826
      %p3829 = scmp.lt.s32.totalorder %s16, 3
      %s3830 = scalar_select %p3829, %s16, 3
      %s3831 = smul.addr %s3830, 41
      %s3832 = smul.addr %s3831, 8
      %s3833 = scalar_lea.vmem %s3, %s3832
      // Predicated region
      $region37: #{autoprotonet_embedding.8} parent=31 // pred_check
        %p3834 = pneg %p102
      $region38: #{autoprotonet_embedding.8} parent=31 // pred_check_branch
        %3836 = sbr.rel (%p3834) target = $region40
      $region39: #{autoprotonet_embedding.8} parent=31 // pred_region
        _
      $region40: #{autoprotonet_embedding.8} parent=31 // pred_fallthru
        _
      // Predicated region
      $region41: #{autoprotonet_embedding.8} parent=31 // pred_check
        %p3837 = pneg %p123
      $region42: #{autoprotonet_embedding.8} parent=31 // pred_check_branch
        %3839 = sbr.rel (%p3837) target = $region44
      $region43: #{autoprotonet_embedding.8} parent=31 // pred_region
        _
      $region44: #{autoprotonet_embedding.8} parent=31 // pred_fallthru
        _
      // Predicated region
      $region45: #{autoprotonet_embedding.8} parent=31 // pred_check
        %p3840 = pneg %p123
      $region46: #{autoprotonet_embedding.8} parent=31 // pred_check_branch
        %3842 = sbr.rel (%p3840) target = $region48
      $region47: #{autoprotonet_embedding.8} parent=31 // pred_region
        _
      $region48: #{autoprotonet_embedding.8} parent=31 // pred_fallthru
        _
    $region32: #{autoprotonet_embedding.8} parent=5 // pred_fallthru
      _
    %p3843 = scmp.le.s32.totalorder 2, %s11
    // Predicated region
    $region49: #{autoprotonet_embedding.8} parent=5 // pred_check
      %p3844 = pneg %p3843
    $region50: #{autoprotonet_embedding.8} parent=5 // pred_check_branch
      %3846 = sbr.rel (%p3844) target = $region52
    $region51: #{autoprotonet_embedding.8} parent=5 // pred_region
      %s3847 = ssub.s32 %s11, 2
      // Predicated region
      $region53: #{autoprotonet_embedding.8} parent=51 // pred_check
        %p3848 = pneg %p108
      $region54: #{autoprotonet_embedding.8} parent=51 // pred_check_branch
        %3850 = sbr.rel (%p3848) target = $region56
      $region55: #{autoprotonet_embedding.8} parent=51 // pred_region
        %p3851 = scmp.lt.s32.totalorder %s17, 3
        %s3852 = scalar_select %p3851, %s17, 3
        %s3853 = smul.addr %s3852, 41
        %s3854 = smul.addr %s3853, 8
        %s3855 = scalar_lea.vmem %s3, %s3854
      $region56: #{autoprotonet_embedding.8} parent=51 // pred_fallthru
        _
    $region52: #{autoprotonet_embedding.8} parent=5 // pred_fallthru
      _
  $region6: #{autoprotonet_embedding.8} parent=0 // loop_footer
    %s15 = sadd.s32 1, %s11
  $region7: #{autoprotonet_embedding.8} parent=0 // loop_footer_branch
    %10 = sbr.rel target = $region3
  $region8: #{autoprotonet_embedding.8} parent=0 // loop_exit
    _

// kernel: autoprotonet_embedding.13
$region0: #{autoprotonet_embedding.13}
  #allocation0 [shape = 'u32[]', space=smem, size = 0x4, offset = 0x4, fixed_abs, tag = 'smem constant byte address 0x4 - core index']
  #allocation1 [shape = 'u32[144,128]{1,0:T(1,128)}', space=vmem, size = 0x12000, scoped, tag = 'internal scratch']
  %s0 = inlined_call_operand.vmem [shape: f32[4,36,16], index: 0, kind: input, shape index: {}]
  %s1 = inlined_call_operand.vmem [shape: f32[1,16], index: 1, kind: input, shape index: {}]
  %s2 = inlined_call_operand.vmem [shape: f32[1,16], index: 2, kind: input, shape index: {}]
  %s3 = inlined_call_operand.vmem [shape: f32[26,29], index: 3, kind: input, shape index: {}]
  %s4 = inlined_call_operand.vmem [shape: bf16[4,26,16], index: 4, kind: output, shape index: {}]
  %s5 = sld [smem:[#allocation0]]
  $region49: #{autoprotonet_embedding.13} parent=0
    _
  %s7 = ssub.s32 1, %s5
  %s8 = scalar_select 0, %s7, %s5
  loop: start=0, step=1, limit=6
  $region2: #{autoprotonet_embedding.13} parent=0 // loop_pre_header
    _
  $region3: #{autoprotonet_embedding.13} parent=0 // loop_header
    %s10 = sphi 0, %s14
    %p11 = scmp.ge.s32.totalorder %s10, 6
    %s20 = sphi 0, %s22
    %s23 = sphi 0, %s20
    %s24 = sphi 0, %s23
    %s40 = sphi 0, %s24
    %s44 = sphi 0, %s44
    %s46 = sphi 0, %s44
    %s47 = sphi 0, %s46
    %s61 = sphi 0, %s47
    %s65 = sphi 0, %s65
    %s67 = sphi 0, %s65
    %s68 = sphi 0, %s67
    %s82 = sphi 0, %s68
    %s86 = sphi 0, %s86
    %s88 = sphi 0, %s86
    %s89 = sphi 0, %s88
    %s103 = sphi 0, %s89
    %s109 = sphi 0, %s111
    %s112 = sphi 0, %s109
    %s113 = sphi 0, %s112
    %s129 = sphi 0, %s113
  $region4: #{autoprotonet_embedding.13} parent=0 // loop_header_branch
    %13 = sbr.rel (%p11) target = $region8
  $region5: #{autoprotonet_embedding.13} parent=0 // loop_body
    %s15 = ssub.s32 %s10, 1
    %s16 = ssub.s32 %s10, 2
    %s17 = sadd.s32 %s10, 1
    %s18 = ssub.s32 %s10, %s17
    %p19 = scmp.eq.s32.totalorder %s18, 0
    %s21 = sadd.s32 %s20, 1
    %s22 = scalar_select %p19, %s20, %s21
    %p25 = pneg %p19
    %p26 = scmp.eq.s32.totalorder %s10, 3
    %p27 = por %p25, %p26
    %p28 = scmp.ne.s32.totalorder %s20, %s23
    %p29 = scmp.eq.s32.totalorder %s10, 0
    %p30 = por %p28, %p29
    %p31 = scmp.ne.s32.totalorder %s20, %s23
    %p32 = scmp.eq.s32.totalorder %s15, 3
    %p33 = por %p31, %p32
    %p34 = scmp.ne.s32.totalorder %s23, %s24
    %p35 = scmp.eq.s32.totalorder %s15, 0
    %p36 = por %p34, %p35
    %p37 = scmp.ne.s32.totalorder %s23, %s24
    %p38 = scmp.eq.s32.totalorder %s16, 3
    %p39 = por %p37, %p38
    %p41 = scmp.ne.s32.totalorder %s24, %s40
    %p42 = scmp.eq.s32.totalorder %s16, 0
    %p43 = por %p41, %p42
    %s45 = sadd.s32 %s44, 1
    %p48 = scmp.eq.s32.totalorder %s10, 3
    %p49 = scmp.ne.s32.totalorder %s44, %s46
    %p50 = scmp.eq.s32.totalorder %s10, 0
    %p51 = por %p49, %p50
    %p52 = scmp.ne.s32.totalorder %s44, %s46
    %p53 = scmp.eq.s32.totalorder %s15, 3
    %p54 = por %p52, %p53
    %p55 = scmp.ne.s32.totalorder %s46, %s47
    %p56 = scmp.eq.s32.totalorder %s15, 0
    %p57 = por %p55, %p56
    %p58 = scmp.ne.s32.totalorder %s46, %s47
    %p59 = scmp.eq.s32.totalorder %s16, 3
    %p60 = por %p58, %p59
    %p62 = scmp.ne.s32.totalorder %s47, %s61
    %p63 = scmp.eq.s32.totalorder %s16, 0
    %p64 = por %p62, %p63
    %s66 = sadd.s32 %s65, 1
    %p69 = scmp.eq.s32.totalorder %s10, 3
    %p70 = scmp.ne.s32.totalorder %s65, %s67
    %p71 = scmp.eq.s32.totalorder %s10, 0
    %p72 = por %p70, %p71
    %p73 = scmp.ne.s32.totalorder %s65, %s67
    %p74 = scmp.eq.s32.totalorder %s15, 3
    %p75 = por %p73, %p74
    %p76 = scmp.ne.s32.totalorder %s67, %s68
    %p77 = scmp.eq.s32.totalorder %s15, 0
    %p78 = por %p76, %p77
    %p79 = scmp.ne.s32.totalorder %s67, %s68
    %p80 = scmp.eq.s32.totalorder %s16, 3
    %p81 = por %p79, %p80
    %p83 = scmp.ne.s32.totalorder %s68, %s82
    %p84 = scmp.eq.s32.totalorder %s16, 0
    %p85 = por %p83, %p84
    %s87 = sadd.s32 %s86, 1
    %p90 = scmp.eq.s32.totalorder %s10, 3
    %p91 = scmp.ne.s32.totalorder %s86, %s88
    %p92 = scmp.eq.s32.totalorder %s10, 0
    %p93 = por %p91, %p92
    %p94 = scmp.ne.s32.totalorder %s86, %s88
    %p95 = scmp.eq.s32.totalorder %s15, 3
    %p96 = por %p94, %p95
    %p97 = scmp.ne.s32.totalorder %s88, %s89
    %p98 = scmp.eq.s32.totalorder %s15, 0
    %p99 = por %p97, %p98
    %p100 = scmp.ne.s32.totalorder %s88, %s89
    %p101 = scmp.eq.s32.totalorder %s16, 3
    %p102 = por %p100, %p101
    %p104 = scmp.ne.s32.totalorder %s89, %s103
    %p105 = scmp.eq.s32.totalorder %s16, 0
    %p106 = por %p104, %p105
    %s107 = ssub.s32 %s10, %s17
    %p108 = scmp.eq.s32.totalorder %s107, 0
    %s110 = sadd.s32 %s109, 1
    %s111 = scalar_select %p108, %s109, %s110
    %p114 = pneg %p108
    %p115 = scmp.eq.s32.totalorder %s10, 3
    %p116 = por %p114, %p115
    %p117 = scmp.ne.s32.totalorder %s109, %s112
    %p118 = scmp.eq.s32.totalorder %s10, 0
    %p119 = por %p117, %p118
    %p120 = scmp.ne.s32.totalorder %s109, %s112
    %p121 = scmp.eq.s32.totalorder %s15, 3
    %p122 = por %p120, %p121
    %p123 = scmp.ne.s32.totalorder %s112, %s113
    %p124 = scmp.eq.s32.totalorder %s15, 0
    %p125 = por %p123, %p124
    %p126 = scmp.ne.s32.totalorder %s112, %s113
    %p127 = scmp.eq.s32.totalorder %s16, 3
    %p128 = por %p126, %p127
    %p130 = scmp.ne.s32.totalorder %s113, %s129
    %p131 = scmp.eq.s32.totalorder %s16, 0
    %p132 = por %p130, %p131
    %p133 = scmp.le.s32.totalorder 1, %s10
    %p134 = scmp.lt.s32.totalorder %s10, 5
    %p135 = pnand %p133, %p134
    %p136 = pneg %p135
    // Predicated region
    $region9: #{autoprotonet_embedding.13} parent=5 // pred_check
      _
    $region10: #{autoprotonet_embedding.13} parent=5 // pred_check_branch
      %138 = sbr.rel (%p135) target = $region12
    $region11: #{autoprotonet_embedding.13} parent=5 // pred_region
      %s139 = ssub.s32 %s10, 1
      // Predicated region
      $region13: #{autoprotonet_embedding.13} parent=11 // pred_check
        %p140 = pneg %p57
      $region14: #{autoprotonet_embedding.13} parent=11 // pred_check_branch
        %142 = sbr.rel (%p140) target = $region16
      $region15: #{autoprotonet_embedding.13} parent=11 // pred_region
        _
      $region16: #{autoprotonet_embedding.13} parent=11 // pred_fallthru
        _
      // Predicated region
      $region17: #{autoprotonet_embedding.13} parent=11 // pred_check
        %p143 = pneg %p78
      $region18: #{autoprotonet_embedding.13} parent=11 // pred_check_branch
        %145 = sbr.rel (%p143) target = $region20
      $region19: #{autoprotonet_embedding.13} parent=11 // pred_region
        _
      $region20: #{autoprotonet_embedding.13} parent=11 // pred_fallthru
        _
      // Predicated region
      $region21: #{autoprotonet_embedding.13} parent=11 // pred_check
        %p146 = pneg %p99
      $region22: #{autoprotonet_embedding.13} parent=11 // pred_check_branch
        %148 = sbr.rel (%p146) target = $region24
      $region23: #{autoprotonet_embedding.13} parent=11 // pred_region
        _
      $region24: #{autoprotonet_embedding.13} parent=11 // pred_fallthru
        _
    $region12: #{autoprotonet_embedding.13} parent=5 // pred_fallthru
      _
    %p149 = scmp.lt.s32.totalorder %s10, 4
    // Predicated region
    $region25: #{autoprotonet_embedding.13} parent=5 // pred_check
      %p150 = pneg %p149
    $region26: #{autoprotonet_embedding.13} parent=5 // pred_check_branch
      %152 = sbr.rel (%p150) target = $region28
    $region27: #{autoprotonet_embedding.13} parent=5 // pred_region
      // Predicated region
      $region29: #{autoprotonet_embedding.13} parent=27 // pred_check
        %p153 = pneg %p30
      $region30: #{autoprotonet_embedding.13} parent=27 // pred_check_branch
        %155 = sbr.rel (%p153) target = $region32
      $region31: #{autoprotonet_embedding.13} parent=27 // pred_region
        %p156 = scmp.lt.s32.totalorder %s10, 3
        %s157 = scalar_select %p156, %s10, 3
        %s158 = smul.addr %s157, 5
        %s159 = smul.addr %s158, 8
        %s160 = scalar_lea.vmem %s0, %s159
      $region32: #{autoprotonet_embedding.13} parent=27 // pred_fallthru
        _
    $region28: #{autoprotonet_embedding.13} parent=5 // pred_fallthru
      _
    %p161 = scmp.le.s32.totalorder 1, %s10
    %p162 = scmp.lt.s32.totalorder %s10, 5
    %p163 = pnand %p161, %p162
    %p164 = pneg %p163
    // Predicated region
    $region33: #{autoprotonet_embedding.13} parent=5 // pred_check
      _
    $region34: #{autoprotonet_embedding.13} parent=5 // pred_check_branch
      %166 = sbr.rel (%p163) target = $region36
    $region35: #{autoprotonet_embedding.13} parent=5 // pred_region
      %s167 = ssub.s32 %s10, 1
      %p168 = scmp.lt.s32.totalorder %s15, 3
      %s169 = scalar_select %p168, %s15, 3
      %s170 = smul.addr %s169, 5
      %s171 = smul.addr %s170, 8
      %s172 = scalar_lea.vmem %s0, %s171
      %p173 = pneg %p36
      %p174 = pneg %p33
      %p175 = pneg %p57
      %p176 = pneg %p54
      %p177 = pneg %p78
      %p178 = pneg %p75
      %p179 = pneg %p99
      %p180 = pneg %p96
      %p181 = pneg %p125
      %p182 = pneg %p122
      %p183 = scmp.lt.s32.totalorder %s15, 3
      %s184 = scalar_select %p183, %s15, 3
      %s185 = smul.addr %s184, 4
      %s186 = smul.addr %s185, 4
      %s187 = scalar_lea.vmem %s4, %s186
      %p188 = scmp.lt.s32.totalorder %s15, 3
      %s189 = scalar_select %p188, %s15, 3
      %s190 = smul.addr %s189, 5
      %s191 = smul.addr %s190, 8
      %s192 = scalar_lea.vmem %s0, %s191
      %p193 = scmp.lt.s32.totalorder %s15, 3
      %s194 = scalar_select %p193, %s15, 3
      %s195 = smul.addr %s194, 4
      %s196 = smul.addr %s195, 4
      %s197 = scalar_lea.vmem %s4, %s196
      %v198 = vld [vmem:[%s192] sm:$0xff]
      %v199 = vld [vmem:[%s192 + $0x8] sm:$0xff]
      %v200 = vld [vmem:[%s192 + $0x10] sm:$0xff]
      %v201 = vld [vmem:[%s192 + $0x18] sm:$0xff]
      %v202 = vld [vmem:[%s192 + $0x20] sm:$0xf]
      %v203 = vld [vmem:[%s1] sm:$0x1]
      %v205 = vlaneseq
      %v206 = vshrl.u32 %v205, 7
      %v207 = vsub.s32 0, %v206
      %v208 = vrot.slane %v203, %v207
      %v210 = vmul.f32 %v198, %v208
      %v211 = vmul.f32 %v199, %v208
      %v212 = vmul.f32 %v200, %v208
      %v213 = vmul.f32 %v201, %v208
      %v214 = vmul.f32 %v202, %v208
      %v215 = vld [vmem:[%s2] sm:$0x1]
      %v217 = vlaneseq
      %v218 = vshrl.u32 %v217, 7
      %v219 = vsub.s32 0, %v218
      %v220 = vrot.slane %v215, %v219
      %v222 = vadd.f32 %v210, %v220
      %v223 = vadd.f32 %v211, %v220
      %v224 = vadd.f32 %v212, %v220
      %v225 = vadd.f32 %v213, %v220
      %v226 = vadd.f32 %v214, %v220
      %v227 = vmax.f32 %v222, 0.0
      %v228 = vmax.f32 %v223, 0.0
      %v229 = vmax.f32 %v224, 0.0
      %v230 = vmax.f32 %v225, 0.0
      %v231 = vmax.f32 %v226, 0.0
      %vm237 = vcmask 1046528
      %v238 = vrot.slane %v227, 1
      %v239 = vrot.slane %v228, 1
      %v240 = vsel %vm237, %v238, %v239
      %v241 = vrot.slane %v229, 1
      %v242 = vsel %vm237, %v239, %v241
      %v243 = vrot.slane %v230, 1
      %v244 = vsel %vm237, %v241, %v243
      %v245 = vrot.slane %v231, 1
      %v246 = vsel %vm237, %v243, %v245
      %v252 = vmax.f32 %v227, %v240
      %v253 = vmax.f32 %v228, %v242
      %v254 = vmax.f32 %v229, %v244
      %v255 = vmax.f32 %v230, %v246
      %v256 = vmax.f32 %v231, %v245
      %vm262 = vcmask 1041408
      %v263 = vrot.slane %v252, 6
      %v264 = vrot.slane %v253, 6
      %v265 = vsel %vm262, %v263, %v264
      %v266 = vrot.slane %v254, 6
      %v267 = vsel %vm262, %v264, %v266
      %v268 = vrot.slane %v255, 6
      %v269 = vsel %vm262, %v266, %v268
      %v270 = vrot.slane %v256, 6
      %v271 = vsel %vm262, %v268, %v270
      %v276 = vmax.f32 %v252, %v265
      %v277 = vmax.f32 %v253, %v267
      %v278 = vmax.f32 %v254, %v269
      %v279 = vmax.f32 %v255, %v271
      %v280 = vld [vmem:[%s3] sm:$0xff]
      %v281 = vld [vmem:[%s3 + $0x8] sm:$0xff]
      %v282 = vld [vmem:[%s3 + $0x10] sm:$0xff]
      %v283 = vld [vmem:[%s3 + $0x18] sm:$0x3]
      %vm284 = vcmask 236544
      %v286 = vsel %vm284, %v280, 0
      %v289 = vsel %vm284, %v281, 0
      %v292 = vsel %vm284, %v282, 0
      %v295 = vsel %vm284, %v283, 0
      %vm297 = vcmask 1044480
      %v299 = vsel %vm297, %v279, 0
      %301 = vmatprep.subr.mxu0 0.0
      %302 = vmatpush1.msra.mxu0 %v276
      %303 = vmatprep.subr.mxu0 0.0
      %304 = vmatpush1.msra.mxu0 %v277
      %305 = vmatprep.subr.mxu0 0.0
      %306 = vmatpush1.msra.mxu0 %v278
      %307 = vmatprep.subr.mxu0 0.0
      %308 = vmatpush1.msra.mxu0 %v299
      %309 = vmatprep.subr.mxu0 0.0
      %310 = vmatpush1.msra.mxu0 0.0
      %311 = vmatprep.subr.mxu0 0.0
      %312 = vmatpush1.msra.mxu0 0.0
      %313 = vmatprep.subr.mxu0 0.0
      %314 = vmatpush1.msra.mxu0 0.0
      %315 = vmatprep.subr.mxu0 0.0
      %316 = vmatpush1.msra.mxu0 0.0
      %317 = vmatprep.subr.mxu0 0.0
      %318 = vmatpush1.msra.mxu0 0.0
      %319 = vmatprep.subr.mxu0 0.0
      %320 = vmatpush1.msra.mxu0 0.0
      %321 = vmatprep.subr.mxu0 0.0
      %322 = vmatpush1.msra.mxu0 0.0
      %323 = vmatprep.subr.mxu0 0.0
      %324 = vmatpush1.msra.mxu0 0.0
      %325 = vmatprep.subr.mxu0 0.0
      %326 = vmatpush1.msra.mxu0 0.0
      %327 = vmatprep.subr.mxu0 0.0
      %328 = vmatpush1.msra.mxu0 0.0
      %329 = vmatprep.subr.mxu0 0.0
      %330 = vmatpush1.msra.mxu0 0.0
      %331 = vmatprep.subr.mxu0 0.0
      %332 = vmatpush1.msra.mxu0 0.0
      %333 = vmatprep.subr.mxu0 0.0
      %334 = vmatpush1.msra.mxu0 0.0
      %335 = vmatprep.subr.mxu0 0.0
      %336 = vmatpush1.msra.mxu0 0.0
      %337 = vmatprep.subr.mxu0 0.0
      %338 = vmatpush1.msra.mxu0 0.0
      %339 = vmatprep.subr.mxu0 0.0
      %340 = vmatpush1.msra.mxu0 0.0
      %341 = vmatprep.subr.mxu0 0.0
      %342 = vmatpush1.msra.mxu0 0.0
      %343 = vmatprep.subr.mxu0 0.0
      %344 = vmatpush1.msra.mxu0 0.0
      %345 = vmatprep.subr.mxu0 0.0
      %346 = vmatpush1.msra.mxu0 0.0
      %347 = vmatprep.subr.mxu0 0.0
      %348 = vmatpush1.msra.mxu0 0.0
      %349 = vmatprep.subr.mxu0 0.0
      %350 = vmatpush1.msra.mxu0 0.0
      %351 = vmatprep.subr.mxu0 0.0
      %352 = vmatpush1.msra.mxu0 0.0
      %353 = vmatprep.subr.mxu0 0.0
      %354 = vmatpush1.msra.mxu0 0.0
      %355 = vmatprep.subr.mxu0 0.0
      %356 = vmatpush1.msra.mxu0 0.0
      %357 = vmatprep.subr.mxu0 0.0
      %358 = vmatpush1.msra.mxu0 0.0
      %359 = vmatprep.subr.mxu0 0.0
      %360 = vmatpush1.msra.mxu0 0.0
      %361 = vmatprep.subr.mxu0 0.0
      %362 = vmatpush1.msra.mxu0 0.0
      %363 = vmatprep.subr.mxu0 0.0
      %364 = vmatpush1.msra.mxu0 0.0
      %365 = vmatprep.mubr.f32.mxu0 0.0
      %366 = vmatmul.mubr.f32.gmra.mrb[0].mxu0 %v286
      %v367 = vpop.f32.mrb[0].mxu0
      %v368 = vadd.f32 0.0, %v367
      %v369 = vpop.f32.mrb[0].mxu0
      %370 = vmatprep.mubr.f32.mxu0 0.0
      %371 = vmatmul.mubr.f32.gmra.mrb[0].mxu0 %v289
      %v372 = vpop.f32.mrb[0].mxu0
      %v373 = vadd.f32 0.0, %v372
      %v374 = vpop.f32.mrb[0].mxu0
      %375 = vmatprep.mubr.f32.mxu0 0.0
      %376 = vmatmul.mubr.f32.gmra.mrb[0].mxu0 %v292
      %v377 = vpop.f32.mrb[0].mxu0
      %v378 = vadd.f32 0.0, %v377
      %v379 = vpop.f32.mrb[0].mxu0
      %380 = vmatprep.mubr.f32.mxu0 0.0
      %381 = vmatmul.mubr.f32.gmra.mrb[0].mxu0 %v295
      %v382 = vpop.f32.mrb[0].mxu0
      %v383 = vadd.f32 0.0, %v382
      %v384 = vpop.f32.mrb[0].mxu0
      %385 = vdwg.mxu0
      %v386 = vpack.c.bf16 %v373, %v368
      %v387 = vpack.c.bf16 %v383, %v378
      %v390 = vunpack.c.l.b16 %v386
      %v391 = vunpack.c.h.b16 %v386
      %v392 = vunpack.c.l.b16 %v387
      %v393 = vunpack.c.h.b16 %v387
      %v394 = vpack.c.b16 %v390, %v390
      %v395 = vpack.c.b16 %v391, %v391
      %v396 = vpack.c.b16 %v392, %v392
      %v397 = vpack.c.b16 %v393, %v393
      %vm402 = vcmask 125952
      %403 = vst.msk [vmem:[%s197] sm:$0xf] %vm402, %v394
      %404 = vst.msk [vmem:[%s197 + $0x4] sm:$0xf] %vm402, %v395
      %405 = vst.msk [vmem:[%s197 + $0x8] sm:$0xf] %vm402, %v396
      %vm406 = vcmask 122880
      %407 = vst.msk [vmem:[%s197 + $0xc] sm:$0x1] %vm406, %v397
      %p408 = scmp.lt.s32.totalorder %s15, 3
      %s409 = scalar_select %p408, %s15, 3
      %s410 = smul.addr %s409, 4
      %s411 = smul.addr %s410, 4
      %s412 = scalar_lea.vmem %s4, %s411
      // Predicated region
      $region37: #{autoprotonet_embedding.13} parent=35 // pred_check
        %p413 = pneg %p122
      $region38: #{autoprotonet_embedding.13} parent=35 // pred_check_branch
        %415 = sbr.rel (%p413) target = $region40
      $region39: #{autoprotonet_embedding.13} parent=35 // pred_region
        _
      $region40: #{autoprotonet_embedding.13} parent=35 // pred_fallthru
        _
    $region36: #{autoprotonet_embedding.13} parent=5 // pred_fallthru
      _
    %p416 = scmp.le.s32.totalorder 2, %s10
    // Predicated region
    $region41: #{autoprotonet_embedding.13} parent=5 // pred_check
      %p417 = pneg %p416
    $region42: #{autoprotonet_embedding.13} parent=5 // pred_check_branch
      %419 = sbr.rel (%p417) target = $region44
    $region43: #{autoprotonet_embedding.13} parent=5 // pred_region
      %s420 = ssub.s32 %s10, 2
      // Predicated region
      $region45: #{autoprotonet_embedding.13} parent=43 // pred_check
        %p421 = pneg %p128
      $region46: #{autoprotonet_embedding.13} parent=43 // pred_check_branch
        %423 = sbr.rel (%p421) target = $region48
      $region47: #{autoprotonet_embedding.13} parent=43 // pred_region
        %p424 = scmp.lt.s32.totalorder %s16, 3
        %s425 = scalar_select %p424, %s16, 3
        %s426 = smul.addr %s425, 4
        %s427 = smul.addr %s426, 4
        %s428 = scalar_lea.vmem %s4, %s427
      $region48: #{autoprotonet_embedding.13} parent=43 // pred_fallthru
        _
    $region44: #{autoprotonet_embedding.13} parent=5 // pred_fallthru
      _
  $region6: #{autoprotonet_embedding.13} parent=0 // loop_footer
    %s14 = sadd.s32 1, %s10
  $region7: #{autoprotonet_embedding.13} parent=0 // loop_footer_branch
    %9 = sbr.rel target = $region3
  $region8: #{autoprotonet_embedding.13} parent=0 // loop_exit
    _

// kernel: autoprotonet_embedding.14
$region0: #{autoprotonet_embedding.14}
  #allocation0 [shape = 'u32[]', space=smem, size = 0x4, offset = 0x4, fixed_abs, tag = 'smem constant byte address 0x4 - core index']
  #allocation1 [shape = 'u32[144,128]{1,0:T(1,128)}', space=vmem, size = 0x12000, scoped, tag = 'internal scratch']
  %s0 = inlined_call_operand.vmem [shape: bf16[4,26,16], index: 0, kind: input, shape index: {}]
  %s1 = inlined_call_operand.vmem [shape: bf16[9,16,16], index: 1, kind: input, shape index: {}]
  %s2 = inlined_call_operand.vmem [shape: f32[1,16], index: 2, kind: input, shape index: {}]
  %s3 = inlined_call_operand.vmem [shape: f32[4,16,16], index: 3, kind: output, shape index: {0}]
  %s4 = inlined_call_operand.vmem [shape: f32[2,16], index: 4, kind: output, shape index: {1}]
  %5 = xla_tuple %s3, %s4
  %s6 = sld [smem:[#allocation0]]
  $region57: #{autoprotonet_embedding.14} parent=0
    _
  %s8 = ssub.s32 1, %s6
  %s9 = scalar_select 0, %s8, %s6
  loop: start=0, step=1, limit=6
  $region2: #{autoprotonet_embedding.14} parent=0 // loop_pre_header
    _
  $region3: #{autoprotonet_embedding.14} parent=0 // loop_header
    %s11 = sphi 0, %s15
    %p12 = scmp.ge.s32.totalorder %s11, 6
    %s21 = sphi 0, %s23
    %s24 = sphi 0, %s21
    %s25 = sphi 0, %s24
    %s41 = sphi 0, %s25
    %s45 = sphi 0, %s45
    %s47 = sphi 0, %s45
    %s48 = sphi 0, %s47
    %s62 = sphi 0, %s48
    %s66 = sphi 0, %s66
    %s68 = sphi 0, %s66
    %s69 = sphi 0, %s68
    %s83 = sphi 0, %s69
    %s89 = sphi 0, %s91
    %s92 = sphi 0, %s89
    %s93 = sphi 0, %s92
    %s109 = sphi 0, %s93
    %s113 = sphi 0, %s113
    %s115 = sphi 0, %s113
    %s116 = sphi 0, %s115
    %s130 = sphi 0, %s116
  $region4: #{autoprotonet_embedding.14} parent=0 // loop_header_branch
    %14 = sbr.rel (%p12) target = $region8
  $region5: #{autoprotonet_embedding.14} parent=0 // loop_body
    %s16 = ssub.s32 %s11, 1
    %s17 = ssub.s32 %s11, 2
    %s18 = sadd.s32 %s11, 1
    %s19 = ssub.s32 %s11, %s18
    %p20 = scmp.eq.s32.totalorder %s19, 0
    %s22 = sadd.s32 %s21, 1
    %s23 = scalar_select %p20, %s21, %s22
    %p26 = pneg %p20
    %p27 = scmp.eq.s32.totalorder %s11, 3
    %p28 = por %p26, %p27
    %p29 = scmp.ne.s32.totalorder %s21, %s24
    %p30 = scmp.eq.s32.totalorder %s11, 0
    %p31 = por %p29, %p30
    %p32 = scmp.ne.s32.totalorder %s21, %s24
    %p33 = scmp.eq.s32.totalorder %s16, 3
    %p34 = por %p32, %p33
    %p35 = scmp.ne.s32.totalorder %s24, %s25
    %p36 = scmp.eq.s32.totalorder %s16, 0
    %p37 = por %p35, %p36
    %p38 = scmp.ne.s32.totalorder %s24, %s25
    %p39 = scmp.eq.s32.totalorder %s17, 3
    %p40 = por %p38, %p39
    %p42 = scmp.ne.s32.totalorder %s25, %s41
    %p43 = scmp.eq.s32.totalorder %s17, 0
    %p44 = por %p42, %p43
    %s46 = sadd.s32 %s45, 1
    %p49 = scmp.eq.s32.totalorder %s11, 3
    %p50 = scmp.ne.s32.totalorder %s45, %s47
    %p51 = scmp.eq.s32.totalorder %s11, 0
    %p52 = por %p50, %p51
    %p53 = scmp.ne.s32.totalorder %s45, %s47
    %p54 = scmp.eq.s32.totalorder %s16, 3
    %p55 = por %p53, %p54
    %p56 = scmp.ne.s32.totalorder %s47, %s48
    %p57 = scmp.eq.s32.totalorder %s16, 0
    %p58 = por %p56, %p57
    %p59 = scmp.ne.s32.totalorder %s47, %s48
    %p60 = scmp.eq.s32.totalorder %s17, 3
    %p61 = por %p59, %p60
    %p63 = scmp.ne.s32.totalorder %s48, %s62
    %p64 = scmp.eq.s32.totalorder %s17, 0
    %p65 = por %p63, %p64
    %s67 = sadd.s32 %s66, 1
    %p70 = scmp.eq.s32.totalorder %s11, 3
    %p71 = scmp.ne.s32.totalorder %s66, %s68
    %p72 = scmp.eq.s32.totalorder %s11, 0
    %p73 = por %p71, %p72
    %p74 = scmp.ne.s32.totalorder %s66, %s68
    %p75 = scmp.eq.s32.totalorder %s16, 3
    %p76 = por %p74, %p75
    %p77 = scmp.ne.s32.totalorder %s68, %s69
    %p78 = scmp.eq.s32.totalorder %s16, 0
    %p79 = por %p77, %p78
    %p80 = scmp.ne.s32.totalorder %s68, %s69
    %p81 = scmp.eq.s32.totalorder %s17, 3
    %p82 = por %p80, %p81
    %p84 = scmp.ne.s32.totalorder %s69, %s83
    %p85 = scmp.eq.s32.totalorder %s17, 0
    %p86 = por %p84, %p85
    %s87 = ssub.s32 %s11, %s18
    %p88 = scmp.eq.s32.totalorder %s87, 0
    %s90 = sadd.s32 %s89, 1
    %s91 = scalar_select %p88, %s89, %s90
    %p94 = pneg %p88
    %p95 = scmp.eq.s32.totalorder %s11, 3
    %p96 = por %p94, %p95
    %p97 = scmp.ne.s32.totalorder %s89, %s92
    %p98 = scmp.eq.s32.totalorder %s11, 0
    %p99 = por %p97, %p98
    %p100 = scmp.ne.s32.totalorder %s89, %s92
    %p101 = scmp.eq.s32.totalorder %s16, 3
    %p102 = por %p100, %p101
    %p103 = scmp.ne.s32.totalorder %s92, %s93
    %p104 = scmp.eq.s32.totalorder %s16, 0
    %p105 = por %p103, %p104
    %p106 = scmp.ne.s32.totalorder %s92, %s93
    %p107 = scmp.eq.s32.totalorder %s17, 3
    %p108 = por %p106, %p107
    %p110 = scmp.ne.s32.totalorder %s93, %s109
    %p111 = scmp.eq.s32.totalorder %s17, 0
    %p112 = por %p110, %p111
    %s114 = sadd.s32 %s113, 1
    %p117 = scmp.eq.s32.totalorder %s11, 3
    %p118 = scmp.ne.s32.totalorder %s113, %s115
    %p119 = scmp.eq.s32.totalorder %s11, 0
    %p120 = por %p118, %p119
    %p121 = scmp.ne.s32.totalorder %s113, %s115
    %p122 = scmp.eq.s32.totalorder %s16, 3
    %p123 = por %p121, %p122
    %p124 = scmp.ne.s32.totalorder %s115, %s116
    %p125 = scmp.eq.s32.totalorder %s16, 0
    %p126 = por %p124, %p125
    %p127 = scmp.ne.s32.totalorder %s115, %s116
    %p128 = scmp.eq.s32.totalorder %s17, 3
    %p129 = por %p127, %p128
    %p131 = scmp.ne.s32.totalorder %s116, %s130
    %p132 = scmp.eq.s32.totalorder %s17, 0
    %p133 = por %p131, %p132
    %p134 = scmp.le.s32.totalorder 1, %s11
    %p135 = scmp.lt.s32.totalorder %s11, 5
    %p136 = pnand %p134, %p135
    %p137 = pneg %p136
    // Predicated region
    $region9: #{autoprotonet_embedding.14} parent=5 // pred_check
      _
    $region10: #{autoprotonet_embedding.14} parent=5 // pred_check_branch
      %139 = sbr.rel (%p136) target = $region12
    $region11: #{autoprotonet_embedding.14} parent=5 // pred_region
      %s140 = ssub.s32 %s11, 1
      // Predicated region
      $region13: #{autoprotonet_embedding.14} parent=11 // pred_check
        %p141 = pneg %p58
      $region14: #{autoprotonet_embedding.14} parent=11 // pred_check_branch
        %143 = sbr.rel (%p141) target = $region16
      $region15: #{autoprotonet_embedding.14} parent=11 // pred_region
        _
      $region16: #{autoprotonet_embedding.14} parent=11 // pred_fallthru
        _
      // Predicated region
      $region17: #{autoprotonet_embedding.14} parent=11 // pred_check
        %p144 = pneg %p79
      $region18: #{autoprotonet_embedding.14} parent=11 // pred_check_branch
        %146 = sbr.rel (%p144) target = $region20
      $region19: #{autoprotonet_embedding.14} parent=11 // pred_region
        _
      $region20: #{autoprotonet_embedding.14} parent=11 // pred_fallthru
        _
    $region12: #{autoprotonet_embedding.14} parent=5 // pred_fallthru
      _
    %p147 = scmp.lt.s32.totalorder %s11, 4
    // Predicated region
    $region21: #{autoprotonet_embedding.14} parent=5 // pred_check
      %p148 = pneg %p147
    $region22: #{autoprotonet_embedding.14} parent=5 // pred_check_branch
      %150 = sbr.rel (%p148) target = $region24
    $region23: #{autoprotonet_embedding.14} parent=5 // pred_region
      // Predicated region
      $region25: #{autoprotonet_embedding.14} parent=23 // pred_check
        %p151 = pneg %p31
      $region26: #{autoprotonet_embedding.14} parent=23 // pred_check_branch
        %153 = sbr.rel (%p151) target = $region28
      $region27: #{autoprotonet_embedding.14} parent=23 // pred_region
        %p154 = scmp.lt.s32.totalorder %s11, 3
        %s155 = scalar_select %p154, %s11, 3
        %s156 = smul.addr %s155, 4
        %s157 = smul.addr %s156, 4
        %s158 = scalar_lea.vmem %s0, %s157
      $region28: #{autoprotonet_embedding.14} parent=23 // pred_fallthru
        _
    $region24: #{autoprotonet_embedding.14} parent=5 // pred_fallthru
      _
    %p159 = scmp.le.s32.totalorder 1, %s11
    %p160 = scmp.lt.s32.totalorder %s11, 5
    %p161 = pnand %p159, %p160
    %p162 = pneg %p161
    // Predicated region
    $region29: #{autoprotonet_embedding.14} parent=5 // pred_check
      _
    $region30: #{autoprotonet_embedding.14} parent=5 // pred_check_branch
      %164 = sbr.rel (%p161) target = $region32
    $region31: #{autoprotonet_embedding.14} parent=5 // pred_region
      %s165 = ssub.s32 %s11, 1
      %p166 = scmp.lt.s32.totalorder %s16, 3
      %s167 = scalar_select %p166, %s16, 3
      %s168 = smul.addr %s167, 4
      %s169 = smul.addr %s168, 4
      %s170 = scalar_lea.vmem %s0, %s169
      %p171 = pneg %p37
      %p172 = pneg %p34
      %p173 = pneg %p58
      %p174 = pneg %p55
      %p175 = pneg %p79
      %p176 = pneg %p76
      %p177 = pneg %p105
      %p178 = pneg %p102
      %p179 = scmp.lt.s32.totalorder %s16, 3
      %s180 = scalar_select %p179, %s16, 3
      %s181 = smul.addr %s180, 2
      %s182 = smul.addr %s181, 8
      %s183 = scalar_lea.vmem %s3, %s182
      %p184 = pneg %p126
      %p185 = pneg %p123
      %p186 = scmp.lt.s32.totalorder %s16, 3
      %s187 = scalar_select %p186, %s16, 3
      %s188 = smul.addr %s187, 4
      %s189 = smul.addr %s188, 4
      %s190 = scalar_lea.vmem %s0, %s189
      %p191 = scmp.lt.s32.totalorder %s16, 3
      %s192 = scalar_select %p191, %s16, 3
      %s193 = smul.addr %s192, 2
      %s194 = smul.addr %s193, 8
      %s195 = scalar_lea.vmem %s3, %s194
      %v197 = vld [vmem:[%s190] sm:$0xf]
      %v198 = vld [vmem:[%s190 + $0x4] sm:$0xf]
      %v199 = vld [vmem:[%s190 + $0x8] sm:$0xf]
      %v200 = vld [vmem:[%s190 + $0xc] sm:$0x1]
      %v201 = vld [vmem:[%s1] sm:$0xf]
      %v202 = vld [vmem:[%s1 + $0x4] sm:$0xf]
      %s203 = scalar_lea.vmem %s1, 8
      %v204 = vld [vmem:[%s203] sm:$0xf]
      %v205 = vld [vmem:[%s203 + $0x4] sm:$0xf]
      %v209 = vunpack.c.l.b16 %v197
      %v210 = vunpack.c.l.b16 %v198
      %v211 = vunpack.c.l.b16 %v199
      %v212 = vpack.c.b16 %v210, %v209
      %v213 = vpack.c.b16 %v211, %v211
      %vm214 = vsmask.f32 7424
      %v216 = vshrl.u32 %v212, 16
      %v218 = vshll.u32 %v212, 16
      %v220 = vrot.slane %v218, 1
      %v221 = vor.u32 %v216, %v220
      %v223 = vshll.u32 %v213, 16
      %v225 = vrot.slane %v223, 1
      %v226 = vsel %vm214, %v221, %v225
      %v229 = vunpack.c.l.b16 %v204
      %v230 = vunpack.c.l.b16 %v205
      %v231 = vpack.c.b16 %v230, %v229
      %vm233 = vcmask 130048
      %v235 = vsel %vm233, %v226, 0
      %237 = vmatprep.subr.bf16.mxu0 0
      %238 = vmatpush1.bf16.msra.mxu0 %v231
      %239 = vmatprep.subr.bf16.mxu0 0
      %240 = vmatpush1.bf16.msra.mxu0 0
      %241 = vmatprep.subr.bf16.mxu0 0
      %242 = vmatpush1.bf16.msra.mxu0 0
      %243 = vmatprep.subr.bf16.mxu0 0
      %244 = vmatpush1.bf16.msra.mxu0 0
      %245 = vmatprep.subr.bf16.mxu0 0
      %246 = vmatpush1.bf16.msra.mxu0 0
      %247 = vmatprep.subr.bf16.mxu0 0
      %248 = vmatpush1.bf16.msra.mxu0 0
      %249 = vmatprep.subr.bf16.mxu0 0
      %250 = vmatpush1.bf16.msra.mxu0 0
      %251 = vmatprep.subr.bf16.mxu0 0
      %252 = vmatpush1.bf16.msra.mxu0 0
      %253 = vmatprep.subr.bf16.mxu0 0
      %254 = vmatpush1.bf16.msra.mxu0 0
      %255 = vmatprep.subr.bf16.mxu0 0
      %256 = vmatpush1.bf16.msra.mxu0 0
      %257 = vmatprep.subr.bf16.mxu0 0
      %258 = vmatpush1.bf16.msra.mxu0 0
      %259 = vmatprep.subr.bf16.mxu0 0
      %260 = vmatpush1.bf16.msra.mxu0 0
      %261 = vmatprep.subr.bf16.mxu0 0
      %262 = vmatpush1.bf16.msra.mxu0 0
      %263 = vmatprep.subr.bf16.mxu0 0
      %264 = vmatpush1.bf16.msra.mxu0 0
      %265 = vmatprep.subr.bf16.mxu0 0
      %266 = vmatpush1.bf16.msra.mxu0 0
      %267 = vmatprep.subr.bf16.mxu0 0
      %268 = vmatpush1.bf16.msra.mxu0 0
      %269 = vmatprep.mubr.bf16.mxu0 0
      %270 = vmatmul.mubr.bf16.gmra.mrb[0].mxu0 %v235
      %v271 = vpop.f32.mrb[0].mxu0
      %v272 = vadd.f32 0.0, %v271
      %v273 = vpop.f32.mrb[0].mxu0
      %v274 = vpop.f32.mrb[0].mxu0
      %v275 = vadd.f32 0.0, %v274
      %v276 = vpop.f32.mrb[0].mxu0
      %277 = vdwg.mxu0
      %v280 = vunpack.c.l.b16 %v201
      %v281 = vunpack.c.l.b16 %v202
      %v282 = vpack.c.b16 %v281, %v280
      %v284 = vsel %vm233, %v212, 0
      %286 = vmatprep.subr.bf16.mxu0 0
      %287 = vmatpush1.bf16.msra.mxu0 %v282
      %288 = vmatprep.subr.bf16.mxu0 0
      %289 = vmatpush1.bf16.msra.mxu0 0
      %290 = vmatprep.subr.bf16.mxu0 0
      %291 = vmatpush1.bf16.msra.mxu0 0
      %292 = vmatprep.subr.bf16.mxu0 0
      %293 = vmatpush1.bf16.msra.mxu0 0
      %294 = vmatprep.subr.bf16.mxu0 0
      %295 = vmatpush1.bf16.msra.mxu0 0
      %296 = vmatprep.subr.bf16.mxu0 0
      %297 = vmatpush1.bf16.msra.mxu0 0
      %298 = vmatprep.subr.bf16.mxu0 0
      %299 = vmatpush1.bf16.msra.mxu0 0
      %300 = vmatprep.subr.bf16.mxu0 0
      %301 = vmatpush1.bf16.msra.mxu0 0
      %302 = vmatprep.subr.bf16.mxu0 0
      %303 = vmatpush1.bf16.msra.mxu0 0
      %304 = vmatprep.subr.bf16.mxu0 0
      %305 = vmatpush1.bf16.msra.mxu0 0
      %306 = vmatprep.subr.bf16.mxu0 0
      %307 = vmatpush1.bf16.msra.mxu0 0
      %308 = vmatprep.subr.bf16.mxu0 0
      %309 = vmatpush1.bf16.msra.mxu0 0
      %310 = vmatprep.subr.bf16.mxu0 0
      %311 = vmatpush1.bf16.msra.mxu0 0
      %312 = vmatprep.subr.bf16.mxu0 0
      %313 = vmatpush1.bf16.msra.mxu0 0
      %314 = vmatprep.subr.bf16.mxu0 0
      %315 = vmatpush1.bf16.msra.mxu0 0
      %316 = vmatprep.subr.bf16.mxu0 0
      %317 = vmatpush1.bf16.msra.mxu0 0
      %318 = vmatprep.mubr.bf16.mxu0 0
      %319 = vmatmul.mubr.bf16.gmra.mrb[0].mxu0 %v284
      %v320 = vpop.f32.mrb[0].mxu0
      %v321 = vadd.f32 %v272, %v320
      %v322 = vpop.f32.mrb[0].mxu0
      %v323 = vpop.f32.mrb[0].mxu0
      %v324 = vadd.f32 %v275, %v323
      %v325 = vpop.f32.mrb[0].mxu0
      %326 = vdwg.mxu0
      %s327 = scalar_lea.vmem %s1, 16
      %v328 = vld [vmem:[%s327] sm:$0xf]
      %v329 = vld [vmem:[%s327 + $0x4] sm:$0xf]
      %vm330 = vcmask 1046528
      %v331 = vrot.slane %v212, 1
      %v332 = vrot.slane %v213, 1
      %v333 = vsel %vm330, %v331, %v332
      %v336 = vunpack.c.l.b16 %v328
      %v337 = vunpack.c.l.b16 %v329
      %v338 = vpack.c.b16 %v337, %v336
      %v341 = vsel %vm233, %v333, 0
      %343 = vmatprep.subr.bf16.mxu0 0
      %344 = vmatpush1.bf16.msra.mxu0 %v338
      %345 = vmatprep.subr.bf16.mxu0 0
      %346 = vmatpush1.bf16.msra.mxu0 0
      %347 = vmatprep.subr.bf16.mxu0 0
      %348 = vmatpush1.bf16.msra.mxu0 0
      %349 = vmatprep.subr.bf16.mxu0 0
      %350 = vmatpush1.bf16.msra.mxu0 0
      %351 = vmatprep.subr.bf16.mxu0 0
      %352 = vmatpush1.bf16.msra.mxu0 0
      %353 = vmatprep.subr.bf16.mxu0 0
      %354 = vmatpush1.bf16.msra.mxu0 0
      %355 = vmatprep.subr.bf16.mxu0 0
      %356 = vmatpush1.bf16.msra.mxu0 0
      %357 = vmatprep.subr.bf16.mxu0 0
      %358 = vmatpush1.bf16.msra.mxu0 0
      %359 = vmatprep.subr.bf16.mxu0 0
      %360 = vmatpush1.bf16.msra.mxu0 0
      %361 = vmatprep.subr.bf16.mxu0 0
      %362 = vmatpush1.bf16.msra.mxu0 0
      %363 = vmatprep.subr.bf16.mxu0 0
      %364 = vmatpush1.bf16.msra.mxu0 0
      %365 = vmatprep.subr.bf16.mxu0 0
      %366 = vmatpush1.bf16.msra.mxu0 0
      %367 = vmatprep.subr.bf16.mxu0 0
      %368 = vmatpush1.bf16.msra.mxu0 0
      %369 = vmatprep.subr.bf16.mxu0 0
      %370 = vmatpush1.bf16.msra.mxu0 0
      %371 = vmatprep.subr.bf16.mxu0 0
      %372 = vmatpush1.bf16.msra.mxu0 0
      %373 = vmatprep.subr.bf16.mxu0 0
      %374 = vmatpush1.bf16.msra.mxu0 0
      %375 = vmatprep.mubr.bf16.mxu0 0
      %376 = vmatmul.mubr.bf16.gmra.mrb[0].mxu0 %v341
      %v377 = vpop.f32.mrb[0].mxu0
      %v378 = vadd.f32 0.0, %v377
      %v379 = vpop.f32.mrb[0].mxu0
      %v380 = vpop.f32.mrb[0].mxu0
      %v381 = vadd.f32 0.0, %v380
      %v382 = vpop.f32.mrb[0].mxu0
      %383 = vdwg.mxu0
      %v384 = vadd.f32 %v321, %v378
      %v385 = vadd.f32 %v324, %v381
      %s386 = scalar_lea.vmem %s1, 24
      %v387 = vld [vmem:[%s386] sm:$0xf]
      %v388 = vld [vmem:[%s386 + $0x4] sm:$0xf]
      %vm389 = vcmask 1045504
      %v390 = vrot.slane %v212, 2
      %v391 = vrot.slane %v213, 2
      %v392 = vsel %vm389, %v390, %v391
      %v395 = vunpack.c.l.b16 %v387
      %v396 = vunpack.c.l.b16 %v388
      %v397 = vpack.c.b16 %v396, %v395
      %v400 = vsel %vm233, %v392, 0
      %402 = vmatprep.subr.bf16.mxu0 0
      %403 = vmatpush1.bf16.msra.mxu0 %v397
      %404 = vmatprep.subr.bf16.mxu0 0
      %405 = vmatpush1.bf16.msra.mxu0 0
      %406 = vmatprep.subr.bf16.mxu0 0
      %407 = vmatpush1.bf16.msra.mxu0 0
      %408 = vmatprep.subr.bf16.mxu0 0
      %409 = vmatpush1.bf16.msra.mxu0 0
      %410 = vmatprep.subr.bf16.mxu0 0
      %411 = vmatpush1.bf16.msra.mxu0 0
      %412 = vmatprep.subr.bf16.mxu0 0
      %413 = vmatpush1.bf16.msra.mxu0 0
      %414 = vmatprep.subr.bf16.mxu0 0
      %415 = vmatpush1.bf16.msra.mxu0 0
      %416 = vmatprep.subr.bf16.mxu0 0
      %417 = vmatpush1.bf16.msra.mxu0 0
      %418 = vmatprep.subr.bf16.mxu0 0
      %419 = vmatpush1.bf16.msra.mxu0 0
      %420 = vmatprep.subr.bf16.mxu0 0
      %421 = vmatpush1.bf16.msra.mxu0 0
      %422 = vmatprep.subr.bf16.mxu0 0
      %423 = vmatpush1.bf16.msra.mxu0 0
      %424 = vmatprep.subr.bf16.mxu0 0
      %425 = vmatpush1.bf16.msra.mxu0 0
      %426 = vmatprep.subr.bf16.mxu0 0
      %427 = vmatpush1.bf16.msra.mxu0 0
      %428 = vmatprep.subr.bf16.mxu0 0
      %429 = vmatpush1.bf16.msra.mxu0 0
      %430 = vmatprep.subr.bf16.mxu0 0
      %431 = vmatpush1.bf16.msra.mxu0 0
      %432 = vmatprep.subr.bf16.mxu0 0
      %433 = vmatpush1.bf16.msra.mxu0 0
      %434 = vmatprep.mubr.bf16.mxu0 0
      %435 = vmatmul.mubr.bf16.gmra.mrb[0].mxu0 %v400
      %v436 = vpop.f32.mrb[0].mxu0
      %v437 = vadd.f32 0.0, %v436
      %v438 = vpop.f32.mrb[0].mxu0
      %v439 = vpop.f32.mrb[0].mxu0
      %v440 = vadd.f32 0.0, %v439
      %v441 = vpop.f32.mrb[0].mxu0
      %442 = vdwg.mxu0
      %v443 = vadd.f32 %v384, %v437
      %v444 = vadd.f32 %v385, %v440
      %s445 = scalar_lea.vmem %s1, 32
      %v446 = vld [vmem:[%s445] sm:$0xf]
      %v447 = vld [vmem:[%s445 + $0x4] sm:$0xf]
      %vm448 = vsmask.f32 5376
      %v449 = vrot.slane %v216, 2
      %v450 = vrot.slane %v218, 3
      %v451 = vor.u32 %v449, %v450
      %v452 = vshrl.u32 %v213, 16
      %v454 = vrot.slane %v452, 2
      %v455 = vrot.slane %v223, 3
      %v456 = vor.u32 %v454, %v455
      %v457 = vsel %vm448, %v451, %v456
      %v460 = vunpack.c.l.b16 %v446
      %v461 = vunpack.c.l.b16 %v447
      %v462 = vpack.c.b16 %v461, %v460
      %v465 = vsel %vm233, %v457, 0
      %467 = vmatprep.subr.bf16.mxu0 0
      %468 = vmatpush1.bf16.msra.mxu0 %v462
      %469 = vmatprep.subr.bf16.mxu0 0
      %470 = vmatpush1.bf16.msra.mxu0 0
      %471 = vmatprep.subr.bf16.mxu0 0
      %472 = vmatpush1.bf16.msra.mxu0 0
      %473 = vmatprep.subr.bf16.mxu0 0
      %474 = vmatpush1.bf16.msra.mxu0 0
      %475 = vmatprep.subr.bf16.mxu0 0
      %476 = vmatpush1.bf16.msra.mxu0 0
      %477 = vmatprep.subr.bf16.mxu0 0
      %478 = vmatpush1.bf16.msra.mxu0 0
      %479 = vmatprep.subr.bf16.mxu0 0
      %480 = vmatpush1.bf16.msra.mxu0 0
      %481 = vmatprep.subr.bf16.mxu0 0
      %482 = vmatpush1.bf16.msra.mxu0 0
      %483 = vmatprep.subr.bf16.mxu0 0
      %484 = vmatpush1.bf16.msra.mxu0 0
      %485 = vmatprep.subr.bf16.mxu0 0
      %486 = vmatpush1.bf16.msra.mxu0 0
      %487 = vmatprep.subr.bf16.mxu0 0
      %488 = vmatpush1.bf16.msra.mxu0 0
      %489 = vmatprep.subr.bf16.mxu0 0
      %490 = vmatpush1.bf16.msra.mxu0 0
      %491 = vmatprep.subr.bf16.mxu0 0
      %492 = vmatpush1.bf16.msra.mxu0 0
      %493 = vmatprep.subr.bf16.mxu0 0
      %494 = vmatpush1.bf16.msra.mxu0 0
      %495 = vmatprep.subr.bf16.mxu0 0
      %496 = vmatpush1.bf16.msra.mxu0 0
      %497 = vmatprep.subr.bf16.mxu0 0
      %498 = vmatpush1.bf16.msra.mxu0 0
      %499 = vmatprep.mubr.bf16.mxu0 0
      %500 = vmatmul.mubr.bf16.gmra.mrb[0].mxu0 %v465
      %v501 = vpop.f32.mrb[0].mxu0
      %v502 = vadd.f32 0.0, %v501
      %v503 = vpop.f32.mrb[0].mxu0
      %v504 = vpop.f32.mrb[0].mxu0
      %v505 = vadd.f32 0.0, %v504
      %v506 = vpop.f32.mrb[0].mxu0
      %507 = vdwg.mxu0
      %v508 = vadd.f32 %v443, %v502
      %v509 = vadd.f32 %v444, %v505
      %s510 = scalar_lea.vmem %s1, 40
      %v511 = vld [vmem:[%s510] sm:$0xf]
      %v512 = vld [vmem:[%s510 + $0x4] sm:$0xf]
      %vm513 = vcmask 1044480
      %v514 = vrot.slane %v212, 3
      %v515 = vrot.slane %v213, 3
      %v516 = vsel %vm513, %v514, %v515
      %v519 = vunpack.c.l.b16 %v511
      %v520 = vunpack.c.l.b16 %v512
      %v521 = vpack.c.b16 %v520, %v519
      %v524 = vsel %vm233, %v516, 0
      %526 = vmatprep.subr.bf16.mxu0 0
      %527 = vmatpush1.bf16.msra.mxu0 %v521
      %528 = vmatprep.subr.bf16.mxu0 0
      %529 = vmatpush1.bf16.msra.mxu0 0
      %530 = vmatprep.subr.bf16.mxu0 0
      %531 = vmatpush1.bf16.msra.mxu0 0
      %532 = vmatprep.subr.bf16.mxu0 0
      %533 = vmatpush1.bf16.msra.mxu0 0
      %534 = vmatprep.subr.bf16.mxu0 0
      %535 = vmatpush1.bf16.msra.mxu0 0
      %536 = vmatprep.subr.bf16.mxu0 0
      %537 = vmatpush1.bf16.msra.mxu0 0
      %538 = vmatprep.subr.bf16.mxu0 0
      %539 = vmatpush1.bf16.msra.mxu0 0
      %540 = vmatprep.subr.bf16.mxu0 0
      %541 = vmatpush1.bf16.msra.mxu0 0
      %542 = vmatprep.subr.bf16.mxu0 0
      %543 = vmatpush1.bf16.msra.mxu0 0
      %544 = vmatprep.subr.bf16.mxu0 0
      %545 = vmatpush1.bf16.msra.mxu0 0
      %546 = vmatprep.subr.bf16.mxu0 0
      %547 = vmatpush1.bf16.msra.mxu0 0
      %548 = vmatprep.subr.bf16.mxu0 0
      %549 = vmatpush1.bf16.msra.mxu0 0
      %550 = vmatprep.subr.bf16.mxu0 0
      %551 = vmatpush1.bf16.msra.mxu0 0
      %552 = vmatprep.subr.bf16.mxu0 0
      %553 = vmatpush1.bf16.msra.mxu0 0
      %554 = vmatprep.subr.bf16.mxu0 0
      %555 = vmatpush1.bf16.msra.mxu0 0
      %556 = vmatprep.subr.bf16.mxu0 0
      %557 = vmatpush1.bf16.msra.mxu0 0
      %558 = vmatprep.mubr.bf16.mxu0 0
      %559 = vmatmul.mubr.bf16.gmra.mrb[0].mxu0 %v524
      %v560 = vpop.f32.mrb[0].mxu0
      %v561 = vadd.f32 0.0, %v560
      %v562 = vpop.f32.mrb[0].mxu0
      %v563 = vpop.f32.mrb[0].mxu0
      %v564 = vadd.f32 0.0, %v563
      %v565 = vpop.f32.mrb[0].mxu0
      %566 = vdwg.mxu0
      %v567 = vadd.f32 %v508, %v561
      %v568 = vadd.f32 %v509, %v564
      %s569 = scalar_lea.vmem %s1, 48
      %v570 = vld [vmem:[%s569] sm:$0xf]
      %v571 = vld [vmem:[%s569 + $0x4] sm:$0xf]
      %v572 = vpack.c.b16 %v211, %v210
      %v575 = vunpack.c.l.b16 %v570
      %v576 = vunpack.c.l.b16 %v571
      %v577 = vpack.c.b16 %v576, %v575
      %v580 = vsel %vm233, %v572, 0
      %582 = vmatprep.subr.bf16.mxu0 0
      %583 = vmatpush1.bf16.msra.mxu0 %v577
      %584 = vmatprep.subr.bf16.mxu0 0
      %585 = vmatpush1.bf16.msra.mxu0 0
      %586 = vmatprep.subr.bf16.mxu0 0
      %587 = vmatpush1.bf16.msra.mxu0 0
      %588 = vmatprep.subr.bf16.mxu0 0
      %589 = vmatpush1.bf16.msra.mxu0 0
      %590 = vmatprep.subr.bf16.mxu0 0
      %591 = vmatpush1.bf16.msra.mxu0 0
      %592 = vmatprep.subr.bf16.mxu0 0
      %593 = vmatpush1.bf16.msra.mxu0 0
      %594 = vmatprep.subr.bf16.mxu0 0
      %595 = vmatpush1.bf16.msra.mxu0 0
      %596 = vmatprep.subr.bf16.mxu0 0
      %597 = vmatpush1.bf16.msra.mxu0 0
      %598 = vmatprep.subr.bf16.mxu0 0
      %599 = vmatpush1.bf16.msra.mxu0 0
      %600 = vmatprep.subr.bf16.mxu0 0
      %601 = vmatpush1.bf16.msra.mxu0 0
      %602 = vmatprep.subr.bf16.mxu0 0
      %603 = vmatpush1.bf16.msra.mxu0 0
      %604 = vmatprep.subr.bf16.mxu0 0
      %605 = vmatpush1.bf16.msra.mxu0 0
      %606 = vmatprep.subr.bf16.mxu0 0
      %607 = vmatpush1.bf16.msra.mxu0 0
      %608 = vmatprep.subr.bf16.mxu0 0
      %609 = vmatpush1.bf16.msra.mxu0 0
      %610 = vmatprep.subr.bf16.mxu0 0
      %611 = vmatpush1.bf16.msra.mxu0 0
      %612 = vmatprep.subr.bf16.mxu0 0
      %613 = vmatpush1.bf16.msra.mxu0 0
      %614 = vmatprep.mubr.bf16.mxu0 0
      %615 = vmatmul.mubr.bf16.gmra.mrb[0].mxu0 %v580
      %v616 = vpop.f32.mrb[0].mxu0
      %v617 = vadd.f32 0.0, %v616
      %v618 = vpop.f32.mrb[0].mxu0
      %v619 = vpop.f32.mrb[0].mxu0
      %v620 = vadd.f32 0.0, %v619
      %v621 = vpop.f32.mrb[0].mxu0
      %622 = vdwg.mxu0
      %v623 = vadd.f32 %v567, %v617
      %v624 = vadd.f32 %v568, %v620
      %s625 = scalar_lea.vmem %s1, 56
      %v626 = vld [vmem:[%s625] sm:$0xf]
      %v627 = vld [vmem:[%s625 + $0x4] sm:$0xf]
      %v629 = vunpack.c.l.b16 %v200
      %v630 = vpack.c.b16 %v629, %v629
      %v631 = vshrl.u32 %v572, 16
      %v633 = vshll.u32 %v572, 16
      %v635 = vrot.slane %v633, 1
      %v636 = vor.u32 %v631, %v635
      %v638 = vshll.u32 %v630, 16
      %v640 = vrot.slane %v638, 1
      %v641 = vsel %vm214, %v636, %v640
      %v644 = vunpack.c.l.b16 %v626
      %v645 = vunpack.c.l.b16 %v627
      %v646 = vpack.c.b16 %v645, %v644
      %v649 = vsel %vm233, %v641, 0
      %651 = vmatprep.subr.bf16.mxu0 0
      %652 = vmatpush1.bf16.msra.mxu0 %v646
      %653 = vmatprep.subr.bf16.mxu0 0
      %654 = vmatpush1.bf16.msra.mxu0 0
      %655 = vmatprep.subr.bf16.mxu0 0
      %656 = vmatpush1.bf16.msra.mxu0 0
      %657 = vmatprep.subr.bf16.mxu0 0
      %658 = vmatpush1.bf16.msra.mxu0 0
      %659 = vmatprep.subr.bf16.mxu0 0
      %660 = vmatpush1.bf16.msra.mxu0 0
      %661 = vmatprep.subr.bf16.mxu0 0
      %662 = vmatpush1.bf16.msra.mxu0 0
      %663 = vmatprep.subr.bf16.mxu0 0
      %664 = vmatpush1.bf16.msra.mxu0 0
      %665 = vmatprep.subr.bf16.mxu0 0
      %666 = vmatpush1.bf16.msra.mxu0 0
      %667 = vmatprep.subr.bf16.mxu0 0
      %668 = vmatpush1.bf16.msra.mxu0 0
      %669 = vmatprep.subr.bf16.mxu0 0
      %670 = vmatpush1.bf16.msra.mxu0 0
      %671 = vmatprep.subr.bf16.mxu0 0
      %672 = vmatpush1.bf16.msra.mxu0 0
      %673 = vmatprep.subr.bf16.mxu0 0
      %674 = vmatpush1.bf16.msra.mxu0 0
      %675 = vmatprep.subr.bf16.mxu0 0
      %676 = vmatpush1.bf16.msra.mxu0 0
      %677 = vmatprep.subr.bf16.mxu0 0
      %678 = vmatpush1.bf16.msra.mxu0 0
      %679 = vmatprep.subr.bf16.mxu0 0
      %680 = vmatpush1.bf16.msra.mxu0 0
      %681 = vmatprep.subr.bf16.mxu0 0
      %682 = vmatpush1.bf16.msra.mxu0 0
      %683 = vmatprep.mubr.bf16.mxu0 0
      %684 = vmatmul.mubr.bf16.gmra.mrb[0].mxu0 %v649
      %v685 = vpop.f32.mrb[0].mxu0
      %v686 = vadd.f32 0.0, %v685
      %v687 = vpop.f32.mrb[0].mxu0
      %v688 = vpop.f32.mrb[0].mxu0
      %v689 = vadd.f32 0.0, %v688
      %v690 = vpop.f32.mrb[0].mxu0
      %691 = vdwg.mxu0
      %v692 = vadd.f32 %v623, %v686
      %v693 = vadd.f32 %v624, %v689
      %s694 = scalar_lea.vmem %s1, 64
      %v695 = vld [vmem:[%s694] sm:$0xf]
      %v696 = vld [vmem:[%s694 + $0x4] sm:$0xf]
      %v697 = vrot.slane %v572, 1
      %v698 = vrot.slane %v630, 1
      %v699 = vsel %vm330, %v697, %v698
      %v702 = vunpack.c.l.b16 %v695
      %v703 = vunpack.c.l.b16 %v696
      %v704 = vpack.c.b16 %v703, %v702
      %v707 = vsel %vm233, %v699, 0
      %709 = vmatprep.subr.bf16.mxu0 0
      %710 = vmatpush1.bf16.msra.mxu0 %v704
      %711 = vmatprep.subr.bf16.mxu0 0
      %712 = vmatpush1.bf16.msra.mxu0 0
      %713 = vmatprep.subr.bf16.mxu0 0
      %714 = vmatpush1.bf16.msra.mxu0 0
      %715 = vmatprep.subr.bf16.mxu0 0
      %716 = vmatpush1.bf16.msra.mxu0 0
      %717 = vmatprep.subr.bf16.mxu0 0
      %718 = vmatpush1.bf16.msra.mxu0 0
      %719 = vmatprep.subr.bf16.mxu0 0
      %720 = vmatpush1.bf16.msra.mxu0 0
      %721 = vmatprep.subr.bf16.mxu0 0
      %722 = vmatpush1.bf16.msra.mxu0 0
      %723 = vmatprep.subr.bf16.mxu0 0
      %724 = vmatpush1.bf16.msra.mxu0 0
      %725 = vmatprep.subr.bf16.mxu0 0
      %726 = vmatpush1.bf16.msra.mxu0 0
      %727 = vmatprep.subr.bf16.mxu0 0
      %728 = vmatpush1.bf16.msra.mxu0 0
      %729 = vmatprep.subr.bf16.mxu0 0
      %730 = vmatpush1.bf16.msra.mxu0 0
      %731 = vmatprep.subr.bf16.mxu0 0
      %732 = vmatpush1.bf16.msra.mxu0 0
      %733 = vmatprep.subr.bf16.mxu0 0
      %734 = vmatpush1.bf16.msra.mxu0 0
      %735 = vmatprep.subr.bf16.mxu0 0
      %736 = vmatpush1.bf16.msra.mxu0 0
      %737 = vmatprep.subr.bf16.mxu0 0
      %738 = vmatpush1.bf16.msra.mxu0 0
      %739 = vmatprep.subr.bf16.mxu0 0
      %740 = vmatpush1.bf16.msra.mxu0 0
      %741 = vmatprep.mubr.bf16.mxu0 0
      %742 = vmatmul.mubr.bf16.gmra.mrb[0].mxu0 %v707
      %v743 = vpop.f32.mrb[0].mxu0
      %v744 = vadd.f32 0.0, %v743
      %v745 = vpop.f32.mrb[0].mxu0
      %v746 = vpop.f32.mrb[0].mxu0
      %v747 = vadd.f32 0.0, %v746
      %v748 = vpop.f32.mrb[0].mxu0
      %749 = vdwg.mxu0
      %v750 = vadd.f32 %v692, %v744
      %v751 = vadd.f32 %v693, %v747
      %752 = vst.msk [vmem:[%s195] sm:$0xff] %vm233, %v750
      %753 = vst.msk [vmem:[%s195 + $0x8] sm:$0xff] %vm233, %v751
      %v754 = vld [vmem:[%s2] sm:$0x1]
      %v756 = vsel %vm233, %v754, 0
      %758 = vmatprep.subr.mxu0 0.0
      %759 = vmatpush1.msra.mxu0 %v750
      %760 = vmatprep.subr.mxu0 0.0
      %761 = vmatpush1.msra.mxu0 %v751
      %762 = vmatprep.subr.mxu0 0.0
      %763 = vmatpush1.msra.mxu0 0.0
      %764 = vmatprep.subr.mxu0 0.0
      %765 = vmatpush1.msra.mxu0 0.0
      %766 = vmatprep.subr.mxu0 0.0
      %767 = vmatpush1.msra.mxu0 0.0
      %768 = vmatprep.subr.mxu0 0.0
      %769 = vmatpush1.msra.mxu0 0.0
      %770 = vmatprep.subr.mxu0 0.0
      %771 = vmatpush1.msra.mxu0 0.0
      %772 = vmatprep.subr.mxu0 0.0
      %773 = vmatpush1.msra.mxu0 0.0
      %774 = vmatprep.subr.mxu0 0.0
      %775 = vmatpush1.msra.mxu0 0.0
      %776 = vmatprep.subr.mxu0 0.0
      %777 = vmatpush1.msra.mxu0 0.0
      %778 = vmatprep.subr.mxu0 0.0
      %779 = vmatpush1.msra.mxu0 0.0
      %780 = vmatprep.subr.mxu0 0.0
      %781 = vmatpush1.msra.mxu0 0.0
      %782 = vmatprep.subr.mxu0 0.0
      %783 = vmatpush1.msra.mxu0 0.0
      %784 = vmatprep.subr.mxu0 0.0
      %785 = vmatpush1.msra.mxu0 0.0
      %786 = vmatprep.subr.mxu0 0.0
      %787 = vmatpush1.msra.mxu0 0.0
      %788 = vmatprep.subr.mxu0 0.0
      %789 = vmatpush1.msra.mxu0 0.0
      %790 = vmatprep.subr.mxu0 0.0
      %791 = vmatpush1.msra.mxu0 0.0
      %792 = vmatprep.subr.mxu0 0.0
      %793 = vmatpush1.msra.mxu0 0.0
      %794 = vmatprep.subr.mxu0 0.0
      %795 = vmatpush1.msra.mxu0 0.0
      %796 = vmatprep.subr.mxu0 0.0
      %797 = vmatpush1.msra.mxu0 0.0
      %798 = vmatprep.subr.mxu0 0.0
      %799 = vmatpush1.msra.mxu0 0.0
      %800 = vmatprep.subr.mxu0 0.0
      %801 = vmatpush1.msra.mxu0 0.0
      %802 = vmatprep.subr.mxu0 0.0
      %803 = vmatpush1.msra.mxu0 0.0
      %804 = vmatprep.subr.mxu0 0.0
      %805 = vmatpush1.msra.mxu0 0.0
      %806 = vmatprep.subr.mxu0 0.0
      %807 = vmatpush1.msra.mxu0 0.0
      %808 = vmatprep.subr.mxu0 0.0
      %809 = vmatpush1.msra.mxu0 0.0
      %810 = vmatprep.subr.mxu0 0.0
      %811 = vmatpush1.msra.mxu0 0.0
      %812 = vmatprep.subr.mxu0 0.0
      %813 = vmatpush1.msra.mxu0 0.0
      %814 = vmatprep.subr.mxu0 0.0
      %815 = vmatpush1.msra.mxu0 0.0
      %816 = vmatprep.subr.mxu0 0.0
      %817 = vmatpush1.msra.mxu0 0.0
      %818 = vmatprep.subr.mxu0 0.0
      %819 = vmatpush1.msra.mxu0 0.0
      %820 = vmatprep.subr.mxu0 0.0
      %821 = vmatpush1.msra.mxu0 0.0
      %822 = vmatprep.mubr.f32.mxu0 0.0
      %823 = vmatmul.mubr.f32.gmra.mrb[0].mxu0 %v756
      %v824 = vpop.f32.mrb[0].mxu0
      %v825 = vadd.f32 0.0, %v824
      %v826 = vpop.f32.mrb[0].mxu0
      %827 = vdwg.mxu0
      %v828 = vmul.f32 %v750, %v750
      %v829 = vmul.f32 %v751, %v751
      %830 = vmatprep.subr.mxu0 0.0
      %831 = vmatpush1.msra.mxu0 %v828
      %832 = vmatprep.subr.mxu0 0.0
      %833 = vmatpush1.msra.mxu0 %v829
      %834 = vmatprep.subr.mxu0 0.0
      %835 = vmatpush1.msra.mxu0 0.0
      %836 = vmatprep.subr.mxu0 0.0
      %837 = vmatpush1.msra.mxu0 0.0
      %838 = vmatprep.subr.mxu0 0.0
      %839 = vmatpush1.msra.mxu0 0.0
      %840 = vmatprep.subr.mxu0 0.0
      %841 = vmatpush1.msra.mxu0 0.0
      %842 = vmatprep.subr.mxu0 0.0
      %843 = vmatpush1.msra.mxu0 0.0
      %844 = vmatprep.subr.mxu0 0.0
      %845 = vmatpush1.msra.mxu0 0.0
      %846 = vmatprep.subr.mxu0 0.0
      %847 = vmatpush1.msra.mxu0 0.0
      %848 = vmatprep.subr.mxu0 0.0
      %849 = vmatpush1.msra.mxu0 0.0
      %850 = vmatprep.subr.mxu0 0.0
      %851 = vmatpush1.msra.mxu0 0.0
      %852 = vmatprep.subr.mxu0 0.0
      %853 = vmatpush1.msra.mxu0 0.0
      %854 = vmatprep.subr.mxu0 0.0
      %855 = vmatpush1.msra.mxu0 0.0
      %856 = vmatprep.subr.mxu0 0.0
      %857 = vmatpush1.msra.mxu0 0.0
      %858 = vmatprep.subr.mxu0 0.0
      %859 = vmatpush1.msra.mxu0 0.0
      %860 = vmatprep.subr.mxu0 0.0
      %861 = vmatpush1.msra.mxu0 0.0
      %862 = vmatprep.subr.mxu0 0.0
      %863 = vmatpush1.msra.mxu0 0.0
      %864 = vmatprep.subr.mxu0 0.0
      %865 = vmatpush1.msra.mxu0 0.0
      %866 = vmatprep.subr.mxu0 0.0
      %867 = vmatpush1.msra.mxu0 0.0
      %868 = vmatprep.subr.mxu0 0.0
      %869 = vmatpush1.msra.mxu0 0.0
      %870 = vmatprep.subr.mxu0 0.0
      %871 = vmatpush1.msra.mxu0 0.0
      %872 = vmatprep.subr.mxu0 0.0
      %873 = vmatpush1.msra.mxu0 0.0
      %874 = vmatprep.subr.mxu0 0.0
      %875 = vmatpush1.msra.mxu0 0.0
      %876 = vmatprep.subr.mxu0 0.0
      %877 = vmatpush1.msra.mxu0 0.0
      %878 = vmatprep.subr.mxu0 0.0
      %879 = vmatpush1.msra.mxu0 0.0
      %880 = vmatprep.subr.mxu0 0.0
      %881 = vmatpush1.msra.mxu0 0.0
      %882 = vmatprep.subr.mxu0 0.0
      %883 = vmatpush1.msra.mxu0 0.0
      %884 = vmatprep.subr.mxu0 0.0
      %885 = vmatpush1.msra.mxu0 0.0
      %886 = vmatprep.subr.mxu0 0.0
      %887 = vmatpush1.msra.mxu0 0.0
      %888 = vmatprep.subr.mxu0 0.0
      %889 = vmatpush1.msra.mxu0 0.0
      %890 = vmatprep.subr.mxu0 0.0
      %891 = vmatpush1.msra.mxu0 0.0
      %892 = vmatprep.subr.mxu0 0.0
      %893 = vmatpush1.msra.mxu0 0.0
      %894 = vmatprep.mubr.f32.mxu0 0.0
      %895 = vmatmul.mubr.f32.gmra.mrb[0].mxu0 %v756
      %v896 = vpop.f32.mrb[0].mxu0
      %v897 = vadd.f32 0.0, %v896
      %v898 = vpop.f32.mrb[0].mxu0
      %899 = vdwg.mxu0
      %p900 = scmp.eq.s32.totalorder %s16, 0
      // Predicated region
      $region33: #{autoprotonet_embedding.14} parent=31 // pred_check
        %p901 = pneg %p900
      $region34: #{autoprotonet_embedding.14} parent=31 // pred_check_branch
        %903 = sbr.rel (%p901) target = $region36
      $region35: #{autoprotonet_embedding.14} parent=31 // pred_region
        %vm904 = vcmask 123904
        %905 = vst.msk [vmem:[%s4] sm:$0x3] %vm904, 0.0
      $region36: #{autoprotonet_embedding.14} parent=31 // pred_fallthru
        _
      %v906 = vld [vmem:[%s4] sm:$0x3]
      %v908 = vrot.slane %v897, 7
      %vm910 = vcmask 1040384
      %v911 = vsel %vm910, %v825, %v908
      %v912 = vadd.f32 %v906, %v911
      %vm913 = vcmask 123904
      %914 = vst.msk [vmem:[%s4] sm:$0x3] %vm913, %v912
      %p915 = scmp.lt.s32.totalorder %s16, 3
      %s916 = scalar_select %p915, %s16, 3
      %s917 = smul.addr %s916, 2
      %s918 = smul.addr %s917, 8
      %s919 = scalar_lea.vmem %s3, %s918
      // Predicated region
      $region37: #{autoprotonet_embedding.14} parent=31 // pred_check
        %p920 = pneg %p102
      $region38: #{autoprotonet_embedding.14} parent=31 // pred_check_branch
        %922 = sbr.rel (%p920) target = $region40
      $region39: #{autoprotonet_embedding.14} parent=31 // pred_region
        _
      $region40: #{autoprotonet_embedding.14} parent=31 // pred_fallthru
        _
      // Predicated region
      $region41: #{autoprotonet_embedding.14} parent=31 // pred_check
        %p923 = pneg %p123
      $region42: #{autoprotonet_embedding.14} parent=31 // pred_check_branch
        %925 = sbr.rel (%p923) target = $region44
      $region43: #{autoprotonet_embedding.14} parent=31 // pred_region
        _
      $region44: #{autoprotonet_embedding.14} parent=31 // pred_fallthru
        _
      // Predicated region
      $region45: #{autoprotonet_embedding.14} parent=31 // pred_check
        %p926 = pneg %p123
      $region46: #{autoprotonet_embedding.14} parent=31 // pred_check_branch
        %928 = sbr.rel (%p926) target = $region48
      $region47: #{autoprotonet_embedding.14} parent=31 // pred_region
        _
      $region48: #{autoprotonet_embedding.14} parent=31 // pred_fallthru
        _
    $region32: #{autoprotonet_embedding.14} parent=5 // pred_fallthru
      _
    %p929 = scmp.le.s32.totalorder 2, %s11
    // Predicated region
    $region49: #{autoprotonet_embedding.14} parent=5 // pred_check
      %p930 = pneg %p929
    $region50: #{autoprotonet_embedding.14} parent=5 // pred_check_branch
      %932 = sbr.rel (%p930) target = $region52
    $region51: #{autoprotonet_embedding.14} parent=5 // pred_region
      %s933 = ssub.s32 %s11, 2
      // Predicated region
      $region53: #{autoprotonet_embedding.14} parent=51 // pred_check
        %p934 = pneg %p108
      $region54: #{autoprotonet_embedding.14} parent=51 // pred_check_branch
        %936 = sbr.rel (%p934) target = $region56
      $region55: #{autoprotonet_embedding.14} parent=51 // pred_region
        %p937 = scmp.lt.s32.totalorder %s17, 3
        %s938 = scalar_select %p937, %s17, 3
        %s939 = smul.addr %s938, 2
        %s940 = smul.addr %s939, 8
        %s941 = scalar_lea.vmem %s3, %s940
      $region56: #{autoprotonet_embedding.14} parent=51 // pred_fallthru
        _
    $region52: #{autoprotonet_embedding.14} parent=5 // pred_fallthru
      _
  $region6: #{autoprotonet_embedding.14} parent=0 // loop_footer
    %s15 = sadd.s32 1, %s11
  $region7: #{autoprotonet_embedding.14} parent=0 // loop_footer_branch
    %10 = sbr.rel target = $region3
  $region8: #{autoprotonet_embedding.14} parent=0 // loop_exit
    _

// kernel: autoprotonet_embedding.12
$region0: #{autoprotonet_embedding.12}
  #allocation0 [shape = 'u32[]', space=smem, size = 0x4, offset = 0x4, fixed_abs, tag = 'smem constant byte address 0x4 - core index']
  #allocation1 [shape = 'u32[144,128]{1,0:T(1,128)}', space=vmem, size = 0x12000, scoped, tag = 'internal scratch']
  %s0 = inlined_call_operand.vmem [shape: bf16[4,50,16], index: 0, kind: input, shape index: {}]
  %s1 = inlined_call_operand.vmem [shape: bf16[9,16,16], index: 1, kind: input, shape index: {}]
  %s2 = inlined_call_operand.vmem [shape: f32[1,36], index: 2, kind: input, shape index: {}]
  %s3 = inlined_call_operand.vmem [shape: f32[4,36,16], index: 3, kind: output, shape index: {0}]
  %s4 = inlined_call_operand.vmem [shape: f32[2,16], index: 4, kind: output, shape index: {1}]
  %5 = xla_tuple %s3, %s4
  %s6 = sld [smem:[#allocation0]]
  $region57: #{autoprotonet_embedding.12} parent=0
    _
  %s8 = ssub.s32 1, %s6
  %s9 = scalar_select 0, %s8, %s6
  loop: start=0, step=1, limit=6
  $region2: #{autoprotonet_embedding.12} parent=0 // loop_pre_header
    _
  $region3: #{autoprotonet_embedding.12} parent=0 // loop_header
    %s11 = sphi 0, %s15
    %p12 = scmp.ge.s32.totalorder %s11, 6
    %s21 = sphi 0, %s23
    %s24 = sphi 0, %s21
    %s25 = sphi 0, %s24
    %s41 = sphi 0, %s25
    %s45 = sphi 0, %s45
    %s47 = sphi 0, %s45
    %s48 = sphi 0, %s47
    %s62 = sphi 0, %s48
    %s66 = sphi 0, %s66
    %s68 = sphi 0, %s66
    %s69 = sphi 0, %s68
    %s83 = sphi 0, %s69
    %s89 = sphi 0, %s91
    %s92 = sphi 0, %s89
    %s93 = sphi 0, %s92
    %s109 = sphi 0, %s93
    %s113 = sphi 0, %s113
    %s115 = sphi 0, %s113
    %s116 = sphi 0, %s115
    %s130 = sphi 0, %s116
  $region4: #{autoprotonet_embedding.12} parent=0 // loop_header_branch
    %14 = sbr.rel (%p12) target = $region8
  $region5: #{autoprotonet_embedding.12} parent=0 // loop_body
    %s16 = ssub.s32 %s11, 1
    %s17 = ssub.s32 %s11, 2
    %s18 = sadd.s32 %s11, 1
    %s19 = ssub.s32 %s11, %s18
    %p20 = scmp.eq.s32.totalorder %s19, 0
    %s22 = sadd.s32 %s21, 1
    %s23 = scalar_select %p20, %s21, %s22
    %p26 = pneg %p20
    %p27 = scmp.eq.s32.totalorder %s11, 3
    %p28 = por %p26, %p27
    %p29 = scmp.ne.s32.totalorder %s21, %s24
    %p30 = scmp.eq.s32.totalorder %s11, 0
    %p31 = por %p29, %p30
    %p32 = scmp.ne.s32.totalorder %s21, %s24
    %p33 = scmp.eq.s32.totalorder %s16, 3
    %p34 = por %p32, %p33
    %p35 = scmp.ne.s32.totalorder %s24, %s25
    %p36 = scmp.eq.s32.totalorder %s16, 0
    %p37 = por %p35, %p36
    %p38 = scmp.ne.s32.totalorder %s24, %s25
    %p39 = scmp.eq.s32.totalorder %s17, 3
    %p40 = por %p38, %p39
    %p42 = scmp.ne.s32.totalorder %s25, %s41
    %p43 = scmp.eq.s32.totalorder %s17, 0
    %p44 = por %p42, %p43
    %s46 = sadd.s32 %s45, 1
    %p49 = scmp.eq.s32.totalorder %s11, 3
    %p50 = scmp.ne.s32.totalorder %s45, %s47
    %p51 = scmp.eq.s32.totalorder %s11, 0
    %p52 = por %p50, %p51
    %p53 = scmp.ne.s32.totalorder %s45, %s47
    %p54 = scmp.eq.s32.totalorder %s16, 3
    %p55 = por %p53, %p54
    %p56 = scmp.ne.s32.totalorder %s47, %s48
    %p57 = scmp.eq.s32.totalorder %s16, 0
    %p58 = por %p56, %p57
    %p59 = scmp.ne.s32.totalorder %s47, %s48
    %p60 = scmp.eq.s32.totalorder %s17, 3
    %p61 = por %p59, %p60
    %p63 = scmp.ne.s32.totalorder %s48, %s62
    %p64 = scmp.eq.s32.totalorder %s17, 0
    %p65 = por %p63, %p64
    %s67 = sadd.s32 %s66, 1
    %p70 = scmp.eq.s32.totalorder %s11, 3
    %p71 = scmp.ne.s32.totalorder %s66, %s68
    %p72 = scmp.eq.s32.totalorder %s11, 0
    %p73 = por %p71, %p72
    %p74 = scmp.ne.s32.totalorder %s66, %s68
    %p75 = scmp.eq.s32.totalorder %s16, 3
    %p76 = por %p74, %p75
    %p77 = scmp.ne.s32.totalorder %s68, %s69
    %p78 = scmp.eq.s32.totalorder %s16, 0
    %p79 = por %p77, %p78
    %p80 = scmp.ne.s32.totalorder %s68, %s69
    %p81 = scmp.eq.s32.totalorder %s17, 3
    %p82 = por %p80, %p81
    %p84 = scmp.ne.s32.totalorder %s69, %s83
    %p85 = scmp.eq.s32.totalorder %s17, 0
    %p86 = por %p84, %p85
    %s87 = ssub.s32 %s11, %s18
    %p88 = scmp.eq.s32.totalorder %s87, 0
    %s90 = sadd.s32 %s89, 1
    %s91 = scalar_select %p88, %s89, %s90
    %p94 = pneg %p88
    %p95 = scmp.eq.s32.totalorder %s11, 3
    %p96 = por %p94, %p95
    %p97 = scmp.ne.s32.totalorder %s89, %s92
    %p98 = scmp.eq.s32.totalorder %s11, 0
    %p99 = por %p97, %p98
    %p100 = scmp.ne.s32.totalorder %s89, %s92
    %p101 = scmp.eq.s32.totalorder %s16, 3
    %p102 = por %p100, %p101
    %p103 = scmp.ne.s32.totalorder %s92, %s93
    %p104 = scmp.eq.s32.totalorder %s16, 0
    %p105 = por %p103, %p104
    %p106 = scmp.ne.s32.totalorder %s92, %s93
    %p107 = scmp.eq.s32.totalorder %s17, 3
    %p108 = por %p106, %p107
    %p110 = scmp.ne.s32.totalorder %s93, %s109
    %p111 = scmp.eq.s32.totalorder %s17, 0
    %p112 = por %p110, %p111
    %s114 = sadd.s32 %s113, 1
    %p117 = scmp.eq.s32.totalorder %s11, 3
    %p118 = scmp.ne.s32.totalorder %s113, %s115
    %p119 = scmp.eq.s32.totalorder %s11, 0
    %p120 = por %p118, %p119
    %p121 = scmp.ne.s32.totalorder %s113, %s115
    %p122 = scmp.eq.s32.totalorder %s16, 3
    %p123 = por %p121, %p122
    %p124 = scmp.ne.s32.totalorder %s115, %s116
    %p125 = scmp.eq.s32.totalorder %s16, 0
    %p126 = por %p124, %p125
    %p127 = scmp.ne.s32.totalorder %s115, %s116
    %p128 = scmp.eq.s32.totalorder %s17, 3
    %p129 = por %p127, %p128
    %p131 = scmp.ne.s32.totalorder %s116, %s130
    %p132 = scmp.eq.s32.totalorder %s17, 0
    %p133 = por %p131, %p132
    %p134 = scmp.le.s32.totalorder 1, %s11
    %p135 = scmp.lt.s32.totalorder %s11, 5
    %p136 = pnand %p134, %p135
    %p137 = pneg %p136
    // Predicated region
    $region9: #{autoprotonet_embedding.12} parent=5 // pred_check
      _
    $region10: #{autoprotonet_embedding.12} parent=5 // pred_check_branch
      %139 = sbr.rel (%p136) target = $region12
    $region11: #{autoprotonet_embedding.12} parent=5 // pred_region
      %s140 = ssub.s32 %s11, 1
      // Predicated region
      $region13: #{autoprotonet_embedding.12} parent=11 // pred_check
        %p141 = pneg %p58
      $region14: #{autoprotonet_embedding.12} parent=11 // pred_check_branch
        %143 = sbr.rel (%p141) target = $region16
      $region15: #{autoprotonet_embedding.12} parent=11 // pred_region
        _
      $region16: #{autoprotonet_embedding.12} parent=11 // pred_fallthru
        _
      // Predicated region
      $region17: #{autoprotonet_embedding.12} parent=11 // pred_check
        %p144 = pneg %p79
      $region18: #{autoprotonet_embedding.12} parent=11 // pred_check_branch
        %146 = sbr.rel (%p144) target = $region20
      $region19: #{autoprotonet_embedding.12} parent=11 // pred_region
        _
      $region20: #{autoprotonet_embedding.12} parent=11 // pred_fallthru
        _
    $region12: #{autoprotonet_embedding.12} parent=5 // pred_fallthru
      _
    %p147 = scmp.lt.s32.totalorder %s11, 4
    // Predicated region
    $region21: #{autoprotonet_embedding.12} parent=5 // pred_check
      %p148 = pneg %p147
    $region22: #{autoprotonet_embedding.12} parent=5 // pred_check_branch
      %150 = sbr.rel (%p148) target = $region24
    $region23: #{autoprotonet_embedding.12} parent=5 // pred_region
      // Predicated region
      $region25: #{autoprotonet_embedding.12} parent=23 // pred_check
        %p151 = pneg %p31
      $region26: #{autoprotonet_embedding.12} parent=23 // pred_check_branch
        %153 = sbr.rel (%p151) target = $region28
      $region27: #{autoprotonet_embedding.12} parent=23 // pred_region
        %p154 = scmp.lt.s32.totalorder %s11, 3
        %s155 = scalar_select %p154, %s11, 3
        %s156 = smul.addr %s155, 7
        %s157 = smul.addr %s156, 4
        %s158 = scalar_lea.vmem %s0, %s157
      $region28: #{autoprotonet_embedding.12} parent=23 // pred_fallthru
        _
    $region24: #{autoprotonet_embedding.12} parent=5 // pred_fallthru
      _
    %p159 = scmp.le.s32.totalorder 1, %s11
    %p160 = scmp.lt.s32.totalorder %s11, 5
    %p161 = pnand %p159, %p160
    %p162 = pneg %p161
    // Predicated region
    $region29: #{autoprotonet_embedding.12} parent=5 // pred_check
      _
    $region30: #{autoprotonet_embedding.12} parent=5 // pred_check_branch
      %164 = sbr.rel (%p161) target = $region32
    $region31: #{autoprotonet_embedding.12} parent=5 // pred_region
      %s165 = ssub.s32 %s11, 1
      %p166 = scmp.lt.s32.totalorder %s16, 3
      %s167 = scalar_select %p166, %s16, 3
      %s168 = smul.addr %s167, 7
      %s169 = smul.addr %s168, 4
      %s170 = scalar_lea.vmem %s0, %s169
      %p171 = pneg %p37
      %p172 = pneg %p34
      %p173 = pneg %p58
      %p174 = pneg %p55
      %p175 = pneg %p79
      %p176 = pneg %p76
      %p177 = pneg %p105
      %p178 = pneg %p102
      %p179 = scmp.lt.s32.totalorder %s16, 3
      %s180 = scalar_select %p179, %s16, 3
      %s181 = smul.addr %s180, 5
      %s182 = smul.addr %s181, 8
      %s183 = scalar_lea.vmem %s3, %s182
      %p184 = pneg %p126
      %p185 = pneg %p123
      %p186 = scmp.lt.s32.totalorder %s16, 3
      %s187 = scalar_select %p186, %s16, 3
      %s188 = smul.addr %s187, 7
      %s189 = smul.addr %s188, 4
      %s190 = scalar_lea.vmem %s0, %s189
      %p191 = scmp.lt.s32.totalorder %s16, 3
      %s192 = scalar_select %p191, %s16, 3
      %s193 = smul.addr %s192, 5
      %s194 = smul.addr %s193, 8
      %s195 = scalar_lea.vmem %s3, %s194
      %v197 = vld [vmem:[%s190] sm:$0xf]
      %v198 = vld [vmem:[%s190 + $0x4] sm:$0xf]
      %v199 = vld [vmem:[%s190 + $0x8] sm:$0xf]
      %v200 = vld [vmem:[%s190 + $0xc] sm:$0xf]
      %v201 = vld [vmem:[%s190 + $0x10] sm:$0xf]
      %v202 = vld [vmem:[%s190 + $0x14] sm:$0xf]
      %v203 = vld [vmem:[%s190 + $0x18] sm:$0x1]
      %v204 = vld [vmem:[%s1] sm:$0xf]
      %v205 = vld [vmem:[%s1 + $0x4] sm:$0xf]
      %s206 = scalar_lea.vmem %s1, 8
      %v207 = vld [vmem:[%s206] sm:$0xf]
      %v208 = vld [vmem:[%s206 + $0x4] sm:$0xf]
      %v214 = vunpack.c.l.b16 %v197
      %v215 = vunpack.c.l.b16 %v198
      %v216 = vunpack.c.l.b16 %v199
      %v217 = vunpack.c.l.b16 %v200
      %v218 = vunpack.c.l.b16 %v201
      %v219 = vpack.c.b16 %v215, %v214
      %v220 = vpack.c.b16 %v217, %v216
      %v221 = vpack.c.b16 %v218, %v218
      %vm222 = vsmask.f32 7424
      %v224 = vshrl.u32 %v219, 16
      %v226 = vshll.u32 %v219, 16
      %v228 = vrot.slane %v226, 1
      %v229 = vor.u32 %v224, %v228
      %v231 = vshll.u32 %v220, 16
      %v233 = vrot.slane %v231, 1
      %v234 = vsel %vm222, %v229, %v233
      %v235 = vshrl.u32 %v220, 16
      %v237 = vor.u32 %v235, %v233
      %v239 = vshll.u32 %v221, 16
      %v241 = vrot.slane %v239, 1
      %v242 = vsel %vm222, %v237, %v241
      %v243 = vshrl.u32 %v221, 16
      %v245 = vor.u32 %v243, %v241
      %v248 = vunpack.c.l.b16 %v207
      %v249 = vunpack.c.l.b16 %v208
      %v250 = vpack.c.b16 %v249, %v248
      %vm252 = vcmask 130048
      %v254 = vsel %vm252, %v234, 0
      %v257 = vsel %vm252, %v242, 0
      %v260 = vsel %vm252, %v245, 0
      %262 = vmatprep.subr.bf16.mxu0 0
      %263 = vmatpush1.bf16.msra.mxu0 %v250
      %264 = vmatprep.subr.bf16.mxu0 0
      %265 = vmatpush1.bf16.msra.mxu0 0
      %266 = vmatprep.subr.bf16.mxu0 0
      %267 = vmatpush1.bf16.msra.mxu0 0
      %268 = vmatprep.subr.bf16.mxu0 0
      %269 = vmatpush1.bf16.msra.mxu0 0
      %270 = vmatprep.subr.bf16.mxu0 0
      %271 = vmatpush1.bf16.msra.mxu0 0
      %272 = vmatprep.subr.bf16.mxu0 0
      %273 = vmatpush1.bf16.msra.mxu0 0
      %274 = vmatprep.subr.bf16.mxu0 0
      %275 = vmatpush1.bf16.msra.mxu0 0
      %276 = vmatprep.subr.bf16.mxu0 0
      %277 = vmatpush1.bf16.msra.mxu0 0
      %278 = vmatprep.subr.bf16.mxu0 0
      %279 = vmatpush1.bf16.msra.mxu0 0
      %280 = vmatprep.subr.bf16.mxu0 0
      %281 = vmatpush1.bf16.msra.mxu0 0
      %282 = vmatprep.subr.bf16.mxu0 0
      %283 = vmatpush1.bf16.msra.mxu0 0
      %284 = vmatprep.subr.bf16.mxu0 0
      %285 = vmatpush1.bf16.msra.mxu0 0
      %286 = vmatprep.subr.bf16.mxu0 0
      %287 = vmatpush1.bf16.msra.mxu0 0
      %288 = vmatprep.subr.bf16.mxu0 0
      %289 = vmatpush1.bf16.msra.mxu0 0
      %290 = vmatprep.subr.bf16.mxu0 0
      %291 = vmatpush1.bf16.msra.mxu0 0
      %292 = vmatprep.subr.bf16.mxu0 0
      %293 = vmatpush1.bf16.msra.mxu0 0
      %294 = vmatprep.mubr.bf16.mxu0 0
      %295 = vmatmul.mubr.bf16.gmra.mrb[0].mxu0 %v254
      %v296 = vpop.f32.mrb[0].mxu0
      %v297 = vadd.f32 0.0, %v296
      %v298 = vpop.f32.mrb[0].mxu0
      %v299 = vpop.f32.mrb[0].mxu0
      %v300 = vadd.f32 0.0, %v299
      %v301 = vpop.f32.mrb[0].mxu0
      %302 = vmatprep.mubr.bf16.mxu0 0
      %303 = vmatmul.mubr.bf16.gmra.mrb[0].mxu0 %v257
      %v304 = vpop.f32.mrb[0].mxu0
      %v305 = vadd.f32 0.0, %v304
      %v306 = vpop.f32.mrb[0].mxu0
      %v307 = vpop.f32.mrb[0].mxu0
      %v308 = vadd.f32 0.0, %v307
      %v309 = vpop.f32.mrb[0].mxu0
      %310 = vmatprep.mubr.bf16.mxu0 0
      %311 = vmatmul.mubr.bf16.gmra.mrb[0].mxu0 %v260
      %v312 = vpop.f32.mrb[0].mxu0
      %v313 = vadd.f32 0.0, %v312
      %v314 = vpop.f32.mrb[0].mxu0
      %v315 = vpop.f32.mrb[0].mxu0
      %v316 = vpop.f32.mrb[0].mxu0
      %317 = vdwg.mxu0
      %v320 = vunpack.c.l.b16 %v204
      %v321 = vunpack.c.l.b16 %v205
      %v322 = vpack.c.b16 %v321, %v320
      %v324 = vsel %vm252, %v219, 0
      %v326 = vsel %vm252, %v220, 0
      %v328 = vsel %vm252, %v221, 0
      %330 = vmatprep.subr.bf16.mxu0 0
      %331 = vmatpush1.bf16.msra.mxu0 %v322
      %332 = vmatprep.subr.bf16.mxu0 0
      %333 = vmatpush1.bf16.msra.mxu0 0
      %334 = vmatprep.subr.bf16.mxu0 0
      %335 = vmatpush1.bf16.msra.mxu0 0
      %336 = vmatprep.subr.bf16.mxu0 0
      %337 = vmatpush1.bf16.msra.mxu0 0
      %338 = vmatprep.subr.bf16.mxu0 0
      %339 = vmatpush1.bf16.msra.mxu0 0
      %340 = vmatprep.subr.bf16.mxu0 0
      %341 = vmatpush1.bf16.msra.mxu0 0
      %342 = vmatprep.subr.bf16.mxu0 0
      %343 = vmatpush1.bf16.msra.mxu0 0
      %344 = vmatprep.subr.bf16.mxu0 0
      %345 = vmatpush1.bf16.msra.mxu0 0
      %346 = vmatprep.subr.bf16.mxu0 0
      %347 = vmatpush1.bf16.msra.mxu0 0
      %348 = vmatprep.subr.bf16.mxu0 0
      %349 = vmatpush1.bf16.msra.mxu0 0
      %350 = vmatprep.subr.bf16.mxu0 0
      %351 = vmatpush1.bf16.msra.mxu0 0
      %352 = vmatprep.subr.bf16.mxu0 0
      %353 = vmatpush1.bf16.msra.mxu0 0
      %354 = vmatprep.subr.bf16.mxu0 0
      %355 = vmatpush1.bf16.msra.mxu0 0
      %356 = vmatprep.subr.bf16.mxu0 0
      %357 = vmatpush1.bf16.msra.mxu0 0
      %358 = vmatprep.subr.bf16.mxu0 0
      %359 = vmatpush1.bf16.msra.mxu0 0
      %360 = vmatprep.subr.bf16.mxu0 0
      %361 = vmatpush1.bf16.msra.mxu0 0
      %362 = vmatprep.mubr.bf16.mxu0 0
      %363 = vmatmul.mubr.bf16.gmra.mrb[0].mxu0 %v324
      %v364 = vpop.f32.mrb[0].mxu0
      %v365 = vadd.f32 %v297, %v364
      %v366 = vpop.f32.mrb[0].mxu0
      %v367 = vpop.f32.mrb[0].mxu0
      %v368 = vadd.f32 %v300, %v367
      %v369 = vpop.f32.mrb[0].mxu0
      %370 = vmatprep.mubr.bf16.mxu0 0
      %371 = vmatmul.mubr.bf16.gmra.mrb[0].mxu0 %v326
      %v372 = vpop.f32.mrb[0].mxu0
      %v373 = vadd.f32 %v305, %v372
      %v374 = vpop.f32.mrb[0].mxu0
      %v375 = vpop.f32.mrb[0].mxu0
      %v376 = vadd.f32 %v308, %v375
      %v377 = vpop.f32.mrb[0].mxu0
      %378 = vmatprep.mubr.bf16.mxu0 0
      %379 = vmatmul.mubr.bf16.gmra.mrb[0].mxu0 %v328
      %v380 = vpop.f32.mrb[0].mxu0
      %v381 = vadd.f32 %v313, %v380
      %v382 = vpop.f32.mrb[0].mxu0
      %v383 = vpop.f32.mrb[0].mxu0
      %v384 = vpop.f32.mrb[0].mxu0
      %385 = vdwg.mxu0
      %s386 = scalar_lea.vmem %s1, 16
      %v387 = vld [vmem:[%s386] sm:$0xf]
      %v388 = vld [vmem:[%s386 + $0x4] sm:$0xf]
      %vm389 = vcmask 1046528
      %v390 = vrot.slane %v219, 1
      %v391 = vrot.slane %v220, 1
      %v392 = vsel %vm389, %v390, %v391
      %v393 = vrot.slane %v221, 1
      %v394 = vsel %vm389, %v391, %v393
      %v397 = vunpack.c.l.b16 %v387
      %v398 = vunpack.c.l.b16 %v388
      %v399 = vpack.c.b16 %v398, %v397
      %v402 = vsel %vm252, %v392, 0
      %v405 = vsel %vm252, %v394, 0
      %v408 = vsel %vm252, %v393, 0
      %410 = vmatprep.subr.bf16.mxu0 0
      %411 = vmatpush1.bf16.msra.mxu0 %v399
      %412 = vmatprep.subr.bf16.mxu0 0
      %413 = vmatpush1.bf16.msra.mxu0 0
      %414 = vmatprep.subr.bf16.mxu0 0
      %415 = vmatpush1.bf16.msra.mxu0 0
      %416 = vmatprep.subr.bf16.mxu0 0
      %417 = vmatpush1.bf16.msra.mxu0 0
      %418 = vmatprep.subr.bf16.mxu0 0
      %419 = vmatpush1.bf16.msra.mxu0 0
      %420 = vmatprep.subr.bf16.mxu0 0
      %421 = vmatpush1.bf16.msra.mxu0 0
      %422 = vmatprep.subr.bf16.mxu0 0
      %423 = vmatpush1.bf16.msra.mxu0 0
      %424 = vmatprep.subr.bf16.mxu0 0
      %425 = vmatpush1.bf16.msra.mxu0 0
      %426 = vmatprep.subr.bf16.mxu0 0
      %427 = vmatpush1.bf16.msra.mxu0 0
      %428 = vmatprep.subr.bf16.mxu0 0
      %429 = vmatpush1.bf16.msra.mxu0 0
      %430 = vmatprep.subr.bf16.mxu0 0
      %431 = vmatpush1.bf16.msra.mxu0 0
      %432 = vmatprep.subr.bf16.mxu0 0
      %433 = vmatpush1.bf16.msra.mxu0 0
      %434 = vmatprep.subr.bf16.mxu0 0
      %435 = vmatpush1.bf16.msra.mxu0 0
      %436 = vmatprep.subr.bf16.mxu0 0
      %437 = vmatpush1.bf16.msra.mxu0 0
      %438 = vmatprep.subr.bf16.mxu0 0
      %439 = vmatpush1.bf16.msra.mxu0 0
      %440 = vmatprep.subr.bf16.mxu0 0
      %441 = vmatpush1.bf16.msra.mxu0 0
      %442 = vmatprep.mubr.bf16.mxu0 0
      %443 = vmatmul.mubr.bf16.gmra.mrb[0].mxu0 %v402
      %v444 = vpop.f32.mrb[0].mxu0
      %v445 = vadd.f32 0.0, %v444
      %v446 = vpop.f32.mrb[0].mxu0
      %v447 = vpop.f32.mrb[0].mxu0
      %v448 = vadd.f32 0.0, %v447
      %v449 = vpop.f32.mrb[0].mxu0
      %450 = vmatprep.mubr.bf16.mxu0 0
      %451 = vmatmul.mubr.bf16.gmra.mrb[0].mxu0 %v405
      %v452 = vpop.f32.mrb[0].mxu0
      %v453 = vadd.f32 0.0, %v452
      %v454 = vpop.f32.mrb[0].mxu0
      %v455 = vpop.f32.mrb[0].mxu0
      %v456 = vadd.f32 0.0, %v455
      %v457 = vpop.f32.mrb[0].mxu0
      %458 = vmatprep.mubr.bf16.mxu0 0
      %459 = vmatmul.mubr.bf16.gmra.mrb[0].mxu0 %v408
      %v460 = vpop.f32.mrb[0].mxu0
      %v461 = vadd.f32 0.0, %v460
      %v462 = vpop.f32.mrb[0].mxu0
      %v463 = vpop.f32.mrb[0].mxu0
      %v464 = vpop.f32.mrb[0].mxu0
      %465 = vdwg.mxu0
      %v466 = vadd.f32 %v365, %v445
      %v467 = vadd.f32 %v368, %v448
      %v468 = vadd.f32 %v373, %v453
      %v469 = vadd.f32 %v376, %v456
      %v470 = vadd.f32 %v381, %v461
      %s471 = scalar_lea.vmem %s1, 24
      %v472 = vld [vmem:[%s471] sm:$0xf]
      %v473 = vld [vmem:[%s471 + $0x4] sm:$0xf]
      %v475 = vunpack.c.l.b16 %v202
      %v476 = vpack.c.b16 %v475, %v218
      %vm477 = vcmask 1044480
      %v478 = vrot.slane %v219, 3
      %v479 = vrot.slane %v220, 3
      %v480 = vsel %vm477, %v478, %v479
      %v481 = vrot.slane %v476, 3
      %v482 = vsel %vm477, %v479, %v481
      %v485 = vunpack.c.l.b16 %v472
      %v486 = vunpack.c.l.b16 %v473
      %v487 = vpack.c.b16 %v486, %v485
      %v490 = vsel %vm252, %v480, 0
      %v493 = vsel %vm252, %v482, 0
      %v496 = vsel %vm252, %v481, 0
      %498 = vmatprep.subr.bf16.mxu0 0
      %499 = vmatpush1.bf16.msra.mxu0 %v487
      %500 = vmatprep.subr.bf16.mxu0 0
      %501 = vmatpush1.bf16.msra.mxu0 0
      %502 = vmatprep.subr.bf16.mxu0 0
      %503 = vmatpush1.bf16.msra.mxu0 0
      %504 = vmatprep.subr.bf16.mxu0 0
      %505 = vmatpush1.bf16.msra.mxu0 0
      %506 = vmatprep.subr.bf16.mxu0 0
      %507 = vmatpush1.bf16.msra.mxu0 0
      %508 = vmatprep.subr.bf16.mxu0 0
      %509 = vmatpush1.bf16.msra.mxu0 0
      %510 = vmatprep.subr.bf16.mxu0 0
      %511 = vmatpush1.bf16.msra.mxu0 0
      %512 = vmatprep.subr.bf16.mxu0 0
      %513 = vmatpush1.bf16.msra.mxu0 0
      %514 = vmatprep.subr.bf16.mxu0 0
      %515 = vmatpush1.bf16.msra.mxu0 0
      %516 = vmatprep.subr.bf16.mxu0 0
      %517 = vmatpush1.bf16.msra.mxu0 0
      %518 = vmatprep.subr.bf16.mxu0 0
      %519 = vmatpush1.bf16.msra.mxu0 0
      %520 = vmatprep.subr.bf16.mxu0 0
      %521 = vmatpush1.bf16.msra.mxu0 0
      %522 = vmatprep.subr.bf16.mxu0 0
      %523 = vmatpush1.bf16.msra.mxu0 0
      %524 = vmatprep.subr.bf16.mxu0 0
      %525 = vmatpush1.bf16.msra.mxu0 0
      %526 = vmatprep.subr.bf16.mxu0 0
      %527 = vmatpush1.bf16.msra.mxu0 0
      %528 = vmatprep.subr.bf16.mxu0 0
      %529 = vmatpush1.bf16.msra.mxu0 0
      %530 = vmatprep.mubr.bf16.mxu0 0
      %531 = vmatmul.mubr.bf16.gmra.mrb[0].mxu0 %v490
      %v532 = vpop.f32.mrb[0].mxu0
      %v533 = vadd.f32 0.0, %v532
      %v534 = vpop.f32.mrb[0].mxu0
      %v535 = vpop.f32.mrb[0].mxu0
      %v536 = vadd.f32 0.0, %v535
      %v537 = vpop.f32.mrb[0].mxu0
      %538 = vmatprep.mubr.bf16.mxu0 0
      %539 = vmatmul.mubr.bf16.gmra.mrb[0].mxu0 %v493
      %v540 = vpop.f32.mrb[0].mxu0
      %v541 = vadd.f32 0.0, %v540
      %v542 = vpop.f32.mrb[0].mxu0
      %v543 = vpop.f32.mrb[0].mxu0
      %v544 = vadd.f32 0.0, %v543
      %v545 = vpop.f32.mrb[0].mxu0
      %546 = vmatprep.mubr.bf16.mxu0 0
      %547 = vmatmul.mubr.bf16.gmra.mrb[0].mxu0 %v496
      %v548 = vpop.f32.mrb[0].mxu0
      %v549 = vadd.f32 0.0, %v548
      %v550 = vpop.f32.mrb[0].mxu0
      %v551 = vpop.f32.mrb[0].mxu0
      %v552 = vpop.f32.mrb[0].mxu0
      %553 = vdwg.mxu0
      %v554 = vadd.f32 %v466, %v533
      %v555 = vadd.f32 %v467, %v536
      %v556 = vadd.f32 %v468, %v541
      %v557 = vadd.f32 %v469, %v544
      %v558 = vadd.f32 %v470, %v549
      %s559 = scalar_lea.vmem %s1, 32
      %v560 = vld [vmem:[%s559] sm:$0xf]
      %v561 = vld [vmem:[%s559 + $0x4] sm:$0xf]
      %vm562 = vsmask.f32 4352
      %v563 = vrot.slane %v224, 3
      %v564 = vrot.slane %v226, 4
      %v565 = vor.u32 %v563, %v564
      %v566 = vrot.slane %v235, 3
      %v567 = vrot.slane %v231, 4
      %v568 = vor.u32 %v566, %v567
      %v569 = vsel %vm562, %v565, %v568
      %v571 = vshrl.u32 %v476, 16
      %v573 = vrot.slane %v571, 3
      %v574 = vshll.u32 %v476, 16
      %v576 = vrot.slane %v574, 4
      %v577 = vor.u32 %v573, %v576
      %v578 = vsel %vm562, %v568, %v577
      %v581 = vunpack.c.l.b16 %v560
      %v582 = vunpack.c.l.b16 %v561
      %v583 = vpack.c.b16 %v582, %v581
      %v586 = vsel %vm252, %v569, 0
      %v589 = vsel %vm252, %v578, 0
      %v592 = vsel %vm252, %v577, 0
      %594 = vmatprep.subr.bf16.mxu0 0
      %595 = vmatpush1.bf16.msra.mxu0 %v583
      %596 = vmatprep.subr.bf16.mxu0 0
      %597 = vmatpush1.bf16.msra.mxu0 0
      %598 = vmatprep.subr.bf16.mxu0 0
      %599 = vmatpush1.bf16.msra.mxu0 0
      %600 = vmatprep.subr.bf16.mxu0 0
      %601 = vmatpush1.bf16.msra.mxu0 0
      %602 = vmatprep.subr.bf16.mxu0 0
      %603 = vmatpush1.bf16.msra.mxu0 0
      %604 = vmatprep.subr.bf16.mxu0 0
      %605 = vmatpush1.bf16.msra.mxu0 0
      %606 = vmatprep.subr.bf16.mxu0 0
      %607 = vmatpush1.bf16.msra.mxu0 0
      %608 = vmatprep.subr.bf16.mxu0 0
      %609 = vmatpush1.bf16.msra.mxu0 0
      %610 = vmatprep.subr.bf16.mxu0 0
      %611 = vmatpush1.bf16.msra.mxu0 0
      %612 = vmatprep.subr.bf16.mxu0 0
      %613 = vmatpush1.bf16.msra.mxu0 0
      %614 = vmatprep.subr.bf16.mxu0 0
      %615 = vmatpush1.bf16.msra.mxu0 0
      %616 = vmatprep.subr.bf16.mxu0 0
      %617 = vmatpush1.bf16.msra.mxu0 0
      %618 = vmatprep.subr.bf16.mxu0 0
      %619 = vmatpush1.bf16.msra.mxu0 0
      %620 = vmatprep.subr.bf16.mxu0 0
      %621 = vmatpush1.bf16.msra.mxu0 0
      %622 = vmatprep.subr.bf16.mxu0 0
      %623 = vmatpush1.bf16.msra.mxu0 0
      %624 = vmatprep.subr.bf16.mxu0 0
      %625 = vmatpush1.bf16.msra.mxu0 0
      %626 = vmatprep.mubr.bf16.mxu0 0
      %627 = vmatmul.mubr.bf16.gmra.mrb[0].mxu0 %v586
      %v628 = vpop.f32.mrb[0].mxu0
      %v629 = vadd.f32 0.0, %v628
      %v630 = vpop.f32.mrb[0].mxu0
      %v631 = vpop.f32.mrb[0].mxu0
      %v632 = vadd.f32 0.0, %v631
      %v633 = vpop.f32.mrb[0].mxu0
      %634 = vmatprep.mubr.bf16.mxu0 0
      %635 = vmatmul.mubr.bf16.gmra.mrb[0].mxu0 %v589
      %v636 = vpop.f32.mrb[0].mxu0
      %v637 = vadd.f32 0.0, %v636
      %v638 = vpop.f32.mrb[0].mxu0
      %v639 = vpop.f32.mrb[0].mxu0
      %v640 = vadd.f32 0.0, %v639
      %v641 = vpop.f32.mrb[0].mxu0
      %642 = vmatprep.mubr.bf16.mxu0 0
      %643 = vmatmul.mubr.bf16.gmra.mrb[0].mxu0 %v592
      %v644 = vpop.f32.mrb[0].mxu0
      %v645 = vadd.f32 0.0, %v644
      %v646 = vpop.f32.mrb[0].mxu0
      %v647 = vpop.f32.mrb[0].mxu0
      %v648 = vpop.f32.mrb[0].mxu0
      %649 = vdwg.mxu0
      %v650 = vadd.f32 %v554, %v629
      %v651 = vadd.f32 %v555, %v632
      %v652 = vadd.f32 %v556, %v637
      %v653 = vadd.f32 %v557, %v640
      %v654 = vadd.f32 %v558, %v645
      %s655 = scalar_lea.vmem %s1, 40
      %v656 = vld [vmem:[%s655] sm:$0xf]
      %v657 = vld [vmem:[%s655 + $0x4] sm:$0xf]
      %v658 = vpack.c.b16 %v216, %v215
      %v659 = vpack.c.b16 %v218, %v217
      %v660 = vpack.c.b16 %v475, %v475
      %v663 = vunpack.c.l.b16 %v656
      %v664 = vunpack.c.l.b16 %v657
      %v665 = vpack.c.b16 %v664, %v663
      %v668 = vsel %vm252, %v658, 0
      %v671 = vsel %vm252, %v659, 0
      %v674 = vsel %vm252, %v660, 0
      %676 = vmatprep.subr.bf16.mxu0 0
      %677 = vmatpush1.bf16.msra.mxu0 %v665
      %678 = vmatprep.subr.bf16.mxu0 0
      %679 = vmatpush1.bf16.msra.mxu0 0
      %680 = vmatprep.subr.bf16.mxu0 0
      %681 = vmatpush1.bf16.msra.mxu0 0
      %682 = vmatprep.subr.bf16.mxu0 0
      %683 = vmatpush1.bf16.msra.mxu0 0
      %684 = vmatprep.subr.bf16.mxu0 0
      %685 = vmatpush1.bf16.msra.mxu0 0
      %686 = vmatprep.subr.bf16.mxu0 0
      %687 = vmatpush1.bf16.msra.mxu0 0
      %688 = vmatprep.subr.bf16.mxu0 0
      %689 = vmatpush1.bf16.msra.mxu0 0
      %690 = vmatprep.subr.bf16.mxu0 0
      %691 = vmatpush1.bf16.msra.mxu0 0
      %692 = vmatprep.subr.bf16.mxu0 0
      %693 = vmatpush1.bf16.msra.mxu0 0
      %694 = vmatprep.subr.bf16.mxu0 0
      %695 = vmatpush1.bf16.msra.mxu0 0
      %696 = vmatprep.subr.bf16.mxu0 0
      %697 = vmatpush1.bf16.msra.mxu0 0
      %698 = vmatprep.subr.bf16.mxu0 0
      %699 = vmatpush1.bf16.msra.mxu0 0
      %700 = vmatprep.subr.bf16.mxu0 0
      %701 = vmatpush1.bf16.msra.mxu0 0
      %702 = vmatprep.subr.bf16.mxu0 0
      %703 = vmatpush1.bf16.msra.mxu0 0
      %704 = vmatprep.subr.bf16.mxu0 0
      %705 = vmatpush1.bf16.msra.mxu0 0
      %706 = vmatprep.subr.bf16.mxu0 0
      %707 = vmatpush1.bf16.msra.mxu0 0
      %708 = vmatprep.mubr.bf16.mxu0 0
      %709 = vmatmul.mubr.bf16.gmra.mrb[0].mxu0 %v668
      %v710 = vpop.f32.mrb[0].mxu0
      %v711 = vadd.f32 0.0, %v710
      %v712 = vpop.f32.mrb[0].mxu0
      %v713 = vpop.f32.mrb[0].mxu0
      %v714 = vadd.f32 0.0, %v713
      %v715 = vpop.f32.mrb[0].mxu0
      %716 = vmatprep.mubr.bf16.mxu0 0
      %717 = vmatmul.mubr.bf16.gmra.mrb[0].mxu0 %v671
      %v718 = vpop.f32.mrb[0].mxu0
      %v719 = vadd.f32 0.0, %v718
      %v720 = vpop.f32.mrb[0].mxu0
      %v721 = vpop.f32.mrb[0].mxu0
      %v722 = vadd.f32 0.0, %v721
      %v723 = vpop.f32.mrb[0].mxu0
      %724 = vmatprep.mubr.bf16.mxu0 0
      %725 = vmatmul.mubr.bf16.gmra.mrb[0].mxu0 %v674
      %v726 = vpop.f32.mrb[0].mxu0
      %v727 = vadd.f32 0.0, %v726
      %v728 = vpop.f32.mrb[0].mxu0
      %v729 = vpop.f32.mrb[0].mxu0
      %v730 = vpop.f32.mrb[0].mxu0
      %731 = vdwg.mxu0
      %v732 = vadd.f32 %v650, %v711
      %v733 = vadd.f32 %v651, %v714
      %v734 = vadd.f32 %v652, %v719
      %v735 = vadd.f32 %v653, %v722
      %v736 = vadd.f32 %v654, %v727
      %s737 = scalar_lea.vmem %s1, 48
      %v738 = vld [vmem:[%s737] sm:$0xf]
      %v739 = vld [vmem:[%s737 + $0x4] sm:$0xf]
      %vm740 = vcmask 1045504
      %v741 = vrot.slane %v658, 2
      %v742 = vrot.slane %v659, 2
      %v743 = vsel %vm740, %v741, %v742
      %v744 = vrot.slane %v660, 2
      %v745 = vsel %vm740, %v742, %v744
      %v748 = vunpack.c.l.b16 %v738
      %v749 = vunpack.c.l.b16 %v739
      %v750 = vpack.c.b16 %v749, %v748
      %v753 = vsel %vm252, %v743, 0
      %v756 = vsel %vm252, %v745, 0
      %v759 = vsel %vm252, %v744, 0
      %761 = vmatprep.subr.bf16.mxu0 0
      %762 = vmatpush1.bf16.msra.mxu0 %v750
      %763 = vmatprep.subr.bf16.mxu0 0
      %764 = vmatpush1.bf16.msra.mxu0 0
      %765 = vmatprep.subr.bf16.mxu0 0
      %766 = vmatpush1.bf16.msra.mxu0 0
      %767 = vmatprep.subr.bf16.mxu0 0
      %768 = vmatpush1.bf16.msra.mxu0 0
      %769 = vmatprep.subr.bf16.mxu0 0
      %770 = vmatpush1.bf16.msra.mxu0 0
      %771 = vmatprep.subr.bf16.mxu0 0
      %772 = vmatpush1.bf16.msra.mxu0 0
      %773 = vmatprep.subr.bf16.mxu0 0
      %774 = vmatpush1.bf16.msra.mxu0 0
      %775 = vmatprep.subr.bf16.mxu0 0
      %776 = vmatpush1.bf16.msra.mxu0 0
      %777 = vmatprep.subr.bf16.mxu0 0
      %778 = vmatpush1.bf16.msra.mxu0 0
      %779 = vmatprep.subr.bf16.mxu0 0
      %780 = vmatpush1.bf16.msra.mxu0 0
      %781 = vmatprep.subr.bf16.mxu0 0
      %782 = vmatpush1.bf16.msra.mxu0 0
      %783 = vmatprep.subr.bf16.mxu0 0
      %784 = vmatpush1.bf16.msra.mxu0 0
      %785 = vmatprep.subr.bf16.mxu0 0
      %786 = vmatpush1.bf16.msra.mxu0 0
      %787 = vmatprep.subr.bf16.mxu0 0
      %788 = vmatpush1.bf16.msra.mxu0 0
      %789 = vmatprep.subr.bf16.mxu0 0
      %790 = vmatpush1.bf16.msra.mxu0 0
      %791 = vmatprep.subr.bf16.mxu0 0
      %792 = vmatpush1.bf16.msra.mxu0 0
      %793 = vmatprep.mubr.bf16.mxu0 0
      %794 = vmatmul.mubr.bf16.gmra.mrb[0].mxu0 %v753
      %v795 = vpop.f32.mrb[0].mxu0
      %v796 = vadd.f32 0.0, %v795
      %v797 = vpop.f32.mrb[0].mxu0
      %v798 = vpop.f32.mrb[0].mxu0
      %v799 = vadd.f32 0.0, %v798
      %v800 = vpop.f32.mrb[0].mxu0
      %801 = vmatprep.mubr.bf16.mxu0 0
      %802 = vmatmul.mubr.bf16.gmra.mrb[0].mxu0 %v756
      %v803 = vpop.f32.mrb[0].mxu0
      %v804 = vadd.f32 0.0, %v803
      %v805 = vpop.f32.mrb[0].mxu0
      %v806 = vpop.f32.mrb[0].mxu0
      %v807 = vadd.f32 0.0, %v806
      %v808 = vpop.f32.mrb[0].mxu0
      %809 = vmatprep.mubr.bf16.mxu0 0
      %810 = vmatmul.mubr.bf16.gmra.mrb[0].mxu0 %v759
      %v811 = vpop.f32.mrb[0].mxu0
      %v812 = vadd.f32 0.0, %v811
      %v813 = vpop.f32.mrb[0].mxu0
      %v814 = vpop.f32.mrb[0].mxu0
      %v815 = vpop.f32.mrb[0].mxu0
      %816 = vdwg.mxu0
      %v817 = vadd.f32 %v732, %v796
      %v818 = vadd.f32 %v733, %v799
      %v819 = vadd.f32 %v734, %v804
      %v820 = vadd.f32 %v735, %v807
      %v821 = vadd.f32 %v736, %v812
      %s822 = scalar_lea.vmem %s1, 56
      %v823 = vld [vmem:[%s822] sm:$0xf]
      %v824 = vld [vmem:[%s822 + $0x4] sm:$0xf]
      %v826 = vunpack.c.l.b16 %v203
      %v827 = vpack.c.b16 %v826, %v475
      %vm828 = vsmask.f32 5376
      %v829 = vshrl.u32 %v658, 16
      %v831 = vrot.slane %v829, 2
      %v832 = vshll.u32 %v658, 16
      %v834 = vrot.slane %v832, 3
      %v835 = vor.u32 %v831, %v834
      %v836 = vshrl.u32 %v659, 16
      %v838 = vrot.slane %v836, 2
      %v839 = vshll.u32 %v659, 16
      %v841 = vrot.slane %v839, 3
      %v842 = vor.u32 %v838, %v841
      %v843 = vsel %vm828, %v835, %v842
      %v845 = vshrl.u32 %v827, 16
      %v847 = vrot.slane %v845, 2
      %v848 = vshll.u32 %v827, 16
      %v850 = vrot.slane %v848, 3
      %v851 = vor.u32 %v847, %v850
      %v852 = vsel %vm828, %v842, %v851
      %v855 = vunpack.c.l.b16 %v823
      %v856 = vunpack.c.l.b16 %v824
      %v857 = vpack.c.b16 %v856, %v855
      %v860 = vsel %vm252, %v843, 0
      %v863 = vsel %vm252, %v852, 0
      %v866 = vsel %vm252, %v851, 0
      %868 = vmatprep.subr.bf16.mxu0 0
      %869 = vmatpush1.bf16.msra.mxu0 %v857
      %870 = vmatprep.subr.bf16.mxu0 0
      %871 = vmatpush1.bf16.msra.mxu0 0
      %872 = vmatprep.subr.bf16.mxu0 0
      %873 = vmatpush1.bf16.msra.mxu0 0
      %874 = vmatprep.subr.bf16.mxu0 0
      %875 = vmatpush1.bf16.msra.mxu0 0
      %876 = vmatprep.subr.bf16.mxu0 0
      %877 = vmatpush1.bf16.msra.mxu0 0
      %878 = vmatprep.subr.bf16.mxu0 0
      %879 = vmatpush1.bf16.msra.mxu0 0
      %880 = vmatprep.subr.bf16.mxu0 0
      %881 = vmatpush1.bf16.msra.mxu0 0
      %882 = vmatprep.subr.bf16.mxu0 0
      %883 = vmatpush1.bf16.msra.mxu0 0
      %884 = vmatprep.subr.bf16.mxu0 0
      %885 = vmatpush1.bf16.msra.mxu0 0
      %886 = vmatprep.subr.bf16.mxu0 0
      %887 = vmatpush1.bf16.msra.mxu0 0
      %888 = vmatprep.subr.bf16.mxu0 0
      %889 = vmatpush1.bf16.msra.mxu0 0
      %890 = vmatprep.subr.bf16.mxu0 0
      %891 = vmatpush1.bf16.msra.mxu0 0
      %892 = vmatprep.subr.bf16.mxu0 0
      %893 = vmatpush1.bf16.msra.mxu0 0
      %894 = vmatprep.subr.bf16.mxu0 0
      %895 = vmatpush1.bf16.msra.mxu0 0
      %896 = vmatprep.subr.bf16.mxu0 0
      %897 = vmatpush1.bf16.msra.mxu0 0
      %898 = vmatprep.subr.bf16.mxu0 0
      %899 = vmatpush1.bf16.msra.mxu0 0
      %900 = vmatprep.mubr.bf16.mxu0 0
      %901 = vmatmul.mubr.bf16.gmra.mrb[0].mxu0 %v860
      %v902 = vpop.f32.mrb[0].mxu0
      %v903 = vadd.f32 0.0, %v902
      %v904 = vpop.f32.mrb[0].mxu0
      %v905 = vpop.f32.mrb[0].mxu0
      %v906 = vadd.f32 0.0, %v905
      %v907 = vpop.f32.mrb[0].mxu0
      %908 = vmatprep.mubr.bf16.mxu0 0
      %909 = vmatmul.mubr.bf16.gmra.mrb[0].mxu0 %v863
      %v910 = vpop.f32.mrb[0].mxu0
      %v911 = vadd.f32 0.0, %v910
      %v912 = vpop.f32.mrb[0].mxu0
      %v913 = vpop.f32.mrb[0].mxu0
      %v914 = vadd.f32 0.0, %v913
      %v915 = vpop.f32.mrb[0].mxu0
      %916 = vmatprep.mubr.bf16.mxu0 0
      %917 = vmatmul.mubr.bf16.gmra.mrb[0].mxu0 %v866
      %v918 = vpop.f32.mrb[0].mxu0
      %v919 = vadd.f32 0.0, %v918
      %v920 = vpop.f32.mrb[0].mxu0
      %v921 = vpop.f32.mrb[0].mxu0
      %v922 = vpop.f32.mrb[0].mxu0
      %923 = vdwg.mxu0
      %v924 = vadd.f32 %v817, %v903
      %v925 = vadd.f32 %v818, %v906
      %v926 = vadd.f32 %v819, %v911
      %v927 = vadd.f32 %v820, %v914
      %v928 = vadd.f32 %v821, %v919
      %s929 = scalar_lea.vmem %s1, 64
      %v930 = vld [vmem:[%s929] sm:$0xf]
      %v931 = vld [vmem:[%s929 + $0x4] sm:$0xf]
      %v932 = vrot.slane %v658, 3
      %v933 = vrot.slane %v659, 3
      %v934 = vsel %vm477, %v932, %v933
      %v935 = vrot.slane %v827, 3
      %v936 = vsel %vm477, %v933, %v935
      %v939 = vunpack.c.l.b16 %v930
      %v940 = vunpack.c.l.b16 %v931
      %v941 = vpack.c.b16 %v940, %v939
      %v944 = vsel %vm252, %v934, 0
      %v947 = vsel %vm252, %v936, 0
      %v950 = vsel %vm252, %v935, 0
      %952 = vmatprep.subr.bf16.mxu0 0
      %953 = vmatpush1.bf16.msra.mxu0 %v941
      %954 = vmatprep.subr.bf16.mxu0 0
      %955 = vmatpush1.bf16.msra.mxu0 0
      %956 = vmatprep.subr.bf16.mxu0 0
      %957 = vmatpush1.bf16.msra.mxu0 0
      %958 = vmatprep.subr.bf16.mxu0 0
      %959 = vmatpush1.bf16.msra.mxu0 0
      %960 = vmatprep.subr.bf16.mxu0 0
      %961 = vmatpush1.bf16.msra.mxu0 0
      %962 = vmatprep.subr.bf16.mxu0 0
      %963 = vmatpush1.bf16.msra.mxu0 0
      %964 = vmatprep.subr.bf16.mxu0 0
      %965 = vmatpush1.bf16.msra.mxu0 0
      %966 = vmatprep.subr.bf16.mxu0 0
      %967 = vmatpush1.bf16.msra.mxu0 0
      %968 = vmatprep.subr.bf16.mxu0 0
      %969 = vmatpush1.bf16.msra.mxu0 0
      %970 = vmatprep.subr.bf16.mxu0 0
      %971 = vmatpush1.bf16.msra.mxu0 0
      %972 = vmatprep.subr.bf16.mxu0 0
      %973 = vmatpush1.bf16.msra.mxu0 0
      %974 = vmatprep.subr.bf16.mxu0 0
      %975 = vmatpush1.bf16.msra.mxu0 0
      %976 = vmatprep.subr.bf16.mxu0 0
      %977 = vmatpush1.bf16.msra.mxu0 0
      %978 = vmatprep.subr.bf16.mxu0 0
      %979 = vmatpush1.bf16.msra.mxu0 0
      %980 = vmatprep.subr.bf16.mxu0 0
      %981 = vmatpush1.bf16.msra.mxu0 0
      %982 = vmatprep.subr.bf16.mxu0 0
      %983 = vmatpush1.bf16.msra.mxu0 0
      %984 = vmatprep.mubr.bf16.mxu0 0
      %985 = vmatmul.mubr.bf16.gmra.mrb[0].mxu0 %v944
      %v986 = vpop.f32.mrb[0].mxu0
      %v987 = vadd.f32 0.0, %v986
      %v988 = vpop.f32.mrb[0].mxu0
      %v989 = vpop.f32.mrb[0].mxu0
      %v990 = vadd.f32 0.0, %v989
      %v991 = vpop.f32.mrb[0].mxu0
      %992 = vmatprep.mubr.bf16.mxu0 0
      %993 = vmatmul.mubr.bf16.gmra.mrb[0].mxu0 %v947
      %v994 = vpop.f32.mrb[0].mxu0
      %v995 = vadd.f32 0.0, %v994
      %v996 = vpop.f32.mrb[0].mxu0
      %v997 = vpop.f32.mrb[0].mxu0
      %v998 = vadd.f32 0.0, %v997
      %v999 = vpop.f32.mrb[0].mxu0
      %1000 = vmatprep.mubr.bf16.mxu0 0
      %1001 = vmatmul.mubr.bf16.gmra.mrb[0].mxu0 %v950
      %v1002 = vpop.f32.mrb[0].mxu0
      %v1003 = vadd.f32 0.0, %v1002
      %v1004 = vpop.f32.mrb[0].mxu0
      %v1005 = vpop.f32.mrb[0].mxu0
      %v1006 = vpop.f32.mrb[0].mxu0
      %1007 = vdwg.mxu0
      %v1008 = vadd.f32 %v924, %v987
      %v1009 = vadd.f32 %v925, %v990
      %v1010 = vadd.f32 %v926, %v995
      %v1011 = vadd.f32 %v927, %v998
      %v1012 = vadd.f32 %v928, %v1003
      %1013 = vst.msk [vmem:[%s195] sm:$0xff] %vm252, %v1008
      %1014 = vst.msk [vmem:[%s195 + $0x8] sm:$0xff] %vm252, %v1009
      %1015 = vst.msk [vmem:[%s195 + $0x10] sm:$0xff] %vm252, %v1010
      %1016 = vst.msk [vmem:[%s195 + $0x18] sm:$0xff] %vm252, %v1011
      %vm1017 = vcmask 125952
      %1018 = vst.msk [vmem:[%s195 + $0x20] sm:$0xf] %vm1017, %v1012
      %v1019 = vld [vmem:[%s2] sm:$0x1]
      %vm1020 = vcmask 293888
      %v1022 = vsel %vm1020, %v1019, 0
      %vm1024 = vcmask 1043456
      %v1026 = vsel %vm1024, %v1012, 0
      %1028 = vmatprep.subr.mxu0 0.0
      %1029 = vmatpush1.msra.mxu0 %v1008
      %1030 = vmatprep.subr.mxu0 0.0
      %1031 = vmatpush1.msra.mxu0 %v1009
      %1032 = vmatprep.subr.mxu0 0.0
      %1033 = vmatpush1.msra.mxu0 %v1010
      %1034 = vmatprep.subr.mxu0 0.0
      %1035 = vmatpush1.msra.mxu0 %v1011
      %1036 = vmatprep.subr.mxu0 0.0
      %1037 = vmatpush1.msra.mxu0 %v1026
      %1038 = vmatprep.subr.mxu0 0.0
      %1039 = vmatpush1.msra.mxu0 0.0
      %1040 = vmatprep.subr.mxu0 0.0
      %1041 = vmatpush1.msra.mxu0 0.0
      %1042 = vmatprep.subr.mxu0 0.0
      %1043 = vmatpush1.msra.mxu0 0.0
      %1044 = vmatprep.subr.mxu0 0.0
      %1045 = vmatpush1.msra.mxu0 0.0
      %1046 = vmatprep.subr.mxu0 0.0
      %1047 = vmatpush1.msra.mxu0 0.0
      %1048 = vmatprep.subr.mxu0 0.0
      %1049 = vmatpush1.msra.mxu0 0.0
      %1050 = vmatprep.subr.mxu0 0.0
      %1051 = vmatpush1.msra.mxu0 0.0
      %1052 = vmatprep.subr.mxu0 0.0
      %1053 = vmatpush1.msra.mxu0 0.0
      %1054 = vmatprep.subr.mxu0 0.0
      %1055 = vmatpush1.msra.mxu0 0.0
      %1056 = vmatprep.subr.mxu0 0.0
      %1057 = vmatpush1.msra.mxu0 0.0
      %1058 = vmatprep.subr.mxu0 0.0
      %1059 = vmatpush1.msra.mxu0 0.0
      %1060 = vmatprep.subr.mxu0 0.0
      %1061 = vmatpush1.msra.mxu0 0.0
      %1062 = vmatprep.subr.mxu0 0.0
      %1063 = vmatpush1.msra.mxu0 0.0
      %1064 = vmatprep.subr.mxu0 0.0
      %1065 = vmatpush1.msra.mxu0 0.0
      %1066 = vmatprep.subr.mxu0 0.0
      %1067 = vmatpush1.msra.mxu0 0.0
      %1068 = vmatprep.subr.mxu0 0.0
      %1069 = vmatpush1.msra.mxu0 0.0
      %1070 = vmatprep.subr.mxu0 0.0
      %1071 = vmatpush1.msra.mxu0 0.0
      %1072 = vmatprep.subr.mxu0 0.0
      %1073 = vmatpush1.msra.mxu0 0.0
      %1074 = vmatprep.subr.mxu0 0.0
      %1075 = vmatpush1.msra.mxu0 0.0
      %1076 = vmatprep.subr.mxu0 0.0
      %1077 = vmatpush1.msra.mxu0 0.0
      %1078 = vmatprep.subr.mxu0 0.0
      %1079 = vmatpush1.msra.mxu0 0.0
      %1080 = vmatprep.subr.mxu0 0.0
      %1081 = vmatpush1.msra.mxu0 0.0
      %1082 = vmatprep.subr.mxu0 0.0
      %1083 = vmatpush1.msra.mxu0 0.0
      %1084 = vmatprep.subr.mxu0 0.0
      %1085 = vmatpush1.msra.mxu0 0.0
      %1086 = vmatprep.subr.mxu0 0.0
      %1087 = vmatpush1.msra.mxu0 0.0
      %1088 = vmatprep.subr.mxu0 0.0
      %1089 = vmatpush1.msra.mxu0 0.0
      %1090 = vmatprep.subr.mxu0 0.0
      %1091 = vmatpush1.msra.mxu0 0.0
      %1092 = vmatprep.mubr.f32.mxu0 0.0
      %1093 = vmatmul.mubr.f32.gmra.mrb[0].mxu0 %v1022
      %v1094 = vpop.f32.mrb[0].mxu0
      %v1095 = vadd.f32 0.0, %v1094
      %v1096 = vpop.f32.mrb[0].mxu0
      %1097 = vdwg.mxu0
      %v1098 = vmul.f32 %v1008, %v1008
      %v1099 = vmul.f32 %v1009, %v1009
      %v1100 = vmul.f32 %v1010, %v1010
      %v1101 = vmul.f32 %v1011, %v1011
      %v1102 = vmul.f32 %v1012, %v1012
      %v1104 = vsel %vm1024, %v1102, 0
      %1106 = vmatprep.subr.mxu0 0.0
      %1107 = vmatpush1.msra.mxu0 %v1098
      %1108 = vmatprep.subr.mxu0 0.0
      %1109 = vmatpush1.msra.mxu0 %v1099
      %1110 = vmatprep.subr.mxu0 0.0
      %1111 = vmatpush1.msra.mxu0 %v1100
      %1112 = vmatprep.subr.mxu0 0.0
      %1113 = vmatpush1.msra.mxu0 %v1101
      %1114 = vmatprep.subr.mxu0 0.0
      %1115 = vmatpush1.msra.mxu0 %v1104
      %1116 = vmatprep.subr.mxu0 0.0
      %1117 = vmatpush1.msra.mxu0 0.0
      %1118 = vmatprep.subr.mxu0 0.0
      %1119 = vmatpush1.msra.mxu0 0.0
      %1120 = vmatprep.subr.mxu0 0.0
      %1121 = vmatpush1.msra.mxu0 0.0
      %1122 = vmatprep.subr.mxu0 0.0
      %1123 = vmatpush1.msra.mxu0 0.0
      %1124 = vmatprep.subr.mxu0 0.0
      %1125 = vmatpush1.msra.mxu0 0.0
      %1126 = vmatprep.subr.mxu0 0.0
      %1127 = vmatpush1.msra.mxu0 0.0
      %1128 = vmatprep.subr.mxu0 0.0
      %1129 = vmatpush1.msra.mxu0 0.0
      %1130 = vmatprep.subr.mxu0 0.0
      %1131 = vmatpush1.msra.mxu0 0.0
      %1132 = vmatprep.subr.mxu0 0.0
      %1133 = vmatpush1.msra.mxu0 0.0
      %1134 = vmatprep.subr.mxu0 0.0
      %1135 = vmatpush1.msra.mxu0 0.0
      %1136 = vmatprep.subr.mxu0 0.0
      %1137 = vmatpush1.msra.mxu0 0.0
      %1138 = vmatprep.subr.mxu0 0.0
      %1139 = vmatpush1.msra.mxu0 0.0
      %1140 = vmatprep.subr.mxu0 0.0
      %1141 = vmatpush1.msra.mxu0 0.0
      %1142 = vmatprep.subr.mxu0 0.0
      %1143 = vmatpush1.msra.mxu0 0.0
      %1144 = vmatprep.subr.mxu0 0.0
      %1145 = vmatpush1.msra.mxu0 0.0
      %1146 = vmatprep.subr.mxu0 0.0
      %1147 = vmatpush1.msra.mxu0 0.0
      %1148 = vmatprep.subr.mxu0 0.0
      %1149 = vmatpush1.msra.mxu0 0.0
      %1150 = vmatprep.subr.mxu0 0.0
      %1151 = vmatpush1.msra.mxu0 0.0
      %1152 = vmatprep.subr.mxu0 0.0
      %1153 = vmatpush1.msra.mxu0 0.0
      %1154 = vmatprep.subr.mxu0 0.0
      %1155 = vmatpush1.msra.mxu0 0.0
      %1156 = vmatprep.subr.mxu0 0.0
      %1157 = vmatpush1.msra.mxu0 0.0
      %1158 = vmatprep.subr.mxu0 0.0
      %1159 = vmatpush1.msra.mxu0 0.0
      %1160 = vmatprep.subr.mxu0 0.0
      %1161 = vmatpush1.msra.mxu0 0.0
      %1162 = vmatprep.subr.mxu0 0.0
      %1163 = vmatpush1.msra.mxu0 0.0
      %1164 = vmatprep.subr.mxu0 0.0
      %1165 = vmatpush1.msra.mxu0 0.0
      %1166 = vmatprep.subr.mxu0 0.0
      %1167 = vmatpush1.msra.mxu0 0.0
      %1168 = vmatprep.subr.mxu0 0.0
      %1169 = vmatpush1.msra.mxu0 0.0
      %1170 = vmatprep.mubr.f32.mxu0 0.0
      %1171 = vmatmul.mubr.f32.gmra.mrb[0].mxu0 %v1022
      %v1172 = vpop.f32.mrb[0].mxu0
      %v1173 = vadd.f32 0.0, %v1172
      %v1174 = vpop.f32.mrb[0].mxu0
      %1175 = vdwg.mxu0
      %p1176 = scmp.eq.s32.totalorder %s16, 0
      // Predicated region
      $region33: #{autoprotonet_embedding.12} parent=31 // pred_check
        %p1177 = pneg %p1176
      $region34: #{autoprotonet_embedding.12} parent=31 // pred_check_branch
        %1179 = sbr.rel (%p1177) target = $region36
      $region35: #{autoprotonet_embedding.12} parent=31 // pred_region
        %vm1180 = vcmask 123904
        %1181 = vst.msk [vmem:[%s4] sm:$0x3] %vm1180, 0.0
      $region36: #{autoprotonet_embedding.12} parent=31 // pred_fallthru
        _
      %v1182 = vld [vmem:[%s4] sm:$0x3]
      %v1184 = vrot.slane %v1173, 7
      %vm1186 = vcmask 1040384
      %v1187 = vsel %vm1186, %v1095, %v1184
      %v1188 = vadd.f32 %v1182, %v1187
      %vm1189 = vcmask 123904
      %1190 = vst.msk [vmem:[%s4] sm:$0x3] %vm1189, %v1188
      %p1191 = scmp.lt.s32.totalorder %s16, 3
      %s1192 = scalar_select %p1191, %s16, 3
      %s1193 = smul.addr %s1192, 5
      %s1194 = smul.addr %s1193, 8
      %s1195 = scalar_lea.vmem %s3, %s1194
      // Predicated region
      $region37: #{autoprotonet_embedding.12} parent=31 // pred_check
        %p1196 = pneg %p102
      $region38: #{autoprotonet_embedding.12} parent=31 // pred_check_branch
        %1198 = sbr.rel (%p1196) target = $region40
      $region39: #{autoprotonet_embedding.12} parent=31 // pred_region
        _
      $region40: #{autoprotonet_embedding.12} parent=31 // pred_fallthru
        _
      // Predicated region
      $region41: #{autoprotonet_embedding.12} parent=31 // pred_check
        %p1199 = pneg %p123
      $region42: #{autoprotonet_embedding.12} parent=31 // pred_check_branch
        %1201 = sbr.rel (%p1199) target = $region44
      $region43: #{autoprotonet_embedding.12} parent=31 // pred_region
        _
      $region44: #{autoprotonet_embedding.12} parent=31 // pred_fallthru
        _
      // Predicated region
      $region45: #{autoprotonet_embedding.12} parent=31 // pred_check
        %p1202 = pneg %p123
      $region46: #{autoprotonet_embedding.12} parent=31 // pred_check_branch
        %1204 = sbr.rel (%p1202) target = $region48
      $region47: #{autoprotonet_embedding.12} parent=31 // pred_region
        _
      $region48: #{autoprotonet_embedding.12} parent=31 // pred_fallthru
        _
    $region32: #{autoprotonet_embedding.12} parent=5 // pred_fallthru
      _
    %p1205 = scmp.le.s32.totalorder 2, %s11
    // Predicated region
    $region49: #{autoprotonet_embedding.12} parent=5 // pred_check
      %p1206 = pneg %p1205
    $region50: #{autoprotonet_embedding.12} parent=5 // pred_check_branch
      %1208 = sbr.rel (%p1206) target = $region52
    $region51: #{autoprotonet_embedding.12} parent=5 // pred_region
      %s1209 = ssub.s32 %s11, 2
      // Predicated region
      $region53: #{autoprotonet_embedding.12} parent=51 // pred_check
        %p1210 = pneg %p108
      $region54: #{autoprotonet_embedding.12} parent=51 // pred_check_branch
        %1212 = sbr.rel (%p1210) target = $region56
      $region55: #{autoprotonet_embedding.12} parent=51 // pred_region
        %p1213 = scmp.lt.s32.totalorder %s17, 3
        %s1214 = scalar_select %p1213, %s17, 3
        %s1215 = smul.addr %s1214, 5
        %s1216 = smul.addr %s1215, 8
        %s1217 = scalar_lea.vmem %s3, %s1216
      $region56: #{autoprotonet_embedding.12} parent=51 // pred_fallthru
        _
    $region52: #{autoprotonet_embedding.12} parent=5 // pred_fallthru
      _
  $region6: #{autoprotonet_embedding.12} parent=0 // loop_footer
    %s15 = sadd.s32 1, %s11
  $region7: #{autoprotonet_embedding.12} parent=0 // loop_footer_branch
    %10 = sbr.rel target = $region3
  $region8: #{autoprotonet_embedding.12} parent=0 // loop_exit
    _

// kernel: autoprotonet_embedding.15
$region0: #{autoprotonet_embedding.15}
  #allocation0 [shape = 'u32[]', space=smem, size = 0x4, offset = 0x4, fixed_abs, tag = 'smem constant byte address 0x4 - core index']
  #allocation1 [shape = 'u32[144,128]{1,0:T(1,128)}', space=vmem, size = 0x12000, scoped, tag = 'internal scratch']
  %s0 = inlined_call_operand.vmem [shape: f32[4,16,16], index: 0, kind: input, shape index: {}]
  %s1 = inlined_call_operand.vmem [shape: f32[1,16], index: 1, kind: input, shape index: {}]
  %s2 = inlined_call_operand.vmem [shape: f32[1,16], index: 2, kind: input, shape index: {}]
  %s3 = inlined_call_operand.vmem [shape: f32[17,11], index: 3, kind: input, shape index: {}]
  %s4 = inlined_call_operand.vmem [shape: f32[4,17,16], index: 4, kind: output, shape index: {}]
  %s5 = sld [smem:[#allocation0]]
  $region49: #{autoprotonet_embedding.15} parent=0
    _
  %s7 = ssub.s32 1, %s5
  %s8 = scalar_select 0, %s7, %s5
  loop: start=0, step=1, limit=6
  $region2: #{autoprotonet_embedding.15} parent=0 // loop_pre_header
    _
  $region3: #{autoprotonet_embedding.15} parent=0 // loop_header
    %s10 = sphi 0, %s14
    %p11 = scmp.ge.s32.totalorder %s10, 6
    %s20 = sphi 0, %s22
    %s23 = sphi 0, %s20
    %s24 = sphi 0, %s23
    %s40 = sphi 0, %s24
    %s44 = sphi 0, %s44
    %s46 = sphi 0, %s44
    %s47 = sphi 0, %s46
    %s61 = sphi 0, %s47
    %s65 = sphi 0, %s65
    %s67 = sphi 0, %s65
    %s68 = sphi 0, %s67
    %s82 = sphi 0, %s68
    %s86 = sphi 0, %s86
    %s88 = sphi 0, %s86
    %s89 = sphi 0, %s88
    %s103 = sphi 0, %s89
    %s109 = sphi 0, %s111
    %s112 = sphi 0, %s109
    %s113 = sphi 0, %s112
    %s129 = sphi 0, %s113
  $region4: #{autoprotonet_embedding.15} parent=0 // loop_header_branch
    %13 = sbr.rel (%p11) target = $region8
  $region5: #{autoprotonet_embedding.15} parent=0 // loop_body
    %s15 = ssub.s32 %s10, 1
    %s16 = ssub.s32 %s10, 2
    %s17 = sadd.s32 %s10, 1
    %s18 = ssub.s32 %s10, %s17
    %p19 = scmp.eq.s32.totalorder %s18, 0
    %s21 = sadd.s32 %s20, 1
    %s22 = scalar_select %p19, %s20, %s21
    %p25 = pneg %p19
    %p26 = scmp.eq.s32.totalorder %s10, 3
    %p27 = por %p25, %p26
    %p28 = scmp.ne.s32.totalorder %s20, %s23
    %p29 = scmp.eq.s32.totalorder %s10, 0
    %p30 = por %p28, %p29
    %p31 = scmp.ne.s32.totalorder %s20, %s23
    %p32 = scmp.eq.s32.totalorder %s15, 3
    %p33 = por %p31, %p32
    %p34 = scmp.ne.s32.totalorder %s23, %s24
    %p35 = scmp.eq.s32.totalorder %s15, 0
    %p36 = por %p34, %p35
    %p37 = scmp.ne.s32.totalorder %s23, %s24
    %p38 = scmp.eq.s32.totalorder %s16, 3
    %p39 = por %p37, %p38
    %p41 = scmp.ne.s32.totalorder %s24, %s40
    %p42 = scmp.eq.s32.totalorder %s16, 0
    %p43 = por %p41, %p42
    %s45 = sadd.s32 %s44, 1
    %p48 = scmp.eq.s32.totalorder %s10, 3
    %p49 = scmp.ne.s32.totalorder %s44, %s46
    %p50 = scmp.eq.s32.totalorder %s10, 0
    %p51 = por %p49, %p50
    %p52 = scmp.ne.s32.totalorder %s44, %s46
    %p53 = scmp.eq.s32.totalorder %s15, 3
    %p54 = por %p52, %p53
    %p55 = scmp.ne.s32.totalorder %s46, %s47
    %p56 = scmp.eq.s32.totalorder %s15, 0
    %p57 = por %p55, %p56
    %p58 = scmp.ne.s32.totalorder %s46, %s47
    %p59 = scmp.eq.s32.totalorder %s16, 3
    %p60 = por %p58, %p59
    %p62 = scmp.ne.s32.totalorder %s47, %s61
    %p63 = scmp.eq.s32.totalorder %s16, 0
    %p64 = por %p62, %p63
    %s66 = sadd.s32 %s65, 1
    %p69 = scmp.eq.s32.totalorder %s10, 3
    %p70 = scmp.ne.s32.totalorder %s65, %s67
    %p71 = scmp.eq.s32.totalorder %s10, 0
    %p72 = por %p70, %p71
    %p73 = scmp.ne.s32.totalorder %s65, %s67
    %p74 = scmp.eq.s32.totalorder %s15, 3
    %p75 = por %p73, %p74
    %p76 = scmp.ne.s32.totalorder %s67, %s68
    %p77 = scmp.eq.s32.totalorder %s15, 0
    %p78 = por %p76, %p77
    %p79 = scmp.ne.s32.totalorder %s67, %s68
    %p80 = scmp.eq.s32.totalorder %s16, 3
    %p81 = por %p79, %p80
    %p83 = scmp.ne.s32.totalorder %s68, %s82
    %p84 = scmp.eq.s32.totalorder %s16, 0
    %p85 = por %p83, %p84
    %s87 = sadd.s32 %s86, 1
    %p90 = scmp.eq.s32.totalorder %s10, 3
    %p91 = scmp.ne.s32.totalorder %s86, %s88
    %p92 = scmp.eq.s32.totalorder %s10, 0
    %p93 = por %p91, %p92
    %p94 = scmp.ne.s32.totalorder %s86, %s88
    %p95 = scmp.eq.s32.totalorder %s15, 3
    %p96 = por %p94, %p95
    %p97 = scmp.ne.s32.totalorder %s88, %s89
    %p98 = scmp.eq.s32.totalorder %s15, 0
    %p99 = por %p97, %p98
    %p100 = scmp.ne.s32.totalorder %s88, %s89
    %p101 = scmp.eq.s32.totalorder %s16, 3
    %p102 = por %p100, %p101
    %p104 = scmp.ne.s32.totalorder %s89, %s103
    %p105 = scmp.eq.s32.totalorder %s16, 0
    %p106 = por %p104, %p105
    %s107 = ssub.s32 %s10, %s17
    %p108 = scmp.eq.s32.totalorder %s107, 0
    %s110 = sadd.s32 %s109, 1
    %s111 = scalar_select %p108, %s109, %s110
    %p114 = pneg %p108
    %p115 = scmp.eq.s32.totalorder %s10, 3
    %p116 = por %p114, %p115
    %p117 = scmp.ne.s32.totalorder %s109, %s112
    %p118 = scmp.eq.s32.totalorder %s10, 0
    %p119 = por %p117, %p118
    %p120 = scmp.ne.s32.totalorder %s109, %s112
    %p121 = scmp.eq.s32.totalorder %s15, 3
    %p122 = por %p120, %p121
    %p123 = scmp.ne.s32.totalorder %s112, %s113
    %p124 = scmp.eq.s32.totalorder %s15, 0
    %p125 = por %p123, %p124
    %p126 = scmp.ne.s32.totalorder %s112, %s113
    %p127 = scmp.eq.s32.totalorder %s16, 3
    %p128 = por %p126, %p127
    %p130 = scmp.ne.s32.totalorder %s113, %s129
    %p131 = scmp.eq.s32.totalorder %s16, 0
    %p132 = por %p130, %p131
    %p133 = scmp.le.s32.totalorder 1, %s10
    %p134 = scmp.lt.s32.totalorder %s10, 5
    %p135 = pnand %p133, %p134
    %p136 = pneg %p135
    // Predicated region
    $region9: #{autoprotonet_embedding.15} parent=5 // pred_check
      _
    $region10: #{autoprotonet_embedding.15} parent=5 // pred_check_branch
      %138 = sbr.rel (%p135) target = $region12
    $region11: #{autoprotonet_embedding.15} parent=5 // pred_region
      %s139 = ssub.s32 %s10, 1
      // Predicated region
      $region13: #{autoprotonet_embedding.15} parent=11 // pred_check
        %p140 = pneg %p57
      $region14: #{autoprotonet_embedding.15} parent=11 // pred_check_branch
        %142 = sbr.rel (%p140) target = $region16
      $region15: #{autoprotonet_embedding.15} parent=11 // pred_region
        _
      $region16: #{autoprotonet_embedding.15} parent=11 // pred_fallthru
        _
      // Predicated region
      $region17: #{autoprotonet_embedding.15} parent=11 // pred_check
        %p143 = pneg %p78
      $region18: #{autoprotonet_embedding.15} parent=11 // pred_check_branch
        %145 = sbr.rel (%p143) target = $region20
      $region19: #{autoprotonet_embedding.15} parent=11 // pred_region
        _
      $region20: #{autoprotonet_embedding.15} parent=11 // pred_fallthru
        _
      // Predicated region
      $region21: #{autoprotonet_embedding.15} parent=11 // pred_check
        %p146 = pneg %p99
      $region22: #{autoprotonet_embedding.15} parent=11 // pred_check_branch
        %148 = sbr.rel (%p146) target = $region24
      $region23: #{autoprotonet_embedding.15} parent=11 // pred_region
        _
      $region24: #{autoprotonet_embedding.15} parent=11 // pred_fallthru
        _
    $region12: #{autoprotonet_embedding.15} parent=5 // pred_fallthru
      _
    %p149 = scmp.lt.s32.totalorder %s10, 4
    // Predicated region
    $region25: #{autoprotonet_embedding.15} parent=5 // pred_check
      %p150 = pneg %p149
    $region26: #{autoprotonet_embedding.15} parent=5 // pred_check_branch
      %152 = sbr.rel (%p150) target = $region28
    $region27: #{autoprotonet_embedding.15} parent=5 // pred_region
      // Predicated region
      $region29: #{autoprotonet_embedding.15} parent=27 // pred_check
        %p153 = pneg %p30
      $region30: #{autoprotonet_embedding.15} parent=27 // pred_check_branch
        %155 = sbr.rel (%p153) target = $region32
      $region31: #{autoprotonet_embedding.15} parent=27 // pred_region
        %p156 = scmp.lt.s32.totalorder %s10, 3
        %s157 = scalar_select %p156, %s10, 3
        %s158 = smul.addr %s157, 2
        %s159 = smul.addr %s158, 8
        %s160 = scalar_lea.vmem %s0, %s159
      $region32: #{autoprotonet_embedding.15} parent=27 // pred_fallthru
        _
    $region28: #{autoprotonet_embedding.15} parent=5 // pred_fallthru
      _
    %p161 = scmp.le.s32.totalorder 1, %s10
    %p162 = scmp.lt.s32.totalorder %s10, 5
    %p163 = pnand %p161, %p162
    %p164 = pneg %p163
    // Predicated region
    $region33: #{autoprotonet_embedding.15} parent=5 // pred_check
      _
    $region34: #{autoprotonet_embedding.15} parent=5 // pred_check_branch
      %166 = sbr.rel (%p163) target = $region36
    $region35: #{autoprotonet_embedding.15} parent=5 // pred_region
      %s167 = ssub.s32 %s10, 1
      %p168 = scmp.lt.s32.totalorder %s15, 3
      %s169 = scalar_select %p168, %s15, 3
      %s170 = smul.addr %s169, 2
      %s171 = smul.addr %s170, 8
      %s172 = scalar_lea.vmem %s0, %s171
      %p173 = pneg %p36
      %p174 = pneg %p33
      %p175 = pneg %p57
      %p176 = pneg %p54
      %p177 = pneg %p78
      %p178 = pneg %p75
      %p179 = pneg %p99
      %p180 = pneg %p96
      %p181 = pneg %p125
      %p182 = pneg %p122
      %p183 = scmp.lt.s32.totalorder %s15, 3
      %s184 = scalar_select %p183, %s15, 3
      %s185 = smul.addr %s184, 3
      %s186 = smul.addr %s185, 8
      %s187 = scalar_lea.vmem %s4, %s186
      %p188 = scmp.lt.s32.totalorder %s15, 3
      %s189 = scalar_select %p188, %s15, 3
      %s190 = smul.addr %s189, 2
      %s191 = smul.addr %s190, 8
      %s192 = scalar_lea.vmem %s0, %s191
      %p193 = scmp.lt.s32.totalorder %s15, 3
      %s194 = scalar_select %p193, %s15, 3
      %s195 = smul.addr %s194, 3
      %s196 = smul.addr %s195, 8
      %s197 = scalar_lea.vmem %s4, %s196
      %v198 = vld [vmem:[%s192] sm:$0xff]
      %v199 = vld [vmem:[%s192 + $0x8] sm:$0xff]
      %v200 = vld [vmem:[%s1] sm:$0x1]
      %v202 = vlaneseq
      %v203 = vshrl.u32 %v202, 7
      %v204 = vsub.s32 0, %v203
      %v205 = vrot.slane %v200, %v204
      %v207 = vmul.f32 %v198, %v205
      %v208 = vmul.f32 %v199, %v205
      %v209 = vld [vmem:[%s2] sm:$0x1]
      %v211 = vlaneseq
      %v212 = vshrl.u32 %v211, 7
      %v213 = vsub.s32 0, %v212
      %v214 = vrot.slane %v209, %v213
      %v216 = vadd.f32 %v207, %v214
      %v217 = vadd.f32 %v208, %v214
      %v218 = vmax.f32 %v216, 0.0
      %v219 = vmax.f32 %v217, 0.0
      %vm222 = vcmask 1046528
      %v223 = vrot.slane %v218, 1
      %v224 = vrot.slane %v219, 1
      %v225 = vsel %vm222, %v223, %v224
      %v228 = vmax.f32 %v218, %v225
      %v229 = vmax.f32 %v219, %v224
      %vm232 = vcmask 1043456
      %v233 = vrot.slane %v228, 4
      %v234 = vrot.slane %v229, 4
      %v235 = vsel %vm232, %v233, %v234
      %v238 = vmax.f32 %v228, %v235
      %v239 = vmax.f32 %v229, %v234
      %v240 = vld [vmem:[%s3] sm:$0xff]
      %v241 = vld [vmem:[%s3 + $0x8] sm:$0xff]
      %v242 = vld [vmem:[%s3 + $0x10] sm:$0x1]
      %vm243 = vcmask 89088
      %v245 = vsel %vm243, %v240, 0
      %v248 = vsel %vm243, %v241, 0
      %v251 = vsel %vm243, %v242, 0
      %vm253 = vcmask 1042432
      %v255 = vsel %vm253, %v239, 0
      %257 = vmatprep.subr.mxu0 0.0
      %258 = vmatpush1.msra.mxu0 %v238
      %259 = vmatprep.subr.mxu0 0.0
      %260 = vmatpush1.msra.mxu0 %v255
      %261 = vmatprep.subr.mxu0 0.0
      %262 = vmatpush1.msra.mxu0 0.0
      %263 = vmatprep.subr.mxu0 0.0
      %264 = vmatpush1.msra.mxu0 0.0
      %265 = vmatprep.subr.mxu0 0.0
      %266 = vmatpush1.msra.mxu0 0.0
      %267 = vmatprep.subr.mxu0 0.0
      %268 = vmatpush1.msra.mxu0 0.0
      %269 = vmatprep.subr.mxu0 0.0
      %270 = vmatpush1.msra.mxu0 0.0
      %271 = vmatprep.subr.mxu0 0.0
      %272 = vmatpush1.msra.mxu0 0.0
      %273 = vmatprep.subr.mxu0 0.0
      %274 = vmatpush1.msra.mxu0 0.0
      %275 = vmatprep.subr.mxu0 0.0
      %276 = vmatpush1.msra.mxu0 0.0
      %277 = vmatprep.subr.mxu0 0.0
      %278 = vmatpush1.msra.mxu0 0.0
      %279 = vmatprep.subr.mxu0 0.0
      %280 = vmatpush1.msra.mxu0 0.0
      %281 = vmatprep.subr.mxu0 0.0
      %282 = vmatpush1.msra.mxu0 0.0
      %283 = vmatprep.subr.mxu0 0.0
      %284 = vmatpush1.msra.mxu0 0.0
      %285 = vmatprep.subr.mxu0 0.0
      %286 = vmatpush1.msra.mxu0 0.0
      %287 = vmatprep.subr.mxu0 0.0
      %288 = vmatpush1.msra.mxu0 0.0
      %289 = vmatprep.subr.mxu0 0.0
      %290 = vmatpush1.msra.mxu0 0.0
      %291 = vmatprep.subr.mxu0 0.0
      %292 = vmatpush1.msra.mxu0 0.0
      %293 = vmatprep.subr.mxu0 0.0
      %294 = vmatpush1.msra.mxu0 0.0
      %295 = vmatprep.subr.mxu0 0.0
      %296 = vmatpush1.msra.mxu0 0.0
      %297 = vmatprep.subr.mxu0 0.0
      %298 = vmatpush1.msra.mxu0 0.0
      %299 = vmatprep.subr.mxu0 0.0
      %300 = vmatpush1.msra.mxu0 0.0
      %301 = vmatprep.subr.mxu0 0.0
      %302 = vmatpush1.msra.mxu0 0.0
      %303 = vmatprep.subr.mxu0 0.0
      %304 = vmatpush1.msra.mxu0 0.0
      %305 = vmatprep.subr.mxu0 0.0
      %306 = vmatpush1.msra.mxu0 0.0
      %307 = vmatprep.subr.mxu0 0.0
      %308 = vmatpush1.msra.mxu0 0.0
      %309 = vmatprep.subr.mxu0 0.0
      %310 = vmatpush1.msra.mxu0 0.0
      %311 = vmatprep.subr.mxu0 0.0
      %312 = vmatpush1.msra.mxu0 0.0
      %313 = vmatprep.subr.mxu0 0.0
      %314 = vmatpush1.msra.mxu0 0.0
      %315 = vmatprep.subr.mxu0 0.0
      %316 = vmatpush1.msra.mxu0 0.0
      %317 = vmatprep.subr.mxu0 0.0
      %318 = vmatpush1.msra.mxu0 0.0
      %319 = vmatprep.subr.mxu0 0.0
      %320 = vmatpush1.msra.mxu0 0.0
      %321 = vmatprep.mubr.f32.mxu0 0.0
      %322 = vmatmul.mubr.f32.gmra.mrb[0].mxu0 %v245
      %v323 = vpop.f32.mrb[0].mxu0
      %v324 = vadd.f32 0.0, %v323
      %v325 = vpop.f32.mrb[0].mxu0
      %326 = vmatprep.mubr.f32.mxu0 0.0
      %327 = vmatmul.mubr.f32.gmra.mrb[0].mxu0 %v248
      %v328 = vpop.f32.mrb[0].mxu0
      %v329 = vadd.f32 0.0, %v328
      %v330 = vpop.f32.mrb[0].mxu0
      %331 = vmatprep.mubr.f32.mxu0 0.0
      %332 = vmatmul.mubr.f32.gmra.mrb[0].mxu0 %v251
      %v333 = vpop.f32.mrb[0].mxu0
      %v334 = vadd.f32 0.0, %v333
      %v335 = vpop.f32.mrb[0].mxu0
      %336 = vdwg.mxu0
      %vm337 = vcmask 130048
      %338 = vst.msk [vmem:[%s197] sm:$0xff] %vm337, %v324
      %339 = vst.msk [vmem:[%s197 + $0x8] sm:$0xff] %vm337, %v329
      %vm340 = vcmask 122880
      %341 = vst.msk [vmem:[%s197 + $0x10] sm:$0x1] %vm340, %v334
      %p342 = scmp.lt.s32.totalorder %s15, 3
      %s343 = scalar_select %p342, %s15, 3
      %s344 = smul.addr %s343, 3
      %s345 = smul.addr %s344, 8
      %s346 = scalar_lea.vmem %s4, %s345
      // Predicated region
      $region37: #{autoprotonet_embedding.15} parent=35 // pred_check
        %p347 = pneg %p122
      $region38: #{autoprotonet_embedding.15} parent=35 // pred_check_branch
        %349 = sbr.rel (%p347) target = $region40
      $region39: #{autoprotonet_embedding.15} parent=35 // pred_region
        _
      $region40: #{autoprotonet_embedding.15} parent=35 // pred_fallthru
        _
    $region36: #{autoprotonet_embedding.15} parent=5 // pred_fallthru
      _
    %p350 = scmp.le.s32.totalorder 2, %s10
    // Predicated region
    $region41: #{autoprotonet_embedding.15} parent=5 // pred_check
      %p351 = pneg %p350
    $region42: #{autoprotonet_embedding.15} parent=5 // pred_check_branch
      %353 = sbr.rel (%p351) target = $region44
    $region43: #{autoprotonet_embedding.15} parent=5 // pred_region
      %s354 = ssub.s32 %s10, 2
      // Predicated region
      $region45: #{autoprotonet_embedding.15} parent=43 // pred_check
        %p355 = pneg %p128
      $region46: #{autoprotonet_embedding.15} parent=43 // pred_check_branch
        %357 = sbr.rel (%p355) target = $region48
      $region47: #{autoprotonet_embedding.15} parent=43 // pred_region
        %p358 = scmp.lt.s32.totalorder %s16, 3
        %s359 = scalar_select %p358, %s16, 3
        %s360 = smul.addr %s359, 3
        %s361 = smul.addr %s360, 8
        %s362 = scalar_lea.vmem %s4, %s361
      $region48: #{autoprotonet_embedding.15} parent=43 // pred_fallthru
        _
    $region44: #{autoprotonet_embedding.15} parent=5 // pred_fallthru
      _
  $region6: #{autoprotonet_embedding.15} parent=0 // loop_footer
    %s14 = sadd.s32 1, %s10
  $region7: #{autoprotonet_embedding.15} parent=0 // loop_footer_branch
    %9 = sbr.rel target = $region3
  $region8: #{autoprotonet_embedding.15} parent=0 // loop_exit
    _

</llo_original>
